<compile_context>
chip_gen: v6e
topology: v6e:2x2x1
jax: 0.10.0
libtpu: 0.0.40
codegen_flags: <defaults>
</compile_context>

<pallas_src>
import functools

import jax
import jax.numpy as jnp
from jax import lax
from jax.experimental import pallas as pl
from jax.experimental.pallas import tpu as pltpu

NUM_WORDS = 5000
EMBED_DIM = 128
HIDDEN = 512
NUM_CLASS = 10
CLASS_PAD = 128  # lane-dense logits block; sliced back to NUM_CLASS in wrapper


def lstm_tiny_kernel(xs_ref, wih_ref, whh_ref, b_ref, w1_ref, b1_ref,
                     w2_ref, b2_ref, logits_ref, feat_ref, gx_sc,
                     *, batch, seq_len):
    """Single-invocation LSTM forward.

    xs_ref : (T*B, E)      bf16  time-major embedded tokens (flattened)
    wih_ref: (E, 4H)       bf16  W_ih^T
    whh_ref: (H, 4H)       bf16  W_hh^T
    b_ref  : (1, 4H)       f32   b_ih + b_hh (pre-summed in the wrapper)
    w1_ref : (H, H2)       bf16  fc1 weight^T     b1_ref: (1, H2) f32
    w2_ref : (H2, 128)     bf16  fc2 weight^T, zero-padded to lane width
    b2_ref : (1, 128)      f32   fc2 bias, zero-padded
    gx_sc  : (T*B, 4H)     f32   hoisted input projection for all timesteps
    """
    B, T = batch, seq_len
    H = whh_ref.shape[0]

    # --- Prologue: hoist x @ W_ih (+ bias) out of the recurrence. One MXU
    # call with M = T*B instead of T matmuls with M = B. ---
    gx_sc[...] = (jnp.dot(xs_ref[...], wih_ref[...],
                          preferred_element_type=jnp.float32)
                  + b_ref[...])

    # --- Recurrence: fully unrolled, h/c carried as f32 values (no per-step
    # grid overhead; LLO scheduler sees across steps). ---
    def step(t, carry):
        h, c = carry
        row = pl.multiple_of(t * B, B)
        gates = gx_sc[pl.ds(row, B), :] + jnp.dot(
            h.astype(whh_ref.dtype), whh_ref[...],
            preferred_element_type=jnp.float32)          # (B, 4H) f32
        i_g = jax.nn.sigmoid(gates[:, 0 * H:1 * H])
        f_g = jax.nn.sigmoid(gates[:, 1 * H:2 * H])
        g_g = jnp.tanh(gates[:, 2 * H:3 * H])
        o_g = jax.nn.sigmoid(gates[:, 3 * H:4 * H])
        c = f_g * c + i_g * g_g
        h = o_g * jnp.tanh(c)
        return (h, c)

    h0 = jnp.zeros((B, H), jnp.float32)
    c0 = jnp.zeros((B, H), jnp.float32)
    h, _ = lax.fori_loop(0, T, step, (h0, c0), unroll=True)

    # --- Head: fc1 -> feat, fc2 -> lane-dense padded logits. ---
    feat = (jnp.dot(h.astype(w1_ref.dtype), w1_ref[...],
                    preferred_element_type=jnp.float32) + b1_ref[...])
    feat_ref[...] = feat.astype(feat_ref.dtype)
    logits_ref[...] = (jnp.dot(feat.astype(w2_ref.dtype), w2_ref[...],
                               preferred_element_type=jnp.float32)
                       + b2_ref[...]).astype(logits_ref.dtype)


@jax.jit
def lstm_tiny_forward(tokens, params):
    B, T = tokens.shape
    E, H, C = EMBED_DIM, HIDDEN, NUM_CLASS
    H2 = H // 2

    # Embedding gather (data-dependent lookup, plain-JAX glue) done directly
    # in time-major order -> no separate (B,T,E)->(T,B,E) activation transpose.
    xe = jnp.take(params["embed"], tokens.T, axis=0)          # (T, B, E)
    xs = xe.reshape(T * B, E).astype(jnp.bfloat16)            # (T*B, E) bf16

    # bf16 weights for the MXU; biases stay f32, b_ih + b_hh pre-summed.
    wih = params["w_ih_t"].astype(jnp.bfloat16)
    whh = params["w_hh_t"].astype(jnp.bfloat16)
    bias = (params["b_ih"] + params["b_hh"]).astype(jnp.float32)
    w1 = params["w1_t"].astype(jnp.bfloat16)
    b1 = params["b1"].astype(jnp.float32)
    # fc2 padded to a 128-wide (lane-dense) output block.
    w2 = jnp.zeros((H2, CLASS_PAD), jnp.bfloat16).at[:, :C].set(
        params["w2_t"].astype(jnp.bfloat16))
    b2 = jnp.zeros((1, CLASS_PAD), jnp.float32).at[:, :C].set(params["b2"])

    kernel = functools.partial(lstm_tiny_kernel, batch=B, seq_len=T)

    in_specs = [
        pl.BlockSpec((T * B, E), lambda i: (0, 0)),           # xs
        pl.BlockSpec((E, 4 * H), lambda i: (0, 0)),           # W_ih^T
        pl.BlockSpec((H, 4 * H), lambda i: (0, 0)),           # W_hh^T
        pl.BlockSpec((1, 4 * H), lambda i: (0, 0)),           # b_ih + b_hh
        pl.BlockSpec((H, H2), lambda i: (0, 0)),              # W1^T
        pl.BlockSpec((1, H2), lambda i: (0, 0)),              # b1
        pl.BlockSpec((H2, CLASS_PAD), lambda i: (0, 0)),      # W2^T (padded)
        pl.BlockSpec((1, CLASS_PAD), lambda i: (0, 0)),       # b2 (padded)
    ]
    out_specs = [
        pl.BlockSpec((B, CLASS_PAD), lambda i: (0, 0)),       # padded logits
        pl.BlockSpec((B, H2), lambda i: (0, 0)),              # feat
    ]
    out_shape = [
        jax.ShapeDtypeStruct((B, CLASS_PAD), jnp.float32),
        jax.ShapeDtypeStruct((B, H2), jnp.float32),
    ]

    logits_pad, feat = pl.pallas_call(
        kernel,
        out_shape=out_shape,
        grid_spec=pltpu.PrefetchScalarGridSpec(
            num_scalar_prefetch=0,
            grid=(1,),                                        # single invocation
            in_specs=in_specs,
            out_specs=out_specs,
            scratch_shapes=[
                pltpu.VMEM((T * B, 4 * H), jnp.float32),      # gx (hoisted proj)
            ],
        ),
        compiler_params=pltpu.CompilerParams(
            dimension_semantics=("arbitrary",),
        ),
    )(xs, wih, whh, bias, w1, b1, w2, b2)

    return logits_pad[:, :C], feat


def make_params(key):
    ks = jax.random.split(key, 9)
    E, H, C = EMBED_DIM, HIDDEN, NUM_CLASS
    H2 = H // 2
    s = 0.05
    return {
        "embed": jax.random.normal(ks[0], (NUM_WORDS, E), jnp.float32) * s,
        # stored pre-transposed: (in, 4H) etc.
        "w_ih_t": jax.random.normal(ks[1], (E, 4 * H), jnp.float32) * s,
        "w_hh_t": jax.random.normal(ks[2], (H, 4 * H), jnp.float32) * s,
        "b_ih": jax.random.normal(ks[3], (1, 4 * H), jnp.float32) * s,
        "b_hh": jax.random.normal(ks[4], (1, 4 * H), jnp.float32) * s,
        "w1_t": jax.random.normal(ks[5], (H, H2), jnp.float32) * s,
        "b1": jax.random.normal(ks[6], (1, H2), jnp.float32) * s,
        "w2_t": jax.random.normal(ks[7], (H2, C), jnp.float32) * s,
        "b2": jax.random.normal(ks[8], (1, C), jnp.float32) * s,
    }


def reference_forward(tokens, params):
    """Pure-JAX f32 reference replicating torch semantics (gate order i,f,g,o)."""
    B, T = tokens.shape
    H = HIDDEN
    emb = jnp.take(params["embed"], tokens, axis=0)  # (B, T, E)
    h = jnp.zeros((B, H), jnp.float32)
    c = jnp.zeros((B, H), jnp.float32)

    def step(carry, x_t):
        h, c = carry
        gates = (x_t @ params["w_ih_t"] + params["b_ih"]
                 + h @ params["w_hh_t"] + params["b_hh"])
        i = jax.nn.sigmoid(gates[:, :H])
        f = jax.nn.sigmoid(gates[:, H:2 * H])
        g = jnp.tanh(gates[:, 2 * H:3 * H])
        o = jax.nn.sigmoid(gates[:, 3 * H:])
        c = f * c + i * g
        h = o * jnp.tanh(c)
        return (h, c), None

    (h, c), _ = jax.lax.scan(step, (h, c), jnp.transpose(emb, (1, 0, 2)))
    feat = h @ params["w1_t"] + params["b1"]
    logits = feat @ params["w2_t"] + params["b2"]
    return logits, feat


if __name__ == "__main__":
    key = jax.random.PRNGKey(0)
    k_tok, k_par = jax.random.split(key)

    B, T = 8, 8
    tokens = jax.random.randint(k_tok, (B, T), 0, NUM_WORDS, dtype=jnp.int32)
    params = make_params(k_par)

    logits, feat = lstm_tiny_forward(tokens, params)
    jax.block_until_ready((logits, feat))

    ref_logits, ref_feat = reference_forward(tokens, params)
    assert logits.shape == (B, NUM_CLASS) and feat.shape == (B, HIDDEN // 2)
    # Looser tolerance vs. the f32 reference: kernel uses bf16 weights/MXU
    # inputs with f32 accumulation (per the perf review).
    assert jnp.allclose(logits, ref_logits, atol=2e-2, rtol=2e-2)
    assert jnp.allclose(feat, ref_feat, atol=2e-2, rtol=2e-2)

    print("KERNEL_OK")
</pallas_src>

<mosaic_0001>
module attributes {stable_mosaic.version = 11 : i64} {
  func.func @lstm_tiny_kernel(%arg0: i32, %arg1: memref<64x128xbf16, #tpu.memory_space<vmem>>, %arg2: memref<128x2048xbf16, #tpu.memory_space<vmem>>, %arg3: memref<512x2048xbf16, #tpu.memory_space<vmem>>, %arg4: memref<1x2048xf32, #tpu.memory_space<vmem>>, %arg5: memref<512x256xbf16, #tpu.memory_space<vmem>>, %arg6: memref<1x256xf32, #tpu.memory_space<vmem>>, %arg7: memref<256x128xbf16, #tpu.memory_space<vmem>>, %arg8: memref<1x128xf32, #tpu.memory_space<vmem>>, %arg9: memref<8x128xf32, #tpu.memory_space<vmem>>, %arg10: memref<8x256xf32, #tpu.memory_space<vmem>>, %arg11: memref<64x2048xf32, #tpu.memory_space<vmem>>) attributes {dimension_semantics = [#tpu.dimension_semantics<arbitrary>], iteration_bounds = array<i64: 1>, scalar_prefetch = 0 : i64, scratch_operands = 1 : i64, tpu.core_type = #tpu.core_type<tc>, window_params = [{pipeline_mode = #tpu.pipeline_mode<synchronous>, transform_indices = @transform_0, window_bounds = array<i64: 64, 128>}, {pipeline_mode = #tpu.pipeline_mode<synchronous>, transform_indices = @transform_1, window_bounds = array<i64: 128, 2048>}, {pipeline_mode = #tpu.pipeline_mode<synchronous>, transform_indices = @transform_2, window_bounds = array<i64: 512, 2048>}, {pipeline_mode = #tpu.pipeline_mode<synchronous>, transform_indices = @transform_3, window_bounds = array<i64: 1, 2048>}, {pipeline_mode = #tpu.pipeline_mode<synchronous>, transform_indices = @transform_4, window_bounds = array<i64: 512, 256>}, {pipeline_mode = #tpu.pipeline_mode<synchronous>, transform_indices = @transform_5, window_bounds = array<i64: 1, 256>}, {pipeline_mode = #tpu.pipeline_mode<synchronous>, transform_indices = @transform_6, window_bounds = array<i64: 256, 128>}, {pipeline_mode = #tpu.pipeline_mode<synchronous>, transform_indices = @transform_7, window_bounds = array<i64: 1, 128>}, {pipeline_mode = #tpu.pipeline_mode<synchronous>, transform_indices = @transform_8, window_bounds = array<i64: 8, 128>}, {pipeline_mode = #tpu.pipeline_mode<synchronous>, transform_indices = @transform_9, window_bounds = array<i64: 8, 256>}]} {
    %c0 = arith.constant 0 : index
    %c0_0 = arith.constant 0 : index
    %0 = vector.load %arg1[%c0, %c0_0] : memref<64x128xbf16, #tpu.memory_space<vmem>>, vector<64x128xbf16>
    %c0_1 = arith.constant 0 : index
    %c0_2 = arith.constant 0 : index
    %1 = vector.load %arg2[%c0_1, %c0_2] : memref<128x2048xbf16, #tpu.memory_space<vmem>>, vector<128x2048xbf16>
    %cst = arith.constant dense<0.000000e+00> : vector<64x2048xf32>
    %2 = tpu.matmul %0, %1, %cst {dimension_numbers = #tpu.dot_dimension_numbers<[1], [0], [0], [1], [0, 0, 1, 1], [], []>} : vector<64x128xbf16>, vector<128x2048xbf16>, vector<64x2048xf32> -> vector<64x2048xf32>
    %c0_3 = arith.constant 0 : index
    %c0_4 = arith.constant 0 : index
    %3 = vector.load %arg4[%c0_3, %c0_4] : memref<1x2048xf32, #tpu.memory_space<vmem>>, vector<1x2048xf32>
    %4 = vector.broadcast %3 : vector<1x2048xf32> to vector<64x2048xf32>
    %5 = arith.addf %2, %4 : vector<64x2048xf32>
    %c0_5 = arith.constant 0 : index
    %c0_6 = arith.constant 0 : index
    %6 = vector.load %arg11[%c0_5, %c0_6] : memref<64x2048xf32, #tpu.memory_space<vmem>>, vector<64x2048xf32>
    tpu.vector_store %arg11[%c0_5, %c0_6], %5 {strides = array<i32>} : memref<64x2048xf32, #tpu.memory_space<vmem>>, vector<64x2048xf32>,
    %cst_7 = arith.constant 0.000000e+00 : f32
    %7 = vector.broadcast %cst_7 : f32 to vector<8x512xf32>
    %cst_8 = arith.constant 0.000000e+00 : f32
    %8 = vector.broadcast %cst_8 : f32 to vector<8x512xf32>
    %c0_i32 = arith.constant 0 : i32
    %c8_i32 = arith.constant 8 : i32
    %9 = arith.muli %c0_i32, %c8_i32 : i32
    %10 = tpu.assume_multiple %9, 8 : i32
    %11 = arith.index_cast %10 : i32 to index
    %c0_9 = arith.constant 0 : index
    %12 = vector.load %arg11[%11, %c0_9] : memref<64x2048xf32, #tpu.memory_space<vmem>>, vector<8x2048xf32>
    %13 = arith.truncf %7 : vector<8x512xf32> to vector<8x512xbf16>
    %c0_10 = arith.constant 0 : index
    %c0_11 = arith.constant 0 : index
    %14 = vector.load %arg3[%c0_10, %c0_11] : memref<512x2048xbf16, #tpu.memory_space<vmem>>, vector<512x2048xbf16>
    %cst_12 = arith.constant dense<0.000000e+00> : vector<8x2048xf32>
    %15 = tpu.matmul %13, %14, %cst_12 {dimension_numbers = #tpu.dot_dimension_numbers<[1], [0], [0], [1], [0, 0, 1, 1], [], []>} : vector<8x512xbf16>, vector<512x2048xbf16>, vector<8x2048xf32> -> vector<8x2048xf32>
    %16 = arith.addf %12, %15 : vector<8x2048xf32>
    %17 = vector.extract_strided_slice %16 {offsets = [0, 0], sizes = [8, 512], strides = [1, 1]} : vector<8x2048xf32> to vector<8x512xf32>
    %18 = arith.negf %17 : vector<8x512xf32>
    %19 = math.exp %18 : vector<8x512xf32>
    %cst_13 = arith.constant 1.000000e+00 : f32
    %20 = vector.broadcast %cst_13 : f32 to vector<8x512xf32>
    %21 = arith.addf %20, %19 : vector<8x512xf32>
    %22 = arith.divf %20, %21 : vector<8x512xf32>
    %23 = vector.extract_strided_slice %16 {offsets = [0, 512], sizes = [8, 512], strides = [1, 1]} : vector<8x2048xf32> to vector<8x512xf32>
    %24 = arith.negf %23 : vector<8x512xf32>
    %25 = math.exp %24 : vector<8x512xf32>
    %cst_14 = arith.constant 1.000000e+00 : f32
    %26 = vector.broadcast %cst_14 : f32 to vector<8x512xf32>
    %27 = arith.addf %26, %25 : vector<8x512xf32>
    %28 = arith.divf %26, %27 : vector<8x512xf32>
    %29 = vector.extract_strided_slice %16 {offsets = [0, 1024], sizes = [8, 512], strides = [1, 1]} : vector<8x2048xf32> to vector<8x512xf32>
    %30 = math.tanh %29 : vector<8x512xf32>
    %31 = vector.extract_strided_slice %16 {offsets = [0, 1536], sizes = [8, 512], strides = [1, 1]} : vector<8x2048xf32> to vector<8x512xf32>
    %32 = arith.negf %31 : vector<8x512xf32>
    %33 = math.exp %32 : vector<8x512xf32>
    %cst_15 = arith.constant 1.000000e+00 : f32
    %34 = vector.broadcast %cst_15 : f32 to vector<8x512xf32>
    %35 = arith.addf %34, %33 : vector<8x512xf32>
    %36 = arith.divf %34, %35 : vector<8x512xf32>
    %37 = arith.mulf %28, %8 : vector<8x512xf32>
    %38 = arith.mulf %22, %30 : vector<8x512xf32>
    %39 = arith.addf %37, %38 : vector<8x512xf32>
    %40 = math.tanh %39 : vector<8x512xf32>
    %41 = arith.mulf %36, %40 : vector<8x512xf32>
    %c1_i32 = arith.constant 1 : i32
    %c8_i32_16 = arith.constant 8 : i32
    %42 = arith.muli %c1_i32, %c8_i32_16 : i32
    %43 = tpu.assume_multiple %42, 8 : i32
    %44 = arith.index_cast %43 : i32 to index
    %c0_17 = arith.constant 0 : index
    %45 = vector.load %arg11[%44, %c0_17] : memref<64x2048xf32, #tpu.memory_space<vmem>>, vector<8x2048xf32>
    %46 = arith.truncf %41 : vector<8x512xf32> to vector<8x512xbf16>
    %c0_18 = arith.constant 0 : index
    %c0_19 = arith.constant 0 : index
    %47 = vector.load %arg3[%c0_18, %c0_19] : memref<512x2048xbf16, #tpu.memory_space<vmem>>, vector<512x2048xbf16>
    %cst_20 = arith.constant dense<0.000000e+00> : vector<8x2048xf32>
    %48 = tpu.matmul %46, %47, %cst_20 {dimension_numbers = #tpu.dot_dimension_numbers<[1], [0], [0], [1], [0, 0, 1, 1], [], []>} : vector<8x512xbf16>, vector<512x2048xbf16>, vector<8x2048xf32> -> vector<8x2048xf32>
    %49 = arith.addf %45, %48 : vector<8x2048xf32>
    %50 = vector.extract_strided_slice %49 {offsets = [0, 0], sizes = [8, 512], strides = [1, 1]} : vector<8x2048xf32> to vector<8x512xf32>
    %51 = arith.negf %50 : vector<8x512xf32>
    %52 = math.exp %51 : vector<8x512xf32>
    %cst_21 = arith.constant 1.000000e+00 : f32
    %53 = vector.broadcast %cst_21 : f32 to vector<8x512xf32>
    %54 = arith.addf %53, %52 : vector<8x512xf32>
    %55 = arith.divf %53, %54 : vector<8x512xf32>
    %56 = vector.extract_strided_slice %49 {offsets = [0, 512], sizes = [8, 512], strides = [1, 1]} : vector<8x2048xf32> to vector<8x512xf32>
    %57 = arith.negf %56 : vector<8x512xf32>
    %58 = math.exp %57 : vector<8x512xf32>
    %cst_22 = arith.constant 1.000000e+00 : f32
    %59 = vector.broadcast %cst_22 : f32 to vector<8x512xf32>
    %60 = arith.addf %59, %58 : vector<8x512xf32>
    %61 = arith.divf %59, %60 : vector<8x512xf32>
    %62 = vector.extract_strided_slice %49 {offsets = [0, 1024], sizes = [8, 512], strides = [1, 1]} : vector<8x2048xf32> to vector<8x512xf32>
    %63 = math.tanh %62 : vector<8x512xf32>
    %64 = vector.extract_strided_slice %49 {offsets = [0, 1536], sizes = [8, 512], strides = [1, 1]} : vector<8x2048xf32> to vector<8x512xf32>
    %65 = arith.negf %64 : vector<8x512xf32>
    %66 = math.exp %65 : vector<8x512xf32>
    %cst_23 = arith.constant 1.000000e+00 : f32
    %67 = vector.broadcast %cst_23 : f32 to vector<8x512xf32>
    %68 = arith.addf %67, %66 : vector<8x512xf32>
    %69 = arith.divf %67, %68 : vector<8x512xf32>
    %70 = arith.mulf %61, %39 : vector<8x512xf32>
    %71 = arith.mulf %55, %63 : vector<8x512xf32>
    %72 = arith.addf %70, %71 : vector<8x512xf32>
    %73 = math.tanh %72 : vector<8x512xf32>
    %74 = arith.mulf %69, %73 : vector<8x512xf32>
    %c2_i32 = arith.constant 2 : i32
    %c8_i32_24 = arith.constant 8 : i32
    %75 = arith.muli %c2_i32, %c8_i32_24 : i32
    %76 = tpu.assume_multiple %75, 8 : i32
    %77 = arith.index_cast %76 : i32 to index
    %c0_25 = arith.constant 0 : index
    %78 = vector.load %arg11[%77, %c0_25] : memref<64x2048xf32, #tpu.memory_space<vmem>>, vector<8x2048xf32>
    %79 = arith.truncf %74 : vector<8x512xf32> to vector<8x512xbf16>
    %c0_26 = arith.constant 0 : index
    %c0_27 = arith.constant 0 : index
    %80 = vector.load %arg3[%c0_26, %c0_27] : memref<512x2048xbf16, #tpu.memory_space<vmem>>, vector<512x2048xbf16>
    %cst_28 = arith.constant dense<0.000000e+00> : vector<8x2048xf32>
    %81 = tpu.matmul %79, %80, %cst_28 {dimension_numbers = #tpu.dot_dimension_numbers<[1], [0], [0], [1], [0, 0, 1, 1], [], []>} : vector<8x512xbf16>, vector<512x2048xbf16>, vector<8x2048xf32> -> vector<8x2048xf32>
    %82 = arith.addf %78, %81 : vector<8x2048xf32>
    %83 = vector.extract_strided_slice %82 {offsets = [0, 0], sizes = [8, 512], strides = [1, 1]} : vector<8x2048xf32> to vector<8x512xf32>
    %84 = arith.negf %83 : vector<8x512xf32>
    %85 = math.exp %84 : vector<8x512xf32>
    %cst_29 = arith.constant 1.000000e+00 : f32
    %86 = vector.broadcast %cst_29 : f32 to vector<8x512xf32>
    %87 = arith.addf %86, %85 : vector<8x512xf32>
    %88 = arith.divf %86, %87 : vector<8x512xf32>
    %89 = vector.extract_strided_slice %82 {offsets = [0, 512], sizes = [8, 512], strides = [1, 1]} : vector<8x2048xf32> to vector<8x512xf32>
    %90 = arith.negf %89 : vector<8x512xf32>
    %91 = math.exp %90 : vector<8x512xf32>
    %cst_30 = arith.constant 1.000000e+00 : f32
    %92 = vector.broadcast %cst_30 : f32 to vector<8x512xf32>
    %93 = arith.addf %92, %91 : vector<8x512xf32>
    %94 = arith.divf %92, %93 : vector<8x512xf32>
    %95 = vector.extract_strided_slice %82 {offsets = [0, 1024], sizes = [8, 512], strides = [1, 1]} : vector<8x2048xf32> to vector<8x512xf32>
    %96 = math.tanh %95 : vector<8x512xf32>
    %97 = vector.extract_strided_slice %82 {offsets = [0, 1536], sizes = [8, 512], strides = [1, 1]} : vector<8x2048xf32> to vector<8x512xf32>
    %98 = arith.negf %97 : vector<8x512xf32>
    %99 = math.exp %98 : vector<8x512xf32>
    %cst_31 = arith.constant 1.000000e+00 : f32
    %100 = vector.broadcast %cst_31 : f32 to vector<8x512xf32>
    %101 = arith.addf %100, %99 : vector<8x512xf32>
    %102 = arith.divf %100, %101 : vector<8x512xf32>
    %103 = arith.mulf %94, %72 : vector<8x512xf32>
    %104 = arith.mulf %88, %96 : vector<8x512xf32>
    %105 = arith.addf %103, %104 : vector<8x512xf32>
    %106 = math.tanh %105 : vector<8x512xf32>
    %107 = arith.mulf %102, %106 : vector<8x512xf32>
    %c3_i32 = arith.constant 3 : i32
    %c8_i32_32 = arith.constant 8 : i32
    %108 = arith.muli %c3_i32, %c8_i32_32 : i32
    %109 = tpu.assume_multiple %108, 8 : i32
    %110 = arith.index_cast %109 : i32 to index
    %c0_33 = arith.constant 0 : index
    %111 = vector.load %arg11[%110, %c0_33] : memref<64x2048xf32, #tpu.memory_space<vmem>>, vector<8x2048xf32>
    %112 = arith.truncf %107 : vector<8x512xf32> to vector<8x512xbf16>
    %c0_34 = arith.constant 0 : index
    %c0_35 = arith.constant 0 : index
    %113 = vector.load %arg3[%c0_34, %c0_35] : memref<512x2048xbf16, #tpu.memory_space<vmem>>, vector<512x2048xbf16>
    %cst_36 = arith.constant dense<0.000000e+00> : vector<8x2048xf32>
    %114 = tpu.matmul %112, %113, %cst_36 {dimension_numbers = #tpu.dot_dimension_numbers<[1], [0], [0], [1], [0, 0, 1, 1], [], []>} : vector<8x512xbf16>, vector<512x2048xbf16>, vector<8x2048xf32> -> vector<8x2048xf32>
    %115 = arith.addf %111, %114 : vector<8x2048xf32>
    %116 = vector.extract_strided_slice %115 {offsets = [0, 0], sizes = [8, 512], strides = [1, 1]} : vector<8x2048xf32> to vector<8x512xf32>
    %117 = arith.negf %116 : vector<8x512xf32>
    %118 = math.exp %117 : vector<8x512xf32>
    %cst_37 = arith.constant 1.000000e+00 : f32
    %119 = vector.broadcast %cst_37 : f32 to vector<8x512xf32>
    %120 = arith.addf %119, %118 : vector<8x512xf32>
    %121 = arith.divf %119, %120 : vector<8x512xf32>
    %122 = vector.extract_strided_slice %115 {offsets = [0, 512], sizes = [8, 512], strides = [1, 1]} : vector<8x2048xf32> to vector<8x512xf32>
    %123 = arith.negf %122 : vector<8x512xf32>
    %124 = math.exp %123 : vector<8x512xf32>
    %cst_38 = arith.constant 1.000000e+00 : f32
    %125 = vector.broadcast %cst_38 : f32 to vector<8x512xf32>
    %126 = arith.addf %125, %124 : vector<8x512xf32>
    %127 = arith.divf %125, %126 : vector<8x512xf32>
    %128 = vector.extract_strided_slice %115 {offsets = [0, 1024], sizes = [8, 512], strides = [1, 1]} : vector<8x2048xf32> to vector<8x512xf32>
    %129 = math.tanh %128 : vector<8x512xf32>
    %130 = vector.extract_strided_slice %115 {offsets = [0, 1536], sizes = [8, 512], strides = [1, 1]} : vector<8x2048xf32> to vector<8x512xf32>
    %131 = arith.negf %130 : vector<8x512xf32>
    %132 = math.exp %131 : vector<8x512xf32>
    %cst_39 = arith.constant 1.000000e+00 : f32
    %133 = vector.broadcast %cst_39 : f32 to vector<8x512xf32>
    %134 = arith.addf %133, %132 : vector<8x512xf32>
    %135 = arith.divf %133, %134 : vector<8x512xf32>
    %136 = arith.mulf %127, %105 : vector<8x512xf32>
    %137 = arith.mulf %121, %129 : vector<8x512xf32>
    %138 = arith.addf %136, %137 : vector<8x512xf32>
    %139 = math.tanh %138 : vector<8x512xf32>
    %140 = arith.mulf %135, %139 : vector<8x512xf32>
    %c4_i32 = arith.constant 4 : i32
    %c8_i32_40 = arith.constant 8 : i32
    %141 = arith.muli %c4_i32, %c8_i32_40 : i32
    %142 = tpu.assume_multiple %141, 8 : i32
    %143 = arith.index_cast %142 : i32 to index
    %c0_41 = arith.constant 0 : index
    %144 = vector.load %arg11[%143, %c0_41] : memref<64x2048xf32, #tpu.memory_space<vmem>>, vector<8x2048xf32>
    %145 = arith.truncf %140 : vector<8x512xf32> to vector<8x512xbf16>
    %c0_42 = arith.constant 0 : index
    %c0_43 = arith.constant 0 : index
    %146 = vector.load %arg3[%c0_42, %c0_43] : memref<512x2048xbf16, #tpu.memory_space<vmem>>, vector<512x2048xbf16>
    %cst_44 = arith.constant dense<0.000000e+00> : vector<8x2048xf32>
    %147 = tpu.matmul %145, %146, %cst_44 {dimension_numbers = #tpu.dot_dimension_numbers<[1], [0], [0], [1], [0, 0, 1, 1], [], []>} : vector<8x512xbf16>, vector<512x2048xbf16>, vector<8x2048xf32> -> vector<8x2048xf32>
    %148 = arith.addf %144, %147 : vector<8x2048xf32>
    %149 = vector.extract_strided_slice %148 {offsets = [0, 0], sizes = [8, 512], strides = [1, 1]} : vector<8x2048xf32> to vector<8x512xf32>
    %150 = arith.negf %149 : vector<8x512xf32>
    %151 = math.exp %150 : vector<8x512xf32>
    %cst_45 = arith.constant 1.000000e+00 : f32
    %152 = vector.broadcast %cst_45 : f32 to vector<8x512xf32>
    %153 = arith.addf %152, %151 : vector<8x512xf32>
    %154 = arith.divf %152, %153 : vector<8x512xf32>
    %155 = vector.extract_strided_slice %148 {offsets = [0, 512], sizes = [8, 512], strides = [1, 1]} : vector<8x2048xf32> to vector<8x512xf32>
    %156 = arith.negf %155 : vector<8x512xf32>
    %157 = math.exp %156 : vector<8x512xf32>
    %cst_46 = arith.constant 1.000000e+00 : f32
    %158 = vector.broadcast %cst_46 : f32 to vector<8x512xf32>
    %159 = arith.addf %158, %157 : vector<8x512xf32>
    %160 = arith.divf %158, %159 : vector<8x512xf32>
    %161 = vector.extract_strided_slice %148 {offsets = [0, 1024], sizes = [8, 512], strides = [1, 1]} : vector<8x2048xf32> to vector<8x512xf32>
    %162 = math.tanh %161 : vector<8x512xf32>
    %163 = vector.extract_strided_slice %148 {offsets = [0, 1536], sizes = [8, 512], strides = [1, 1]} : vector<8x2048xf32> to vector<8x512xf32>
    %164 = arith.negf %163 : vector<8x512xf32>
    %165 = math.exp %164 : vector<8x512xf32>
    %cst_47 = arith.constant 1.000000e+00 : f32
    %166 = vector.broadcast %cst_47 : f32 to vector<8x512xf32>
    %167 = arith.addf %166, %165 : vector<8x512xf32>
    %168 = arith.divf %166, %167 : vector<8x512xf32>
    %169 = arith.mulf %160, %138 : vector<8x512xf32>
    %170 = arith.mulf %154, %162 : vector<8x512xf32>
    %171 = arith.addf %169, %170 : vector<8x512xf32>
    %172 = math.tanh %171 : vector<8x512xf32>
    %173 = arith.mulf %168, %172 : vector<8x512xf32>
    %c5_i32 = arith.constant 5 : i32
    %c8_i32_48 = arith.constant 8 : i32
    %174 = arith.muli %c5_i32, %c8_i32_48 : i32
    %175 = tpu.assume_multiple %174, 8 : i32
    %176 = arith.index_cast %175 : i32 to index
    %c0_49 = arith.constant 0 : index
    %177 = vector.load %arg11[%176, %c0_49] : memref<64x2048xf32, #tpu.memory_space<vmem>>, vector<8x2048xf32>
    %178 = arith.truncf %173 : vector<8x512xf32> to vector<8x512xbf16>
    %c0_50 = arith.constant 0 : index
    %c0_51 = arith.constant 0 : index
    %179 = vector.load %arg3[%c0_50, %c0_51] : memref<512x2048xbf16, #tpu.memory_space<vmem>>, vector<512x2048xbf16>
    %cst_52 = arith.constant dense<0.000000e+00> : vector<8x2048xf32>
    %180 = tpu.matmul %178, %179, %cst_52 {dimension_numbers = #tpu.dot_dimension_numbers<[1], [0], [0], [1], [0, 0, 1, 1], [], []>} : vector<8x512xbf16>, vector<512x2048xbf16>, vector<8x2048xf32> -> vector<8x2048xf32>
    %181 = arith.addf %177, %180 : vector<8x2048xf32>
    %182 = vector.extract_strided_slice %181 {offsets = [0, 0], sizes = [8, 512], strides = [1, 1]} : vector<8x2048xf32> to vector<8x512xf32>
    %183 = arith.negf %182 : vector<8x512xf32>
    %184 = math.exp %183 : vector<8x512xf32>
    %cst_53 = arith.constant 1.000000e+00 : f32
    %185 = vector.broadcast %cst_53 : f32 to vector<8x512xf32>
    %186 = arith.addf %185, %184 : vector<8x512xf32>
    %187 = arith.divf %185, %186 : vector<8x512xf32>
    %188 = vector.extract_strided_slice %181 {offsets = [0, 512], sizes = [8, 512], strides = [1, 1]} : vector<8x2048xf32> to vector<8x512xf32>
    %189 = arith.negf %188 : vector<8x512xf32>
    %190 = math.exp %189 : vector<8x512xf32>
    %cst_54 = arith.constant 1.000000e+00 : f32
    %191 = vector.broadcast %cst_54 : f32 to vector<8x512xf32>
    %192 = arith.addf %191, %190 : vector<8x512xf32>
    %193 = arith.divf %191, %192 : vector<8x512xf32>
    %194 = vector.extract_strided_slice %181 {offsets = [0, 1024], sizes = [8, 512], strides = [1, 1]} : vector<8x2048xf32> to vector<8x512xf32>
    %195 = math.tanh %194 : vector<8x512xf32>
    %196 = vector.extract_strided_slice %181 {offsets = [0, 1536], sizes = [8, 512], strides = [1, 1]} : vector<8x2048xf32> to vector<8x512xf32>
    %197 = arith.negf %196 : vector<8x512xf32>
    %198 = math.exp %197 : vector<8x512xf32>
    %cst_55 = arith.constant 1.000000e+00 : f32
    %199 = vector.broadcast %cst_55 : f32 to vector<8x512xf32>
    %200 = arith.addf %199, %198 : vector<8x512xf32>
    %201 = arith.divf %199, %200 : vector<8x512xf32>
    %202 = arith.mulf %193, %171 : vector<8x512xf32>
    %203 = arith.mulf %187, %195 : vector<8x512xf32>
    %204 = arith.addf %202, %203 : vector<8x512xf32>
    %205 = math.tanh %204 : vector<8x512xf32>
    %206 = arith.mulf %201, %205 : vector<8x512xf32>
    %c6_i32 = arith.constant 6 : i32
    %c8_i32_56 = arith.constant 8 : i32
    %207 = arith.muli %c6_i32, %c8_i32_56 : i32
    %208 = tpu.assume_multiple %207, 8 : i32
    %209 = arith.index_cast %208 : i32 to index
    %c0_57 = arith.constant 0 : index
    %210 = vector.load %arg11[%209, %c0_57] : memref<64x2048xf32, #tpu.memory_space<vmem>>, vector<8x2048xf32>
    %211 = arith.truncf %206 : vector<8x512xf32> to vector<8x512xbf16>
    %c0_58 = arith.constant 0 : index
    %c0_59 = arith.constant 0 : index
    %212 = vector.load %arg3[%c0_58, %c0_59] : memref<512x2048xbf16, #tpu.memory_space<vmem>>, vector<512x2048xbf16>
    %cst_60 = arith.constant dense<0.000000e+00> : vector<8x2048xf32>
    %213 = tpu.matmul %211, %212, %cst_60 {dimension_numbers = #tpu.dot_dimension_numbers<[1], [0], [0], [1], [0, 0, 1, 1], [], []>} : vector<8x512xbf16>, vector<512x2048xbf16>, vector<8x2048xf32> -> vector<8x2048xf32>
    %214 = arith.addf %210, %213 : vector<8x2048xf32>
    %215 = vector.extract_strided_slice %214 {offsets = [0, 0], sizes = [8, 512], strides = [1, 1]} : vector<8x2048xf32> to vector<8x512xf32>
    %216 = arith.negf %215 : vector<8x512xf32>
    %217 = math.exp %216 : vector<8x512xf32>
    %cst_61 = arith.constant 1.000000e+00 : f32
    %218 = vector.broadcast %cst_61 : f32 to vector<8x512xf32>
    %219 = arith.addf %218, %217 : vector<8x512xf32>
    %220 = arith.divf %218, %219 : vector<8x512xf32>
    %221 = vector.extract_strided_slice %214 {offsets = [0, 512], sizes = [8, 512], strides = [1, 1]} : vector<8x2048xf32> to vector<8x512xf32>
    %222 = arith.negf %221 : vector<8x512xf32>
    %223 = math.exp %222 : vector<8x512xf32>
    %cst_62 = arith.constant 1.000000e+00 : f32
    %224 = vector.broadcast %cst_62 : f32 to vector<8x512xf32>
    %225 = arith.addf %224, %223 : vector<8x512xf32>
    %226 = arith.divf %224, %225 : vector<8x512xf32>
    %227 = vector.extract_strided_slice %214 {offsets = [0, 1024], sizes = [8, 512], strides = [1, 1]} : vector<8x2048xf32> to vector<8x512xf32>
    %228 = math.tanh %227 : vector<8x512xf32>
    %229 = vector.extract_strided_slice %214 {offsets = [0, 1536], sizes = [8, 512], strides = [1, 1]} : vector<8x2048xf32> to vector<8x512xf32>
    %230 = arith.negf %229 : vector<8x512xf32>
    %231 = math.exp %230 : vector<8x512xf32>
    %cst_63 = arith.constant 1.000000e+00 : f32
    %232 = vector.broadcast %cst_63 : f32 to vector<8x512xf32>
    %233 = arith.addf %232, %231 : vector<8x512xf32>
    %234 = arith.divf %232, %233 : vector<8x512xf32>
    %235 = arith.mulf %226, %204 : vector<8x512xf32>
    %236 = arith.mulf %220, %228 : vector<8x512xf32>
    %237 = arith.addf %235, %236 : vector<8x512xf32>
    %238 = math.tanh %237 : vector<8x512xf32>
    %239 = arith.mulf %234, %238 : vector<8x512xf32>
    %c7_i32 = arith.constant 7 : i32
    %c8_i32_64 = arith.constant 8 : i32
    %240 = arith.muli %c7_i32, %c8_i32_64 : i32
    %241 = tpu.assume_multiple %240, 8 : i32
    %242 = arith.index_cast %241 : i32 to index
    %c0_65 = arith.constant 0 : index
    %243 = vector.load %arg11[%242, %c0_65] : memref<64x2048xf32, #tpu.memory_space<vmem>>, vector<8x2048xf32>
    %244 = arith.truncf %239 : vector<8x512xf32> to vector<8x512xbf16>
    %c0_66 = arith.constant 0 : index
    %c0_67 = arith.constant 0 : index
    %245 = vector.load %arg3[%c0_66, %c0_67] : memref<512x2048xbf16, #tpu.memory_space<vmem>>, vector<512x2048xbf16>
    %cst_68 = arith.constant dense<0.000000e+00> : vector<8x2048xf32>
    %246 = tpu.matmul %244, %245, %cst_68 {dimension_numbers = #tpu.dot_dimension_numbers<[1], [0], [0], [1], [0, 0, 1, 1], [], []>} : vector<8x512xbf16>, vector<512x2048xbf16>, vector<8x2048xf32> -> vector<8x2048xf32>
    %247 = arith.addf %243, %246 : vector<8x2048xf32>
    %248 = vector.extract_strided_slice %247 {offsets = [0, 0], sizes = [8, 512], strides = [1, 1]} : vector<8x2048xf32> to vector<8x512xf32>
    %249 = arith.negf %248 : vector<8x512xf32>
    %250 = math.exp %249 : vector<8x512xf32>
    %cst_69 = arith.constant 1.000000e+00 : f32
    %251 = vector.broadcast %cst_69 : f32 to vector<8x512xf32>
    %252 = arith.addf %251, %250 : vector<8x512xf32>
    %253 = arith.divf %251, %252 : vector<8x512xf32>
    %254 = vector.extract_strided_slice %247 {offsets = [0, 512], sizes = [8, 512], strides = [1, 1]} : vector<8x2048xf32> to vector<8x512xf32>
    %255 = arith.negf %254 : vector<8x512xf32>
    %256 = math.exp %255 : vector<8x512xf32>
    %cst_70 = arith.constant 1.000000e+00 : f32
    %257 = vector.broadcast %cst_70 : f32 to vector<8x512xf32>
    %258 = arith.addf %257, %256 : vector<8x512xf32>
    %259 = arith.divf %257, %258 : vector<8x512xf32>
    %260 = vector.extract_strided_slice %247 {offsets = [0, 1024], sizes = [8, 512], strides = [1, 1]} : vector<8x2048xf32> to vector<8x512xf32>
    %261 = math.tanh %260 : vector<8x512xf32>
    %262 = vector.extract_strided_slice %247 {offsets = [0, 1536], sizes = [8, 512], strides = [1, 1]} : vector<8x2048xf32> to vector<8x512xf32>
    %263 = arith.negf %262 : vector<8x512xf32>
    %264 = math.exp %263 : vector<8x512xf32>
    %cst_71 = arith.constant 1.000000e+00 : f32
    %265 = vector.broadcast %cst_71 : f32 to vector<8x512xf32>
    %266 = arith.addf %265, %264 : vector<8x512xf32>
    %267 = arith.divf %265, %266 : vector<8x512xf32>
    %268 = arith.mulf %259, %237 : vector<8x512xf32>
    %269 = arith.mulf %253, %261 : vector<8x512xf32>
    %270 = arith.addf %268, %269 : vector<8x512xf32>
    %271 = math.tanh %270 : vector<8x512xf32>
    %272 = arith.mulf %267, %271 : vector<8x512xf32>
    %c8_i32_72 = arith.constant 8 : i32
    %273 = arith.truncf %272 : vector<8x512xf32> to vector<8x512xbf16>
    %c0_73 = arith.constant 0 : index
    %c0_74 = arith.constant 0 : index
    %274 = vector.load %arg5[%c0_73, %c0_74] : memref<512x256xbf16, #tpu.memory_space<vmem>>, vector<512x256xbf16>
    %cst_75 = arith.constant dense<0.000000e+00> : vector<8x256xf32>
    %275 = tpu.matmul %273, %274, %cst_75 {dimension_numbers = #tpu.dot_dimension_numbers<[1], [0], [0], [1], [0, 0, 1, 1], [], []>} : vector<8x512xbf16>, vector<512x256xbf16>, vector<8x256xf32> -> vector<8x256xf32>
    %c0_76 = arith.constant 0 : index
    %c0_77 = arith.constant 0 : index
    %276 = vector.load %arg6[%c0_76, %c0_77] : memref<1x256xf32, #tpu.memory_space<vmem>>, vector<1x256xf32>
    %277 = vector.broadcast %276 : vector<1x256xf32> to vector<8x256xf32>
    %278 = arith.addf %275, %277 : vector<8x256xf32>
    %c0_78 = arith.constant 0 : index
    %c0_79 = arith.constant 0 : index
    %279 = vector.load %arg10[%c0_78, %c0_79] : memref<8x256xf32, #tpu.memory_space<vmem>>, vector<8x256xf32>
    tpu.vector_store %arg10[%c0_78, %c0_79], %278 {strides = array<i32>} : memref<8x256xf32, #tpu.memory_space<vmem>>, vector<8x256xf32>,
    %280 = arith.truncf %278 : vector<8x256xf32> to vector<8x256xbf16>
    %c0_80 = arith.constant 0 : index
    %c0_81 = arith.constant 0 : index
    %281 = vector.load %arg7[%c0_80, %c0_81] : memref<256x128xbf16, #tpu.memory_space<vmem>>, vector<256x128xbf16>
    %cst_82 = arith.constant dense<0.000000e+00> : vector<8x128xf32>
    %282 = tpu.matmul %280, %281, %cst_82 {dimension_numbers = #tpu.dot_dimension_numbers<[1], [0], [0], [1], [0, 0, 1, 1], [], []>} : vector<8x256xbf16>, vector<256x128xbf16>, vector<8x128xf32> -> vector<8x128xf32>
    %c0_83 = arith.constant 0 : index
    %c0_84 = arith.constant 0 : index
    %283 = vector.load %arg8[%c0_83, %c0_84] : memref<1x128xf32, #tpu.memory_space<vmem>>, vector<1x128xf32>
    %284 = vector.broadcast %283 : vector<1x128xf32> to vector<8x128xf32>
    %285 = arith.addf %282, %284 : vector<8x128xf32>
    %c0_85 = arith.constant 0 : index
    %c0_86 = arith.constant 0 : index
    %286 = vector.load %arg9[%c0_85, %c0_86] : memref<8x128xf32, #tpu.memory_space<vmem>>, vector<8x128xf32>
    tpu.vector_store %arg9[%c0_85, %c0_86], %285 {strides = array<i32>} : memref<8x128xf32, #tpu.memory_space<vmem>>, vector<8x128xf32>,
    return
  }
  func.func @transform_0(%arg0: i32) -> (i32, i32) {
    %c0_i32 = arith.constant 0 : i32
    %c0_i32_0 = arith.constant 0 : i32
    %c0_i32_1 = arith.constant 0 : i32
    return %c0_i32, %c0_i32_0 : i32, i32
  }
  func.func @transform_1(%arg0: i32) -> (i32, i32) {
    %c0_i32 = arith.constant 0 : i32
    %c0_i32_0 = arith.constant 0 : i32
    %c0_i32_1 = arith.constant 0 : i32
    return %c0_i32, %c0_i32_0 : i32, i32
  }
  func.func @transform_2(%arg0: i32) -> (i32, i32) {
    %c0_i32 = arith.constant 0 : i32
    %c0_i32_0 = arith.constant 0 : i32
    %c0_i32_1 = arith.constant 0 : i32
    return %c0_i32, %c0_i32_0 : i32, i32
  }
  func.func @transform_3(%arg0: i32) -> (i32, i32) {
    %c0_i32 = arith.constant 0 : i32
    %c0_i32_0 = arith.constant 0 : i32
    %c0_i32_1 = arith.constant 0 : i32
    return %c0_i32, %c0_i32_0 : i32, i32
  }
  func.func @transform_4(%arg0: i32) -> (i32, i32) {
    %c0_i32 = arith.constant 0 : i32
    %c0_i32_0 = arith.constant 0 : i32
    %c0_i32_1 = arith.constant 0 : i32
    return %c0_i32, %c0_i32_0 : i32, i32
  }
  func.func @transform_5(%arg0: i32) -> (i32, i32) {
    %c0_i32 = arith.constant 0 : i32
    %c0_i32_0 = arith.constant 0 : i32
    %c0_i32_1 = arith.constant 0 : i32
    return %c0_i32, %c0_i32_0 : i32, i32
  }
  func.func @transform_6(%arg0: i32) -> (i32, i32) {
    %c0_i32 = arith.constant 0 : i32
    %c0_i32_0 = arith.constant 0 : i32
    %c0_i32_1 = arith.constant 0 : i32
    return %c0_i32, %c0_i32_0 : i32, i32
  }
  func.func @transform_7(%arg0: i32) -> (i32, i32) {
    %c0_i32 = arith.constant 0 : i32
    %c0_i32_0 = arith.constant 0 : i32
    %c0_i32_1 = arith.constant 0 : i32
    return %c0_i32, %c0_i32_0 : i32, i32
  }
  func.func @transform_8(%arg0: i32) -> (i32, i32) {
    %c0_i32 = arith.constant 0 : i32
    %c0_i32_0 = arith.constant 0 : i32
    %c0_i32_1 = arith.constant 0 : i32
    return %c0_i32, %c0_i32_0 : i32, i32
  }
  func.func @transform_9(%arg0: i32) -> (i32, i32) {
    %c0_i32 = arith.constant 0 : i32
    %c0_i32_0 = arith.constant 0 : i32
    %c0_i32_1 = arith.constant 0 : i32
    return %c0_i32, %c0_i32_0 : i32, i32
  }
}

</mosaic_0001>

<llo_original>
// kernel: lstm_tiny_forward.1
$region0: #{lstm_tiny_forward.1}
  #allocation0 [shape = 'u32[]', space=smem, size = 0x4, offset = 0x4, fixed_abs, tag = 'smem constant byte address 0x4 - core index']
  #allocation1 [shape = 'u32[144,128]{1,0:T(1,128)}', space=vmem, size = 0x12000, scoped, tag = 'internal scratch']
  #allocation2 [shape = 'f32[64,2048]{1,0:T(8,128)}', space=vmem, size = 0x80000, scoped, tag = 'scratch operand']
  %s0 = inlined_call_operand.vmem [shape: bf16[64,128], index: 0, kind: input, shape index: {}]
  %s1 = inlined_call_operand.vmem [shape: bf16[128,2048], index: 1, kind: input, shape index: {}]
  %s2 = inlined_call_operand.vmem [shape: bf16[512,2048], index: 2, kind: input, shape index: {}]
  %s3 = inlined_call_operand.vmem [shape: f32[1,2048], index: 3, kind: input, shape index: {}]
  %s4 = inlined_call_operand.vmem [shape: bf16[512,256], index: 4, kind: input, shape index: {}]
  %s5 = inlined_call_operand.vmem [shape: f32[1,256], index: 5, kind: input, shape index: {}]
  %s6 = inlined_call_operand.vmem [shape: bf16[256,128], index: 6, kind: input, shape index: {}]
  %s7 = inlined_call_operand.vmem [shape: f32[1,128], index: 7, kind: input, shape index: {}]
  %s8 = inlined_call_operand.hbm [shape: f32[8,128], index: 8, kind: output, shape index: {0}]
  %s9 = inlined_call_operand.hbm [shape: f32[8,256], index: 9, kind: output, shape index: {1}]
  %10 = xla_tuple %s8, %s9
  %s11 = sld [smem:[#allocation0]]
  $region50: #{lstm_tiny_forward.1} parent=0
    _
  %s13 = ssub.s32 1, %s11
  %s14 = scalar_select 0, %s13, %s11
  $region1: #{lstm_tiny_forward.1} parent=0
    #allocation3 [shape = 'u8[4096]{0}', space=vmem, size = 0x1000, scoped, tag = 'output window, operand 0, single buffered']
    #allocation4 [shape = 's32[1]{0}', space=sflag, size = 0x4, scoped, tag = 'scoped memory for lstm_tiny_forward.1']
    #allocation5 [shape = 'u8[8192]{0}', space=vmem, size = 0x2000, scoped, tag = 'output window, operand 1, single buffered']
    #allocation6 [shape = 's32[1]{0}', space=sflag, size = 0x4, scoped, tag = 'scoped memory for lstm_tiny_forward.1']
    %15 = vsyncpa [#allocation4], 0
    %16 = vsyncpa [#allocation6], 0
    // Predicated region
    $region2: #{lstm_tiny_forward.1} parent=1 // pred_check
      _
    $region3: #{lstm_tiny_forward.1} parent=1 // pred_check_branch
      %18 = sbr.rel (0) target = $region5
    $region4: #{lstm_tiny_forward.1} parent=1 // pred_region
      _
    $region5: #{lstm_tiny_forward.1} parent=1 // pred_fallthru
      _
    // Predicated region
    $region6: #{lstm_tiny_forward.1} parent=1 // pred_check
      _
    $region7: #{lstm_tiny_forward.1} parent=1 // pred_check_branch
      %20 = sbr.rel (0) target = $region9
    $region8: #{lstm_tiny_forward.1} parent=1 // pred_region
      _
    $region9: #{lstm_tiny_forward.1} parent=1 // pred_fallthru
      _
    // Predicated region
    $region10: #{lstm_tiny_forward.1} parent=1 // pred_check
      _
    $region11: #{lstm_tiny_forward.1} parent=1 // pred_check_branch
      %22 = sbr.rel (0) target = $region13
    $region12: #{lstm_tiny_forward.1} parent=1 // pred_region
      _
    $region13: #{lstm_tiny_forward.1} parent=1 // pred_fallthru
      _
    // Predicated region
    $region14: #{lstm_tiny_forward.1} parent=1 // pred_check
      _
    $region15: #{lstm_tiny_forward.1} parent=1 // pred_check_branch
      %24 = sbr.rel (0) target = $region17
    $region16: #{lstm_tiny_forward.1} parent=1 // pred_region
      _
    $region17: #{lstm_tiny_forward.1} parent=1 // pred_fallthru
      _
    // Predicated region
    $region18: #{lstm_tiny_forward.1} parent=1 // pred_check
      _
    $region19: #{lstm_tiny_forward.1} parent=1 // pred_check_branch
      %26 = sbr.rel (0) target = $region21
    $region20: #{lstm_tiny_forward.1} parent=1 // pred_region
      _
    $region21: #{lstm_tiny_forward.1} parent=1 // pred_fallthru
      _
    // Predicated region
    $region22: #{lstm_tiny_forward.1} parent=1 // pred_check
      _
    $region23: #{lstm_tiny_forward.1} parent=1 // pred_check_branch
      %28 = sbr.rel (0) target = $region25
    $region24: #{lstm_tiny_forward.1} parent=1 // pred_region
      _
    $region25: #{lstm_tiny_forward.1} parent=1 // pred_fallthru
      _
    // Predicated region
    $region26: #{lstm_tiny_forward.1} parent=1 // pred_check
      _
    $region27: #{lstm_tiny_forward.1} parent=1 // pred_check_branch
      %30 = sbr.rel (0) target = $region29
    $region28: #{lstm_tiny_forward.1} parent=1 // pred_region
      _
    $region29: #{lstm_tiny_forward.1} parent=1 // pred_fallthru
      _
    // Predicated region
    $region30: #{lstm_tiny_forward.1} parent=1 // pred_check
      _
    $region31: #{lstm_tiny_forward.1} parent=1 // pred_check_branch
      %32 = sbr.rel (0) target = $region33
    $region32: #{lstm_tiny_forward.1} parent=1 // pred_region
      _
    $region33: #{lstm_tiny_forward.1} parent=1 // pred_fallthru
      _
    %v34 = vld [vmem:[%s0] sm:$0xf]
    %v35 = vld [vmem:[%s0 + $0x4] sm:$0xf]
    %v36 = vld [vmem:[%s0 + $0x8] sm:$0xf]
    %v37 = vld [vmem:[%s0 + $0xc] sm:$0xf]
    %v38 = vld [vmem:[%s0 + $0x10] sm:$0xf]
    %v39 = vld [vmem:[%s0 + $0x14] sm:$0xf]
    %v40 = vld [vmem:[%s0 + $0x18] sm:$0xf]
    %v41 = vld [vmem:[%s0 + $0x1c] sm:$0xf]
    %v42 = vld [vmem:[%s1] sm:$0xff]
    %v43 = vld [vmem:[%s1 + $0x8] sm:$0xff]
    %v44 = vld [vmem:[%s1 + $0x10] sm:$0xff]
    %v45 = vld [vmem:[%s1 + $0x18] sm:$0xff]
    %v46 = vld [vmem:[%s1 + $0x20] sm:$0xff]
    %v47 = vld [vmem:[%s1 + $0x28] sm:$0xff]
    %v48 = vld [vmem:[%s1 + $0x30] sm:$0xff]
    %v49 = vld [vmem:[%s1 + $0x38] sm:$0xff]
    %v50 = vld [vmem:[%s1 + $0x40] sm:$0xff]
    %v51 = vld [vmem:[%s1 + $0x48] sm:$0xff]
    %v52 = vld [vmem:[%s1 + $0x50] sm:$0xff]
    %v53 = vld [vmem:[%s1 + $0x58] sm:$0xff]
    %v54 = vld [vmem:[%s1 + $0x60] sm:$0xff]
    %v55 = vld [vmem:[%s1 + $0x68] sm:$0xff]
    %v56 = vld [vmem:[%s1 + $0x70] sm:$0xff]
    %v57 = vld [vmem:[%s1 + $0x78] sm:$0xff]
    %v58 = vld [vmem:[%s1 + $0x80] sm:$0xff]
    %v59 = vld [vmem:[%s1 + $0x88] sm:$0xff]
    %v60 = vld [vmem:[%s1 + $0x90] sm:$0xff]
    %v61 = vld [vmem:[%s1 + $0x98] sm:$0xff]
    %v62 = vld [vmem:[%s1 + $0xa0] sm:$0xff]
    %v63 = vld [vmem:[%s1 + $0xa8] sm:$0xff]
    %v64 = vld [vmem:[%s1 + $0xb0] sm:$0xff]
    %v65 = vld [vmem:[%s1 + $0xb8] sm:$0xff]
    %v66 = vld [vmem:[%s1 + $0xc0] sm:$0xff]
    %v67 = vld [vmem:[%s1 + $0xc8] sm:$0xff]
    %v68 = vld [vmem:[%s1 + $0xd0] sm:$0xff]
    %v69 = vld [vmem:[%s1 + $0xd8] sm:$0xff]
    %v70 = vld [vmem:[%s1 + $0xe0] sm:$0xff]
    %v71 = vld [vmem:[%s1 + $0xe8] sm:$0xff]
    %v72 = vld [vmem:[%s1 + $0xf0] sm:$0xff]
    %v73 = vld [vmem:[%s1 + $0xf8] sm:$0xff]
    %v74 = vld [vmem:[%s1 + $0x100] sm:$0xff]
    %v75 = vld [vmem:[%s1 + $0x108] sm:$0xff]
    %v76 = vld [vmem:[%s1 + $0x110] sm:$0xff]
    %v77 = vld [vmem:[%s1 + $0x118] sm:$0xff]
    %v78 = vld [vmem:[%s1 + $0x120] sm:$0xff]
    %v79 = vld [vmem:[%s1 + $0x128] sm:$0xff]
    %v80 = vld [vmem:[%s1 + $0x130] sm:$0xff]
    %v81 = vld [vmem:[%s1 + $0x138] sm:$0xff]
    %v82 = vld [vmem:[%s1 + $0x140] sm:$0xff]
    %v83 = vld [vmem:[%s1 + $0x148] sm:$0xff]
    %v84 = vld [vmem:[%s1 + $0x150] sm:$0xff]
    %v85 = vld [vmem:[%s1 + $0x158] sm:$0xff]
    %v86 = vld [vmem:[%s1 + $0x160] sm:$0xff]
    %v87 = vld [vmem:[%s1 + $0x168] sm:$0xff]
    %v88 = vld [vmem:[%s1 + $0x170] sm:$0xff]
    %v89 = vld [vmem:[%s1 + $0x178] sm:$0xff]
    %v90 = vld [vmem:[%s1 + $0x180] sm:$0xff]
    %v91 = vld [vmem:[%s1 + $0x188] sm:$0xff]
    %v92 = vld [vmem:[%s1 + $0x190] sm:$0xff]
    %v93 = vld [vmem:[%s1 + $0x198] sm:$0xff]
    %v94 = vld [vmem:[%s1 + $0x1a0] sm:$0xff]
    %v95 = vld [vmem:[%s1 + $0x1a8] sm:$0xff]
    %v96 = vld [vmem:[%s1 + $0x1b0] sm:$0xff]
    %v97 = vld [vmem:[%s1 + $0x1b8] sm:$0xff]
    %v98 = vld [vmem:[%s1 + $0x1c0] sm:$0xff]
    %v99 = vld [vmem:[%s1 + $0x1c8] sm:$0xff]
    %v100 = vld [vmem:[%s1 + $0x1d0] sm:$0xff]
    %v101 = vld [vmem:[%s1 + $0x1d8] sm:$0xff]
    %v102 = vld [vmem:[%s1 + $0x1e0] sm:$0xff]
    %v103 = vld [vmem:[%s1 + $0x1e8] sm:$0xff]
    %v104 = vld [vmem:[%s1 + $0x1f0] sm:$0xff]
    %v105 = vld [vmem:[%s1 + $0x1f8] sm:$0xff]
    %v106 = vld [vmem:[%s1 + $0x200] sm:$0xff]
    %v107 = vld [vmem:[%s1 + $0x208] sm:$0xff]
    %v108 = vld [vmem:[%s1 + $0x210] sm:$0xff]
    %v109 = vld [vmem:[%s1 + $0x218] sm:$0xff]
    %v110 = vld [vmem:[%s1 + $0x220] sm:$0xff]
    %v111 = vld [vmem:[%s1 + $0x228] sm:$0xff]
    %v112 = vld [vmem:[%s1 + $0x230] sm:$0xff]
    %v113 = vld [vmem:[%s1 + $0x238] sm:$0xff]
    %v114 = vld [vmem:[%s1 + $0x240] sm:$0xff]
    %v115 = vld [vmem:[%s1 + $0x248] sm:$0xff]
    %v116 = vld [vmem:[%s1 + $0x250] sm:$0xff]
    %v117 = vld [vmem:[%s1 + $0x258] sm:$0xff]
    %v118 = vld [vmem:[%s1 + $0x260] sm:$0xff]
    %v119 = vld [vmem:[%s1 + $0x268] sm:$0xff]
    %v120 = vld [vmem:[%s1 + $0x270] sm:$0xff]
    %v121 = vld [vmem:[%s1 + $0x278] sm:$0xff]
    %v122 = vld [vmem:[%s1 + $0x280] sm:$0xff]
    %v123 = vld [vmem:[%s1 + $0x288] sm:$0xff]
    %v124 = vld [vmem:[%s1 + $0x290] sm:$0xff]
    %v125 = vld [vmem:[%s1 + $0x298] sm:$0xff]
    %v126 = vld [vmem:[%s1 + $0x2a0] sm:$0xff]
    %v127 = vld [vmem:[%s1 + $0x2a8] sm:$0xff]
    %v128 = vld [vmem:[%s1 + $0x2b0] sm:$0xff]
    %v129 = vld [vmem:[%s1 + $0x2b8] sm:$0xff]
    %v130 = vld [vmem:[%s1 + $0x2c0] sm:$0xff]
    %v131 = vld [vmem:[%s1 + $0x2c8] sm:$0xff]
    %v132 = vld [vmem:[%s1 + $0x2d0] sm:$0xff]
    %v133 = vld [vmem:[%s1 + $0x2d8] sm:$0xff]
    %v134 = vld [vmem:[%s1 + $0x2e0] sm:$0xff]
    %v135 = vld [vmem:[%s1 + $0x2e8] sm:$0xff]
    %v136 = vld [vmem:[%s1 + $0x2f0] sm:$0xff]
    %v137 = vld [vmem:[%s1 + $0x2f8] sm:$0xff]
    %v138 = vld [vmem:[%s1 + $0x300] sm:$0xff]
    %v139 = vld [vmem:[%s1 + $0x308] sm:$0xff]
    %v140 = vld [vmem:[%s1 + $0x310] sm:$0xff]
    %v141 = vld [vmem:[%s1 + $0x318] sm:$0xff]
    %v142 = vld [vmem:[%s1 + $0x320] sm:$0xff]
    %v143 = vld [vmem:[%s1 + $0x328] sm:$0xff]
    %v144 = vld [vmem:[%s1 + $0x330] sm:$0xff]
    %v145 = vld [vmem:[%s1 + $0x338] sm:$0xff]
    %v146 = vld [vmem:[%s1 + $0x340] sm:$0xff]
    %v147 = vld [vmem:[%s1 + $0x348] sm:$0xff]
    %v148 = vld [vmem:[%s1 + $0x350] sm:$0xff]
    %v149 = vld [vmem:[%s1 + $0x358] sm:$0xff]
    %v150 = vld [vmem:[%s1 + $0x360] sm:$0xff]
    %v151 = vld [vmem:[%s1 + $0x368] sm:$0xff]
    %v152 = vld [vmem:[%s1 + $0x370] sm:$0xff]
    %v153 = vld [vmem:[%s1 + $0x378] sm:$0xff]
    %v154 = vld [vmem:[%s1 + $0x380] sm:$0xff]
    %v155 = vld [vmem:[%s1 + $0x388] sm:$0xff]
    %v156 = vld [vmem:[%s1 + $0x390] sm:$0xff]
    %v157 = vld [vmem:[%s1 + $0x398] sm:$0xff]
    %v158 = vld [vmem:[%s1 + $0x3a0] sm:$0xff]
    %v159 = vld [vmem:[%s1 + $0x3a8] sm:$0xff]
    %v160 = vld [vmem:[%s1 + $0x3b0] sm:$0xff]
    %v161 = vld [vmem:[%s1 + $0x3b8] sm:$0xff]
    %v162 = vld [vmem:[%s1 + $0x3c0] sm:$0xff]
    %v163 = vld [vmem:[%s1 + $0x3c8] sm:$0xff]
    %v164 = vld [vmem:[%s1 + $0x3d0] sm:$0xff]
    %v165 = vld [vmem:[%s1 + $0x3d8] sm:$0xff]
    %v166 = vld [vmem:[%s1 + $0x3e0] sm:$0xff]
    %v167 = vld [vmem:[%s1 + $0x3e8] sm:$0xff]
    %v168 = vld [vmem:[%s1 + $0x3f0] sm:$0xff]
    %v169 = vld [vmem:[%s1 + $0x3f8] sm:$0xff]
    %v170 = vld [vmem:[%s3] sm:$0xff]
    %v171 = vld [vmem:[%s3 + $0x8] sm:$0xff]
    %v174 = vlaneseq
    %v175 = vshrl.u32 %v174, 7
    %v176 = vsub.s32 0, %v175
    %v177 = vrot.slane %v170, %v176
    %v178 = vlaneseq
    %v179 = vshrl.u32 %v178, 7
    %v180 = vsub.s32 1, %v179
    %v181 = vrot.slane %v170, %v180
    %v182 = vlaneseq
    %v183 = vshrl.u32 %v182, 7
    %v184 = vsub.s32 2, %v183
    %v185 = vrot.slane %v170, %v184
    %v186 = vlaneseq
    %v187 = vshrl.u32 %v186, 7
    %v188 = vsub.s32 3, %v187
    %v189 = vrot.slane %v170, %v188
    %v190 = vlaneseq
    %v191 = vshrl.u32 %v190, 7
    %v192 = vsub.s32 4, %v191
    %v193 = vrot.slane %v170, %v192
    %v194 = vlaneseq
    %v195 = vshrl.u32 %v194, 7
    %v196 = vsub.s32 5, %v195
    %v197 = vrot.slane %v170, %v196
    %v198 = vlaneseq
    %v199 = vshrl.u32 %v198, 7
    %v200 = vsub.s32 6, %v199
    %v201 = vrot.slane %v170, %v200
    %v202 = vlaneseq
    %v203 = vshrl.u32 %v202, 7
    %v204 = vsub.s32 7, %v203
    %v205 = vrot.slane %v170, %v204
    %v206 = vlaneseq
    %v207 = vshrl.u32 %v206, 7
    %v208 = vsub.s32 0, %v207
    %v209 = vrot.slane %v171, %v208
    %v210 = vlaneseq
    %v211 = vshrl.u32 %v210, 7
    %v212 = vsub.s32 1, %v211
    %v213 = vrot.slane %v171, %v212
    %v214 = vlaneseq
    %v215 = vshrl.u32 %v214, 7
    %v216 = vsub.s32 2, %v215
    %v217 = vrot.slane %v171, %v216
    %v218 = vlaneseq
    %v219 = vshrl.u32 %v218, 7
    %v220 = vsub.s32 3, %v219
    %v221 = vrot.slane %v171, %v220
    %v222 = vlaneseq
    %v223 = vshrl.u32 %v222, 7
    %v224 = vsub.s32 4, %v223
    %v225 = vrot.slane %v171, %v224
    %v226 = vlaneseq
    %v227 = vshrl.u32 %v226, 7
    %v228 = vsub.s32 5, %v227
    %v229 = vrot.slane %v171, %v228
    %v230 = vlaneseq
    %v231 = vshrl.u32 %v230, 7
    %v232 = vsub.s32 6, %v231
    %v233 = vrot.slane %v171, %v232
    %v234 = vlaneseq
    %v235 = vshrl.u32 %v234, 7
    %v236 = vsub.s32 7, %v235
    %v237 = vrot.slane %v171, %v236
    %v262 = vunpack.c.l.b16 %v34
    %v263 = vunpack.c.l.b16 %v35
    %v264 = vunpack.c.l.b16 %v36
    %v265 = vunpack.c.l.b16 %v37
    %v266 = vunpack.c.l.b16 %v38
    %v267 = vunpack.c.l.b16 %v39
    %v268 = vunpack.c.l.b16 %v40
    %v269 = vunpack.c.l.b16 %v41
    %v270 = vpack.c.b16 %v263, %v262
    %v271 = vpack.c.b16 %v265, %v264
    %v272 = vpack.c.b16 %v267, %v266
    %v273 = vpack.c.b16 %v269, %v268
    %v406 = vunpack.c.l.b16 %v42
    %v407 = vunpack.c.h.b16 %v42
    %v408 = vunpack.c.l.b16 %v43
    %v409 = vunpack.c.h.b16 %v43
    %v410 = vunpack.c.l.b16 %v44
    %v411 = vunpack.c.h.b16 %v44
    %v412 = vunpack.c.l.b16 %v45
    %v413 = vunpack.c.h.b16 %v45
    %v414 = vunpack.c.l.b16 %v46
    %v415 = vunpack.c.h.b16 %v46
    %v416 = vunpack.c.l.b16 %v47
    %v417 = vunpack.c.h.b16 %v47
    %v418 = vunpack.c.l.b16 %v48
    %v419 = vunpack.c.h.b16 %v48
    %v420 = vunpack.c.l.b16 %v49
    %v421 = vunpack.c.h.b16 %v49
    %v422 = vunpack.c.l.b16 %v50
    %v423 = vunpack.c.h.b16 %v50
    %v424 = vunpack.c.l.b16 %v51
    %v425 = vunpack.c.h.b16 %v51
    %v426 = vunpack.c.l.b16 %v52
    %v427 = vunpack.c.h.b16 %v52
    %v428 = vunpack.c.l.b16 %v53
    %v429 = vunpack.c.h.b16 %v53
    %v430 = vunpack.c.l.b16 %v54
    %v431 = vunpack.c.h.b16 %v54
    %v432 = vunpack.c.l.b16 %v55
    %v433 = vunpack.c.h.b16 %v55
    %v434 = vunpack.c.l.b16 %v56
    %v435 = vunpack.c.h.b16 %v56
    %v436 = vunpack.c.l.b16 %v57
    %v437 = vunpack.c.h.b16 %v57
    %v438 = vunpack.c.l.b16 %v58
    %v439 = vunpack.c.h.b16 %v58
    %v440 = vunpack.c.l.b16 %v59
    %v441 = vunpack.c.h.b16 %v59
    %v442 = vunpack.c.l.b16 %v60
    %v443 = vunpack.c.h.b16 %v60
    %v444 = vunpack.c.l.b16 %v61
    %v445 = vunpack.c.h.b16 %v61
    %v446 = vunpack.c.l.b16 %v62
    %v447 = vunpack.c.h.b16 %v62
    %v448 = vunpack.c.l.b16 %v63
    %v449 = vunpack.c.h.b16 %v63
    %v450 = vunpack.c.l.b16 %v64
    %v451 = vunpack.c.h.b16 %v64
    %v452 = vunpack.c.l.b16 %v65
    %v453 = vunpack.c.h.b16 %v65
    %v454 = vunpack.c.l.b16 %v66
    %v455 = vunpack.c.h.b16 %v66
    %v456 = vunpack.c.l.b16 %v67
    %v457 = vunpack.c.h.b16 %v67
    %v458 = vunpack.c.l.b16 %v68
    %v459 = vunpack.c.h.b16 %v68
    %v460 = vunpack.c.l.b16 %v69
    %v461 = vunpack.c.h.b16 %v69
    %v462 = vunpack.c.l.b16 %v70
    %v463 = vunpack.c.h.b16 %v70
    %v464 = vunpack.c.l.b16 %v71
    %v465 = vunpack.c.h.b16 %v71
    %v466 = vunpack.c.l.b16 %v72
    %v467 = vunpack.c.h.b16 %v72
    %v468 = vunpack.c.l.b16 %v73
    %v469 = vunpack.c.h.b16 %v73
    %v470 = vunpack.c.l.b16 %v74
    %v471 = vunpack.c.h.b16 %v74
    %v472 = vunpack.c.l.b16 %v75
    %v473 = vunpack.c.h.b16 %v75
    %v474 = vunpack.c.l.b16 %v76
    %v475 = vunpack.c.h.b16 %v76
    %v476 = vunpack.c.l.b16 %v77
    %v477 = vunpack.c.h.b16 %v77
    %v478 = vunpack.c.l.b16 %v78
    %v479 = vunpack.c.h.b16 %v78
    %v480 = vunpack.c.l.b16 %v79
    %v481 = vunpack.c.h.b16 %v79
    %v482 = vunpack.c.l.b16 %v80
    %v483 = vunpack.c.h.b16 %v80
    %v484 = vunpack.c.l.b16 %v81
    %v485 = vunpack.c.h.b16 %v81
    %v486 = vunpack.c.l.b16 %v82
    %v487 = vunpack.c.h.b16 %v82
    %v488 = vunpack.c.l.b16 %v83
    %v489 = vunpack.c.h.b16 %v83
    %v490 = vunpack.c.l.b16 %v84
    %v491 = vunpack.c.h.b16 %v84
    %v492 = vunpack.c.l.b16 %v85
    %v493 = vunpack.c.h.b16 %v85
    %v494 = vunpack.c.l.b16 %v86
    %v495 = vunpack.c.h.b16 %v86
    %v496 = vunpack.c.l.b16 %v87
    %v497 = vunpack.c.h.b16 %v87
    %v498 = vunpack.c.l.b16 %v88
    %v499 = vunpack.c.h.b16 %v88
    %v500 = vunpack.c.l.b16 %v89
    %v501 = vunpack.c.h.b16 %v89
    %v502 = vunpack.c.l.b16 %v90
    %v503 = vunpack.c.h.b16 %v90
    %v504 = vunpack.c.l.b16 %v91
    %v505 = vunpack.c.h.b16 %v91
    %v506 = vunpack.c.l.b16 %v92
    %v507 = vunpack.c.h.b16 %v92
    %v508 = vunpack.c.l.b16 %v93
    %v509 = vunpack.c.h.b16 %v93
    %v510 = vunpack.c.l.b16 %v94
    %v511 = vunpack.c.h.b16 %v94
    %v512 = vunpack.c.l.b16 %v95
    %v513 = vunpack.c.h.b16 %v95
    %v514 = vunpack.c.l.b16 %v96
    %v515 = vunpack.c.h.b16 %v96
    %v516 = vunpack.c.l.b16 %v97
    %v517 = vunpack.c.h.b16 %v97
    %v518 = vunpack.c.l.b16 %v98
    %v519 = vunpack.c.h.b16 %v98
    %v520 = vunpack.c.l.b16 %v99
    %v521 = vunpack.c.h.b16 %v99
    %v522 = vunpack.c.l.b16 %v100
    %v523 = vunpack.c.h.b16 %v100
    %v524 = vunpack.c.l.b16 %v101
    %v525 = vunpack.c.h.b16 %v101
    %v526 = vunpack.c.l.b16 %v102
    %v527 = vunpack.c.h.b16 %v102
    %v528 = vunpack.c.l.b16 %v103
    %v529 = vunpack.c.h.b16 %v103
    %v530 = vunpack.c.l.b16 %v104
    %v531 = vunpack.c.h.b16 %v104
    %v532 = vunpack.c.l.b16 %v105
    %v533 = vunpack.c.h.b16 %v105
    %v534 = vunpack.c.l.b16 %v106
    %v535 = vunpack.c.h.b16 %v106
    %v536 = vunpack.c.l.b16 %v107
    %v537 = vunpack.c.h.b16 %v107
    %v538 = vunpack.c.l.b16 %v108
    %v539 = vunpack.c.h.b16 %v108
    %v540 = vunpack.c.l.b16 %v109
    %v541 = vunpack.c.h.b16 %v109
    %v542 = vunpack.c.l.b16 %v110
    %v543 = vunpack.c.h.b16 %v110
    %v544 = vunpack.c.l.b16 %v111
    %v545 = vunpack.c.h.b16 %v111
    %v546 = vunpack.c.l.b16 %v112
    %v547 = vunpack.c.h.b16 %v112
    %v548 = vunpack.c.l.b16 %v113
    %v549 = vunpack.c.h.b16 %v113
    %v550 = vunpack.c.l.b16 %v114
    %v551 = vunpack.c.h.b16 %v114
    %v552 = vunpack.c.l.b16 %v115
    %v553 = vunpack.c.h.b16 %v115
    %v554 = vunpack.c.l.b16 %v116
    %v555 = vunpack.c.h.b16 %v116
    %v556 = vunpack.c.l.b16 %v117
    %v557 = vunpack.c.h.b16 %v117
    %v558 = vunpack.c.l.b16 %v118
    %v559 = vunpack.c.h.b16 %v118
    %v560 = vunpack.c.l.b16 %v119
    %v561 = vunpack.c.h.b16 %v119
    %v562 = vunpack.c.l.b16 %v120
    %v563 = vunpack.c.h.b16 %v120
    %v564 = vunpack.c.l.b16 %v121
    %v565 = vunpack.c.h.b16 %v121
    %v566 = vunpack.c.l.b16 %v122
    %v567 = vunpack.c.h.b16 %v122
    %v568 = vunpack.c.l.b16 %v123
    %v569 = vunpack.c.h.b16 %v123
    %v570 = vunpack.c.l.b16 %v124
    %v571 = vunpack.c.h.b16 %v124
    %v572 = vunpack.c.l.b16 %v125
    %v573 = vunpack.c.h.b16 %v125
    %v574 = vunpack.c.l.b16 %v126
    %v575 = vunpack.c.h.b16 %v126
    %v576 = vunpack.c.l.b16 %v127
    %v577 = vunpack.c.h.b16 %v127
    %v578 = vunpack.c.l.b16 %v128
    %v579 = vunpack.c.h.b16 %v128
    %v580 = vunpack.c.l.b16 %v129
    %v581 = vunpack.c.h.b16 %v129
    %v582 = vunpack.c.l.b16 %v130
    %v583 = vunpack.c.h.b16 %v130
    %v584 = vunpack.c.l.b16 %v131
    %v585 = vunpack.c.h.b16 %v131
    %v586 = vunpack.c.l.b16 %v132
    %v587 = vunpack.c.h.b16 %v132
    %v588 = vunpack.c.l.b16 %v133
    %v589 = vunpack.c.h.b16 %v133
    %v590 = vunpack.c.l.b16 %v134
    %v591 = vunpack.c.h.b16 %v134
    %v592 = vunpack.c.l.b16 %v135
    %v593 = vunpack.c.h.b16 %v135
    %v594 = vunpack.c.l.b16 %v136
    %v595 = vunpack.c.h.b16 %v136
    %v596 = vunpack.c.l.b16 %v137
    %v597 = vunpack.c.h.b16 %v137
    %v598 = vunpack.c.l.b16 %v138
    %v599 = vunpack.c.h.b16 %v138
    %v600 = vunpack.c.l.b16 %v139
    %v601 = vunpack.c.h.b16 %v139
    %v602 = vunpack.c.l.b16 %v140
    %v603 = vunpack.c.h.b16 %v140
    %v604 = vunpack.c.l.b16 %v141
    %v605 = vunpack.c.h.b16 %v141
    %v606 = vunpack.c.l.b16 %v142
    %v607 = vunpack.c.h.b16 %v142
    %v608 = vunpack.c.l.b16 %v143
    %v609 = vunpack.c.h.b16 %v143
    %v610 = vunpack.c.l.b16 %v144
    %v611 = vunpack.c.h.b16 %v144
    %v612 = vunpack.c.l.b16 %v145
    %v613 = vunpack.c.h.b16 %v145
    %v614 = vunpack.c.l.b16 %v146
    %v615 = vunpack.c.h.b16 %v146
    %v616 = vunpack.c.l.b16 %v147
    %v617 = vunpack.c.h.b16 %v147
    %v618 = vunpack.c.l.b16 %v148
    %v619 = vunpack.c.h.b16 %v148
    %v620 = vunpack.c.l.b16 %v149
    %v621 = vunpack.c.h.b16 %v149
    %v622 = vunpack.c.l.b16 %v150
    %v623 = vunpack.c.h.b16 %v150
    %v624 = vunpack.c.l.b16 %v151
    %v625 = vunpack.c.h.b16 %v151
    %v626 = vunpack.c.l.b16 %v152
    %v627 = vunpack.c.h.b16 %v152
    %v628 = vunpack.c.l.b16 %v153
    %v629 = vunpack.c.h.b16 %v153
    %v630 = vunpack.c.l.b16 %v154
    %v631 = vunpack.c.h.b16 %v154
    %v632 = vunpack.c.l.b16 %v155
    %v633 = vunpack.c.h.b16 %v155
    %v634 = vunpack.c.l.b16 %v156
    %v635 = vunpack.c.h.b16 %v156
    %v636 = vunpack.c.l.b16 %v157
    %v637 = vunpack.c.h.b16 %v157
    %v638 = vunpack.c.l.b16 %v158
    %v639 = vunpack.c.h.b16 %v158
    %v640 = vunpack.c.l.b16 %v159
    %v641 = vunpack.c.h.b16 %v159
    %v642 = vunpack.c.l.b16 %v160
    %v643 = vunpack.c.h.b16 %v160
    %v644 = vunpack.c.l.b16 %v161
    %v645 = vunpack.c.h.b16 %v161
    %v646 = vunpack.c.l.b16 %v162
    %v647 = vunpack.c.h.b16 %v162
    %v648 = vunpack.c.l.b16 %v163
    %v649 = vunpack.c.h.b16 %v163
    %v650 = vunpack.c.l.b16 %v164
    %v651 = vunpack.c.h.b16 %v164
    %v652 = vunpack.c.l.b16 %v165
    %v653 = vunpack.c.h.b16 %v165
    %v654 = vunpack.c.l.b16 %v166
    %v655 = vunpack.c.h.b16 %v166
    %v656 = vunpack.c.l.b16 %v167
    %v657 = vunpack.c.h.b16 %v167
    %v658 = vunpack.c.l.b16 %v168
    %v659 = vunpack.c.h.b16 %v168
    %v660 = vunpack.c.l.b16 %v169
    %v661 = vunpack.c.h.b16 %v169
    %v662 = vpack.c.b16 %v422, %v406
    %v663 = vpack.c.b16 %v423, %v407
    %v664 = vpack.c.b16 %v424, %v408
    %v665 = vpack.c.b16 %v425, %v409
    %v666 = vpack.c.b16 %v426, %v410
    %v667 = vpack.c.b16 %v427, %v411
    %v668 = vpack.c.b16 %v428, %v412
    %v669 = vpack.c.b16 %v429, %v413
    %v670 = vpack.c.b16 %v430, %v414
    %v671 = vpack.c.b16 %v431, %v415
    %v672 = vpack.c.b16 %v432, %v416
    %v673 = vpack.c.b16 %v433, %v417
    %v674 = vpack.c.b16 %v434, %v418
    %v675 = vpack.c.b16 %v435, %v419
    %v676 = vpack.c.b16 %v436, %v420
    %v677 = vpack.c.b16 %v437, %v421
    %v678 = vpack.c.b16 %v454, %v438
    %v679 = vpack.c.b16 %v455, %v439
    %v680 = vpack.c.b16 %v456, %v440
    %v681 = vpack.c.b16 %v457, %v441
    %v682 = vpack.c.b16 %v458, %v442
    %v683 = vpack.c.b16 %v459, %v443
    %v684 = vpack.c.b16 %v460, %v444
    %v685 = vpack.c.b16 %v461, %v445
    %v686 = vpack.c.b16 %v462, %v446
    %v687 = vpack.c.b16 %v463, %v447
    %v688 = vpack.c.b16 %v464, %v448
    %v689 = vpack.c.b16 %v465, %v449
    %v690 = vpack.c.b16 %v466, %v450
    %v691 = vpack.c.b16 %v467, %v451
    %v692 = vpack.c.b16 %v468, %v452
    %v693 = vpack.c.b16 %v469, %v453
    %v694 = vpack.c.b16 %v486, %v470
    %v695 = vpack.c.b16 %v487, %v471
    %v696 = vpack.c.b16 %v488, %v472
    %v697 = vpack.c.b16 %v489, %v473
    %v698 = vpack.c.b16 %v490, %v474
    %v699 = vpack.c.b16 %v491, %v475
    %v700 = vpack.c.b16 %v492, %v476
    %v701 = vpack.c.b16 %v493, %v477
    %v702 = vpack.c.b16 %v494, %v478
    %v703 = vpack.c.b16 %v495, %v479
    %v704 = vpack.c.b16 %v496, %v480
    %v705 = vpack.c.b16 %v497, %v481
    %v706 = vpack.c.b16 %v498, %v482
    %v707 = vpack.c.b16 %v499, %v483
    %v708 = vpack.c.b16 %v500, %v484
    %v709 = vpack.c.b16 %v501, %v485
    %v710 = vpack.c.b16 %v518, %v502
    %v711 = vpack.c.b16 %v519, %v503
    %v712 = vpack.c.b16 %v520, %v504
    %v713 = vpack.c.b16 %v521, %v505
    %v714 = vpack.c.b16 %v522, %v506
    %v715 = vpack.c.b16 %v523, %v507
    %v716 = vpack.c.b16 %v524, %v508
    %v717 = vpack.c.b16 %v525, %v509
    %v718 = vpack.c.b16 %v526, %v510
    %v719 = vpack.c.b16 %v527, %v511
    %v720 = vpack.c.b16 %v528, %v512
    %v721 = vpack.c.b16 %v529, %v513
    %v722 = vpack.c.b16 %v530, %v514
    %v723 = vpack.c.b16 %v531, %v515
    %v724 = vpack.c.b16 %v532, %v516
    %v725 = vpack.c.b16 %v533, %v517
    %v726 = vpack.c.b16 %v550, %v534
    %v727 = vpack.c.b16 %v551, %v535
    %v728 = vpack.c.b16 %v552, %v536
    %v729 = vpack.c.b16 %v553, %v537
    %v730 = vpack.c.b16 %v554, %v538
    %v731 = vpack.c.b16 %v555, %v539
    %v732 = vpack.c.b16 %v556, %v540
    %v733 = vpack.c.b16 %v557, %v541
    %v734 = vpack.c.b16 %v558, %v542
    %v735 = vpack.c.b16 %v559, %v543
    %v736 = vpack.c.b16 %v560, %v544
    %v737 = vpack.c.b16 %v561, %v545
    %v738 = vpack.c.b16 %v562, %v546
    %v739 = vpack.c.b16 %v563, %v547
    %v740 = vpack.c.b16 %v564, %v548
    %v741 = vpack.c.b16 %v565, %v549
    %v742 = vpack.c.b16 %v582, %v566
    %v743 = vpack.c.b16 %v583, %v567
    %v744 = vpack.c.b16 %v584, %v568
    %v745 = vpack.c.b16 %v585, %v569
    %v746 = vpack.c.b16 %v586, %v570
    %v747 = vpack.c.b16 %v587, %v571
    %v748 = vpack.c.b16 %v588, %v572
    %v749 = vpack.c.b16 %v589, %v573
    %v750 = vpack.c.b16 %v590, %v574
    %v751 = vpack.c.b16 %v591, %v575
    %v752 = vpack.c.b16 %v592, %v576
    %v753 = vpack.c.b16 %v593, %v577
    %v754 = vpack.c.b16 %v594, %v578
    %v755 = vpack.c.b16 %v595, %v579
    %v756 = vpack.c.b16 %v596, %v580
    %v757 = vpack.c.b16 %v597, %v581
    %v758 = vpack.c.b16 %v614, %v598
    %v759 = vpack.c.b16 %v615, %v599
    %v760 = vpack.c.b16 %v616, %v600
    %v761 = vpack.c.b16 %v617, %v601
    %v762 = vpack.c.b16 %v618, %v602
    %v763 = vpack.c.b16 %v619, %v603
    %v764 = vpack.c.b16 %v620, %v604
    %v765 = vpack.c.b16 %v621, %v605
    %v766 = vpack.c.b16 %v622, %v606
    %v767 = vpack.c.b16 %v623, %v607
    %v768 = vpack.c.b16 %v624, %v608
    %v769 = vpack.c.b16 %v625, %v609
    %v770 = vpack.c.b16 %v626, %v610
    %v771 = vpack.c.b16 %v627, %v611
    %v772 = vpack.c.b16 %v628, %v612
    %v773 = vpack.c.b16 %v629, %v613
    %v774 = vpack.c.b16 %v646, %v630
    %v775 = vpack.c.b16 %v647, %v631
    %v776 = vpack.c.b16 %v648, %v632
    %v777 = vpack.c.b16 %v649, %v633
    %v778 = vpack.c.b16 %v650, %v634
    %v779 = vpack.c.b16 %v651, %v635
    %v780 = vpack.c.b16 %v652, %v636
    %v781 = vpack.c.b16 %v653, %v637
    %v782 = vpack.c.b16 %v654, %v638
    %v783 = vpack.c.b16 %v655, %v639
    %v784 = vpack.c.b16 %v656, %v640
    %v785 = vpack.c.b16 %v657, %v641
    %v786 = vpack.c.b16 %v658, %v642
    %v787 = vpack.c.b16 %v659, %v643
    %v788 = vpack.c.b16 %v660, %v644
    %v789 = vpack.c.b16 %v661, %v645
    %918 = vmatprep.subr.bf16.mxu0 %v775
    %919 = vmatpush1.bf16.msra.mxu0 %v774
    %920 = vmatprep.subr.bf16.mxu0 %v759
    %921 = vmatpush1.bf16.msra.mxu0 %v758
    %922 = vmatprep.subr.bf16.mxu0 %v743
    %923 = vmatpush1.bf16.msra.mxu0 %v742
    %924 = vmatprep.subr.bf16.mxu0 %v727
    %925 = vmatpush1.bf16.msra.mxu0 %v726
    %926 = vmatprep.subr.bf16.mxu0 %v711
    %927 = vmatpush1.bf16.msra.mxu0 %v710
    %928 = vmatprep.subr.bf16.mxu0 %v695
    %929 = vmatpush1.bf16.msra.mxu0 %v694
    %930 = vmatprep.subr.bf16.mxu0 %v679
    %931 = vmatpush1.bf16.msra.mxu0 %v678
    %932 = vmatprep.subr.bf16.mxu0 %v663
    %933 = vmatpush1.bf16.msra.mxu0 %v662
    %934 = vmatprep.subr.bf16.mxu0 0
    %935 = vmatpush2.bf16.msra.mxu0 0
    %936 = vmatprep.subr.bf16.mxu0 0
    %937 = vmatpush2.bf16.msra.mxu0 0
    %938 = vmatprep.subr.bf16.mxu0 0
    %939 = vmatpush2.bf16.msra.mxu0 0
    %940 = vmatprep.subr.bf16.mxu0 0
    %941 = vmatpush2.bf16.msra.mxu0 0
    %942 = vmatprep.subr.bf16.mxu0 0
    %943 = vmatpush2.bf16.msra.mxu0 0
    %944 = vmatprep.subr.bf16.mxu0 0
    %945 = vmatpush2.bf16.msra.mxu0 0
    %946 = vmatprep.subr.bf16.mxu0 0
    %947 = vmatpush2.bf16.msra.mxu0 0
    %948 = vmatprep.subr.bf16.mxu0 0
    %949 = vmatpush2.bf16.msra.mxu0 0
    %950 = vmatprep.mubr.bf16.mxu0 0
    %951 = vmatmul.mubr.bf16.gmra.mxu0 %v270
    %v952 = vpop.f32.mrf.mxu0
    %v953 = vadd.f32 %v177, %v952
    %v954 = vpop.f32.mrf.mxu0
    %v955 = vadd.f32 %v181, %v954
    %v956 = vpop.f32.mrf.mxu0
    %v957 = vadd.f32 %v177, %v956
    %v958 = vpop.f32.mrf.mxu0
    %v959 = vadd.f32 %v181, %v958
    %960 = vmatprep.mubr.bf16.mxu0 0
    %961 = vmatmul.mubr.bf16.gmra.mxu0 %v271
    %v962 = vpop.f32.mrf.mxu0
    %v963 = vadd.f32 %v177, %v962
    %v964 = vpop.f32.mrf.mxu0
    %v965 = vadd.f32 %v181, %v964
    %v966 = vpop.f32.mrf.mxu0
    %v967 = vadd.f32 %v177, %v966
    %v968 = vpop.f32.mrf.mxu0
    %v969 = vadd.f32 %v181, %v968
    %970 = vmatprep.mubr.bf16.mxu0 0
    %971 = vmatmul.mubr.bf16.gmra.mxu0 %v272
    %v972 = vpop.f32.mrf.mxu0
    %v973 = vadd.f32 %v177, %v972
    %v974 = vpop.f32.mrf.mxu0
    %v975 = vadd.f32 %v181, %v974
    %v976 = vpop.f32.mrf.mxu0
    %v977 = vadd.f32 %v177, %v976
    %v978 = vpop.f32.mrf.mxu0
    %v979 = vadd.f32 %v181, %v978
    %980 = vmatprep.mubr.bf16.mxu0 0
    %981 = vmatmul.mubr.bf16.gmra.mxu0 %v273
    %v982 = vpop.f32.mrf.mxu0
    %v983 = vadd.f32 %v177, %v982
    %v984 = vpop.f32.mrf.mxu0
    %v985 = vadd.f32 %v181, %v984
    %v986 = vpop.f32.mrf.mxu0
    %v987 = vadd.f32 %v177, %v986
    %v988 = vpop.f32.mrf.mxu0
    %v989 = vadd.f32 %v181, %v988
    %990 = vdwg.mxu0
    %991 = vmatprep.subr.bf16.mxu0 %v777
    %992 = vmatpush1.bf16.msra.mxu0 %v776
    %993 = vmatprep.subr.bf16.mxu0 %v761
    %994 = vmatpush1.bf16.msra.mxu0 %v760
    %995 = vmatprep.subr.bf16.mxu0 %v745
    %996 = vmatpush1.bf16.msra.mxu0 %v744
    %997 = vmatprep.subr.bf16.mxu0 %v729
    %998 = vmatpush1.bf16.msra.mxu0 %v728
    %999 = vmatprep.subr.bf16.mxu0 %v713
    %1000 = vmatpush1.bf16.msra.mxu0 %v712
    %1001 = vmatprep.subr.bf16.mxu0 %v697
    %1002 = vmatpush1.bf16.msra.mxu0 %v696
    %1003 = vmatprep.subr.bf16.mxu0 %v681
    %1004 = vmatpush1.bf16.msra.mxu0 %v680
    %1005 = vmatprep.subr.bf16.mxu0 %v665
    %1006 = vmatpush1.bf16.msra.mxu0 %v664
    %1007 = vmatprep.subr.bf16.mxu0 0
    %1008 = vmatpush2.bf16.msra.mxu0 0
    %1009 = vmatprep.subr.bf16.mxu0 0
    %1010 = vmatpush2.bf16.msra.mxu0 0
    %1011 = vmatprep.subr.bf16.mxu0 0
    %1012 = vmatpush2.bf16.msra.mxu0 0
    %1013 = vmatprep.subr.bf16.mxu0 0
    %1014 = vmatpush2.bf16.msra.mxu0 0
    %1015 = vmatprep.subr.bf16.mxu0 0
    %1016 = vmatpush2.bf16.msra.mxu0 0
    %1017 = vmatprep.subr.bf16.mxu0 0
    %1018 = vmatpush2.bf16.msra.mxu0 0
    %1019 = vmatprep.subr.bf16.mxu0 0
    %1020 = vmatpush2.bf16.msra.mxu0 0
    %1021 = vmatprep.subr.bf16.mxu0 0
    %1022 = vmatpush2.bf16.msra.mxu0 0
    %1023 = vmatprep.mubr.bf16.mxu0 0
    %1024 = vmatmul.mubr.bf16.gmra.mxu0 %v270
    %v1025 = vpop.f32.mrf.mxu0
    %v1026 = vadd.f32 %v185, %v1025
    %v1027 = vpop.f32.mrf.mxu0
    %v1028 = vadd.f32 %v189, %v1027
    %v1029 = vpop.f32.mrf.mxu0
    %v1030 = vadd.f32 %v185, %v1029
    %v1031 = vpop.f32.mrf.mxu0
    %v1032 = vadd.f32 %v189, %v1031
    %1033 = vmatprep.mubr.bf16.mxu0 0
    %1034 = vmatmul.mubr.bf16.gmra.mxu0 %v271
    %v1035 = vpop.f32.mrf.mxu0
    %v1036 = vadd.f32 %v185, %v1035
    %v1037 = vpop.f32.mrf.mxu0
    %v1038 = vadd.f32 %v189, %v1037
    %v1039 = vpop.f32.mrf.mxu0
    %v1040 = vadd.f32 %v185, %v1039
    %v1041 = vpop.f32.mrf.mxu0
    %v1042 = vadd.f32 %v189, %v1041
    %1043 = vmatprep.mubr.bf16.mxu0 0
    %1044 = vmatmul.mubr.bf16.gmra.mxu0 %v272
    %v1045 = vpop.f32.mrf.mxu0
    %v1046 = vadd.f32 %v185, %v1045
    %v1047 = vpop.f32.mrf.mxu0
    %v1048 = vadd.f32 %v189, %v1047
    %v1049 = vpop.f32.mrf.mxu0
    %v1050 = vadd.f32 %v185, %v1049
    %v1051 = vpop.f32.mrf.mxu0
    %v1052 = vadd.f32 %v189, %v1051
    %1053 = vmatprep.mubr.bf16.mxu0 0
    %1054 = vmatmul.mubr.bf16.gmra.mxu0 %v273
    %v1055 = vpop.f32.mrf.mxu0
    %v1056 = vadd.f32 %v185, %v1055
    %v1057 = vpop.f32.mrf.mxu0
    %v1058 = vadd.f32 %v189, %v1057
    %v1059 = vpop.f32.mrf.mxu0
    %v1060 = vadd.f32 %v185, %v1059
    %v1061 = vpop.f32.mrf.mxu0
    %v1062 = vadd.f32 %v189, %v1061
    %1063 = vdwg.mxu0
    %1064 = vmatprep.subr.bf16.mxu0 %v779
    %1065 = vmatpush1.bf16.msra.mxu0 %v778
    %1066 = vmatprep.subr.bf16.mxu0 %v763
    %1067 = vmatpush1.bf16.msra.mxu0 %v762
    %1068 = vmatprep.subr.bf16.mxu0 %v747
    %1069 = vmatpush1.bf16.msra.mxu0 %v746
    %1070 = vmatprep.subr.bf16.mxu0 %v731
    %1071 = vmatpush1.bf16.msra.mxu0 %v730
    %1072 = vmatprep.subr.bf16.mxu0 %v715
    %1073 = vmatpush1.bf16.msra.mxu0 %v714
    %1074 = vmatprep.subr.bf16.mxu0 %v699
    %1075 = vmatpush1.bf16.msra.mxu0 %v698
    %1076 = vmatprep.subr.bf16.mxu0 %v683
    %1077 = vmatpush1.bf16.msra.mxu0 %v682
    %1078 = vmatprep.subr.bf16.mxu0 %v667
    %1079 = vmatpush1.bf16.msra.mxu0 %v666
    %1080 = vmatprep.subr.bf16.mxu0 0
    %1081 = vmatpush2.bf16.msra.mxu0 0
    %1082 = vmatprep.subr.bf16.mxu0 0
    %1083 = vmatpush2.bf16.msra.mxu0 0
    %1084 = vmatprep.subr.bf16.mxu0 0
    %1085 = vmatpush2.bf16.msra.mxu0 0
    %1086 = vmatprep.subr.bf16.mxu0 0
    %1087 = vmatpush2.bf16.msra.mxu0 0
    %1088 = vmatprep.subr.bf16.mxu0 0
    %1089 = vmatpush2.bf16.msra.mxu0 0
    %1090 = vmatprep.subr.bf16.mxu0 0
    %1091 = vmatpush2.bf16.msra.mxu0 0
    %1092 = vmatprep.subr.bf16.mxu0 0
    %1093 = vmatpush2.bf16.msra.mxu0 0
    %1094 = vmatprep.subr.bf16.mxu0 0
    %1095 = vmatpush2.bf16.msra.mxu0 0
    %1096 = vmatprep.mubr.bf16.mxu0 0
    %1097 = vmatmul.mubr.bf16.gmra.mxu0 %v270
    %v1098 = vpop.f32.mrf.mxu0
    %v1099 = vadd.f32 %v193, %v1098
    %v1100 = vpop.f32.mrf.mxu0
    %v1101 = vadd.f32 %v197, %v1100
    %v1102 = vpop.f32.mrf.mxu0
    %v1103 = vadd.f32 %v193, %v1102
    %v1104 = vpop.f32.mrf.mxu0
    %v1105 = vadd.f32 %v197, %v1104
    %1106 = vmatprep.mubr.bf16.mxu0 0
    %1107 = vmatmul.mubr.bf16.gmra.mxu0 %v271
    %v1108 = vpop.f32.mrf.mxu0
    %v1109 = vadd.f32 %v193, %v1108
    %v1110 = vpop.f32.mrf.mxu0
    %v1111 = vadd.f32 %v197, %v1110
    %v1112 = vpop.f32.mrf.mxu0
    %v1113 = vadd.f32 %v193, %v1112
    %v1114 = vpop.f32.mrf.mxu0
    %v1115 = vadd.f32 %v197, %v1114
    %1116 = vmatprep.mubr.bf16.mxu0 0
    %1117 = vmatmul.mubr.bf16.gmra.mxu0 %v272
    %v1118 = vpop.f32.mrf.mxu0
    %v1119 = vadd.f32 %v193, %v1118
    %v1120 = vpop.f32.mrf.mxu0
    %v1121 = vadd.f32 %v197, %v1120
    %v1122 = vpop.f32.mrf.mxu0
    %v1123 = vadd.f32 %v193, %v1122
    %v1124 = vpop.f32.mrf.mxu0
    %v1125 = vadd.f32 %v197, %v1124
    %1126 = vmatprep.mubr.bf16.mxu0 0
    %1127 = vmatmul.mubr.bf16.gmra.mxu0 %v273
    %v1128 = vpop.f32.mrf.mxu0
    %v1129 = vadd.f32 %v193, %v1128
    %v1130 = vpop.f32.mrf.mxu0
    %v1131 = vadd.f32 %v197, %v1130
    %v1132 = vpop.f32.mrf.mxu0
    %v1133 = vadd.f32 %v193, %v1132
    %v1134 = vpop.f32.mrf.mxu0
    %v1135 = vadd.f32 %v197, %v1134
    %1136 = vdwg.mxu0
    %1137 = vmatprep.subr.bf16.mxu0 %v781
    %1138 = vmatpush1.bf16.msra.mxu0 %v780
    %1139 = vmatprep.subr.bf16.mxu0 %v765
    %1140 = vmatpush1.bf16.msra.mxu0 %v764
    %1141 = vmatprep.subr.bf16.mxu0 %v749
    %1142 = vmatpush1.bf16.msra.mxu0 %v748
    %1143 = vmatprep.subr.bf16.mxu0 %v733
    %1144 = vmatpush1.bf16.msra.mxu0 %v732
    %1145 = vmatprep.subr.bf16.mxu0 %v717
    %1146 = vmatpush1.bf16.msra.mxu0 %v716
    %1147 = vmatprep.subr.bf16.mxu0 %v701
    %1148 = vmatpush1.bf16.msra.mxu0 %v700
    %1149 = vmatprep.subr.bf16.mxu0 %v685
    %1150 = vmatpush1.bf16.msra.mxu0 %v684
    %1151 = vmatprep.subr.bf16.mxu0 %v669
    %1152 = vmatpush1.bf16.msra.mxu0 %v668
    %1153 = vmatprep.subr.bf16.mxu0 0
    %1154 = vmatpush2.bf16.msra.mxu0 0
    %1155 = vmatprep.subr.bf16.mxu0 0
    %1156 = vmatpush2.bf16.msra.mxu0 0
    %1157 = vmatprep.subr.bf16.mxu0 0
    %1158 = vmatpush2.bf16.msra.mxu0 0
    %1159 = vmatprep.subr.bf16.mxu0 0
    %1160 = vmatpush2.bf16.msra.mxu0 0
    %1161 = vmatprep.subr.bf16.mxu0 0
    %1162 = vmatpush2.bf16.msra.mxu0 0
    %1163 = vmatprep.subr.bf16.mxu0 0
    %1164 = vmatpush2.bf16.msra.mxu0 0
    %1165 = vmatprep.subr.bf16.mxu0 0
    %1166 = vmatpush2.bf16.msra.mxu0 0
    %1167 = vmatprep.subr.bf16.mxu0 0
    %1168 = vmatpush2.bf16.msra.mxu0 0
    %1169 = vmatprep.mubr.bf16.mxu0 0
    %1170 = vmatmul.mubr.bf16.gmra.mxu0 %v270
    %v1171 = vpop.f32.mrf.mxu0
    %v1172 = vadd.f32 %v201, %v1171
    %v1173 = vpop.f32.mrf.mxu0
    %v1174 = vadd.f32 %v205, %v1173
    %v1175 = vpop.f32.mrf.mxu0
    %v1176 = vadd.f32 %v201, %v1175
    %v1177 = vpop.f32.mrf.mxu0
    %v1178 = vadd.f32 %v205, %v1177
    %1179 = vmatprep.mubr.bf16.mxu0 0
    %1180 = vmatmul.mubr.bf16.gmra.mxu0 %v271
    %v1181 = vpop.f32.mrf.mxu0
    %v1182 = vadd.f32 %v201, %v1181
    %v1183 = vpop.f32.mrf.mxu0
    %v1184 = vadd.f32 %v205, %v1183
    %v1185 = vpop.f32.mrf.mxu0
    %v1186 = vadd.f32 %v201, %v1185
    %v1187 = vpop.f32.mrf.mxu0
    %v1188 = vadd.f32 %v205, %v1187
    %1189 = vmatprep.mubr.bf16.mxu0 0
    %1190 = vmatmul.mubr.bf16.gmra.mxu0 %v272
    %v1191 = vpop.f32.mrf.mxu0
    %v1192 = vadd.f32 %v201, %v1191
    %v1193 = vpop.f32.mrf.mxu0
    %v1194 = vadd.f32 %v205, %v1193
    %v1195 = vpop.f32.mrf.mxu0
    %v1196 = vadd.f32 %v201, %v1195
    %v1197 = vpop.f32.mrf.mxu0
    %v1198 = vadd.f32 %v205, %v1197
    %1199 = vmatprep.mubr.bf16.mxu0 0
    %1200 = vmatmul.mubr.bf16.gmra.mxu0 %v273
    %v1201 = vpop.f32.mrf.mxu0
    %v1202 = vadd.f32 %v201, %v1201
    %v1203 = vpop.f32.mrf.mxu0
    %v1204 = vadd.f32 %v205, %v1203
    %v1205 = vpop.f32.mrf.mxu0
    %v1206 = vadd.f32 %v201, %v1205
    %v1207 = vpop.f32.mrf.mxu0
    %v1208 = vadd.f32 %v205, %v1207
    %1209 = vdwg.mxu0
    %1210 = vmatprep.subr.bf16.mxu0 %v783
    %1211 = vmatpush1.bf16.msra.mxu0 %v782
    %1212 = vmatprep.subr.bf16.mxu0 %v767
    %1213 = vmatpush1.bf16.msra.mxu0 %v766
    %1214 = vmatprep.subr.bf16.mxu0 %v751
    %1215 = vmatpush1.bf16.msra.mxu0 %v750
    %1216 = vmatprep.subr.bf16.mxu0 %v735
    %1217 = vmatpush1.bf16.msra.mxu0 %v734
    %1218 = vmatprep.subr.bf16.mxu0 %v719
    %1219 = vmatpush1.bf16.msra.mxu0 %v718
    %1220 = vmatprep.subr.bf16.mxu0 %v703
    %1221 = vmatpush1.bf16.msra.mxu0 %v702
    %1222 = vmatprep.subr.bf16.mxu0 %v687
    %1223 = vmatpush1.bf16.msra.mxu0 %v686
    %1224 = vmatprep.subr.bf16.mxu0 %v671
    %1225 = vmatpush1.bf16.msra.mxu0 %v670
    %1226 = vmatprep.subr.bf16.mxu0 0
    %1227 = vmatpush2.bf16.msra.mxu0 0
    %1228 = vmatprep.subr.bf16.mxu0 0
    %1229 = vmatpush2.bf16.msra.mxu0 0
    %1230 = vmatprep.subr.bf16.mxu0 0
    %1231 = vmatpush2.bf16.msra.mxu0 0
    %1232 = vmatprep.subr.bf16.mxu0 0
    %1233 = vmatpush2.bf16.msra.mxu0 0
    %1234 = vmatprep.subr.bf16.mxu0 0
    %1235 = vmatpush2.bf16.msra.mxu0 0
    %1236 = vmatprep.subr.bf16.mxu0 0
    %1237 = vmatpush2.bf16.msra.mxu0 0
    %1238 = vmatprep.subr.bf16.mxu0 0
    %1239 = vmatpush2.bf16.msra.mxu0 0
    %1240 = vmatprep.subr.bf16.mxu0 0
    %1241 = vmatpush2.bf16.msra.mxu0 0
    %1242 = vmatprep.mubr.bf16.mxu0 0
    %1243 = vmatmul.mubr.bf16.gmra.mxu0 %v270
    %v1244 = vpop.f32.mrf.mxu0
    %v1245 = vadd.f32 %v209, %v1244
    %v1246 = vpop.f32.mrf.mxu0
    %v1247 = vadd.f32 %v213, %v1246
    %v1248 = vpop.f32.mrf.mxu0
    %v1249 = vadd.f32 %v209, %v1248
    %v1250 = vpop.f32.mrf.mxu0
    %v1251 = vadd.f32 %v213, %v1250
    %1252 = vmatprep.mubr.bf16.mxu0 0
    %1253 = vmatmul.mubr.bf16.gmra.mxu0 %v271
    %v1254 = vpop.f32.mrf.mxu0
    %v1255 = vadd.f32 %v209, %v1254
    %v1256 = vpop.f32.mrf.mxu0
    %v1257 = vadd.f32 %v213, %v1256
    %v1258 = vpop.f32.mrf.mxu0
    %v1259 = vadd.f32 %v209, %v1258
    %v1260 = vpop.f32.mrf.mxu0
    %v1261 = vadd.f32 %v213, %v1260
    %1262 = vmatprep.mubr.bf16.mxu0 0
    %1263 = vmatmul.mubr.bf16.gmra.mxu0 %v272
    %v1264 = vpop.f32.mrf.mxu0
    %v1265 = vadd.f32 %v209, %v1264
    %v1266 = vpop.f32.mrf.mxu0
    %v1267 = vadd.f32 %v213, %v1266
    %v1268 = vpop.f32.mrf.mxu0
    %v1269 = vadd.f32 %v209, %v1268
    %v1270 = vpop.f32.mrf.mxu0
    %v1271 = vadd.f32 %v213, %v1270
    %1272 = vmatprep.mubr.bf16.mxu0 0
    %1273 = vmatmul.mubr.bf16.gmra.mxu0 %v273
    %v1274 = vpop.f32.mrf.mxu0
    %v1275 = vadd.f32 %v209, %v1274
    %v1276 = vpop.f32.mrf.mxu0
    %v1277 = vadd.f32 %v213, %v1276
    %v1278 = vpop.f32.mrf.mxu0
    %v1279 = vadd.f32 %v209, %v1278
    %v1280 = vpop.f32.mrf.mxu0
    %v1281 = vadd.f32 %v213, %v1280
    %1282 = vdwg.mxu0
    %1283 = vmatprep.subr.bf16.mxu0 %v785
    %1284 = vmatpush1.bf16.msra.mxu0 %v784
    %1285 = vmatprep.subr.bf16.mxu0 %v769
    %1286 = vmatpush1.bf16.msra.mxu0 %v768
    %1287 = vmatprep.subr.bf16.mxu0 %v753
    %1288 = vmatpush1.bf16.msra.mxu0 %v752
    %1289 = vmatprep.subr.bf16.mxu0 %v737
    %1290 = vmatpush1.bf16.msra.mxu0 %v736
    %1291 = vmatprep.subr.bf16.mxu0 %v721
    %1292 = vmatpush1.bf16.msra.mxu0 %v720
    %1293 = vmatprep.subr.bf16.mxu0 %v705
    %1294 = vmatpush1.bf16.msra.mxu0 %v704
    %1295 = vmatprep.subr.bf16.mxu0 %v689
    %1296 = vmatpush1.bf16.msra.mxu0 %v688
    %1297 = vmatprep.subr.bf16.mxu0 %v673
    %1298 = vmatpush1.bf16.msra.mxu0 %v672
    %1299 = vmatprep.subr.bf16.mxu0 0
    %1300 = vmatpush2.bf16.msra.mxu0 0
    %1301 = vmatprep.subr.bf16.mxu0 0
    %1302 = vmatpush2.bf16.msra.mxu0 0
    %1303 = vmatprep.subr.bf16.mxu0 0
    %1304 = vmatpush2.bf16.msra.mxu0 0
    %1305 = vmatprep.subr.bf16.mxu0 0
    %1306 = vmatpush2.bf16.msra.mxu0 0
    %1307 = vmatprep.subr.bf16.mxu0 0
    %1308 = vmatpush2.bf16.msra.mxu0 0
    %1309 = vmatprep.subr.bf16.mxu0 0
    %1310 = vmatpush2.bf16.msra.mxu0 0
    %1311 = vmatprep.subr.bf16.mxu0 0
    %1312 = vmatpush2.bf16.msra.mxu0 0
    %1313 = vmatprep.subr.bf16.mxu0 0
    %1314 = vmatpush2.bf16.msra.mxu0 0
    %1315 = vmatprep.mubr.bf16.mxu0 0
    %1316 = vmatmul.mubr.bf16.gmra.mxu0 %v270
    %v1317 = vpop.f32.mrf.mxu0
    %v1318 = vadd.f32 %v217, %v1317
    %v1319 = vpop.f32.mrf.mxu0
    %v1320 = vadd.f32 %v221, %v1319
    %v1321 = vpop.f32.mrf.mxu0
    %v1322 = vadd.f32 %v217, %v1321
    %v1323 = vpop.f32.mrf.mxu0
    %v1324 = vadd.f32 %v221, %v1323
    %1325 = vmatprep.mubr.bf16.mxu0 0
    %1326 = vmatmul.mubr.bf16.gmra.mxu0 %v271
    %v1327 = vpop.f32.mrf.mxu0
    %v1328 = vadd.f32 %v217, %v1327
    %v1329 = vpop.f32.mrf.mxu0
    %v1330 = vadd.f32 %v221, %v1329
    %v1331 = vpop.f32.mrf.mxu0
    %v1332 = vadd.f32 %v217, %v1331
    %v1333 = vpop.f32.mrf.mxu0
    %v1334 = vadd.f32 %v221, %v1333
    %1335 = vmatprep.mubr.bf16.mxu0 0
    %1336 = vmatmul.mubr.bf16.gmra.mxu0 %v272
    %v1337 = vpop.f32.mrf.mxu0
    %v1338 = vadd.f32 %v217, %v1337
    %v1339 = vpop.f32.mrf.mxu0
    %v1340 = vadd.f32 %v221, %v1339
    %v1341 = vpop.f32.mrf.mxu0
    %v1342 = vadd.f32 %v217, %v1341
    %v1343 = vpop.f32.mrf.mxu0
    %v1344 = vadd.f32 %v221, %v1343
    %1345 = vmatprep.mubr.bf16.mxu0 0
    %1346 = vmatmul.mubr.bf16.gmra.mxu0 %v273
    %v1347 = vpop.f32.mrf.mxu0
    %v1348 = vadd.f32 %v217, %v1347
    %v1349 = vpop.f32.mrf.mxu0
    %v1350 = vadd.f32 %v221, %v1349
    %v1351 = vpop.f32.mrf.mxu0
    %v1352 = vadd.f32 %v217, %v1351
    %v1353 = vpop.f32.mrf.mxu0
    %v1354 = vadd.f32 %v221, %v1353
    %1355 = vdwg.mxu0
    %1356 = vmatprep.subr.bf16.mxu0 %v787
    %1357 = vmatpush1.bf16.msra.mxu0 %v786
    %1358 = vmatprep.subr.bf16.mxu0 %v771
    %1359 = vmatpush1.bf16.msra.mxu0 %v770
    %1360 = vmatprep.subr.bf16.mxu0 %v755
    %1361 = vmatpush1.bf16.msra.mxu0 %v754
    %1362 = vmatprep.subr.bf16.mxu0 %v739
    %1363 = vmatpush1.bf16.msra.mxu0 %v738
    %1364 = vmatprep.subr.bf16.mxu0 %v723
    %1365 = vmatpush1.bf16.msra.mxu0 %v722
    %1366 = vmatprep.subr.bf16.mxu0 %v707
    %1367 = vmatpush1.bf16.msra.mxu0 %v706
    %1368 = vmatprep.subr.bf16.mxu0 %v691
    %1369 = vmatpush1.bf16.msra.mxu0 %v690
    %1370 = vmatprep.subr.bf16.mxu0 %v675
    %1371 = vmatpush1.bf16.msra.mxu0 %v674
    %1372 = vmatprep.subr.bf16.mxu0 0
    %1373 = vmatpush2.bf16.msra.mxu0 0
    %1374 = vmatprep.subr.bf16.mxu0 0
    %1375 = vmatpush2.bf16.msra.mxu0 0
    %1376 = vmatprep.subr.bf16.mxu0 0
    %1377 = vmatpush2.bf16.msra.mxu0 0
    %1378 = vmatprep.subr.bf16.mxu0 0
    %1379 = vmatpush2.bf16.msra.mxu0 0
    %1380 = vmatprep.subr.bf16.mxu0 0
    %1381 = vmatpush2.bf16.msra.mxu0 0
    %1382 = vmatprep.subr.bf16.mxu0 0
    %1383 = vmatpush2.bf16.msra.mxu0 0
    %1384 = vmatprep.subr.bf16.mxu0 0
    %1385 = vmatpush2.bf16.msra.mxu0 0
    %1386 = vmatprep.subr.bf16.mxu0 0
    %1387 = vmatpush2.bf16.msra.mxu0 0
    %1388 = vmatprep.mubr.bf16.mxu0 0
    %1389 = vmatmul.mubr.bf16.gmra.mxu0 %v270
    %v1390 = vpop.f32.mrf.mxu0
    %v1391 = vadd.f32 %v225, %v1390
    %v1392 = vpop.f32.mrf.mxu0
    %v1393 = vadd.f32 %v229, %v1392
    %v1394 = vpop.f32.mrf.mxu0
    %v1395 = vadd.f32 %v225, %v1394
    %v1396 = vpop.f32.mrf.mxu0
    %v1397 = vadd.f32 %v229, %v1396
    %1398 = vmatprep.mubr.bf16.mxu0 0
    %1399 = vmatmul.mubr.bf16.gmra.mxu0 %v271
    %v1400 = vpop.f32.mrf.mxu0
    %v1401 = vadd.f32 %v225, %v1400
    %v1402 = vpop.f32.mrf.mxu0
    %v1403 = vadd.f32 %v229, %v1402
    %v1404 = vpop.f32.mrf.mxu0
    %v1405 = vadd.f32 %v225, %v1404
    %v1406 = vpop.f32.mrf.mxu0
    %v1407 = vadd.f32 %v229, %v1406
    %1408 = vmatprep.mubr.bf16.mxu0 0
    %1409 = vmatmul.mubr.bf16.gmra.mxu0 %v272
    %v1410 = vpop.f32.mrf.mxu0
    %v1411 = vadd.f32 %v225, %v1410
    %v1412 = vpop.f32.mrf.mxu0
    %v1413 = vadd.f32 %v229, %v1412
    %v1414 = vpop.f32.mrf.mxu0
    %v1415 = vadd.f32 %v225, %v1414
    %v1416 = vpop.f32.mrf.mxu0
    %v1417 = vadd.f32 %v229, %v1416
    %1418 = vmatprep.mubr.bf16.mxu0 0
    %1419 = vmatmul.mubr.bf16.gmra.mxu0 %v273
    %v1420 = vpop.f32.mrf.mxu0
    %v1421 = vadd.f32 %v225, %v1420
    %v1422 = vpop.f32.mrf.mxu0
    %v1423 = vadd.f32 %v229, %v1422
    %v1424 = vpop.f32.mrf.mxu0
    %v1425 = vadd.f32 %v225, %v1424
    %v1426 = vpop.f32.mrf.mxu0
    %v1427 = vadd.f32 %v229, %v1426
    %1428 = vdwg.mxu0
    %1429 = vmatprep.subr.bf16.mxu0 %v789
    %1430 = vmatpush1.bf16.msra.mxu0 %v788
    %1431 = vmatprep.subr.bf16.mxu0 %v773
    %1432 = vmatpush1.bf16.msra.mxu0 %v772
    %1433 = vmatprep.subr.bf16.mxu0 %v757
    %1434 = vmatpush1.bf16.msra.mxu0 %v756
    %1435 = vmatprep.subr.bf16.mxu0 %v741
    %1436 = vmatpush1.bf16.msra.mxu0 %v740
    %1437 = vmatprep.subr.bf16.mxu0 %v725
    %1438 = vmatpush1.bf16.msra.mxu0 %v724
    %1439 = vmatprep.subr.bf16.mxu0 %v709
    %1440 = vmatpush1.bf16.msra.mxu0 %v708
    %1441 = vmatprep.subr.bf16.mxu0 %v693
    %1442 = vmatpush1.bf16.msra.mxu0 %v692
    %1443 = vmatprep.subr.bf16.mxu0 %v677
    %1444 = vmatpush1.bf16.msra.mxu0 %v676
    %1445 = vmatprep.subr.bf16.mxu0 0
    %1446 = vmatpush2.bf16.msra.mxu0 0
    %1447 = vmatprep.subr.bf16.mxu0 0
    %1448 = vmatpush2.bf16.msra.mxu0 0
    %1449 = vmatprep.subr.bf16.mxu0 0
    %1450 = vmatpush2.bf16.msra.mxu0 0
    %1451 = vmatprep.subr.bf16.mxu0 0
    %1452 = vmatpush2.bf16.msra.mxu0 0
    %1453 = vmatprep.subr.bf16.mxu0 0
    %1454 = vmatpush2.bf16.msra.mxu0 0
    %1455 = vmatprep.subr.bf16.mxu0 0
    %1456 = vmatpush2.bf16.msra.mxu0 0
    %1457 = vmatprep.subr.bf16.mxu0 0
    %1458 = vmatpush2.bf16.msra.mxu0 0
    %1459 = vmatprep.subr.bf16.mxu0 0
    %1460 = vmatpush2.bf16.msra.mxu0 0
    %1461 = vmatprep.mubr.bf16.mxu0 0
    %1462 = vmatmul.mubr.bf16.gmra.mxu0 %v270
    %v1463 = vpop.f32.mrf.mxu0
    %v1464 = vadd.f32 %v233, %v1463
    %v1465 = vpop.f32.mrf.mxu0
    %v1466 = vadd.f32 %v237, %v1465
    %v1467 = vpop.f32.mrf.mxu0
    %v1468 = vadd.f32 %v233, %v1467
    %v1469 = vpop.f32.mrf.mxu0
    %v1470 = vadd.f32 %v237, %v1469
    %1471 = vmatprep.mubr.bf16.mxu0 0
    %1472 = vmatmul.mubr.bf16.gmra.mxu0 %v271
    %v1473 = vpop.f32.mrf.mxu0
    %v1474 = vadd.f32 %v233, %v1473
    %v1475 = vpop.f32.mrf.mxu0
    %v1476 = vadd.f32 %v237, %v1475
    %v1477 = vpop.f32.mrf.mxu0
    %v1478 = vadd.f32 %v233, %v1477
    %v1479 = vpop.f32.mrf.mxu0
    %v1480 = vadd.f32 %v237, %v1479
    %1481 = vmatprep.mubr.bf16.mxu0 0
    %1482 = vmatmul.mubr.bf16.gmra.mxu0 %v272
    %v1483 = vpop.f32.mrf.mxu0
    %v1484 = vadd.f32 %v233, %v1483
    %v1485 = vpop.f32.mrf.mxu0
    %v1486 = vadd.f32 %v237, %v1485
    %v1487 = vpop.f32.mrf.mxu0
    %v1488 = vadd.f32 %v233, %v1487
    %v1489 = vpop.f32.mrf.mxu0
    %v1490 = vadd.f32 %v237, %v1489
    %1491 = vmatprep.mubr.bf16.mxu0 0
    %1492 = vmatmul.mubr.bf16.gmra.mxu0 %v273
    %v1493 = vpop.f32.mrf.mxu0
    %v1494 = vadd.f32 %v233, %v1493
    %v1495 = vpop.f32.mrf.mxu0
    %v1496 = vadd.f32 %v237, %v1495
    %v1497 = vpop.f32.mrf.mxu0
    %v1498 = vadd.f32 %v233, %v1497
    %v1499 = vpop.f32.mrf.mxu0
    %v1500 = vadd.f32 %v237, %v1499
    %1501 = vdwg.mxu0
    %1502 = vst [vmem:[#allocation2] sm:$0xff] %v953
    %1503 = vst [vmem:[#allocation2 + $0x8] sm:$0xff] %v955
    %1504 = vst [vmem:[#allocation2 + $0x10] sm:$0xff] %v1026
    %1505 = vst [vmem:[#allocation2 + $0x18] sm:$0xff] %v1028
    %1506 = vst [vmem:[#allocation2 + $0x20] sm:$0xff] %v1099
    %1507 = vst [vmem:[#allocation2 + $0x28] sm:$0xff] %v1101
    %1508 = vst [vmem:[#allocation2 + $0x30] sm:$0xff] %v1172
    %1509 = vst [vmem:[#allocation2 + $0x38] sm:$0xff] %v1174
    %1510 = vst [vmem:[#allocation2 + $0x40] sm:$0xff] %v1245
    %1511 = vst [vmem:[#allocation2 + $0x48] sm:$0xff] %v1247
    %1512 = vst [vmem:[#allocation2 + $0x50] sm:$0xff] %v1318
    %1513 = vst [vmem:[#allocation2 + $0x58] sm:$0xff] %v1320
    %1514 = vst [vmem:[#allocation2 + $0x60] sm:$0xff] %v1391
    %1515 = vst [vmem:[#allocation2 + $0x68] sm:$0xff] %v1393
    %1516 = vst [vmem:[#allocation2 + $0x70] sm:$0xff] %v1464
    %1517 = vst [vmem:[#allocation2 + $0x78] sm:$0xff] %v1466
    %1518 = vst [vmem:[#allocation2 + $0x80] sm:$0xff] %v957
    %1519 = vst [vmem:[#allocation2 + $0x88] sm:$0xff] %v959
    %1520 = vst [vmem:[#allocation2 + $0x90] sm:$0xff] %v1030
    %1521 = vst [vmem:[#allocation2 + $0x98] sm:$0xff] %v1032
    %1522 = vst [vmem:[#allocation2 + $0xa0] sm:$0xff] %v1103
    %1523 = vst [vmem:[#allocation2 + $0xa8] sm:$0xff] %v1105
    %1524 = vst [vmem:[#allocation2 + $0xb0] sm:$0xff] %v1176
    %1525 = vst [vmem:[#allocation2 + $0xb8] sm:$0xff] %v1178
    %1526 = vst [vmem:[#allocation2 + $0xc0] sm:$0xff] %v1249
    %1527 = vst [vmem:[#allocation2 + $0xc8] sm:$0xff] %v1251
    %1528 = vst [vmem:[#allocation2 + $0xd0] sm:$0xff] %v1322
    %1529 = vst [vmem:[#allocation2 + $0xd8] sm:$0xff] %v1324
    %1530 = vst [vmem:[#allocation2 + $0xe0] sm:$0xff] %v1395
    %1531 = vst [vmem:[#allocation2 + $0xe8] sm:$0xff] %v1397
    %1532 = vst [vmem:[#allocation2 + $0xf0] sm:$0xff] %v1468
    %1533 = vst [vmem:[#allocation2 + $0xf8] sm:$0xff] %v1470
    %1534 = vst [vmem:[#allocation2 + $0x100] sm:$0xff] %v963
    %1535 = vst [vmem:[#allocation2 + $0x108] sm:$0xff] %v965
    %1536 = vst [vmem:[#allocation2 + $0x110] sm:$0xff] %v1036
    %1537 = vst [vmem:[#allocation2 + $0x118] sm:$0xff] %v1038
    %1538 = vst [vmem:[#allocation2 + $0x120] sm:$0xff] %v1109
    %1539 = vst [vmem:[#allocation2 + $0x128] sm:$0xff] %v1111
    %1540 = vst [vmem:[#allocation2 + $0x130] sm:$0xff] %v1182
    %1541 = vst [vmem:[#allocation2 + $0x138] sm:$0xff] %v1184
    %1542 = vst [vmem:[#allocation2 + $0x140] sm:$0xff] %v1255
    %1543 = vst [vmem:[#allocation2 + $0x148] sm:$0xff] %v1257
    %1544 = vst [vmem:[#allocation2 + $0x150] sm:$0xff] %v1328
    %1545 = vst [vmem:[#allocation2 + $0x158] sm:$0xff] %v1330
    %1546 = vst [vmem:[#allocation2 + $0x160] sm:$0xff] %v1401
    %1547 = vst [vmem:[#allocation2 + $0x168] sm:$0xff] %v1403
    %1548 = vst [vmem:[#allocation2 + $0x170] sm:$0xff] %v1474
    %1549 = vst [vmem:[#allocation2 + $0x178] sm:$0xff] %v1476
    %1550 = vst [vmem:[#allocation2 + $0x180] sm:$0xff] %v967
    %1551 = vst [vmem:[#allocation2 + $0x188] sm:$0xff] %v969
    %1552 = vst [vmem:[#allocation2 + $0x190] sm:$0xff] %v1040
    %1553 = vst [vmem:[#allocation2 + $0x198] sm:$0xff] %v1042
    %1554 = vst [vmem:[#allocation2 + $0x1a0] sm:$0xff] %v1113
    %1555 = vst [vmem:[#allocation2 + $0x1a8] sm:$0xff] %v1115
    %1556 = vst [vmem:[#allocation2 + $0x1b0] sm:$0xff] %v1186
    %1557 = vst [vmem:[#allocation2 + $0x1b8] sm:$0xff] %v1188
    %1558 = vst [vmem:[#allocation2 + $0x1c0] sm:$0xff] %v1259
    %1559 = vst [vmem:[#allocation2 + $0x1c8] sm:$0xff] %v1261
    %1560 = vst [vmem:[#allocation2 + $0x1d0] sm:$0xff] %v1332
    %1561 = vst [vmem:[#allocation2 + $0x1d8] sm:$0xff] %v1334
    %1562 = vst [vmem:[#allocation2 + $0x1e0] sm:$0xff] %v1405
    %1563 = vst [vmem:[#allocation2 + $0x1e8] sm:$0xff] %v1407
    %1564 = vst [vmem:[#allocation2 + $0x1f0] sm:$0xff] %v1478
    %1565 = vst [vmem:[#allocation2 + $0x1f8] sm:$0xff] %v1480
    %1566 = vst [vmem:[#allocation2 + $0x200] sm:$0xff] %v973
    %1567 = vst [vmem:[#allocation2 + $0x208] sm:$0xff] %v975
    %1568 = vst [vmem:[#allocation2 + $0x210] sm:$0xff] %v1046
    %1569 = vst [vmem:[#allocation2 + $0x218] sm:$0xff] %v1048
    %1570 = vst [vmem:[#allocation2 + $0x220] sm:$0xff] %v1119
    %1571 = vst [vmem:[#allocation2 + $0x228] sm:$0xff] %v1121
    %1572 = vst [vmem:[#allocation2 + $0x230] sm:$0xff] %v1192
    %1573 = vst [vmem:[#allocation2 + $0x238] sm:$0xff] %v1194
    %1574 = vst [vmem:[#allocation2 + $0x240] sm:$0xff] %v1265
    %1575 = vst [vmem:[#allocation2 + $0x248] sm:$0xff] %v1267
    %1576 = vst [vmem:[#allocation2 + $0x250] sm:$0xff] %v1338
    %1577 = vst [vmem:[#allocation2 + $0x258] sm:$0xff] %v1340
    %1578 = vst [vmem:[#allocation2 + $0x260] sm:$0xff] %v1411
    %1579 = vst [vmem:[#allocation2 + $0x268] sm:$0xff] %v1413
    %1580 = vst [vmem:[#allocation2 + $0x270] sm:$0xff] %v1484
    %1581 = vst [vmem:[#allocation2 + $0x278] sm:$0xff] %v1486
    %1582 = vst [vmem:[#allocation2 + $0x280] sm:$0xff] %v977
    %1583 = vst [vmem:[#allocation2 + $0x288] sm:$0xff] %v979
    %1584 = vst [vmem:[#allocation2 + $0x290] sm:$0xff] %v1050
    %1585 = vst [vmem:[#allocation2 + $0x298] sm:$0xff] %v1052
    %1586 = vst [vmem:[#allocation2 + $0x2a0] sm:$0xff] %v1123
    %1587 = vst [vmem:[#allocation2 + $0x2a8] sm:$0xff] %v1125
    %1588 = vst [vmem:[#allocation2 + $0x2b0] sm:$0xff] %v1196
    %1589 = vst [vmem:[#allocation2 + $0x2b8] sm:$0xff] %v1198
    %1590 = vst [vmem:[#allocation2 + $0x2c0] sm:$0xff] %v1269
    %1591 = vst [vmem:[#allocation2 + $0x2c8] sm:$0xff] %v1271
    %1592 = vst [vmem:[#allocation2 + $0x2d0] sm:$0xff] %v1342
    %1593 = vst [vmem:[#allocation2 + $0x2d8] sm:$0xff] %v1344
    %1594 = vst [vmem:[#allocation2 + $0x2e0] sm:$0xff] %v1415
    %1595 = vst [vmem:[#allocation2 + $0x2e8] sm:$0xff] %v1417
    %1596 = vst [vmem:[#allocation2 + $0x2f0] sm:$0xff] %v1488
    %1597 = vst [vmem:[#allocation2 + $0x2f8] sm:$0xff] %v1490
    %1598 = vst [vmem:[#allocation2 + $0x300] sm:$0xff] %v983
    %1599 = vst [vmem:[#allocation2 + $0x308] sm:$0xff] %v985
    %1600 = vst [vmem:[#allocation2 + $0x310] sm:$0xff] %v1056
    %1601 = vst [vmem:[#allocation2 + $0x318] sm:$0xff] %v1058
    %1602 = vst [vmem:[#allocation2 + $0x320] sm:$0xff] %v1129
    %1603 = vst [vmem:[#allocation2 + $0x328] sm:$0xff] %v1131
    %1604 = vst [vmem:[#allocation2 + $0x330] sm:$0xff] %v1202
    %1605 = vst [vmem:[#allocation2 + $0x338] sm:$0xff] %v1204
    %1606 = vst [vmem:[#allocation2 + $0x340] sm:$0xff] %v1275
    %1607 = vst [vmem:[#allocation2 + $0x348] sm:$0xff] %v1277
    %1608 = vst [vmem:[#allocation2 + $0x350] sm:$0xff] %v1348
    %1609 = vst [vmem:[#allocation2 + $0x358] sm:$0xff] %v1350
    %1610 = vst [vmem:[#allocation2 + $0x360] sm:$0xff] %v1421
    %1611 = vst [vmem:[#allocation2 + $0x368] sm:$0xff] %v1423
    %1612 = vst [vmem:[#allocation2 + $0x370] sm:$0xff] %v1494
    %1613 = vst [vmem:[#allocation2 + $0x378] sm:$0xff] %v1496
    %1614 = vst [vmem:[#allocation2 + $0x380] sm:$0xff] %v987
    %1615 = vst [vmem:[#allocation2 + $0x388] sm:$0xff] %v989
    %1616 = vst [vmem:[#allocation2 + $0x390] sm:$0xff] %v1060
    %1617 = vst [vmem:[#allocation2 + $0x398] sm:$0xff] %v1062
    %1618 = vst [vmem:[#allocation2 + $0x3a0] sm:$0xff] %v1133
    %1619 = vst [vmem:[#allocation2 + $0x3a8] sm:$0xff] %v1135
    %1620 = vst [vmem:[#allocation2 + $0x3b0] sm:$0xff] %v1206
    %1621 = vst [vmem:[#allocation2 + $0x3b8] sm:$0xff] %v1208
    %1622 = vst [vmem:[#allocation2 + $0x3c0] sm:$0xff] %v1279
    %1623 = vst [vmem:[#allocation2 + $0x3c8] sm:$0xff] %v1281
    %1624 = vst [vmem:[#allocation2 + $0x3d0] sm:$0xff] %v1352
    %1625 = vst [vmem:[#allocation2 + $0x3d8] sm:$0xff] %v1354
    %1626 = vst [vmem:[#allocation2 + $0x3e0] sm:$0xff] %v1425
    %1627 = vst [vmem:[#allocation2 + $0x3e8] sm:$0xff] %v1427
    %1628 = vst [vmem:[#allocation2 + $0x3f0] sm:$0xff] %v1498
    %1629 = vst [vmem:[#allocation2 + $0x3f8] sm:$0xff] %v1500
    %s1630 = smul.u32 0, 16
    %s1631 = smul.addr %s1630, 8
    %s1632 = scalar_lea.vmem [#allocation2], %s1631
    %v1633 = vld [vmem:[%s1632] sm:$0xff]
    %v1634 = vld [vmem:[%s1632 + $0x8] sm:$0xff]
    %v1635 = vld [vmem:[%s1632 + $0x10] sm:$0xff]
    %v1636 = vld [vmem:[%s1632 + $0x18] sm:$0xff]
    %v1637 = vld [vmem:[%s1632 + $0x20] sm:$0xff]
    %v1638 = vld [vmem:[%s1632 + $0x28] sm:$0xff]
    %v1639 = vld [vmem:[%s1632 + $0x30] sm:$0xff]
    %v1640 = vld [vmem:[%s1632 + $0x38] sm:$0xff]
    %v1641 = vld [vmem:[%s1632 + $0x40] sm:$0xff]
    %v1642 = vld [vmem:[%s1632 + $0x48] sm:$0xff]
    %v1643 = vld [vmem:[%s1632 + $0x50] sm:$0xff]
    %v1644 = vld [vmem:[%s1632 + $0x58] sm:$0xff]
    %v1645 = vld [vmem:[%s1632 + $0x60] sm:$0xff]
    %v1646 = vld [vmem:[%s1632 + $0x68] sm:$0xff]
    %v1647 = vld [vmem:[%s1632 + $0x70] sm:$0xff]
    %v1648 = vld [vmem:[%s1632 + $0x78] sm:$0xff]
    %v1649 = vld [vmem:[%s2] sm:$0xff]
    %v1650 = vld [vmem:[%s2 + $0x8] sm:$0xff]
    %v1651 = vld [vmem:[%s2 + $0x10] sm:$0xff]
    %v1652 = vld [vmem:[%s2 + $0x18] sm:$0xff]
    %v1653 = vld [vmem:[%s2 + $0x20] sm:$0xff]
    %v1654 = vld [vmem:[%s2 + $0x28] sm:$0xff]
    %v1655 = vld [vmem:[%s2 + $0x30] sm:$0xff]
    %v1656 = vld [vmem:[%s2 + $0x38] sm:$0xff]
    %v1657 = vld [vmem:[%s2 + $0x40] sm:$0xff]
    %v1658 = vld [vmem:[%s2 + $0x48] sm:$0xff]
    %v1659 = vld [vmem:[%s2 + $0x50] sm:$0xff]
    %v1660 = vld [vmem:[%s2 + $0x58] sm:$0xff]
    %v1661 = vld [vmem:[%s2 + $0x60] sm:$0xff]
    %v1662 = vld [vmem:[%s2 + $0x68] sm:$0xff]
    %v1663 = vld [vmem:[%s2 + $0x70] sm:$0xff]
    %v1664 = vld [vmem:[%s2 + $0x78] sm:$0xff]
    %v1665 = vld [vmem:[%s2 + $0x80] sm:$0xff]
    %v1666 = vld [vmem:[%s2 + $0x88] sm:$0xff]
    %v1667 = vld [vmem:[%s2 + $0x90] sm:$0xff]
    %v1668 = vld [vmem:[%s2 + $0x98] sm:$0xff]
    %v1669 = vld [vmem:[%s2 + $0xa0] sm:$0xff]
    %v1670 = vld [vmem:[%s2 + $0xa8] sm:$0xff]
    %v1671 = vld [vmem:[%s2 + $0xb0] sm:$0xff]
    %v1672 = vld [vmem:[%s2 + $0xb8] sm:$0xff]
    %v1673 = vld [vmem:[%s2 + $0xc0] sm:$0xff]
    %v1674 = vld [vmem:[%s2 + $0xc8] sm:$0xff]
    %v1675 = vld [vmem:[%s2 + $0xd0] sm:$0xff]
    %v1676 = vld [vmem:[%s2 + $0xd8] sm:$0xff]
    %v1677 = vld [vmem:[%s2 + $0xe0] sm:$0xff]
    %v1678 = vld [vmem:[%s2 + $0xe8] sm:$0xff]
    %v1679 = vld [vmem:[%s2 + $0xf0] sm:$0xff]
    %v1680 = vld [vmem:[%s2 + $0xf8] sm:$0xff]
    %v1681 = vld [vmem:[%s2 + $0x100] sm:$0xff]
    %v1682 = vld [vmem:[%s2 + $0x108] sm:$0xff]
    %v1683 = vld [vmem:[%s2 + $0x110] sm:$0xff]
    %v1684 = vld [vmem:[%s2 + $0x118] sm:$0xff]
    %v1685 = vld [vmem:[%s2 + $0x120] sm:$0xff]
    %v1686 = vld [vmem:[%s2 + $0x128] sm:$0xff]
    %v1687 = vld [vmem:[%s2 + $0x130] sm:$0xff]
    %v1688 = vld [vmem:[%s2 + $0x138] sm:$0xff]
    %v1689 = vld [vmem:[%s2 + $0x140] sm:$0xff]
    %v1690 = vld [vmem:[%s2 + $0x148] sm:$0xff]
    %v1691 = vld [vmem:[%s2 + $0x150] sm:$0xff]
    %v1692 = vld [vmem:[%s2 + $0x158] sm:$0xff]
    %v1693 = vld [vmem:[%s2 + $0x160] sm:$0xff]
    %v1694 = vld [vmem:[%s2 + $0x168] sm:$0xff]
    %v1695 = vld [vmem:[%s2 + $0x170] sm:$0xff]
    %v1696 = vld [vmem:[%s2 + $0x178] sm:$0xff]
    %v1697 = vld [vmem:[%s2 + $0x180] sm:$0xff]
    %v1698 = vld [vmem:[%s2 + $0x188] sm:$0xff]
    %v1699 = vld [vmem:[%s2 + $0x190] sm:$0xff]
    %v1700 = vld [vmem:[%s2 + $0x198] sm:$0xff]
    %v1701 = vld [vmem:[%s2 + $0x1a0] sm:$0xff]
    %v1702 = vld [vmem:[%s2 + $0x1a8] sm:$0xff]
    %v1703 = vld [vmem:[%s2 + $0x1b0] sm:$0xff]
    %v1704 = vld [vmem:[%s2 + $0x1b8] sm:$0xff]
    %v1705 = vld [vmem:[%s2 + $0x1c0] sm:$0xff]
    %v1706 = vld [vmem:[%s2 + $0x1c8] sm:$0xff]
    %v1707 = vld [vmem:[%s2 + $0x1d0] sm:$0xff]
    %v1708 = vld [vmem:[%s2 + $0x1d8] sm:$0xff]
    %v1709 = vld [vmem:[%s2 + $0x1e0] sm:$0xff]
    %v1710 = vld [vmem:[%s2 + $0x1e8] sm:$0xff]
    %v1711 = vld [vmem:[%s2 + $0x1f0] sm:$0xff]
    %v1712 = vld [vmem:[%s2 + $0x1f8] sm:$0xff]
    %v1713 = vld [vmem:[%s2 + $0x200] sm:$0xff]
    %v1714 = vld [vmem:[%s2 + $0x208] sm:$0xff]
    %v1715 = vld [vmem:[%s2 + $0x210] sm:$0xff]
    %v1716 = vld [vmem:[%s2 + $0x218] sm:$0xff]
    %v1717 = vld [vmem:[%s2 + $0x220] sm:$0xff]
    %v1718 = vld [vmem:[%s2 + $0x228] sm:$0xff]
    %v1719 = vld [vmem:[%s2 + $0x230] sm:$0xff]
    %v1720 = vld [vmem:[%s2 + $0x238] sm:$0xff]
    %v1721 = vld [vmem:[%s2 + $0x240] sm:$0xff]
    %v1722 = vld [vmem:[%s2 + $0x248] sm:$0xff]
    %v1723 = vld [vmem:[%s2 + $0x250] sm:$0xff]
    %v1724 = vld [vmem:[%s2 + $0x258] sm:$0xff]
    %v1725 = vld [vmem:[%s2 + $0x260] sm:$0xff]
    %v1726 = vld [vmem:[%s2 + $0x268] sm:$0xff]
    %v1727 = vld [vmem:[%s2 + $0x270] sm:$0xff]
    %v1728 = vld [vmem:[%s2 + $0x278] sm:$0xff]
    %v1729 = vld [vmem:[%s2 + $0x280] sm:$0xff]
    %v1730 = vld [vmem:[%s2 + $0x288] sm:$0xff]
    %v1731 = vld [vmem:[%s2 + $0x290] sm:$0xff]
    %v1732 = vld [vmem:[%s2 + $0x298] sm:$0xff]
    %v1733 = vld [vmem:[%s2 + $0x2a0] sm:$0xff]
    %v1734 = vld [vmem:[%s2 + $0x2a8] sm:$0xff]
    %v1735 = vld [vmem:[%s2 + $0x2b0] sm:$0xff]
    %v1736 = vld [vmem:[%s2 + $0x2b8] sm:$0xff]
    %v1737 = vld [vmem:[%s2 + $0x2c0] sm:$0xff]
    %v1738 = vld [vmem:[%s2 + $0x2c8] sm:$0xff]
    %v1739 = vld [vmem:[%s2 + $0x2d0] sm:$0xff]
    %v1740 = vld [vmem:[%s2 + $0x2d8] sm:$0xff]
    %v1741 = vld [vmem:[%s2 + $0x2e0] sm:$0xff]
    %v1742 = vld [vmem:[%s2 + $0x2e8] sm:$0xff]
    %v1743 = vld [vmem:[%s2 + $0x2f0] sm:$0xff]
    %v1744 = vld [vmem:[%s2 + $0x2f8] sm:$0xff]
    %v1745 = vld [vmem:[%s2 + $0x300] sm:$0xff]
    %v1746 = vld [vmem:[%s2 + $0x308] sm:$0xff]
    %v1747 = vld [vmem:[%s2 + $0x310] sm:$0xff]
    %v1748 = vld [vmem:[%s2 + $0x318] sm:$0xff]
    %v1749 = vld [vmem:[%s2 + $0x320] sm:$0xff]
    %v1750 = vld [vmem:[%s2 + $0x328] sm:$0xff]
    %v1751 = vld [vmem:[%s2 + $0x330] sm:$0xff]
    %v1752 = vld [vmem:[%s2 + $0x338] sm:$0xff]
    %v1753 = vld [vmem:[%s2 + $0x340] sm:$0xff]
    %v1754 = vld [vmem:[%s2 + $0x348] sm:$0xff]
    %v1755 = vld [vmem:[%s2 + $0x350] sm:$0xff]
    %v1756 = vld [vmem:[%s2 + $0x358] sm:$0xff]
    %v1757 = vld [vmem:[%s2 + $0x360] sm:$0xff]
    %v1758 = vld [vmem:[%s2 + $0x368] sm:$0xff]
    %v1759 = vld [vmem:[%s2 + $0x370] sm:$0xff]
    %v1760 = vld [vmem:[%s2 + $0x378] sm:$0xff]
    %v1761 = vld [vmem:[%s2 + $0x380] sm:$0xff]
    %v1762 = vld [vmem:[%s2 + $0x388] sm:$0xff]
    %v1763 = vld [vmem:[%s2 + $0x390] sm:$0xff]
    %v1764 = vld [vmem:[%s2 + $0x398] sm:$0xff]
    %v1765 = vld [vmem:[%s2 + $0x3a0] sm:$0xff]
    %v1766 = vld [vmem:[%s2 + $0x3a8] sm:$0xff]
    %v1767 = vld [vmem:[%s2 + $0x3b0] sm:$0xff]
    %v1768 = vld [vmem:[%s2 + $0x3b8] sm:$0xff]
    %v1769 = vld [vmem:[%s2 + $0x3c0] sm:$0xff]
    %v1770 = vld [vmem:[%s2 + $0x3c8] sm:$0xff]
    %v1771 = vld [vmem:[%s2 + $0x3d0] sm:$0xff]
    %v1772 = vld [vmem:[%s2 + $0x3d8] sm:$0xff]
    %v1773 = vld [vmem:[%s2 + $0x3e0] sm:$0xff]
    %v1774 = vld [vmem:[%s2 + $0x3e8] sm:$0xff]
    %v1775 = vld [vmem:[%s2 + $0x3f0] sm:$0xff]
    %v1776 = vld [vmem:[%s2 + $0x3f8] sm:$0xff]
    %v1777 = vld [vmem:[%s2 + $0x400] sm:$0xff]
    %v1778 = vld [vmem:[%s2 + $0x408] sm:$0xff]
    %v1779 = vld [vmem:[%s2 + $0x410] sm:$0xff]
    %v1780 = vld [vmem:[%s2 + $0x418] sm:$0xff]
    %v1781 = vld [vmem:[%s2 + $0x420] sm:$0xff]
    %v1782 = vld [vmem:[%s2 + $0x428] sm:$0xff]
    %v1783 = vld [vmem:[%s2 + $0x430] sm:$0xff]
    %v1784 = vld [vmem:[%s2 + $0x438] sm:$0xff]
    %v1785 = vld [vmem:[%s2 + $0x440] sm:$0xff]
    %v1786 = vld [vmem:[%s2 + $0x448] sm:$0xff]
    %v1787 = vld [vmem:[%s2 + $0x450] sm:$0xff]
    %v1788 = vld [vmem:[%s2 + $0x458] sm:$0xff]
    %v1789 = vld [vmem:[%s2 + $0x460] sm:$0xff]
    %v1790 = vld [vmem:[%s2 + $0x468] sm:$0xff]
    %v1791 = vld [vmem:[%s2 + $0x470] sm:$0xff]
    %v1792 = vld [vmem:[%s2 + $0x478] sm:$0xff]
    %v1793 = vld [vmem:[%s2 + $0x480] sm:$0xff]
    %v1794 = vld [vmem:[%s2 + $0x488] sm:$0xff]
    %v1795 = vld [vmem:[%s2 + $0x490] sm:$0xff]
    %v1796 = vld [vmem:[%s2 + $0x498] sm:$0xff]
    %v1797 = vld [vmem:[%s2 + $0x4a0] sm:$0xff]
    %v1798 = vld [vmem:[%s2 + $0x4a8] sm:$0xff]
    %v1799 = vld [vmem:[%s2 + $0x4b0] sm:$0xff]
    %v1800 = vld [vmem:[%s2 + $0x4b8] sm:$0xff]
    %v1801 = vld [vmem:[%s2 + $0x4c0] sm:$0xff]
    %v1802 = vld [vmem:[%s2 + $0x4c8] sm:$0xff]
    %v1803 = vld [vmem:[%s2 + $0x4d0] sm:$0xff]
    %v1804 = vld [vmem:[%s2 + $0x4d8] sm:$0xff]
    %v1805 = vld [vmem:[%s2 + $0x4e0] sm:$0xff]
    %v1806 = vld [vmem:[%s2 + $0x4e8] sm:$0xff]
    %v1807 = vld [vmem:[%s2 + $0x4f0] sm:$0xff]
    %v1808 = vld [vmem:[%s2 + $0x4f8] sm:$0xff]
    %v1809 = vld [vmem:[%s2 + $0x500] sm:$0xff]
    %v1810 = vld [vmem:[%s2 + $0x508] sm:$0xff]
    %v1811 = vld [vmem:[%s2 + $0x510] sm:$0xff]
    %v1812 = vld [vmem:[%s2 + $0x518] sm:$0xff]
    %v1813 = vld [vmem:[%s2 + $0x520] sm:$0xff]
    %v1814 = vld [vmem:[%s2 + $0x528] sm:$0xff]
    %v1815 = vld [vmem:[%s2 + $0x530] sm:$0xff]
    %v1816 = vld [vmem:[%s2 + $0x538] sm:$0xff]
    %v1817 = vld [vmem:[%s2 + $0x540] sm:$0xff]
    %v1818 = vld [vmem:[%s2 + $0x548] sm:$0xff]
    %v1819 = vld [vmem:[%s2 + $0x550] sm:$0xff]
    %v1820 = vld [vmem:[%s2 + $0x558] sm:$0xff]
    %v1821 = vld [vmem:[%s2 + $0x560] sm:$0xff]
    %v1822 = vld [vmem:[%s2 + $0x568] sm:$0xff]
    %v1823 = vld [vmem:[%s2 + $0x570] sm:$0xff]
    %v1824 = vld [vmem:[%s2 + $0x578] sm:$0xff]
    %v1825 = vld [vmem:[%s2 + $0x580] sm:$0xff]
    %v1826 = vld [vmem:[%s2 + $0x588] sm:$0xff]
    %v1827 = vld [vmem:[%s2 + $0x590] sm:$0xff]
    %v1828 = vld [vmem:[%s2 + $0x598] sm:$0xff]
    %v1829 = vld [vmem:[%s2 + $0x5a0] sm:$0xff]
    %v1830 = vld [vmem:[%s2 + $0x5a8] sm:$0xff]
    %v1831 = vld [vmem:[%s2 + $0x5b0] sm:$0xff]
    %v1832 = vld [vmem:[%s2 + $0x5b8] sm:$0xff]
    %v1833 = vld [vmem:[%s2 + $0x5c0] sm:$0xff]
    %v1834 = vld [vmem:[%s2 + $0x5c8] sm:$0xff]
    %v1835 = vld [vmem:[%s2 + $0x5d0] sm:$0xff]
    %v1836 = vld [vmem:[%s2 + $0x5d8] sm:$0xff]
    %v1837 = vld [vmem:[%s2 + $0x5e0] sm:$0xff]
    %v1838 = vld [vmem:[%s2 + $0x5e8] sm:$0xff]
    %v1839 = vld [vmem:[%s2 + $0x5f0] sm:$0xff]
    %v1840 = vld [vmem:[%s2 + $0x5f8] sm:$0xff]
    %v1841 = vld [vmem:[%s2 + $0x600] sm:$0xff]
    %v1842 = vld [vmem:[%s2 + $0x608] sm:$0xff]
    %v1843 = vld [vmem:[%s2 + $0x610] sm:$0xff]
    %v1844 = vld [vmem:[%s2 + $0x618] sm:$0xff]
    %v1845 = vld [vmem:[%s2 + $0x620] sm:$0xff]
    %v1846 = vld [vmem:[%s2 + $0x628] sm:$0xff]
    %v1847 = vld [vmem:[%s2 + $0x630] sm:$0xff]
    %v1848 = vld [vmem:[%s2 + $0x638] sm:$0xff]
    %v1849 = vld [vmem:[%s2 + $0x640] sm:$0xff]
    %v1850 = vld [vmem:[%s2 + $0x648] sm:$0xff]
    %v1851 = vld [vmem:[%s2 + $0x650] sm:$0xff]
    %v1852 = vld [vmem:[%s2 + $0x658] sm:$0xff]
    %v1853 = vld [vmem:[%s2 + $0x660] sm:$0xff]
    %v1854 = vld [vmem:[%s2 + $0x668] sm:$0xff]
    %v1855 = vld [vmem:[%s2 + $0x670] sm:$0xff]
    %v1856 = vld [vmem:[%s2 + $0x678] sm:$0xff]
    %v1857 = vld [vmem:[%s2 + $0x680] sm:$0xff]
    %v1858 = vld [vmem:[%s2 + $0x688] sm:$0xff]
    %v1859 = vld [vmem:[%s2 + $0x690] sm:$0xff]
    %v1860 = vld [vmem:[%s2 + $0x698] sm:$0xff]
    %v1861 = vld [vmem:[%s2 + $0x6a0] sm:$0xff]
    %v1862 = vld [vmem:[%s2 + $0x6a8] sm:$0xff]
    %v1863 = vld [vmem:[%s2 + $0x6b0] sm:$0xff]
    %v1864 = vld [vmem:[%s2 + $0x6b8] sm:$0xff]
    %v1865 = vld [vmem:[%s2 + $0x6c0] sm:$0xff]
    %v1866 = vld [vmem:[%s2 + $0x6c8] sm:$0xff]
    %v1867 = vld [vmem:[%s2 + $0x6d0] sm:$0xff]
    %v1868 = vld [vmem:[%s2 + $0x6d8] sm:$0xff]
    %v1869 = vld [vmem:[%s2 + $0x6e0] sm:$0xff]
    %v1870 = vld [vmem:[%s2 + $0x6e8] sm:$0xff]
    %v1871 = vld [vmem:[%s2 + $0x6f0] sm:$0xff]
    %v1872 = vld [vmem:[%s2 + $0x6f8] sm:$0xff]
    %v1873 = vld [vmem:[%s2 + $0x700] sm:$0xff]
    %v1874 = vld [vmem:[%s2 + $0x708] sm:$0xff]
    %v1875 = vld [vmem:[%s2 + $0x710] sm:$0xff]
    %v1876 = vld [vmem:[%s2 + $0x718] sm:$0xff]
    %v1877 = vld [vmem:[%s2 + $0x720] sm:$0xff]
    %v1878 = vld [vmem:[%s2 + $0x728] sm:$0xff]
    %v1879 = vld [vmem:[%s2 + $0x730] sm:$0xff]
    %v1880 = vld [vmem:[%s2 + $0x738] sm:$0xff]
    %v1881 = vld [vmem:[%s2 + $0x740] sm:$0xff]
    %v1882 = vld [vmem:[%s2 + $0x748] sm:$0xff]
    %v1883 = vld [vmem:[%s2 + $0x750] sm:$0xff]
    %v1884 = vld [vmem:[%s2 + $0x758] sm:$0xff]
    %v1885 = vld [vmem:[%s2 + $0x760] sm:$0xff]
    %v1886 = vld [vmem:[%s2 + $0x768] sm:$0xff]
    %v1887 = vld [vmem:[%s2 + $0x770] sm:$0xff]
    %v1888 = vld [vmem:[%s2 + $0x778] sm:$0xff]
    %v1889 = vld [vmem:[%s2 + $0x780] sm:$0xff]
    %v1890 = vld [vmem:[%s2 + $0x788] sm:$0xff]
    %v1891 = vld [vmem:[%s2 + $0x790] sm:$0xff]
    %v1892 = vld [vmem:[%s2 + $0x798] sm:$0xff]
    %v1893 = vld [vmem:[%s2 + $0x7a0] sm:$0xff]
    %v1894 = vld [vmem:[%s2 + $0x7a8] sm:$0xff]
    %v1895 = vld [vmem:[%s2 + $0x7b0] sm:$0xff]
    %v1896 = vld [vmem:[%s2 + $0x7b8] sm:$0xff]
    %v1897 = vld [vmem:[%s2 + $0x7c0] sm:$0xff]
    %v1898 = vld [vmem:[%s2 + $0x7c8] sm:$0xff]
    %v1899 = vld [vmem:[%s2 + $0x7d0] sm:$0xff]
    %v1900 = vld [vmem:[%s2 + $0x7d8] sm:$0xff]
    %v1901 = vld [vmem:[%s2 + $0x7e0] sm:$0xff]
    %v1902 = vld [vmem:[%s2 + $0x7e8] sm:$0xff]
    %v1903 = vld [vmem:[%s2 + $0x7f0] sm:$0xff]
    %v1904 = vld [vmem:[%s2 + $0x7f8] sm:$0xff]
    %v1905 = vld [vmem:[%s2 + $0x800] sm:$0xff]
    %v1906 = vld [vmem:[%s2 + $0x808] sm:$0xff]
    %v1907 = vld [vmem:[%s2 + $0x810] sm:$0xff]
    %v1908 = vld [vmem:[%s2 + $0x818] sm:$0xff]
    %v1909 = vld [vmem:[%s2 + $0x820] sm:$0xff]
    %v1910 = vld [vmem:[%s2 + $0x828] sm:$0xff]
    %v1911 = vld [vmem:[%s2 + $0x830] sm:$0xff]
    %v1912 = vld [vmem:[%s2 + $0x838] sm:$0xff]
    %v1913 = vld [vmem:[%s2 + $0x840] sm:$0xff]
    %v1914 = vld [vmem:[%s2 + $0x848] sm:$0xff]
    %v1915 = vld [vmem:[%s2 + $0x850] sm:$0xff]
    %v1916 = vld [vmem:[%s2 + $0x858] sm:$0xff]
    %v1917 = vld [vmem:[%s2 + $0x860] sm:$0xff]
    %v1918 = vld [vmem:[%s2 + $0x868] sm:$0xff]
    %v1919 = vld [vmem:[%s2 + $0x870] sm:$0xff]
    %v1920 = vld [vmem:[%s2 + $0x878] sm:$0xff]
    %v1921 = vld [vmem:[%s2 + $0x880] sm:$0xff]
    %v1922 = vld [vmem:[%s2 + $0x888] sm:$0xff]
    %v1923 = vld [vmem:[%s2 + $0x890] sm:$0xff]
    %v1924 = vld [vmem:[%s2 + $0x898] sm:$0xff]
    %v1925 = vld [vmem:[%s2 + $0x8a0] sm:$0xff]
    %v1926 = vld [vmem:[%s2 + $0x8a8] sm:$0xff]
    %v1927 = vld [vmem:[%s2 + $0x8b0] sm:$0xff]
    %v1928 = vld [vmem:[%s2 + $0x8b8] sm:$0xff]
    %v1929 = vld [vmem:[%s2 + $0x8c0] sm:$0xff]
    %v1930 = vld [vmem:[%s2 + $0x8c8] sm:$0xff]
    %v1931 = vld [vmem:[%s2 + $0x8d0] sm:$0xff]
    %v1932 = vld [vmem:[%s2 + $0x8d8] sm:$0xff]
    %v1933 = vld [vmem:[%s2 + $0x8e0] sm:$0xff]
    %v1934 = vld [vmem:[%s2 + $0x8e8] sm:$0xff]
    %v1935 = vld [vmem:[%s2 + $0x8f0] sm:$0xff]
    %v1936 = vld [vmem:[%s2 + $0x8f8] sm:$0xff]
    %v1937 = vld [vmem:[%s2 + $0x900] sm:$0xff]
    %v1938 = vld [vmem:[%s2 + $0x908] sm:$0xff]
    %v1939 = vld [vmem:[%s2 + $0x910] sm:$0xff]
    %v1940 = vld [vmem:[%s2 + $0x918] sm:$0xff]
    %v1941 = vld [vmem:[%s2 + $0x920] sm:$0xff]
    %v1942 = vld [vmem:[%s2 + $0x928] sm:$0xff]
    %v1943 = vld [vmem:[%s2 + $0x930] sm:$0xff]
    %v1944 = vld [vmem:[%s2 + $0x938] sm:$0xff]
    %v1945 = vld [vmem:[%s2 + $0x940] sm:$0xff]
    %v1946 = vld [vmem:[%s2 + $0x948] sm:$0xff]
    %v1947 = vld [vmem:[%s2 + $0x950] sm:$0xff]
    %v1948 = vld [vmem:[%s2 + $0x958] sm:$0xff]
    %v1949 = vld [vmem:[%s2 + $0x960] sm:$0xff]
    %v1950 = vld [vmem:[%s2 + $0x968] sm:$0xff]
    %v1951 = vld [vmem:[%s2 + $0x970] sm:$0xff]
    %v1952 = vld [vmem:[%s2 + $0x978] sm:$0xff]
    %v1953 = vld [vmem:[%s2 + $0x980] sm:$0xff]
    %v1954 = vld [vmem:[%s2 + $0x988] sm:$0xff]
    %v1955 = vld [vmem:[%s2 + $0x990] sm:$0xff]
    %v1956 = vld [vmem:[%s2 + $0x998] sm:$0xff]
    %v1957 = vld [vmem:[%s2 + $0x9a0] sm:$0xff]
    %v1958 = vld [vmem:[%s2 + $0x9a8] sm:$0xff]
    %v1959 = vld [vmem:[%s2 + $0x9b0] sm:$0xff]
    %v1960 = vld [vmem:[%s2 + $0x9b8] sm:$0xff]
    %v1961 = vld [vmem:[%s2 + $0x9c0] sm:$0xff]
    %v1962 = vld [vmem:[%s2 + $0x9c8] sm:$0xff]
    %v1963 = vld [vmem:[%s2 + $0x9d0] sm:$0xff]
    %v1964 = vld [vmem:[%s2 + $0x9d8] sm:$0xff]
    %v1965 = vld [vmem:[%s2 + $0x9e0] sm:$0xff]
    %v1966 = vld [vmem:[%s2 + $0x9e8] sm:$0xff]
    %v1967 = vld [vmem:[%s2 + $0x9f0] sm:$0xff]
    %v1968 = vld [vmem:[%s2 + $0x9f8] sm:$0xff]
    %v1969 = vld [vmem:[%s2 + $0xa00] sm:$0xff]
    %v1970 = vld [vmem:[%s2 + $0xa08] sm:$0xff]
    %v1971 = vld [vmem:[%s2 + $0xa10] sm:$0xff]
    %v1972 = vld [vmem:[%s2 + $0xa18] sm:$0xff]
    %v1973 = vld [vmem:[%s2 + $0xa20] sm:$0xff]
    %v1974 = vld [vmem:[%s2 + $0xa28] sm:$0xff]
    %v1975 = vld [vmem:[%s2 + $0xa30] sm:$0xff]
    %v1976 = vld [vmem:[%s2 + $0xa38] sm:$0xff]
    %v1977 = vld [vmem:[%s2 + $0xa40] sm:$0xff]
    %v1978 = vld [vmem:[%s2 + $0xa48] sm:$0xff]
    %v1979 = vld [vmem:[%s2 + $0xa50] sm:$0xff]
    %v1980 = vld [vmem:[%s2 + $0xa58] sm:$0xff]
    %v1981 = vld [vmem:[%s2 + $0xa60] sm:$0xff]
    %v1982 = vld [vmem:[%s2 + $0xa68] sm:$0xff]
    %v1983 = vld [vmem:[%s2 + $0xa70] sm:$0xff]
    %v1984 = vld [vmem:[%s2 + $0xa78] sm:$0xff]
    %v1985 = vld [vmem:[%s2 + $0xa80] sm:$0xff]
    %v1986 = vld [vmem:[%s2 + $0xa88] sm:$0xff]
    %v1987 = vld [vmem:[%s2 + $0xa90] sm:$0xff]
    %v1988 = vld [vmem:[%s2 + $0xa98] sm:$0xff]
    %v1989 = vld [vmem:[%s2 + $0xaa0] sm:$0xff]
    %v1990 = vld [vmem:[%s2 + $0xaa8] sm:$0xff]
    %v1991 = vld [vmem:[%s2 + $0xab0] sm:$0xff]
    %v1992 = vld [vmem:[%s2 + $0xab8] sm:$0xff]
    %v1993 = vld [vmem:[%s2 + $0xac0] sm:$0xff]
    %v1994 = vld [vmem:[%s2 + $0xac8] sm:$0xff]
    %v1995 = vld [vmem:[%s2 + $0xad0] sm:$0xff]
    %v1996 = vld [vmem:[%s2 + $0xad8] sm:$0xff]
    %v1997 = vld [vmem:[%s2 + $0xae0] sm:$0xff]
    %v1998 = vld [vmem:[%s2 + $0xae8] sm:$0xff]
    %v1999 = vld [vmem:[%s2 + $0xaf0] sm:$0xff]
    %v2000 = vld [vmem:[%s2 + $0xaf8] sm:$0xff]
    %v2001 = vld [vmem:[%s2 + $0xb00] sm:$0xff]
    %v2002 = vld [vmem:[%s2 + $0xb08] sm:$0xff]
    %v2003 = vld [vmem:[%s2 + $0xb10] sm:$0xff]
    %v2004 = vld [vmem:[%s2 + $0xb18] sm:$0xff]
    %v2005 = vld [vmem:[%s2 + $0xb20] sm:$0xff]
    %v2006 = vld [vmem:[%s2 + $0xb28] sm:$0xff]
    %v2007 = vld [vmem:[%s2 + $0xb30] sm:$0xff]
    %v2008 = vld [vmem:[%s2 + $0xb38] sm:$0xff]
    %v2009 = vld [vmem:[%s2 + $0xb40] sm:$0xff]
    %v2010 = vld [vmem:[%s2 + $0xb48] sm:$0xff]
    %v2011 = vld [vmem:[%s2 + $0xb50] sm:$0xff]
    %v2012 = vld [vmem:[%s2 + $0xb58] sm:$0xff]
    %v2013 = vld [vmem:[%s2 + $0xb60] sm:$0xff]
    %v2014 = vld [vmem:[%s2 + $0xb68] sm:$0xff]
    %v2015 = vld [vmem:[%s2 + $0xb70] sm:$0xff]
    %v2016 = vld [vmem:[%s2 + $0xb78] sm:$0xff]
    %v2017 = vld [vmem:[%s2 + $0xb80] sm:$0xff]
    %v2018 = vld [vmem:[%s2 + $0xb88] sm:$0xff]
    %v2019 = vld [vmem:[%s2 + $0xb90] sm:$0xff]
    %v2020 = vld [vmem:[%s2 + $0xb98] sm:$0xff]
    %v2021 = vld [vmem:[%s2 + $0xba0] sm:$0xff]
    %v2022 = vld [vmem:[%s2 + $0xba8] sm:$0xff]
    %v2023 = vld [vmem:[%s2 + $0xbb0] sm:$0xff]
    %v2024 = vld [vmem:[%s2 + $0xbb8] sm:$0xff]
    %v2025 = vld [vmem:[%s2 + $0xbc0] sm:$0xff]
    %v2026 = vld [vmem:[%s2 + $0xbc8] sm:$0xff]
    %v2027 = vld [vmem:[%s2 + $0xbd0] sm:$0xff]
    %v2028 = vld [vmem:[%s2 + $0xbd8] sm:$0xff]
    %v2029 = vld [vmem:[%s2 + $0xbe0] sm:$0xff]
    %v2030 = vld [vmem:[%s2 + $0xbe8] sm:$0xff]
    %v2031 = vld [vmem:[%s2 + $0xbf0] sm:$0xff]
    %v2032 = vld [vmem:[%s2 + $0xbf8] sm:$0xff]
    %v2033 = vld [vmem:[%s2 + $0xc00] sm:$0xff]
    %v2034 = vld [vmem:[%s2 + $0xc08] sm:$0xff]
    %v2035 = vld [vmem:[%s2 + $0xc10] sm:$0xff]
    %v2036 = vld [vmem:[%s2 + $0xc18] sm:$0xff]
    %v2037 = vld [vmem:[%s2 + $0xc20] sm:$0xff]
    %v2038 = vld [vmem:[%s2 + $0xc28] sm:$0xff]
    %v2039 = vld [vmem:[%s2 + $0xc30] sm:$0xff]
    %v2040 = vld [vmem:[%s2 + $0xc38] sm:$0xff]
    %v2041 = vld [vmem:[%s2 + $0xc40] sm:$0xff]
    %v2042 = vld [vmem:[%s2 + $0xc48] sm:$0xff]
    %v2043 = vld [vmem:[%s2 + $0xc50] sm:$0xff]
    %v2044 = vld [vmem:[%s2 + $0xc58] sm:$0xff]
    %v2045 = vld [vmem:[%s2 + $0xc60] sm:$0xff]
    %v2046 = vld [vmem:[%s2 + $0xc68] sm:$0xff]
    %v2047 = vld [vmem:[%s2 + $0xc70] sm:$0xff]
    %v2048 = vld [vmem:[%s2 + $0xc78] sm:$0xff]
    %v2049 = vld [vmem:[%s2 + $0xc80] sm:$0xff]
    %v2050 = vld [vmem:[%s2 + $0xc88] sm:$0xff]
    %v2051 = vld [vmem:[%s2 + $0xc90] sm:$0xff]
    %v2052 = vld [vmem:[%s2 + $0xc98] sm:$0xff]
    %v2053 = vld [vmem:[%s2 + $0xca0] sm:$0xff]
    %v2054 = vld [vmem:[%s2 + $0xca8] sm:$0xff]
    %v2055 = vld [vmem:[%s2 + $0xcb0] sm:$0xff]
    %v2056 = vld [vmem:[%s2 + $0xcb8] sm:$0xff]
    %v2057 = vld [vmem:[%s2 + $0xcc0] sm:$0xff]
    %v2058 = vld [vmem:[%s2 + $0xcc8] sm:$0xff]
    %v2059 = vld [vmem:[%s2 + $0xcd0] sm:$0xff]
    %v2060 = vld [vmem:[%s2 + $0xcd8] sm:$0xff]
    %v2061 = vld [vmem:[%s2 + $0xce0] sm:$0xff]
    %v2062 = vld [vmem:[%s2 + $0xce8] sm:$0xff]
    %v2063 = vld [vmem:[%s2 + $0xcf0] sm:$0xff]
    %v2064 = vld [vmem:[%s2 + $0xcf8] sm:$0xff]
    %v2065 = vld [vmem:[%s2 + $0xd00] sm:$0xff]
    %v2066 = vld [vmem:[%s2 + $0xd08] sm:$0xff]
    %v2067 = vld [vmem:[%s2 + $0xd10] sm:$0xff]
    %v2068 = vld [vmem:[%s2 + $0xd18] sm:$0xff]
    %v2069 = vld [vmem:[%s2 + $0xd20] sm:$0xff]
    %v2070 = vld [vmem:[%s2 + $0xd28] sm:$0xff]
    %v2071 = vld [vmem:[%s2 + $0xd30] sm:$0xff]
    %v2072 = vld [vmem:[%s2 + $0xd38] sm:$0xff]
    %v2073 = vld [vmem:[%s2 + $0xd40] sm:$0xff]
    %v2074 = vld [vmem:[%s2 + $0xd48] sm:$0xff]
    %v2075 = vld [vmem:[%s2 + $0xd50] sm:$0xff]
    %v2076 = vld [vmem:[%s2 + $0xd58] sm:$0xff]
    %v2077 = vld [vmem:[%s2 + $0xd60] sm:$0xff]
    %v2078 = vld [vmem:[%s2 + $0xd68] sm:$0xff]
    %v2079 = vld [vmem:[%s2 + $0xd70] sm:$0xff]
    %v2080 = vld [vmem:[%s2 + $0xd78] sm:$0xff]
    %v2081 = vld [vmem:[%s2 + $0xd80] sm:$0xff]
    %v2082 = vld [vmem:[%s2 + $0xd88] sm:$0xff]
    %v2083 = vld [vmem:[%s2 + $0xd90] sm:$0xff]
    %v2084 = vld [vmem:[%s2 + $0xd98] sm:$0xff]
    %v2085 = vld [vmem:[%s2 + $0xda0] sm:$0xff]
    %v2086 = vld [vmem:[%s2 + $0xda8] sm:$0xff]
    %v2087 = vld [vmem:[%s2 + $0xdb0] sm:$0xff]
    %v2088 = vld [vmem:[%s2 + $0xdb8] sm:$0xff]
    %v2089 = vld [vmem:[%s2 + $0xdc0] sm:$0xff]
    %v2090 = vld [vmem:[%s2 + $0xdc8] sm:$0xff]
    %v2091 = vld [vmem:[%s2 + $0xdd0] sm:$0xff]
    %v2092 = vld [vmem:[%s2 + $0xdd8] sm:$0xff]
    %v2093 = vld [vmem:[%s2 + $0xde0] sm:$0xff]
    %v2094 = vld [vmem:[%s2 + $0xde8] sm:$0xff]
    %v2095 = vld [vmem:[%s2 + $0xdf0] sm:$0xff]
    %v2096 = vld [vmem:[%s2 + $0xdf8] sm:$0xff]
    %v2097 = vld [vmem:[%s2 + $0xe00] sm:$0xff]
    %v2098 = vld [vmem:[%s2 + $0xe08] sm:$0xff]
    %v2099 = vld [vmem:[%s2 + $0xe10] sm:$0xff]
    %v2100 = vld [vmem:[%s2 + $0xe18] sm:$0xff]
    %v2101 = vld [vmem:[%s2 + $0xe20] sm:$0xff]
    %v2102 = vld [vmem:[%s2 + $0xe28] sm:$0xff]
    %v2103 = vld [vmem:[%s2 + $0xe30] sm:$0xff]
    %v2104 = vld [vmem:[%s2 + $0xe38] sm:$0xff]
    %v2105 = vld [vmem:[%s2 + $0xe40] sm:$0xff]
    %v2106 = vld [vmem:[%s2 + $0xe48] sm:$0xff]
    %v2107 = vld [vmem:[%s2 + $0xe50] sm:$0xff]
    %v2108 = vld [vmem:[%s2 + $0xe58] sm:$0xff]
    %v2109 = vld [vmem:[%s2 + $0xe60] sm:$0xff]
    %v2110 = vld [vmem:[%s2 + $0xe68] sm:$0xff]
    %v2111 = vld [vmem:[%s2 + $0xe70] sm:$0xff]
    %v2112 = vld [vmem:[%s2 + $0xe78] sm:$0xff]
    %v2113 = vld [vmem:[%s2 + $0xe80] sm:$0xff]
    %v2114 = vld [vmem:[%s2 + $0xe88] sm:$0xff]
    %v2115 = vld [vmem:[%s2 + $0xe90] sm:$0xff]
    %v2116 = vld [vmem:[%s2 + $0xe98] sm:$0xff]
    %v2117 = vld [vmem:[%s2 + $0xea0] sm:$0xff]
    %v2118 = vld [vmem:[%s2 + $0xea8] sm:$0xff]
    %v2119 = vld [vmem:[%s2 + $0xeb0] sm:$0xff]
    %v2120 = vld [vmem:[%s2 + $0xeb8] sm:$0xff]
    %v2121 = vld [vmem:[%s2 + $0xec0] sm:$0xff]
    %v2122 = vld [vmem:[%s2 + $0xec8] sm:$0xff]
    %v2123 = vld [vmem:[%s2 + $0xed0] sm:$0xff]
    %v2124 = vld [vmem:[%s2 + $0xed8] sm:$0xff]
    %v2125 = vld [vmem:[%s2 + $0xee0] sm:$0xff]
    %v2126 = vld [vmem:[%s2 + $0xee8] sm:$0xff]
    %v2127 = vld [vmem:[%s2 + $0xef0] sm:$0xff]
    %v2128 = vld [vmem:[%s2 + $0xef8] sm:$0xff]
    %v2129 = vld [vmem:[%s2 + $0xf00] sm:$0xff]
    %v2130 = vld [vmem:[%s2 + $0xf08] sm:$0xff]
    %v2131 = vld [vmem:[%s2 + $0xf10] sm:$0xff]
    %v2132 = vld [vmem:[%s2 + $0xf18] sm:$0xff]
    %v2133 = vld [vmem:[%s2 + $0xf20] sm:$0xff]
    %v2134 = vld [vmem:[%s2 + $0xf28] sm:$0xff]
    %v2135 = vld [vmem:[%s2 + $0xf30] sm:$0xff]
    %v2136 = vld [vmem:[%s2 + $0xf38] sm:$0xff]
    %v2137 = vld [vmem:[%s2 + $0xf40] sm:$0xff]
    %v2138 = vld [vmem:[%s2 + $0xf48] sm:$0xff]
    %v2139 = vld [vmem:[%s2 + $0xf50] sm:$0xff]
    %v2140 = vld [vmem:[%s2 + $0xf58] sm:$0xff]
    %v2141 = vld [vmem:[%s2 + $0xf60] sm:$0xff]
    %v2142 = vld [vmem:[%s2 + $0xf68] sm:$0xff]
    %v2143 = vld [vmem:[%s2 + $0xf70] sm:$0xff]
    %v2144 = vld [vmem:[%s2 + $0xf78] sm:$0xff]
    %v2145 = vld [vmem:[%s2 + $0xf80] sm:$0xff]
    %v2146 = vld [vmem:[%s2 + $0xf88] sm:$0xff]
    %v2147 = vld [vmem:[%s2 + $0xf90] sm:$0xff]
    %v2148 = vld [vmem:[%s2 + $0xf98] sm:$0xff]
    %v2149 = vld [vmem:[%s2 + $0xfa0] sm:$0xff]
    %v2150 = vld [vmem:[%s2 + $0xfa8] sm:$0xff]
    %v2151 = vld [vmem:[%s2 + $0xfb0] sm:$0xff]
    %v2152 = vld [vmem:[%s2 + $0xfb8] sm:$0xff]
    %v2153 = vld [vmem:[%s2 + $0xfc0] sm:$0xff]
    %v2154 = vld [vmem:[%s2 + $0xfc8] sm:$0xff]
    %v2155 = vld [vmem:[%s2 + $0xfd0] sm:$0xff]
    %v2156 = vld [vmem:[%s2 + $0xfd8] sm:$0xff]
    %v2157 = vld [vmem:[%s2 + $0xfe0] sm:$0xff]
    %v2158 = vld [vmem:[%s2 + $0xfe8] sm:$0xff]
    %v2159 = vld [vmem:[%s2 + $0xff0] sm:$0xff]
    %v2160 = vld [vmem:[%s2 + $0xff8] sm:$0xff]
    %v2673 = vunpack.c.l.b16 %v1649
    %v2674 = vunpack.c.h.b16 %v1649
    %v2675 = vunpack.c.l.b16 %v1650
    %v2676 = vunpack.c.h.b16 %v1650
    %v2677 = vunpack.c.l.b16 %v1651
    %v2678 = vunpack.c.h.b16 %v1651
    %v2679 = vunpack.c.l.b16 %v1652
    %v2680 = vunpack.c.h.b16 %v1652
    %v2681 = vunpack.c.l.b16 %v1653
    %v2682 = vunpack.c.h.b16 %v1653
    %v2683 = vunpack.c.l.b16 %v1654
    %v2684 = vunpack.c.h.b16 %v1654
    %v2685 = vunpack.c.l.b16 %v1655
    %v2686 = vunpack.c.h.b16 %v1655
    %v2687 = vunpack.c.l.b16 %v1656
    %v2688 = vunpack.c.h.b16 %v1656
    %v2689 = vunpack.c.l.b16 %v1657
    %v2690 = vunpack.c.h.b16 %v1657
    %v2691 = vunpack.c.l.b16 %v1658
    %v2692 = vunpack.c.h.b16 %v1658
    %v2693 = vunpack.c.l.b16 %v1659
    %v2694 = vunpack.c.h.b16 %v1659
    %v2695 = vunpack.c.l.b16 %v1660
    %v2696 = vunpack.c.h.b16 %v1660
    %v2697 = vunpack.c.l.b16 %v1661
    %v2698 = vunpack.c.h.b16 %v1661
    %v2699 = vunpack.c.l.b16 %v1662
    %v2700 = vunpack.c.h.b16 %v1662
    %v2701 = vunpack.c.l.b16 %v1663
    %v2702 = vunpack.c.h.b16 %v1663
    %v2703 = vunpack.c.l.b16 %v1664
    %v2704 = vunpack.c.h.b16 %v1664
    %v2705 = vunpack.c.l.b16 %v1665
    %v2706 = vunpack.c.h.b16 %v1665
    %v2707 = vunpack.c.l.b16 %v1666
    %v2708 = vunpack.c.h.b16 %v1666
    %v2709 = vunpack.c.l.b16 %v1667
    %v2710 = vunpack.c.h.b16 %v1667
    %v2711 = vunpack.c.l.b16 %v1668
    %v2712 = vunpack.c.h.b16 %v1668
    %v2713 = vunpack.c.l.b16 %v1669
    %v2714 = vunpack.c.h.b16 %v1669
    %v2715 = vunpack.c.l.b16 %v1670
    %v2716 = vunpack.c.h.b16 %v1670
    %v2717 = vunpack.c.l.b16 %v1671
    %v2718 = vunpack.c.h.b16 %v1671
    %v2719 = vunpack.c.l.b16 %v1672
    %v2720 = vunpack.c.h.b16 %v1672
    %v2721 = vunpack.c.l.b16 %v1673
    %v2722 = vunpack.c.h.b16 %v1673
    %v2723 = vunpack.c.l.b16 %v1674
    %v2724 = vunpack.c.h.b16 %v1674
    %v2725 = vunpack.c.l.b16 %v1675
    %v2726 = vunpack.c.h.b16 %v1675
    %v2727 = vunpack.c.l.b16 %v1676
    %v2728 = vunpack.c.h.b16 %v1676
    %v2729 = vunpack.c.l.b16 %v1677
    %v2730 = vunpack.c.h.b16 %v1677
    %v2731 = vunpack.c.l.b16 %v1678
    %v2732 = vunpack.c.h.b16 %v1678
    %v2733 = vunpack.c.l.b16 %v1679
    %v2734 = vunpack.c.h.b16 %v1679
    %v2735 = vunpack.c.l.b16 %v1680
    %v2736 = vunpack.c.h.b16 %v1680
    %v2737 = vunpack.c.l.b16 %v1681
    %v2738 = vunpack.c.h.b16 %v1681
    %v2739 = vunpack.c.l.b16 %v1682
    %v2740 = vunpack.c.h.b16 %v1682
    %v2741 = vunpack.c.l.b16 %v1683
    %v2742 = vunpack.c.h.b16 %v1683
    %v2743 = vunpack.c.l.b16 %v1684
    %v2744 = vunpack.c.h.b16 %v1684
    %v2745 = vunpack.c.l.b16 %v1685
    %v2746 = vunpack.c.h.b16 %v1685
    %v2747 = vunpack.c.l.b16 %v1686
    %v2748 = vunpack.c.h.b16 %v1686
    %v2749 = vunpack.c.l.b16 %v1687
    %v2750 = vunpack.c.h.b16 %v1687
    %v2751 = vunpack.c.l.b16 %v1688
    %v2752 = vunpack.c.h.b16 %v1688
    %v2753 = vunpack.c.l.b16 %v1689
    %v2754 = vunpack.c.h.b16 %v1689
    %v2755 = vunpack.c.l.b16 %v1690
    %v2756 = vunpack.c.h.b16 %v1690
    %v2757 = vunpack.c.l.b16 %v1691
    %v2758 = vunpack.c.h.b16 %v1691
    %v2759 = vunpack.c.l.b16 %v1692
    %v2760 = vunpack.c.h.b16 %v1692
    %v2761 = vunpack.c.l.b16 %v1693
    %v2762 = vunpack.c.h.b16 %v1693
    %v2763 = vunpack.c.l.b16 %v1694
    %v2764 = vunpack.c.h.b16 %v1694
    %v2765 = vunpack.c.l.b16 %v1695
    %v2766 = vunpack.c.h.b16 %v1695
    %v2767 = vunpack.c.l.b16 %v1696
    %v2768 = vunpack.c.h.b16 %v1696
    %v2769 = vunpack.c.l.b16 %v1697
    %v2770 = vunpack.c.h.b16 %v1697
    %v2771 = vunpack.c.l.b16 %v1698
    %v2772 = vunpack.c.h.b16 %v1698
    %v2773 = vunpack.c.l.b16 %v1699
    %v2774 = vunpack.c.h.b16 %v1699
    %v2775 = vunpack.c.l.b16 %v1700
    %v2776 = vunpack.c.h.b16 %v1700
    %v2777 = vunpack.c.l.b16 %v1701
    %v2778 = vunpack.c.h.b16 %v1701
    %v2779 = vunpack.c.l.b16 %v1702
    %v2780 = vunpack.c.h.b16 %v1702
    %v2781 = vunpack.c.l.b16 %v1703
    %v2782 = vunpack.c.h.b16 %v1703
    %v2783 = vunpack.c.l.b16 %v1704
    %v2784 = vunpack.c.h.b16 %v1704
    %v2785 = vunpack.c.l.b16 %v1705
    %v2786 = vunpack.c.h.b16 %v1705
    %v2787 = vunpack.c.l.b16 %v1706
    %v2788 = vunpack.c.h.b16 %v1706
    %v2789 = vunpack.c.l.b16 %v1707
    %v2790 = vunpack.c.h.b16 %v1707
    %v2791 = vunpack.c.l.b16 %v1708
    %v2792 = vunpack.c.h.b16 %v1708
    %v2793 = vunpack.c.l.b16 %v1709
    %v2794 = vunpack.c.h.b16 %v1709
    %v2795 = vunpack.c.l.b16 %v1710
    %v2796 = vunpack.c.h.b16 %v1710
    %v2797 = vunpack.c.l.b16 %v1711
    %v2798 = vunpack.c.h.b16 %v1711
    %v2799 = vunpack.c.l.b16 %v1712
    %v2800 = vunpack.c.h.b16 %v1712
    %v2801 = vunpack.c.l.b16 %v1713
    %v2802 = vunpack.c.h.b16 %v1713
    %v2803 = vunpack.c.l.b16 %v1714
    %v2804 = vunpack.c.h.b16 %v1714
    %v2805 = vunpack.c.l.b16 %v1715
    %v2806 = vunpack.c.h.b16 %v1715
    %v2807 = vunpack.c.l.b16 %v1716
    %v2808 = vunpack.c.h.b16 %v1716
    %v2809 = vunpack.c.l.b16 %v1717
    %v2810 = vunpack.c.h.b16 %v1717
    %v2811 = vunpack.c.l.b16 %v1718
    %v2812 = vunpack.c.h.b16 %v1718
    %v2813 = vunpack.c.l.b16 %v1719
    %v2814 = vunpack.c.h.b16 %v1719
    %v2815 = vunpack.c.l.b16 %v1720
    %v2816 = vunpack.c.h.b16 %v1720
    %v2817 = vunpack.c.l.b16 %v1721
    %v2818 = vunpack.c.h.b16 %v1721
    %v2819 = vunpack.c.l.b16 %v1722
    %v2820 = vunpack.c.h.b16 %v1722
    %v2821 = vunpack.c.l.b16 %v1723
    %v2822 = vunpack.c.h.b16 %v1723
    %v2823 = vunpack.c.l.b16 %v1724
    %v2824 = vunpack.c.h.b16 %v1724
    %v2825 = vunpack.c.l.b16 %v1725
    %v2826 = vunpack.c.h.b16 %v1725
    %v2827 = vunpack.c.l.b16 %v1726
    %v2828 = vunpack.c.h.b16 %v1726
    %v2829 = vunpack.c.l.b16 %v1727
    %v2830 = vunpack.c.h.b16 %v1727
    %v2831 = vunpack.c.l.b16 %v1728
    %v2832 = vunpack.c.h.b16 %v1728
    %v2833 = vunpack.c.l.b16 %v1729
    %v2834 = vunpack.c.h.b16 %v1729
    %v2835 = vunpack.c.l.b16 %v1730
    %v2836 = vunpack.c.h.b16 %v1730
    %v2837 = vunpack.c.l.b16 %v1731
    %v2838 = vunpack.c.h.b16 %v1731
    %v2839 = vunpack.c.l.b16 %v1732
    %v2840 = vunpack.c.h.b16 %v1732
    %v2841 = vunpack.c.l.b16 %v1733
    %v2842 = vunpack.c.h.b16 %v1733
    %v2843 = vunpack.c.l.b16 %v1734
    %v2844 = vunpack.c.h.b16 %v1734
    %v2845 = vunpack.c.l.b16 %v1735
    %v2846 = vunpack.c.h.b16 %v1735
    %v2847 = vunpack.c.l.b16 %v1736
    %v2848 = vunpack.c.h.b16 %v1736
    %v2849 = vunpack.c.l.b16 %v1737
    %v2850 = vunpack.c.h.b16 %v1737
    %v2851 = vunpack.c.l.b16 %v1738
    %v2852 = vunpack.c.h.b16 %v1738
    %v2853 = vunpack.c.l.b16 %v1739
    %v2854 = vunpack.c.h.b16 %v1739
    %v2855 = vunpack.c.l.b16 %v1740
    %v2856 = vunpack.c.h.b16 %v1740
    %v2857 = vunpack.c.l.b16 %v1741
    %v2858 = vunpack.c.h.b16 %v1741
    %v2859 = vunpack.c.l.b16 %v1742
    %v2860 = vunpack.c.h.b16 %v1742
    %v2861 = vunpack.c.l.b16 %v1743
    %v2862 = vunpack.c.h.b16 %v1743
    %v2863 = vunpack.c.l.b16 %v1744
    %v2864 = vunpack.c.h.b16 %v1744
    %v2865 = vunpack.c.l.b16 %v1745
    %v2866 = vunpack.c.h.b16 %v1745
    %v2867 = vunpack.c.l.b16 %v1746
    %v2868 = vunpack.c.h.b16 %v1746
    %v2869 = vunpack.c.l.b16 %v1747
    %v2870 = vunpack.c.h.b16 %v1747
    %v2871 = vunpack.c.l.b16 %v1748
    %v2872 = vunpack.c.h.b16 %v1748
    %v2873 = vunpack.c.l.b16 %v1749
    %v2874 = vunpack.c.h.b16 %v1749
    %v2875 = vunpack.c.l.b16 %v1750
    %v2876 = vunpack.c.h.b16 %v1750
    %v2877 = vunpack.c.l.b16 %v1751
    %v2878 = vunpack.c.h.b16 %v1751
    %v2879 = vunpack.c.l.b16 %v1752
    %v2880 = vunpack.c.h.b16 %v1752
    %v2881 = vunpack.c.l.b16 %v1753
    %v2882 = vunpack.c.h.b16 %v1753
    %v2883 = vunpack.c.l.b16 %v1754
    %v2884 = vunpack.c.h.b16 %v1754
    %v2885 = vunpack.c.l.b16 %v1755
    %v2886 = vunpack.c.h.b16 %v1755
    %v2887 = vunpack.c.l.b16 %v1756
    %v2888 = vunpack.c.h.b16 %v1756
    %v2889 = vunpack.c.l.b16 %v1757
    %v2890 = vunpack.c.h.b16 %v1757
    %v2891 = vunpack.c.l.b16 %v1758
    %v2892 = vunpack.c.h.b16 %v1758
    %v2893 = vunpack.c.l.b16 %v1759
    %v2894 = vunpack.c.h.b16 %v1759
    %v2895 = vunpack.c.l.b16 %v1760
    %v2896 = vunpack.c.h.b16 %v1760
    %v2897 = vunpack.c.l.b16 %v1761
    %v2898 = vunpack.c.h.b16 %v1761
    %v2899 = vunpack.c.l.b16 %v1762
    %v2900 = vunpack.c.h.b16 %v1762
    %v2901 = vunpack.c.l.b16 %v1763
    %v2902 = vunpack.c.h.b16 %v1763
    %v2903 = vunpack.c.l.b16 %v1764
    %v2904 = vunpack.c.h.b16 %v1764
    %v2905 = vunpack.c.l.b16 %v1765
    %v2906 = vunpack.c.h.b16 %v1765
    %v2907 = vunpack.c.l.b16 %v1766
    %v2908 = vunpack.c.h.b16 %v1766
    %v2909 = vunpack.c.l.b16 %v1767
    %v2910 = vunpack.c.h.b16 %v1767
    %v2911 = vunpack.c.l.b16 %v1768
    %v2912 = vunpack.c.h.b16 %v1768
    %v2913 = vunpack.c.l.b16 %v1769
    %v2914 = vunpack.c.h.b16 %v1769
    %v2915 = vunpack.c.l.b16 %v1770
    %v2916 = vunpack.c.h.b16 %v1770
    %v2917 = vunpack.c.l.b16 %v1771
    %v2918 = vunpack.c.h.b16 %v1771
    %v2919 = vunpack.c.l.b16 %v1772
    %v2920 = vunpack.c.h.b16 %v1772
    %v2921 = vunpack.c.l.b16 %v1773
    %v2922 = vunpack.c.h.b16 %v1773
    %v2923 = vunpack.c.l.b16 %v1774
    %v2924 = vunpack.c.h.b16 %v1774
    %v2925 = vunpack.c.l.b16 %v1775
    %v2926 = vunpack.c.h.b16 %v1775
    %v2927 = vunpack.c.l.b16 %v1776
    %v2928 = vunpack.c.h.b16 %v1776
    %v2929 = vunpack.c.l.b16 %v1777
    %v2930 = vunpack.c.h.b16 %v1777
    %v2931 = vunpack.c.l.b16 %v1778
    %v2932 = vunpack.c.h.b16 %v1778
    %v2933 = vunpack.c.l.b16 %v1779
    %v2934 = vunpack.c.h.b16 %v1779
    %v2935 = vunpack.c.l.b16 %v1780
    %v2936 = vunpack.c.h.b16 %v1780
    %v2937 = vunpack.c.l.b16 %v1781
    %v2938 = vunpack.c.h.b16 %v1781
    %v2939 = vunpack.c.l.b16 %v1782
    %v2940 = vunpack.c.h.b16 %v1782
    %v2941 = vunpack.c.l.b16 %v1783
    %v2942 = vunpack.c.h.b16 %v1783
    %v2943 = vunpack.c.l.b16 %v1784
    %v2944 = vunpack.c.h.b16 %v1784
    %v2945 = vunpack.c.l.b16 %v1785
    %v2946 = vunpack.c.h.b16 %v1785
    %v2947 = vunpack.c.l.b16 %v1786
    %v2948 = vunpack.c.h.b16 %v1786
    %v2949 = vunpack.c.l.b16 %v1787
    %v2950 = vunpack.c.h.b16 %v1787
    %v2951 = vunpack.c.l.b16 %v1788
    %v2952 = vunpack.c.h.b16 %v1788
    %v2953 = vunpack.c.l.b16 %v1789
    %v2954 = vunpack.c.h.b16 %v1789
    %v2955 = vunpack.c.l.b16 %v1790
    %v2956 = vunpack.c.h.b16 %v1790
    %v2957 = vunpack.c.l.b16 %v1791
    %v2958 = vunpack.c.h.b16 %v1791
    %v2959 = vunpack.c.l.b16 %v1792
    %v2960 = vunpack.c.h.b16 %v1792
    %v2961 = vunpack.c.l.b16 %v1793
    %v2962 = vunpack.c.h.b16 %v1793
    %v2963 = vunpack.c.l.b16 %v1794
    %v2964 = vunpack.c.h.b16 %v1794
    %v2965 = vunpack.c.l.b16 %v1795
    %v2966 = vunpack.c.h.b16 %v1795
    %v2967 = vunpack.c.l.b16 %v1796
    %v2968 = vunpack.c.h.b16 %v1796
    %v2969 = vunpack.c.l.b16 %v1797
    %v2970 = vunpack.c.h.b16 %v1797
    %v2971 = vunpack.c.l.b16 %v1798
    %v2972 = vunpack.c.h.b16 %v1798
    %v2973 = vunpack.c.l.b16 %v1799
    %v2974 = vunpack.c.h.b16 %v1799
    %v2975 = vunpack.c.l.b16 %v1800
    %v2976 = vunpack.c.h.b16 %v1800
    %v2977 = vunpack.c.l.b16 %v1801
    %v2978 = vunpack.c.h.b16 %v1801
    %v2979 = vunpack.c.l.b16 %v1802
    %v2980 = vunpack.c.h.b16 %v1802
    %v2981 = vunpack.c.l.b16 %v1803
    %v2982 = vunpack.c.h.b16 %v1803
    %v2983 = vunpack.c.l.b16 %v1804
    %v2984 = vunpack.c.h.b16 %v1804
    %v2985 = vunpack.c.l.b16 %v1805
    %v2986 = vunpack.c.h.b16 %v1805
    %v2987 = vunpack.c.l.b16 %v1806
    %v2988 = vunpack.c.h.b16 %v1806
    %v2989 = vunpack.c.l.b16 %v1807
    %v2990 = vunpack.c.h.b16 %v1807
    %v2991 = vunpack.c.l.b16 %v1808
    %v2992 = vunpack.c.h.b16 %v1808
    %v2993 = vunpack.c.l.b16 %v1809
    %v2994 = vunpack.c.h.b16 %v1809
    %v2995 = vunpack.c.l.b16 %v1810
    %v2996 = vunpack.c.h.b16 %v1810
    %v2997 = vunpack.c.l.b16 %v1811
    %v2998 = vunpack.c.h.b16 %v1811
    %v2999 = vunpack.c.l.b16 %v1812
    %v3000 = vunpack.c.h.b16 %v1812
    %v3001 = vunpack.c.l.b16 %v1813
    %v3002 = vunpack.c.h.b16 %v1813
    %v3003 = vunpack.c.l.b16 %v1814
    %v3004 = vunpack.c.h.b16 %v1814
    %v3005 = vunpack.c.l.b16 %v1815
    %v3006 = vunpack.c.h.b16 %v1815
    %v3007 = vunpack.c.l.b16 %v1816
    %v3008 = vunpack.c.h.b16 %v1816
    %v3009 = vunpack.c.l.b16 %v1817
    %v3010 = vunpack.c.h.b16 %v1817
    %v3011 = vunpack.c.l.b16 %v1818
    %v3012 = vunpack.c.h.b16 %v1818
    %v3013 = vunpack.c.l.b16 %v1819
    %v3014 = vunpack.c.h.b16 %v1819
    %v3015 = vunpack.c.l.b16 %v1820
    %v3016 = vunpack.c.h.b16 %v1820
    %v3017 = vunpack.c.l.b16 %v1821
    %v3018 = vunpack.c.h.b16 %v1821
    %v3019 = vunpack.c.l.b16 %v1822
    %v3020 = vunpack.c.h.b16 %v1822
    %v3021 = vunpack.c.l.b16 %v1823
    %v3022 = vunpack.c.h.b16 %v1823
    %v3023 = vunpack.c.l.b16 %v1824
    %v3024 = vunpack.c.h.b16 %v1824
    %v3025 = vunpack.c.l.b16 %v1825
    %v3026 = vunpack.c.h.b16 %v1825
    %v3027 = vunpack.c.l.b16 %v1826
    %v3028 = vunpack.c.h.b16 %v1826
    %v3029 = vunpack.c.l.b16 %v1827
    %v3030 = vunpack.c.h.b16 %v1827
    %v3031 = vunpack.c.l.b16 %v1828
    %v3032 = vunpack.c.h.b16 %v1828
    %v3033 = vunpack.c.l.b16 %v1829
    %v3034 = vunpack.c.h.b16 %v1829
    %v3035 = vunpack.c.l.b16 %v1830
    %v3036 = vunpack.c.h.b16 %v1830
    %v3037 = vunpack.c.l.b16 %v1831
    %v3038 = vunpack.c.h.b16 %v1831
    %v3039 = vunpack.c.l.b16 %v1832
    %v3040 = vunpack.c.h.b16 %v1832
    %v3041 = vunpack.c.l.b16 %v1833
    %v3042 = vunpack.c.h.b16 %v1833
    %v3043 = vunpack.c.l.b16 %v1834
    %v3044 = vunpack.c.h.b16 %v1834
    %v3045 = vunpack.c.l.b16 %v1835
    %v3046 = vunpack.c.h.b16 %v1835
    %v3047 = vunpack.c.l.b16 %v1836
    %v3048 = vunpack.c.h.b16 %v1836
    %v3049 = vunpack.c.l.b16 %v1837
    %v3050 = vunpack.c.h.b16 %v1837
    %v3051 = vunpack.c.l.b16 %v1838
    %v3052 = vunpack.c.h.b16 %v1838
    %v3053 = vunpack.c.l.b16 %v1839
    %v3054 = vunpack.c.h.b16 %v1839
    %v3055 = vunpack.c.l.b16 %v1840
    %v3056 = vunpack.c.h.b16 %v1840
    %v3057 = vunpack.c.l.b16 %v1841
    %v3058 = vunpack.c.h.b16 %v1841
    %v3059 = vunpack.c.l.b16 %v1842
    %v3060 = vunpack.c.h.b16 %v1842
    %v3061 = vunpack.c.l.b16 %v1843
    %v3062 = vunpack.c.h.b16 %v1843
    %v3063 = vunpack.c.l.b16 %v1844
    %v3064 = vunpack.c.h.b16 %v1844
    %v3065 = vunpack.c.l.b16 %v1845
    %v3066 = vunpack.c.h.b16 %v1845
    %v3067 = vunpack.c.l.b16 %v1846
    %v3068 = vunpack.c.h.b16 %v1846
    %v3069 = vunpack.c.l.b16 %v1847
    %v3070 = vunpack.c.h.b16 %v1847
    %v3071 = vunpack.c.l.b16 %v1848
    %v3072 = vunpack.c.h.b16 %v1848
    %v3073 = vunpack.c.l.b16 %v1849
    %v3074 = vunpack.c.h.b16 %v1849
    %v3075 = vunpack.c.l.b16 %v1850
    %v3076 = vunpack.c.h.b16 %v1850
    %v3077 = vunpack.c.l.b16 %v1851
    %v3078 = vunpack.c.h.b16 %v1851
    %v3079 = vunpack.c.l.b16 %v1852
    %v3080 = vunpack.c.h.b16 %v1852
    %v3081 = vunpack.c.l.b16 %v1853
    %v3082 = vunpack.c.h.b16 %v1853
    %v3083 = vunpack.c.l.b16 %v1854
    %v3084 = vunpack.c.h.b16 %v1854
    %v3085 = vunpack.c.l.b16 %v1855
    %v3086 = vunpack.c.h.b16 %v1855
    %v3087 = vunpack.c.l.b16 %v1856
    %v3088 = vunpack.c.h.b16 %v1856
    %v3089 = vunpack.c.l.b16 %v1857
    %v3090 = vunpack.c.h.b16 %v1857
    %v3091 = vunpack.c.l.b16 %v1858
    %v3092 = vunpack.c.h.b16 %v1858
    %v3093 = vunpack.c.l.b16 %v1859
    %v3094 = vunpack.c.h.b16 %v1859
    %v3095 = vunpack.c.l.b16 %v1860
    %v3096 = vunpack.c.h.b16 %v1860
    %v3097 = vunpack.c.l.b16 %v1861
    %v3098 = vunpack.c.h.b16 %v1861
    %v3099 = vunpack.c.l.b16 %v1862
    %v3100 = vunpack.c.h.b16 %v1862
    %v3101 = vunpack.c.l.b16 %v1863
    %v3102 = vunpack.c.h.b16 %v1863
    %v3103 = vunpack.c.l.b16 %v1864
    %v3104 = vunpack.c.h.b16 %v1864
    %v3105 = vunpack.c.l.b16 %v1865
    %v3106 = vunpack.c.h.b16 %v1865
    %v3107 = vunpack.c.l.b16 %v1866
    %v3108 = vunpack.c.h.b16 %v1866
    %v3109 = vunpack.c.l.b16 %v1867
    %v3110 = vunpack.c.h.b16 %v1867
    %v3111 = vunpack.c.l.b16 %v1868
    %v3112 = vunpack.c.h.b16 %v1868
    %v3113 = vunpack.c.l.b16 %v1869
    %v3114 = vunpack.c.h.b16 %v1869
    %v3115 = vunpack.c.l.b16 %v1870
    %v3116 = vunpack.c.h.b16 %v1870
    %v3117 = vunpack.c.l.b16 %v1871
    %v3118 = vunpack.c.h.b16 %v1871
    %v3119 = vunpack.c.l.b16 %v1872
    %v3120 = vunpack.c.h.b16 %v1872
    %v3121 = vunpack.c.l.b16 %v1873
    %v3122 = vunpack.c.h.b16 %v1873
    %v3123 = vunpack.c.l.b16 %v1874
    %v3124 = vunpack.c.h.b16 %v1874
    %v3125 = vunpack.c.l.b16 %v1875
    %v3126 = vunpack.c.h.b16 %v1875
    %v3127 = vunpack.c.l.b16 %v1876
    %v3128 = vunpack.c.h.b16 %v1876
    %v3129 = vunpack.c.l.b16 %v1877
    %v3130 = vunpack.c.h.b16 %v1877
    %v3131 = vunpack.c.l.b16 %v1878
    %v3132 = vunpack.c.h.b16 %v1878
    %v3133 = vunpack.c.l.b16 %v1879
    %v3134 = vunpack.c.h.b16 %v1879
    %v3135 = vunpack.c.l.b16 %v1880
    %v3136 = vunpack.c.h.b16 %v1880
    %v3137 = vunpack.c.l.b16 %v1881
    %v3138 = vunpack.c.h.b16 %v1881
    %v3139 = vunpack.c.l.b16 %v1882
    %v3140 = vunpack.c.h.b16 %v1882
    %v3141 = vunpack.c.l.b16 %v1883
    %v3142 = vunpack.c.h.b16 %v1883
    %v3143 = vunpack.c.l.b16 %v1884
    %v3144 = vunpack.c.h.b16 %v1884
    %v3145 = vunpack.c.l.b16 %v1885
    %v3146 = vunpack.c.h.b16 %v1885
    %v3147 = vunpack.c.l.b16 %v1886
    %v3148 = vunpack.c.h.b16 %v1886
    %v3149 = vunpack.c.l.b16 %v1887
    %v3150 = vunpack.c.h.b16 %v1887
    %v3151 = vunpack.c.l.b16 %v1888
    %v3152 = vunpack.c.h.b16 %v1888
    %v3153 = vunpack.c.l.b16 %v1889
    %v3154 = vunpack.c.h.b16 %v1889
    %v3155 = vunpack.c.l.b16 %v1890
    %v3156 = vunpack.c.h.b16 %v1890
    %v3157 = vunpack.c.l.b16 %v1891
    %v3158 = vunpack.c.h.b16 %v1891
    %v3159 = vunpack.c.l.b16 %v1892
    %v3160 = vunpack.c.h.b16 %v1892
    %v3161 = vunpack.c.l.b16 %v1893
    %v3162 = vunpack.c.h.b16 %v1893
    %v3163 = vunpack.c.l.b16 %v1894
    %v3164 = vunpack.c.h.b16 %v1894
    %v3165 = vunpack.c.l.b16 %v1895
    %v3166 = vunpack.c.h.b16 %v1895
    %v3167 = vunpack.c.l.b16 %v1896
    %v3168 = vunpack.c.h.b16 %v1896
    %v3169 = vunpack.c.l.b16 %v1897
    %v3170 = vunpack.c.h.b16 %v1897
    %v3171 = vunpack.c.l.b16 %v1898
    %v3172 = vunpack.c.h.b16 %v1898
    %v3173 = vunpack.c.l.b16 %v1899
    %v3174 = vunpack.c.h.b16 %v1899
    %v3175 = vunpack.c.l.b16 %v1900
    %v3176 = vunpack.c.h.b16 %v1900
    %v3177 = vunpack.c.l.b16 %v1901
    %v3178 = vunpack.c.h.b16 %v1901
    %v3179 = vunpack.c.l.b16 %v1902
    %v3180 = vunpack.c.h.b16 %v1902
    %v3181 = vunpack.c.l.b16 %v1903
    %v3182 = vunpack.c.h.b16 %v1903
    %v3183 = vunpack.c.l.b16 %v1904
    %v3184 = vunpack.c.h.b16 %v1904
    %v3185 = vunpack.c.l.b16 %v1905
    %v3186 = vunpack.c.h.b16 %v1905
    %v3187 = vunpack.c.l.b16 %v1906
    %v3188 = vunpack.c.h.b16 %v1906
    %v3189 = vunpack.c.l.b16 %v1907
    %v3190 = vunpack.c.h.b16 %v1907
    %v3191 = vunpack.c.l.b16 %v1908
    %v3192 = vunpack.c.h.b16 %v1908
    %v3193 = vunpack.c.l.b16 %v1909
    %v3194 = vunpack.c.h.b16 %v1909
    %v3195 = vunpack.c.l.b16 %v1910
    %v3196 = vunpack.c.h.b16 %v1910
    %v3197 = vunpack.c.l.b16 %v1911
    %v3198 = vunpack.c.h.b16 %v1911
    %v3199 = vunpack.c.l.b16 %v1912
    %v3200 = vunpack.c.h.b16 %v1912
    %v3201 = vunpack.c.l.b16 %v1913
    %v3202 = vunpack.c.h.b16 %v1913
    %v3203 = vunpack.c.l.b16 %v1914
    %v3204 = vunpack.c.h.b16 %v1914
    %v3205 = vunpack.c.l.b16 %v1915
    %v3206 = vunpack.c.h.b16 %v1915
    %v3207 = vunpack.c.l.b16 %v1916
    %v3208 = vunpack.c.h.b16 %v1916
    %v3209 = vunpack.c.l.b16 %v1917
    %v3210 = vunpack.c.h.b16 %v1917
    %v3211 = vunpack.c.l.b16 %v1918
    %v3212 = vunpack.c.h.b16 %v1918
    %v3213 = vunpack.c.l.b16 %v1919
    %v3214 = vunpack.c.h.b16 %v1919
    %v3215 = vunpack.c.l.b16 %v1920
    %v3216 = vunpack.c.h.b16 %v1920
    %v3217 = vunpack.c.l.b16 %v1921
    %v3218 = vunpack.c.h.b16 %v1921
    %v3219 = vunpack.c.l.b16 %v1922
    %v3220 = vunpack.c.h.b16 %v1922
    %v3221 = vunpack.c.l.b16 %v1923
    %v3222 = vunpack.c.h.b16 %v1923
    %v3223 = vunpack.c.l.b16 %v1924
    %v3224 = vunpack.c.h.b16 %v1924
    %v3225 = vunpack.c.l.b16 %v1925
    %v3226 = vunpack.c.h.b16 %v1925
    %v3227 = vunpack.c.l.b16 %v1926
    %v3228 = vunpack.c.h.b16 %v1926
    %v3229 = vunpack.c.l.b16 %v1927
    %v3230 = vunpack.c.h.b16 %v1927
    %v3231 = vunpack.c.l.b16 %v1928
    %v3232 = vunpack.c.h.b16 %v1928
    %v3233 = vunpack.c.l.b16 %v1929
    %v3234 = vunpack.c.h.b16 %v1929
    %v3235 = vunpack.c.l.b16 %v1930
    %v3236 = vunpack.c.h.b16 %v1930
    %v3237 = vunpack.c.l.b16 %v1931
    %v3238 = vunpack.c.h.b16 %v1931
    %v3239 = vunpack.c.l.b16 %v1932
    %v3240 = vunpack.c.h.b16 %v1932
    %v3241 = vunpack.c.l.b16 %v1933
    %v3242 = vunpack.c.h.b16 %v1933
    %v3243 = vunpack.c.l.b16 %v1934
    %v3244 = vunpack.c.h.b16 %v1934
    %v3245 = vunpack.c.l.b16 %v1935
    %v3246 = vunpack.c.h.b16 %v1935
    %v3247 = vunpack.c.l.b16 %v1936
    %v3248 = vunpack.c.h.b16 %v1936
    %v3249 = vunpack.c.l.b16 %v1937
    %v3250 = vunpack.c.h.b16 %v1937
    %v3251 = vunpack.c.l.b16 %v1938
    %v3252 = vunpack.c.h.b16 %v1938
    %v3253 = vunpack.c.l.b16 %v1939
    %v3254 = vunpack.c.h.b16 %v1939
    %v3255 = vunpack.c.l.b16 %v1940
    %v3256 = vunpack.c.h.b16 %v1940
    %v3257 = vunpack.c.l.b16 %v1941
    %v3258 = vunpack.c.h.b16 %v1941
    %v3259 = vunpack.c.l.b16 %v1942
    %v3260 = vunpack.c.h.b16 %v1942
    %v3261 = vunpack.c.l.b16 %v1943
    %v3262 = vunpack.c.h.b16 %v1943
    %v3263 = vunpack.c.l.b16 %v1944
    %v3264 = vunpack.c.h.b16 %v1944
    %v3265 = vunpack.c.l.b16 %v1945
    %v3266 = vunpack.c.h.b16 %v1945
    %v3267 = vunpack.c.l.b16 %v1946
    %v3268 = vunpack.c.h.b16 %v1946
    %v3269 = vunpack.c.l.b16 %v1947
    %v3270 = vunpack.c.h.b16 %v1947
    %v3271 = vunpack.c.l.b16 %v1948
    %v3272 = vunpack.c.h.b16 %v1948
    %v3273 = vunpack.c.l.b16 %v1949
    %v3274 = vunpack.c.h.b16 %v1949
    %v3275 = vunpack.c.l.b16 %v1950
    %v3276 = vunpack.c.h.b16 %v1950
    %v3277 = vunpack.c.l.b16 %v1951
    %v3278 = vunpack.c.h.b16 %v1951
    %v3279 = vunpack.c.l.b16 %v1952
    %v3280 = vunpack.c.h.b16 %v1952
    %v3281 = vunpack.c.l.b16 %v1953
    %v3282 = vunpack.c.h.b16 %v1953
    %v3283 = vunpack.c.l.b16 %v1954
    %v3284 = vunpack.c.h.b16 %v1954
    %v3285 = vunpack.c.l.b16 %v1955
    %v3286 = vunpack.c.h.b16 %v1955
    %v3287 = vunpack.c.l.b16 %v1956
    %v3288 = vunpack.c.h.b16 %v1956
    %v3289 = vunpack.c.l.b16 %v1957
    %v3290 = vunpack.c.h.b16 %v1957
    %v3291 = vunpack.c.l.b16 %v1958
    %v3292 = vunpack.c.h.b16 %v1958
    %v3293 = vunpack.c.l.b16 %v1959
    %v3294 = vunpack.c.h.b16 %v1959
    %v3295 = vunpack.c.l.b16 %v1960
    %v3296 = vunpack.c.h.b16 %v1960
    %v3297 = vunpack.c.l.b16 %v1961
    %v3298 = vunpack.c.h.b16 %v1961
    %v3299 = vunpack.c.l.b16 %v1962
    %v3300 = vunpack.c.h.b16 %v1962
    %v3301 = vunpack.c.l.b16 %v1963
    %v3302 = vunpack.c.h.b16 %v1963
    %v3303 = vunpack.c.l.b16 %v1964
    %v3304 = vunpack.c.h.b16 %v1964
    %v3305 = vunpack.c.l.b16 %v1965
    %v3306 = vunpack.c.h.b16 %v1965
    %v3307 = vunpack.c.l.b16 %v1966
    %v3308 = vunpack.c.h.b16 %v1966
    %v3309 = vunpack.c.l.b16 %v1967
    %v3310 = vunpack.c.h.b16 %v1967
    %v3311 = vunpack.c.l.b16 %v1968
    %v3312 = vunpack.c.h.b16 %v1968
    %v3313 = vunpack.c.l.b16 %v1969
    %v3314 = vunpack.c.h.b16 %v1969
    %v3315 = vunpack.c.l.b16 %v1970
    %v3316 = vunpack.c.h.b16 %v1970
    %v3317 = vunpack.c.l.b16 %v1971
    %v3318 = vunpack.c.h.b16 %v1971
    %v3319 = vunpack.c.l.b16 %v1972
    %v3320 = vunpack.c.h.b16 %v1972
    %v3321 = vunpack.c.l.b16 %v1973
    %v3322 = vunpack.c.h.b16 %v1973
    %v3323 = vunpack.c.l.b16 %v1974
    %v3324 = vunpack.c.h.b16 %v1974
    %v3325 = vunpack.c.l.b16 %v1975
    %v3326 = vunpack.c.h.b16 %v1975
    %v3327 = vunpack.c.l.b16 %v1976
    %v3328 = vunpack.c.h.b16 %v1976
    %v3329 = vunpack.c.l.b16 %v1977
    %v3330 = vunpack.c.h.b16 %v1977
    %v3331 = vunpack.c.l.b16 %v1978
    %v3332 = vunpack.c.h.b16 %v1978
    %v3333 = vunpack.c.l.b16 %v1979
    %v3334 = vunpack.c.h.b16 %v1979
    %v3335 = vunpack.c.l.b16 %v1980
    %v3336 = vunpack.c.h.b16 %v1980
    %v3337 = vunpack.c.l.b16 %v1981
    %v3338 = vunpack.c.h.b16 %v1981
    %v3339 = vunpack.c.l.b16 %v1982
    %v3340 = vunpack.c.h.b16 %v1982
    %v3341 = vunpack.c.l.b16 %v1983
    %v3342 = vunpack.c.h.b16 %v1983
    %v3343 = vunpack.c.l.b16 %v1984
    %v3344 = vunpack.c.h.b16 %v1984
    %v3345 = vunpack.c.l.b16 %v1985
    %v3346 = vunpack.c.h.b16 %v1985
    %v3347 = vunpack.c.l.b16 %v1986
    %v3348 = vunpack.c.h.b16 %v1986
    %v3349 = vunpack.c.l.b16 %v1987
    %v3350 = vunpack.c.h.b16 %v1987
    %v3351 = vunpack.c.l.b16 %v1988
    %v3352 = vunpack.c.h.b16 %v1988
    %v3353 = vunpack.c.l.b16 %v1989
    %v3354 = vunpack.c.h.b16 %v1989
    %v3355 = vunpack.c.l.b16 %v1990
    %v3356 = vunpack.c.h.b16 %v1990
    %v3357 = vunpack.c.l.b16 %v1991
    %v3358 = vunpack.c.h.b16 %v1991
    %v3359 = vunpack.c.l.b16 %v1992
    %v3360 = vunpack.c.h.b16 %v1992
    %v3361 = vunpack.c.l.b16 %v1993
    %v3362 = vunpack.c.h.b16 %v1993
    %v3363 = vunpack.c.l.b16 %v1994
    %v3364 = vunpack.c.h.b16 %v1994
    %v3365 = vunpack.c.l.b16 %v1995
    %v3366 = vunpack.c.h.b16 %v1995
    %v3367 = vunpack.c.l.b16 %v1996
    %v3368 = vunpack.c.h.b16 %v1996
    %v3369 = vunpack.c.l.b16 %v1997
    %v3370 = vunpack.c.h.b16 %v1997
    %v3371 = vunpack.c.l.b16 %v1998
    %v3372 = vunpack.c.h.b16 %v1998
    %v3373 = vunpack.c.l.b16 %v1999
    %v3374 = vunpack.c.h.b16 %v1999
    %v3375 = vunpack.c.l.b16 %v2000
    %v3376 = vunpack.c.h.b16 %v2000
    %v3377 = vunpack.c.l.b16 %v2001
    %v3378 = vunpack.c.h.b16 %v2001
    %v3379 = vunpack.c.l.b16 %v2002
    %v3380 = vunpack.c.h.b16 %v2002
    %v3381 = vunpack.c.l.b16 %v2003
    %v3382 = vunpack.c.h.b16 %v2003
    %v3383 = vunpack.c.l.b16 %v2004
    %v3384 = vunpack.c.h.b16 %v2004
    %v3385 = vunpack.c.l.b16 %v2005
    %v3386 = vunpack.c.h.b16 %v2005
    %v3387 = vunpack.c.l.b16 %v2006
    %v3388 = vunpack.c.h.b16 %v2006
    %v3389 = vunpack.c.l.b16 %v2007
    %v3390 = vunpack.c.h.b16 %v2007
    %v3391 = vunpack.c.l.b16 %v2008
    %v3392 = vunpack.c.h.b16 %v2008
    %v3393 = vunpack.c.l.b16 %v2009
    %v3394 = vunpack.c.h.b16 %v2009
    %v3395 = vunpack.c.l.b16 %v2010
    %v3396 = vunpack.c.h.b16 %v2010
    %v3397 = vunpack.c.l.b16 %v2011
    %v3398 = vunpack.c.h.b16 %v2011
    %v3399 = vunpack.c.l.b16 %v2012
    %v3400 = vunpack.c.h.b16 %v2012
    %v3401 = vunpack.c.l.b16 %v2013
    %v3402 = vunpack.c.h.b16 %v2013
    %v3403 = vunpack.c.l.b16 %v2014
    %v3404 = vunpack.c.h.b16 %v2014
    %v3405 = vunpack.c.l.b16 %v2015
    %v3406 = vunpack.c.h.b16 %v2015
    %v3407 = vunpack.c.l.b16 %v2016
    %v3408 = vunpack.c.h.b16 %v2016
    %v3409 = vunpack.c.l.b16 %v2017
    %v3410 = vunpack.c.h.b16 %v2017
    %v3411 = vunpack.c.l.b16 %v2018
    %v3412 = vunpack.c.h.b16 %v2018
    %v3413 = vunpack.c.l.b16 %v2019
    %v3414 = vunpack.c.h.b16 %v2019
    %v3415 = vunpack.c.l.b16 %v2020
    %v3416 = vunpack.c.h.b16 %v2020
    %v3417 = vunpack.c.l.b16 %v2021
    %v3418 = vunpack.c.h.b16 %v2021
    %v3419 = vunpack.c.l.b16 %v2022
    %v3420 = vunpack.c.h.b16 %v2022
    %v3421 = vunpack.c.l.b16 %v2023
    %v3422 = vunpack.c.h.b16 %v2023
    %v3423 = vunpack.c.l.b16 %v2024
    %v3424 = vunpack.c.h.b16 %v2024
    %v3425 = vunpack.c.l.b16 %v2025
    %v3426 = vunpack.c.h.b16 %v2025
    %v3427 = vunpack.c.l.b16 %v2026
    %v3428 = vunpack.c.h.b16 %v2026
    %v3429 = vunpack.c.l.b16 %v2027
    %v3430 = vunpack.c.h.b16 %v2027
    %v3431 = vunpack.c.l.b16 %v2028
    %v3432 = vunpack.c.h.b16 %v2028
    %v3433 = vunpack.c.l.b16 %v2029
    %v3434 = vunpack.c.h.b16 %v2029
    %v3435 = vunpack.c.l.b16 %v2030
    %v3436 = vunpack.c.h.b16 %v2030
    %v3437 = vunpack.c.l.b16 %v2031
    %v3438 = vunpack.c.h.b16 %v2031
    %v3439 = vunpack.c.l.b16 %v2032
    %v3440 = vunpack.c.h.b16 %v2032
    %v3441 = vunpack.c.l.b16 %v2033
    %v3442 = vunpack.c.h.b16 %v2033
    %v3443 = vunpack.c.l.b16 %v2034
    %v3444 = vunpack.c.h.b16 %v2034
    %v3445 = vunpack.c.l.b16 %v2035
    %v3446 = vunpack.c.h.b16 %v2035
    %v3447 = vunpack.c.l.b16 %v2036
    %v3448 = vunpack.c.h.b16 %v2036
    %v3449 = vunpack.c.l.b16 %v2037
    %v3450 = vunpack.c.h.b16 %v2037
    %v3451 = vunpack.c.l.b16 %v2038
    %v3452 = vunpack.c.h.b16 %v2038
    %v3453 = vunpack.c.l.b16 %v2039
    %v3454 = vunpack.c.h.b16 %v2039
    %v3455 = vunpack.c.l.b16 %v2040
    %v3456 = vunpack.c.h.b16 %v2040
    %v3457 = vunpack.c.l.b16 %v2041
    %v3458 = vunpack.c.h.b16 %v2041
    %v3459 = vunpack.c.l.b16 %v2042
    %v3460 = vunpack.c.h.b16 %v2042
    %v3461 = vunpack.c.l.b16 %v2043
    %v3462 = vunpack.c.h.b16 %v2043
    %v3463 = vunpack.c.l.b16 %v2044
    %v3464 = vunpack.c.h.b16 %v2044
    %v3465 = vunpack.c.l.b16 %v2045
    %v3466 = vunpack.c.h.b16 %v2045
    %v3467 = vunpack.c.l.b16 %v2046
    %v3468 = vunpack.c.h.b16 %v2046
    %v3469 = vunpack.c.l.b16 %v2047
    %v3470 = vunpack.c.h.b16 %v2047
    %v3471 = vunpack.c.l.b16 %v2048
    %v3472 = vunpack.c.h.b16 %v2048
    %v3473 = vunpack.c.l.b16 %v2049
    %v3474 = vunpack.c.h.b16 %v2049
    %v3475 = vunpack.c.l.b16 %v2050
    %v3476 = vunpack.c.h.b16 %v2050
    %v3477 = vunpack.c.l.b16 %v2051
    %v3478 = vunpack.c.h.b16 %v2051
    %v3479 = vunpack.c.l.b16 %v2052
    %v3480 = vunpack.c.h.b16 %v2052
    %v3481 = vunpack.c.l.b16 %v2053
    %v3482 = vunpack.c.h.b16 %v2053
    %v3483 = vunpack.c.l.b16 %v2054
    %v3484 = vunpack.c.h.b16 %v2054
    %v3485 = vunpack.c.l.b16 %v2055
    %v3486 = vunpack.c.h.b16 %v2055
    %v3487 = vunpack.c.l.b16 %v2056
    %v3488 = vunpack.c.h.b16 %v2056
    %v3489 = vunpack.c.l.b16 %v2057
    %v3490 = vunpack.c.h.b16 %v2057
    %v3491 = vunpack.c.l.b16 %v2058
    %v3492 = vunpack.c.h.b16 %v2058
    %v3493 = vunpack.c.l.b16 %v2059
    %v3494 = vunpack.c.h.b16 %v2059
    %v3495 = vunpack.c.l.b16 %v2060
    %v3496 = vunpack.c.h.b16 %v2060
    %v3497 = vunpack.c.l.b16 %v2061
    %v3498 = vunpack.c.h.b16 %v2061
    %v3499 = vunpack.c.l.b16 %v2062
    %v3500 = vunpack.c.h.b16 %v2062
    %v3501 = vunpack.c.l.b16 %v2063
    %v3502 = vunpack.c.h.b16 %v2063
    %v3503 = vunpack.c.l.b16 %v2064
    %v3504 = vunpack.c.h.b16 %v2064
    %v3505 = vunpack.c.l.b16 %v2065
    %v3506 = vunpack.c.h.b16 %v2065
    %v3507 = vunpack.c.l.b16 %v2066
    %v3508 = vunpack.c.h.b16 %v2066
    %v3509 = vunpack.c.l.b16 %v2067
    %v3510 = vunpack.c.h.b16 %v2067
    %v3511 = vunpack.c.l.b16 %v2068
    %v3512 = vunpack.c.h.b16 %v2068
    %v3513 = vunpack.c.l.b16 %v2069
    %v3514 = vunpack.c.h.b16 %v2069
    %v3515 = vunpack.c.l.b16 %v2070
    %v3516 = vunpack.c.h.b16 %v2070
    %v3517 = vunpack.c.l.b16 %v2071
    %v3518 = vunpack.c.h.b16 %v2071
    %v3519 = vunpack.c.l.b16 %v2072
    %v3520 = vunpack.c.h.b16 %v2072
    %v3521 = vunpack.c.l.b16 %v2073
    %v3522 = vunpack.c.h.b16 %v2073
    %v3523 = vunpack.c.l.b16 %v2074
    %v3524 = vunpack.c.h.b16 %v2074
    %v3525 = vunpack.c.l.b16 %v2075
    %v3526 = vunpack.c.h.b16 %v2075
    %v3527 = vunpack.c.l.b16 %v2076
    %v3528 = vunpack.c.h.b16 %v2076
    %v3529 = vunpack.c.l.b16 %v2077
    %v3530 = vunpack.c.h.b16 %v2077
    %v3531 = vunpack.c.l.b16 %v2078
    %v3532 = vunpack.c.h.b16 %v2078
    %v3533 = vunpack.c.l.b16 %v2079
    %v3534 = vunpack.c.h.b16 %v2079
    %v3535 = vunpack.c.l.b16 %v2080
    %v3536 = vunpack.c.h.b16 %v2080
    %v3537 = vunpack.c.l.b16 %v2081
    %v3538 = vunpack.c.h.b16 %v2081
    %v3539 = vunpack.c.l.b16 %v2082
    %v3540 = vunpack.c.h.b16 %v2082
    %v3541 = vunpack.c.l.b16 %v2083
    %v3542 = vunpack.c.h.b16 %v2083
    %v3543 = vunpack.c.l.b16 %v2084
    %v3544 = vunpack.c.h.b16 %v2084
    %v3545 = vunpack.c.l.b16 %v2085
    %v3546 = vunpack.c.h.b16 %v2085
    %v3547 = vunpack.c.l.b16 %v2086
    %v3548 = vunpack.c.h.b16 %v2086
    %v3549 = vunpack.c.l.b16 %v2087
    %v3550 = vunpack.c.h.b16 %v2087
    %v3551 = vunpack.c.l.b16 %v2088
    %v3552 = vunpack.c.h.b16 %v2088
    %v3553 = vunpack.c.l.b16 %v2089
    %v3554 = vunpack.c.h.b16 %v2089
    %v3555 = vunpack.c.l.b16 %v2090
    %v3556 = vunpack.c.h.b16 %v2090
    %v3557 = vunpack.c.l.b16 %v2091
    %v3558 = vunpack.c.h.b16 %v2091
    %v3559 = vunpack.c.l.b16 %v2092
    %v3560 = vunpack.c.h.b16 %v2092
    %v3561 = vunpack.c.l.b16 %v2093
    %v3562 = vunpack.c.h.b16 %v2093
    %v3563 = vunpack.c.l.b16 %v2094
    %v3564 = vunpack.c.h.b16 %v2094
    %v3565 = vunpack.c.l.b16 %v2095
    %v3566 = vunpack.c.h.b16 %v2095
    %v3567 = vunpack.c.l.b16 %v2096
    %v3568 = vunpack.c.h.b16 %v2096
    %v3569 = vunpack.c.l.b16 %v2097
    %v3570 = vunpack.c.h.b16 %v2097
    %v3571 = vunpack.c.l.b16 %v2098
    %v3572 = vunpack.c.h.b16 %v2098
    %v3573 = vunpack.c.l.b16 %v2099
    %v3574 = vunpack.c.h.b16 %v2099
    %v3575 = vunpack.c.l.b16 %v2100
    %v3576 = vunpack.c.h.b16 %v2100
    %v3577 = vunpack.c.l.b16 %v2101
    %v3578 = vunpack.c.h.b16 %v2101
    %v3579 = vunpack.c.l.b16 %v2102
    %v3580 = vunpack.c.h.b16 %v2102
    %v3581 = vunpack.c.l.b16 %v2103
    %v3582 = vunpack.c.h.b16 %v2103
    %v3583 = vunpack.c.l.b16 %v2104
    %v3584 = vunpack.c.h.b16 %v2104
    %v3585 = vunpack.c.l.b16 %v2105
    %v3586 = vunpack.c.h.b16 %v2105
    %v3587 = vunpack.c.l.b16 %v2106
    %v3588 = vunpack.c.h.b16 %v2106
    %v3589 = vunpack.c.l.b16 %v2107
    %v3590 = vunpack.c.h.b16 %v2107
    %v3591 = vunpack.c.l.b16 %v2108
    %v3592 = vunpack.c.h.b16 %v2108
    %v3593 = vunpack.c.l.b16 %v2109
    %v3594 = vunpack.c.h.b16 %v2109
    %v3595 = vunpack.c.l.b16 %v2110
    %v3596 = vunpack.c.h.b16 %v2110
    %v3597 = vunpack.c.l.b16 %v2111
    %v3598 = vunpack.c.h.b16 %v2111
    %v3599 = vunpack.c.l.b16 %v2112
    %v3600 = vunpack.c.h.b16 %v2112
    %v3601 = vunpack.c.l.b16 %v2113
    %v3602 = vunpack.c.h.b16 %v2113
    %v3603 = vunpack.c.l.b16 %v2114
    %v3604 = vunpack.c.h.b16 %v2114
    %v3605 = vunpack.c.l.b16 %v2115
    %v3606 = vunpack.c.h.b16 %v2115
    %v3607 = vunpack.c.l.b16 %v2116
    %v3608 = vunpack.c.h.b16 %v2116
    %v3609 = vunpack.c.l.b16 %v2117
    %v3610 = vunpack.c.h.b16 %v2117
    %v3611 = vunpack.c.l.b16 %v2118
    %v3612 = vunpack.c.h.b16 %v2118
    %v3613 = vunpack.c.l.b16 %v2119
    %v3614 = vunpack.c.h.b16 %v2119
    %v3615 = vunpack.c.l.b16 %v2120
    %v3616 = vunpack.c.h.b16 %v2120
    %v3617 = vunpack.c.l.b16 %v2121
    %v3618 = vunpack.c.h.b16 %v2121
    %v3619 = vunpack.c.l.b16 %v2122
    %v3620 = vunpack.c.h.b16 %v2122
    %v3621 = vunpack.c.l.b16 %v2123
    %v3622 = vunpack.c.h.b16 %v2123
    %v3623 = vunpack.c.l.b16 %v2124
    %v3624 = vunpack.c.h.b16 %v2124
    %v3625 = vunpack.c.l.b16 %v2125
    %v3626 = vunpack.c.h.b16 %v2125
    %v3627 = vunpack.c.l.b16 %v2126
    %v3628 = vunpack.c.h.b16 %v2126
    %v3629 = vunpack.c.l.b16 %v2127
    %v3630 = vunpack.c.h.b16 %v2127
    %v3631 = vunpack.c.l.b16 %v2128
    %v3632 = vunpack.c.h.b16 %v2128
    %v3633 = vunpack.c.l.b16 %v2129
    %v3634 = vunpack.c.h.b16 %v2129
    %v3635 = vunpack.c.l.b16 %v2130
    %v3636 = vunpack.c.h.b16 %v2130
    %v3637 = vunpack.c.l.b16 %v2131
    %v3638 = vunpack.c.h.b16 %v2131
    %v3639 = vunpack.c.l.b16 %v2132
    %v3640 = vunpack.c.h.b16 %v2132
    %v3641 = vunpack.c.l.b16 %v2133
    %v3642 = vunpack.c.h.b16 %v2133
    %v3643 = vunpack.c.l.b16 %v2134
    %v3644 = vunpack.c.h.b16 %v2134
    %v3645 = vunpack.c.l.b16 %v2135
    %v3646 = vunpack.c.h.b16 %v2135
    %v3647 = vunpack.c.l.b16 %v2136
    %v3648 = vunpack.c.h.b16 %v2136
    %v3649 = vunpack.c.l.b16 %v2137
    %v3650 = vunpack.c.h.b16 %v2137
    %v3651 = vunpack.c.l.b16 %v2138
    %v3652 = vunpack.c.h.b16 %v2138
    %v3653 = vunpack.c.l.b16 %v2139
    %v3654 = vunpack.c.h.b16 %v2139
    %v3655 = vunpack.c.l.b16 %v2140
    %v3656 = vunpack.c.h.b16 %v2140
    %v3657 = vunpack.c.l.b16 %v2141
    %v3658 = vunpack.c.h.b16 %v2141
    %v3659 = vunpack.c.l.b16 %v2142
    %v3660 = vunpack.c.h.b16 %v2142
    %v3661 = vunpack.c.l.b16 %v2143
    %v3662 = vunpack.c.h.b16 %v2143
    %v3663 = vunpack.c.l.b16 %v2144
    %v3664 = vunpack.c.h.b16 %v2144
    %v3665 = vunpack.c.l.b16 %v2145
    %v3666 = vunpack.c.h.b16 %v2145
    %v3667 = vunpack.c.l.b16 %v2146
    %v3668 = vunpack.c.h.b16 %v2146
    %v3669 = vunpack.c.l.b16 %v2147
    %v3670 = vunpack.c.h.b16 %v2147
    %v3671 = vunpack.c.l.b16 %v2148
    %v3672 = vunpack.c.h.b16 %v2148
    %v3673 = vunpack.c.l.b16 %v2149
    %v3674 = vunpack.c.h.b16 %v2149
    %v3675 = vunpack.c.l.b16 %v2150
    %v3676 = vunpack.c.h.b16 %v2150
    %v3677 = vunpack.c.l.b16 %v2151
    %v3678 = vunpack.c.h.b16 %v2151
    %v3679 = vunpack.c.l.b16 %v2152
    %v3680 = vunpack.c.h.b16 %v2152
    %v3681 = vunpack.c.l.b16 %v2153
    %v3682 = vunpack.c.h.b16 %v2153
    %v3683 = vunpack.c.l.b16 %v2154
    %v3684 = vunpack.c.h.b16 %v2154
    %v3685 = vunpack.c.l.b16 %v2155
    %v3686 = vunpack.c.h.b16 %v2155
    %v3687 = vunpack.c.l.b16 %v2156
    %v3688 = vunpack.c.h.b16 %v2156
    %v3689 = vunpack.c.l.b16 %v2157
    %v3690 = vunpack.c.h.b16 %v2157
    %v3691 = vunpack.c.l.b16 %v2158
    %v3692 = vunpack.c.h.b16 %v2158
    %v3693 = vunpack.c.l.b16 %v2159
    %v3694 = vunpack.c.h.b16 %v2159
    %v3695 = vunpack.c.l.b16 %v2160
    %v3696 = vunpack.c.h.b16 %v2160
    %v3697 = vpack.c.b16 %v2689, %v2673
    %v3698 = vpack.c.b16 %v2690, %v2674
    %v3699 = vpack.c.b16 %v2691, %v2675
    %v3700 = vpack.c.b16 %v2692, %v2676
    %v3701 = vpack.c.b16 %v2693, %v2677
    %v3702 = vpack.c.b16 %v2694, %v2678
    %v3703 = vpack.c.b16 %v2695, %v2679
    %v3704 = vpack.c.b16 %v2696, %v2680
    %v3705 = vpack.c.b16 %v2697, %v2681
    %v3706 = vpack.c.b16 %v2698, %v2682
    %v3707 = vpack.c.b16 %v2699, %v2683
    %v3708 = vpack.c.b16 %v2700, %v2684
    %v3709 = vpack.c.b16 %v2701, %v2685
    %v3710 = vpack.c.b16 %v2702, %v2686
    %v3711 = vpack.c.b16 %v2703, %v2687
    %v3712 = vpack.c.b16 %v2704, %v2688
    %v3713 = vpack.c.b16 %v2721, %v2705
    %v3714 = vpack.c.b16 %v2722, %v2706
    %v3715 = vpack.c.b16 %v2723, %v2707
    %v3716 = vpack.c.b16 %v2724, %v2708
    %v3717 = vpack.c.b16 %v2725, %v2709
    %v3718 = vpack.c.b16 %v2726, %v2710
    %v3719 = vpack.c.b16 %v2727, %v2711
    %v3720 = vpack.c.b16 %v2728, %v2712
    %v3721 = vpack.c.b16 %v2729, %v2713
    %v3722 = vpack.c.b16 %v2730, %v2714
    %v3723 = vpack.c.b16 %v2731, %v2715
    %v3724 = vpack.c.b16 %v2732, %v2716
    %v3725 = vpack.c.b16 %v2733, %v2717
    %v3726 = vpack.c.b16 %v2734, %v2718
    %v3727 = vpack.c.b16 %v2735, %v2719
    %v3728 = vpack.c.b16 %v2736, %v2720
    %v3729 = vpack.c.b16 %v2753, %v2737
    %v3730 = vpack.c.b16 %v2754, %v2738
    %v3731 = vpack.c.b16 %v2755, %v2739
    %v3732 = vpack.c.b16 %v2756, %v2740
    %v3733 = vpack.c.b16 %v2757, %v2741
    %v3734 = vpack.c.b16 %v2758, %v2742
    %v3735 = vpack.c.b16 %v2759, %v2743
    %v3736 = vpack.c.b16 %v2760, %v2744
    %v3737 = vpack.c.b16 %v2761, %v2745
    %v3738 = vpack.c.b16 %v2762, %v2746
    %v3739 = vpack.c.b16 %v2763, %v2747
    %v3740 = vpack.c.b16 %v2764, %v2748
    %v3741 = vpack.c.b16 %v2765, %v2749
    %v3742 = vpack.c.b16 %v2766, %v2750
    %v3743 = vpack.c.b16 %v2767, %v2751
    %v3744 = vpack.c.b16 %v2768, %v2752
    %v3745 = vpack.c.b16 %v2785, %v2769
    %v3746 = vpack.c.b16 %v2786, %v2770
    %v3747 = vpack.c.b16 %v2787, %v2771
    %v3748 = vpack.c.b16 %v2788, %v2772
    %v3749 = vpack.c.b16 %v2789, %v2773
    %v3750 = vpack.c.b16 %v2790, %v2774
    %v3751 = vpack.c.b16 %v2791, %v2775
    %v3752 = vpack.c.b16 %v2792, %v2776
    %v3753 = vpack.c.b16 %v2793, %v2777
    %v3754 = vpack.c.b16 %v2794, %v2778
    %v3755 = vpack.c.b16 %v2795, %v2779
    %v3756 = vpack.c.b16 %v2796, %v2780
    %v3757 = vpack.c.b16 %v2797, %v2781
    %v3758 = vpack.c.b16 %v2798, %v2782
    %v3759 = vpack.c.b16 %v2799, %v2783
    %v3760 = vpack.c.b16 %v2800, %v2784
    %v3761 = vpack.c.b16 %v2817, %v2801
    %v3762 = vpack.c.b16 %v2818, %v2802
    %v3763 = vpack.c.b16 %v2819, %v2803
    %v3764 = vpack.c.b16 %v2820, %v2804
    %v3765 = vpack.c.b16 %v2821, %v2805
    %v3766 = vpack.c.b16 %v2822, %v2806
    %v3767 = vpack.c.b16 %v2823, %v2807
    %v3768 = vpack.c.b16 %v2824, %v2808
    %v3769 = vpack.c.b16 %v2825, %v2809
    %v3770 = vpack.c.b16 %v2826, %v2810
    %v3771 = vpack.c.b16 %v2827, %v2811
    %v3772 = vpack.c.b16 %v2828, %v2812
    %v3773 = vpack.c.b16 %v2829, %v2813
    %v3774 = vpack.c.b16 %v2830, %v2814
    %v3775 = vpack.c.b16 %v2831, %v2815
    %v3776 = vpack.c.b16 %v2832, %v2816
    %v3777 = vpack.c.b16 %v2849, %v2833
    %v3778 = vpack.c.b16 %v2850, %v2834
    %v3779 = vpack.c.b16 %v2851, %v2835
    %v3780 = vpack.c.b16 %v2852, %v2836
    %v3781 = vpack.c.b16 %v2853, %v2837
    %v3782 = vpack.c.b16 %v2854, %v2838
    %v3783 = vpack.c.b16 %v2855, %v2839
    %v3784 = vpack.c.b16 %v2856, %v2840
    %v3785 = vpack.c.b16 %v2857, %v2841
    %v3786 = vpack.c.b16 %v2858, %v2842
    %v3787 = vpack.c.b16 %v2859, %v2843
    %v3788 = vpack.c.b16 %v2860, %v2844
    %v3789 = vpack.c.b16 %v2861, %v2845
    %v3790 = vpack.c.b16 %v2862, %v2846
    %v3791 = vpack.c.b16 %v2863, %v2847
    %v3792 = vpack.c.b16 %v2864, %v2848
    %v3793 = vpack.c.b16 %v2881, %v2865
    %v3794 = vpack.c.b16 %v2882, %v2866
    %v3795 = vpack.c.b16 %v2883, %v2867
    %v3796 = vpack.c.b16 %v2884, %v2868
    %v3797 = vpack.c.b16 %v2885, %v2869
    %v3798 = vpack.c.b16 %v2886, %v2870
    %v3799 = vpack.c.b16 %v2887, %v2871
    %v3800 = vpack.c.b16 %v2888, %v2872
    %v3801 = vpack.c.b16 %v2889, %v2873
    %v3802 = vpack.c.b16 %v2890, %v2874
    %v3803 = vpack.c.b16 %v2891, %v2875
    %v3804 = vpack.c.b16 %v2892, %v2876
    %v3805 = vpack.c.b16 %v2893, %v2877
    %v3806 = vpack.c.b16 %v2894, %v2878
    %v3807 = vpack.c.b16 %v2895, %v2879
    %v3808 = vpack.c.b16 %v2896, %v2880
    %v3809 = vpack.c.b16 %v2913, %v2897
    %v3810 = vpack.c.b16 %v2914, %v2898
    %v3811 = vpack.c.b16 %v2915, %v2899
    %v3812 = vpack.c.b16 %v2916, %v2900
    %v3813 = vpack.c.b16 %v2917, %v2901
    %v3814 = vpack.c.b16 %v2918, %v2902
    %v3815 = vpack.c.b16 %v2919, %v2903
    %v3816 = vpack.c.b16 %v2920, %v2904
    %v3817 = vpack.c.b16 %v2921, %v2905
    %v3818 = vpack.c.b16 %v2922, %v2906
    %v3819 = vpack.c.b16 %v2923, %v2907
    %v3820 = vpack.c.b16 %v2924, %v2908
    %v3821 = vpack.c.b16 %v2925, %v2909
    %v3822 = vpack.c.b16 %v2926, %v2910
    %v3823 = vpack.c.b16 %v2927, %v2911
    %v3824 = vpack.c.b16 %v2928, %v2912
    %v3825 = vpack.c.b16 %v2945, %v2929
    %v3826 = vpack.c.b16 %v2946, %v2930
    %v3827 = vpack.c.b16 %v2947, %v2931
    %v3828 = vpack.c.b16 %v2948, %v2932
    %v3829 = vpack.c.b16 %v2949, %v2933
    %v3830 = vpack.c.b16 %v2950, %v2934
    %v3831 = vpack.c.b16 %v2951, %v2935
    %v3832 = vpack.c.b16 %v2952, %v2936
    %v3833 = vpack.c.b16 %v2953, %v2937
    %v3834 = vpack.c.b16 %v2954, %v2938
    %v3835 = vpack.c.b16 %v2955, %v2939
    %v3836 = vpack.c.b16 %v2956, %v2940
    %v3837 = vpack.c.b16 %v2957, %v2941
    %v3838 = vpack.c.b16 %v2958, %v2942
    %v3839 = vpack.c.b16 %v2959, %v2943
    %v3840 = vpack.c.b16 %v2960, %v2944
    %v3841 = vpack.c.b16 %v2977, %v2961
    %v3842 = vpack.c.b16 %v2978, %v2962
    %v3843 = vpack.c.b16 %v2979, %v2963
    %v3844 = vpack.c.b16 %v2980, %v2964
    %v3845 = vpack.c.b16 %v2981, %v2965
    %v3846 = vpack.c.b16 %v2982, %v2966
    %v3847 = vpack.c.b16 %v2983, %v2967
    %v3848 = vpack.c.b16 %v2984, %v2968
    %v3849 = vpack.c.b16 %v2985, %v2969
    %v3850 = vpack.c.b16 %v2986, %v2970
    %v3851 = vpack.c.b16 %v2987, %v2971
    %v3852 = vpack.c.b16 %v2988, %v2972
    %v3853 = vpack.c.b16 %v2989, %v2973
    %v3854 = vpack.c.b16 %v2990, %v2974
    %v3855 = vpack.c.b16 %v2991, %v2975
    %v3856 = vpack.c.b16 %v2992, %v2976
    %v3857 = vpack.c.b16 %v3009, %v2993
    %v3858 = vpack.c.b16 %v3010, %v2994
    %v3859 = vpack.c.b16 %v3011, %v2995
    %v3860 = vpack.c.b16 %v3012, %v2996
    %v3861 = vpack.c.b16 %v3013, %v2997
    %v3862 = vpack.c.b16 %v3014, %v2998
    %v3863 = vpack.c.b16 %v3015, %v2999
    %v3864 = vpack.c.b16 %v3016, %v3000
    %v3865 = vpack.c.b16 %v3017, %v3001
    %v3866 = vpack.c.b16 %v3018, %v3002
    %v3867 = vpack.c.b16 %v3019, %v3003
    %v3868 = vpack.c.b16 %v3020, %v3004
    %v3869 = vpack.c.b16 %v3021, %v3005
    %v3870 = vpack.c.b16 %v3022, %v3006
    %v3871 = vpack.c.b16 %v3023, %v3007
    %v3872 = vpack.c.b16 %v3024, %v3008
    %v3873 = vpack.c.b16 %v3041, %v3025
    %v3874 = vpack.c.b16 %v3042, %v3026
    %v3875 = vpack.c.b16 %v3043, %v3027
    %v3876 = vpack.c.b16 %v3044, %v3028
    %v3877 = vpack.c.b16 %v3045, %v3029
    %v3878 = vpack.c.b16 %v3046, %v3030
    %v3879 = vpack.c.b16 %v3047, %v3031
    %v3880 = vpack.c.b16 %v3048, %v3032
    %v3881 = vpack.c.b16 %v3049, %v3033
    %v3882 = vpack.c.b16 %v3050, %v3034
    %v3883 = vpack.c.b16 %v3051, %v3035
    %v3884 = vpack.c.b16 %v3052, %v3036
    %v3885 = vpack.c.b16 %v3053, %v3037
    %v3886 = vpack.c.b16 %v3054, %v3038
    %v3887 = vpack.c.b16 %v3055, %v3039
    %v3888 = vpack.c.b16 %v3056, %v3040
    %v3889 = vpack.c.b16 %v3073, %v3057
    %v3890 = vpack.c.b16 %v3074, %v3058
    %v3891 = vpack.c.b16 %v3075, %v3059
    %v3892 = vpack.c.b16 %v3076, %v3060
    %v3893 = vpack.c.b16 %v3077, %v3061
    %v3894 = vpack.c.b16 %v3078, %v3062
    %v3895 = vpack.c.b16 %v3079, %v3063
    %v3896 = vpack.c.b16 %v3080, %v3064
    %v3897 = vpack.c.b16 %v3081, %v3065
    %v3898 = vpack.c.b16 %v3082, %v3066
    %v3899 = vpack.c.b16 %v3083, %v3067
    %v3900 = vpack.c.b16 %v3084, %v3068
    %v3901 = vpack.c.b16 %v3085, %v3069
    %v3902 = vpack.c.b16 %v3086, %v3070
    %v3903 = vpack.c.b16 %v3087, %v3071
    %v3904 = vpack.c.b16 %v3088, %v3072
    %v3905 = vpack.c.b16 %v3105, %v3089
    %v3906 = vpack.c.b16 %v3106, %v3090
    %v3907 = vpack.c.b16 %v3107, %v3091
    %v3908 = vpack.c.b16 %v3108, %v3092
    %v3909 = vpack.c.b16 %v3109, %v3093
    %v3910 = vpack.c.b16 %v3110, %v3094
    %v3911 = vpack.c.b16 %v3111, %v3095
    %v3912 = vpack.c.b16 %v3112, %v3096
    %v3913 = vpack.c.b16 %v3113, %v3097
    %v3914 = vpack.c.b16 %v3114, %v3098
    %v3915 = vpack.c.b16 %v3115, %v3099
    %v3916 = vpack.c.b16 %v3116, %v3100
    %v3917 = vpack.c.b16 %v3117, %v3101
    %v3918 = vpack.c.b16 %v3118, %v3102
    %v3919 = vpack.c.b16 %v3119, %v3103
    %v3920 = vpack.c.b16 %v3120, %v3104
    %v3921 = vpack.c.b16 %v3137, %v3121
    %v3922 = vpack.c.b16 %v3138, %v3122
    %v3923 = vpack.c.b16 %v3139, %v3123
    %v3924 = vpack.c.b16 %v3140, %v3124
    %v3925 = vpack.c.b16 %v3141, %v3125
    %v3926 = vpack.c.b16 %v3142, %v3126
    %v3927 = vpack.c.b16 %v3143, %v3127
    %v3928 = vpack.c.b16 %v3144, %v3128
    %v3929 = vpack.c.b16 %v3145, %v3129
    %v3930 = vpack.c.b16 %v3146, %v3130
    %v3931 = vpack.c.b16 %v3147, %v3131
    %v3932 = vpack.c.b16 %v3148, %v3132
    %v3933 = vpack.c.b16 %v3149, %v3133
    %v3934 = vpack.c.b16 %v3150, %v3134
    %v3935 = vpack.c.b16 %v3151, %v3135
    %v3936 = vpack.c.b16 %v3152, %v3136
    %v3937 = vpack.c.b16 %v3169, %v3153
    %v3938 = vpack.c.b16 %v3170, %v3154
    %v3939 = vpack.c.b16 %v3171, %v3155
    %v3940 = vpack.c.b16 %v3172, %v3156
    %v3941 = vpack.c.b16 %v3173, %v3157
    %v3942 = vpack.c.b16 %v3174, %v3158
    %v3943 = vpack.c.b16 %v3175, %v3159
    %v3944 = vpack.c.b16 %v3176, %v3160
    %v3945 = vpack.c.b16 %v3177, %v3161
    %v3946 = vpack.c.b16 %v3178, %v3162
    %v3947 = vpack.c.b16 %v3179, %v3163
    %v3948 = vpack.c.b16 %v3180, %v3164
    %v3949 = vpack.c.b16 %v3181, %v3165
    %v3950 = vpack.c.b16 %v3182, %v3166
    %v3951 = vpack.c.b16 %v3183, %v3167
    %v3952 = vpack.c.b16 %v3184, %v3168
    %v3953 = vpack.c.b16 %v3201, %v3185
    %v3954 = vpack.c.b16 %v3202, %v3186
    %v3955 = vpack.c.b16 %v3203, %v3187
    %v3956 = vpack.c.b16 %v3204, %v3188
    %v3957 = vpack.c.b16 %v3205, %v3189
    %v3958 = vpack.c.b16 %v3206, %v3190
    %v3959 = vpack.c.b16 %v3207, %v3191
    %v3960 = vpack.c.b16 %v3208, %v3192
    %v3961 = vpack.c.b16 %v3209, %v3193
    %v3962 = vpack.c.b16 %v3210, %v3194
    %v3963 = vpack.c.b16 %v3211, %v3195
    %v3964 = vpack.c.b16 %v3212, %v3196
    %v3965 = vpack.c.b16 %v3213, %v3197
    %v3966 = vpack.c.b16 %v3214, %v3198
    %v3967 = vpack.c.b16 %v3215, %v3199
    %v3968 = vpack.c.b16 %v3216, %v3200
    %v3969 = vpack.c.b16 %v3233, %v3217
    %v3970 = vpack.c.b16 %v3234, %v3218
    %v3971 = vpack.c.b16 %v3235, %v3219
    %v3972 = vpack.c.b16 %v3236, %v3220
    %v3973 = vpack.c.b16 %v3237, %v3221
    %v3974 = vpack.c.b16 %v3238, %v3222
    %v3975 = vpack.c.b16 %v3239, %v3223
    %v3976 = vpack.c.b16 %v3240, %v3224
    %v3977 = vpack.c.b16 %v3241, %v3225
    %v3978 = vpack.c.b16 %v3242, %v3226
    %v3979 = vpack.c.b16 %v3243, %v3227
    %v3980 = vpack.c.b16 %v3244, %v3228
    %v3981 = vpack.c.b16 %v3245, %v3229
    %v3982 = vpack.c.b16 %v3246, %v3230
    %v3983 = vpack.c.b16 %v3247, %v3231
    %v3984 = vpack.c.b16 %v3248, %v3232
    %v3985 = vpack.c.b16 %v3265, %v3249
    %v3986 = vpack.c.b16 %v3266, %v3250
    %v3987 = vpack.c.b16 %v3267, %v3251
    %v3988 = vpack.c.b16 %v3268, %v3252
    %v3989 = vpack.c.b16 %v3269, %v3253
    %v3990 = vpack.c.b16 %v3270, %v3254
    %v3991 = vpack.c.b16 %v3271, %v3255
    %v3992 = vpack.c.b16 %v3272, %v3256
    %v3993 = vpack.c.b16 %v3273, %v3257
    %v3994 = vpack.c.b16 %v3274, %v3258
    %v3995 = vpack.c.b16 %v3275, %v3259
    %v3996 = vpack.c.b16 %v3276, %v3260
    %v3997 = vpack.c.b16 %v3277, %v3261
    %v3998 = vpack.c.b16 %v3278, %v3262
    %v3999 = vpack.c.b16 %v3279, %v3263
    %v4000 = vpack.c.b16 %v3280, %v3264
    %v4001 = vpack.c.b16 %v3297, %v3281
    %v4002 = vpack.c.b16 %v3298, %v3282
    %v4003 = vpack.c.b16 %v3299, %v3283
    %v4004 = vpack.c.b16 %v3300, %v3284
    %v4005 = vpack.c.b16 %v3301, %v3285
    %v4006 = vpack.c.b16 %v3302, %v3286
    %v4007 = vpack.c.b16 %v3303, %v3287
    %v4008 = vpack.c.b16 %v3304, %v3288
    %v4009 = vpack.c.b16 %v3305, %v3289
    %v4010 = vpack.c.b16 %v3306, %v3290
    %v4011 = vpack.c.b16 %v3307, %v3291
    %v4012 = vpack.c.b16 %v3308, %v3292
    %v4013 = vpack.c.b16 %v3309, %v3293
    %v4014 = vpack.c.b16 %v3310, %v3294
    %v4015 = vpack.c.b16 %v3311, %v3295
    %v4016 = vpack.c.b16 %v3312, %v3296
    %v4017 = vpack.c.b16 %v3329, %v3313
    %v4018 = vpack.c.b16 %v3330, %v3314
    %v4019 = vpack.c.b16 %v3331, %v3315
    %v4020 = vpack.c.b16 %v3332, %v3316
    %v4021 = vpack.c.b16 %v3333, %v3317
    %v4022 = vpack.c.b16 %v3334, %v3318
    %v4023 = vpack.c.b16 %v3335, %v3319
    %v4024 = vpack.c.b16 %v3336, %v3320
    %v4025 = vpack.c.b16 %v3337, %v3321
    %v4026 = vpack.c.b16 %v3338, %v3322
    %v4027 = vpack.c.b16 %v3339, %v3323
    %v4028 = vpack.c.b16 %v3340, %v3324
    %v4029 = vpack.c.b16 %v3341, %v3325
    %v4030 = vpack.c.b16 %v3342, %v3326
    %v4031 = vpack.c.b16 %v3343, %v3327
    %v4032 = vpack.c.b16 %v3344, %v3328
    %v4033 = vpack.c.b16 %v3361, %v3345
    %v4034 = vpack.c.b16 %v3362, %v3346
    %v4035 = vpack.c.b16 %v3363, %v3347
    %v4036 = vpack.c.b16 %v3364, %v3348
    %v4037 = vpack.c.b16 %v3365, %v3349
    %v4038 = vpack.c.b16 %v3366, %v3350
    %v4039 = vpack.c.b16 %v3367, %v3351
    %v4040 = vpack.c.b16 %v3368, %v3352
    %v4041 = vpack.c.b16 %v3369, %v3353
    %v4042 = vpack.c.b16 %v3370, %v3354
    %v4043 = vpack.c.b16 %v3371, %v3355
    %v4044 = vpack.c.b16 %v3372, %v3356
    %v4045 = vpack.c.b16 %v3373, %v3357
    %v4046 = vpack.c.b16 %v3374, %v3358
    %v4047 = vpack.c.b16 %v3375, %v3359
    %v4048 = vpack.c.b16 %v3376, %v3360
    %v4049 = vpack.c.b16 %v3393, %v3377
    %v4050 = vpack.c.b16 %v3394, %v3378
    %v4051 = vpack.c.b16 %v3395, %v3379
    %v4052 = vpack.c.b16 %v3396, %v3380
    %v4053 = vpack.c.b16 %v3397, %v3381
    %v4054 = vpack.c.b16 %v3398, %v3382
    %v4055 = vpack.c.b16 %v3399, %v3383
    %v4056 = vpack.c.b16 %v3400, %v3384
    %v4057 = vpack.c.b16 %v3401, %v3385
    %v4058 = vpack.c.b16 %v3402, %v3386
    %v4059 = vpack.c.b16 %v3403, %v3387
    %v4060 = vpack.c.b16 %v3404, %v3388
    %v4061 = vpack.c.b16 %v3405, %v3389
    %v4062 = vpack.c.b16 %v3406, %v3390
    %v4063 = vpack.c.b16 %v3407, %v3391
    %v4064 = vpack.c.b16 %v3408, %v3392
    %v4065 = vpack.c.b16 %v3425, %v3409
    %v4066 = vpack.c.b16 %v3426, %v3410
    %v4067 = vpack.c.b16 %v3427, %v3411
    %v4068 = vpack.c.b16 %v3428, %v3412
    %v4069 = vpack.c.b16 %v3429, %v3413
    %v4070 = vpack.c.b16 %v3430, %v3414
    %v4071 = vpack.c.b16 %v3431, %v3415
    %v4072 = vpack.c.b16 %v3432, %v3416
    %v4073 = vpack.c.b16 %v3433, %v3417
    %v4074 = vpack.c.b16 %v3434, %v3418
    %v4075 = vpack.c.b16 %v3435, %v3419
    %v4076 = vpack.c.b16 %v3436, %v3420
    %v4077 = vpack.c.b16 %v3437, %v3421
    %v4078 = vpack.c.b16 %v3438, %v3422
    %v4079 = vpack.c.b16 %v3439, %v3423
    %v4080 = vpack.c.b16 %v3440, %v3424
    %v4081 = vpack.c.b16 %v3457, %v3441
    %v4082 = vpack.c.b16 %v3458, %v3442
    %v4083 = vpack.c.b16 %v3459, %v3443
    %v4084 = vpack.c.b16 %v3460, %v3444
    %v4085 = vpack.c.b16 %v3461, %v3445
    %v4086 = vpack.c.b16 %v3462, %v3446
    %v4087 = vpack.c.b16 %v3463, %v3447
    %v4088 = vpack.c.b16 %v3464, %v3448
    %v4089 = vpack.c.b16 %v3465, %v3449
    %v4090 = vpack.c.b16 %v3466, %v3450
    %v4091 = vpack.c.b16 %v3467, %v3451
    %v4092 = vpack.c.b16 %v3468, %v3452
    %v4093 = vpack.c.b16 %v3469, %v3453
    %v4094 = vpack.c.b16 %v3470, %v3454
    %v4095 = vpack.c.b16 %v3471, %v3455
    %v4096 = vpack.c.b16 %v3472, %v3456
    %v4097 = vpack.c.b16 %v3489, %v3473
    %v4098 = vpack.c.b16 %v3490, %v3474
    %v4099 = vpack.c.b16 %v3491, %v3475
    %v4100 = vpack.c.b16 %v3492, %v3476
    %v4101 = vpack.c.b16 %v3493, %v3477
    %v4102 = vpack.c.b16 %v3494, %v3478
    %v4103 = vpack.c.b16 %v3495, %v3479
    %v4104 = vpack.c.b16 %v3496, %v3480
    %v4105 = vpack.c.b16 %v3497, %v3481
    %v4106 = vpack.c.b16 %v3498, %v3482
    %v4107 = vpack.c.b16 %v3499, %v3483
    %v4108 = vpack.c.b16 %v3500, %v3484
    %v4109 = vpack.c.b16 %v3501, %v3485
    %v4110 = vpack.c.b16 %v3502, %v3486
    %v4111 = vpack.c.b16 %v3503, %v3487
    %v4112 = vpack.c.b16 %v3504, %v3488
    %v4113 = vpack.c.b16 %v3521, %v3505
    %v4114 = vpack.c.b16 %v3522, %v3506
    %v4115 = vpack.c.b16 %v3523, %v3507
    %v4116 = vpack.c.b16 %v3524, %v3508
    %v4117 = vpack.c.b16 %v3525, %v3509
    %v4118 = vpack.c.b16 %v3526, %v3510
    %v4119 = vpack.c.b16 %v3527, %v3511
    %v4120 = vpack.c.b16 %v3528, %v3512
    %v4121 = vpack.c.b16 %v3529, %v3513
    %v4122 = vpack.c.b16 %v3530, %v3514
    %v4123 = vpack.c.b16 %v3531, %v3515
    %v4124 = vpack.c.b16 %v3532, %v3516
    %v4125 = vpack.c.b16 %v3533, %v3517
    %v4126 = vpack.c.b16 %v3534, %v3518
    %v4127 = vpack.c.b16 %v3535, %v3519
    %v4128 = vpack.c.b16 %v3536, %v3520
    %v4129 = vpack.c.b16 %v3553, %v3537
    %v4130 = vpack.c.b16 %v3554, %v3538
    %v4131 = vpack.c.b16 %v3555, %v3539
    %v4132 = vpack.c.b16 %v3556, %v3540
    %v4133 = vpack.c.b16 %v3557, %v3541
    %v4134 = vpack.c.b16 %v3558, %v3542
    %v4135 = vpack.c.b16 %v3559, %v3543
    %v4136 = vpack.c.b16 %v3560, %v3544
    %v4137 = vpack.c.b16 %v3561, %v3545
    %v4138 = vpack.c.b16 %v3562, %v3546
    %v4139 = vpack.c.b16 %v3563, %v3547
    %v4140 = vpack.c.b16 %v3564, %v3548
    %v4141 = vpack.c.b16 %v3565, %v3549
    %v4142 = vpack.c.b16 %v3566, %v3550
    %v4143 = vpack.c.b16 %v3567, %v3551
    %v4144 = vpack.c.b16 %v3568, %v3552
    %v4145 = vpack.c.b16 %v3585, %v3569
    %v4146 = vpack.c.b16 %v3586, %v3570
    %v4147 = vpack.c.b16 %v3587, %v3571
    %v4148 = vpack.c.b16 %v3588, %v3572
    %v4149 = vpack.c.b16 %v3589, %v3573
    %v4150 = vpack.c.b16 %v3590, %v3574
    %v4151 = vpack.c.b16 %v3591, %v3575
    %v4152 = vpack.c.b16 %v3592, %v3576
    %v4153 = vpack.c.b16 %v3593, %v3577
    %v4154 = vpack.c.b16 %v3594, %v3578
    %v4155 = vpack.c.b16 %v3595, %v3579
    %v4156 = vpack.c.b16 %v3596, %v3580
    %v4157 = vpack.c.b16 %v3597, %v3581
    %v4158 = vpack.c.b16 %v3598, %v3582
    %v4159 = vpack.c.b16 %v3599, %v3583
    %v4160 = vpack.c.b16 %v3600, %v3584
    %v4161 = vpack.c.b16 %v3617, %v3601
    %v4162 = vpack.c.b16 %v3618, %v3602
    %v4163 = vpack.c.b16 %v3619, %v3603
    %v4164 = vpack.c.b16 %v3620, %v3604
    %v4165 = vpack.c.b16 %v3621, %v3605
    %v4166 = vpack.c.b16 %v3622, %v3606
    %v4167 = vpack.c.b16 %v3623, %v3607
    %v4168 = vpack.c.b16 %v3624, %v3608
    %v4169 = vpack.c.b16 %v3625, %v3609
    %v4170 = vpack.c.b16 %v3626, %v3610
    %v4171 = vpack.c.b16 %v3627, %v3611
    %v4172 = vpack.c.b16 %v3628, %v3612
    %v4173 = vpack.c.b16 %v3629, %v3613
    %v4174 = vpack.c.b16 %v3630, %v3614
    %v4175 = vpack.c.b16 %v3631, %v3615
    %v4176 = vpack.c.b16 %v3632, %v3616
    %v4177 = vpack.c.b16 %v3649, %v3633
    %v4178 = vpack.c.b16 %v3650, %v3634
    %v4179 = vpack.c.b16 %v3651, %v3635
    %v4180 = vpack.c.b16 %v3652, %v3636
    %v4181 = vpack.c.b16 %v3653, %v3637
    %v4182 = vpack.c.b16 %v3654, %v3638
    %v4183 = vpack.c.b16 %v3655, %v3639
    %v4184 = vpack.c.b16 %v3656, %v3640
    %v4185 = vpack.c.b16 %v3657, %v3641
    %v4186 = vpack.c.b16 %v3658, %v3642
    %v4187 = vpack.c.b16 %v3659, %v3643
    %v4188 = vpack.c.b16 %v3660, %v3644
    %v4189 = vpack.c.b16 %v3661, %v3645
    %v4190 = vpack.c.b16 %v3662, %v3646
    %v4191 = vpack.c.b16 %v3663, %v3647
    %v4192 = vpack.c.b16 %v3664, %v3648
    %v4193 = vpack.c.b16 %v3681, %v3665
    %v4194 = vpack.c.b16 %v3682, %v3666
    %v4195 = vpack.c.b16 %v3683, %v3667
    %v4196 = vpack.c.b16 %v3684, %v3668
    %v4197 = vpack.c.b16 %v3685, %v3669
    %v4198 = vpack.c.b16 %v3686, %v3670
    %v4199 = vpack.c.b16 %v3687, %v3671
    %v4200 = vpack.c.b16 %v3688, %v3672
    %v4201 = vpack.c.b16 %v3689, %v3673
    %v4202 = vpack.c.b16 %v3690, %v3674
    %v4203 = vpack.c.b16 %v3691, %v3675
    %v4204 = vpack.c.b16 %v3692, %v3676
    %v4205 = vpack.c.b16 %v3693, %v3677
    %v4206 = vpack.c.b16 %v3694, %v3678
    %v4207 = vpack.c.b16 %v3695, %v3679
    %v4208 = vpack.c.b16 %v3696, %v3680
    %4721 = vmatprep.subr.bf16.mxu0 %v3810
    %4722 = vmatpush1.bf16.msra.mxu0 %v3809
    %4723 = vmatprep.subr.bf16.mxu0 %v3794
    %4724 = vmatpush1.bf16.msra.mxu0 %v3793
    %4725 = vmatprep.subr.bf16.mxu0 %v3778
    %4726 = vmatpush1.bf16.msra.mxu0 %v3777
    %4727 = vmatprep.subr.bf16.mxu0 %v3762
    %4728 = vmatpush1.bf16.msra.mxu0 %v3761
    %4729 = vmatprep.subr.bf16.mxu0 %v3746
    %4730 = vmatpush1.bf16.msra.mxu0 %v3745
    %4731 = vmatprep.subr.bf16.mxu0 %v3730
    %4732 = vmatpush1.bf16.msra.mxu0 %v3729
    %4733 = vmatprep.subr.bf16.mxu0 %v3714
    %4734 = vmatpush1.bf16.msra.mxu0 %v3713
    %4735 = vmatprep.subr.bf16.mxu0 %v3698
    %4736 = vmatpush1.bf16.msra.mxu0 %v3697
    %4737 = vmatprep.subr.bf16.mxu0 %v3938
    %4738 = vmatpush2.bf16.msra.mxu0 %v3937
    %4739 = vmatprep.subr.bf16.mxu0 %v3922
    %4740 = vmatpush2.bf16.msra.mxu0 %v3921
    %4741 = vmatprep.subr.bf16.mxu0 %v3906
    %4742 = vmatpush2.bf16.msra.mxu0 %v3905
    %4743 = vmatprep.subr.bf16.mxu0 %v3890
    %4744 = vmatpush2.bf16.msra.mxu0 %v3889
    %4745 = vmatprep.subr.bf16.mxu0 %v3874
    %4746 = vmatpush2.bf16.msra.mxu0 %v3873
    %4747 = vmatprep.subr.bf16.mxu0 %v3858
    %4748 = vmatpush2.bf16.msra.mxu0 %v3857
    %4749 = vmatprep.subr.bf16.mxu0 %v3842
    %4750 = vmatpush2.bf16.msra.mxu0 %v3841
    %4751 = vmatprep.subr.bf16.mxu0 %v3826
    %4752 = vmatpush2.bf16.msra.mxu0 %v3825
    %4753 = vmatprep.mubr.bf16.mxu0 0
    %4754 = vmatmul.mubr.bf16.gmra.mxu0 0
    %v4755 = vpop.f32.mrf.mxu0
    %v4756 = vadd.f32 0.0, %v4755
    %v4757 = vpop.f32.mrf.mxu0
    %v4758 = vadd.f32 0.0, %v4757
    %v4759 = vpop.f32.mrf.mxu0
    %v4760 = vpop.f32.mrf.mxu0
    %4761 = vdwg.mxu0
    %4762 = vmatprep.subr.bf16.mxu0 %v4066
    %4763 = vmatpush1.bf16.msra.mxu0 %v4065
    %4764 = vmatprep.subr.bf16.mxu0 %v4050
    %4765 = vmatpush1.bf16.msra.mxu0 %v4049
    %4766 = vmatprep.subr.bf16.mxu0 %v4034
    %4767 = vmatpush1.bf16.msra.mxu0 %v4033
    %4768 = vmatprep.subr.bf16.mxu0 %v4018
    %4769 = vmatpush1.bf16.msra.mxu0 %v4017
    %4770 = vmatprep.subr.bf16.mxu0 %v4002
    %4771 = vmatpush1.bf16.msra.mxu0 %v4001
    %4772 = vmatprep.subr.bf16.mxu0 %v3986
    %4773 = vmatpush1.bf16.msra.mxu0 %v3985
    %4774 = vmatprep.subr.bf16.mxu0 %v3970
    %4775 = vmatpush1.bf16.msra.mxu0 %v3969
    %4776 = vmatprep.subr.bf16.mxu0 %v3954
    %4777 = vmatpush1.bf16.msra.mxu0 %v3953
    %4778 = vmatprep.subr.bf16.mxu0 %v4194
    %4779 = vmatpush2.bf16.msra.mxu0 %v4193
    %4780 = vmatprep.subr.bf16.mxu0 %v4178
    %4781 = vmatpush2.bf16.msra.mxu0 %v4177
    %4782 = vmatprep.subr.bf16.mxu0 %v4162
    %4783 = vmatpush2.bf16.msra.mxu0 %v4161
    %4784 = vmatprep.subr.bf16.mxu0 %v4146
    %4785 = vmatpush2.bf16.msra.mxu0 %v4145
    %4786 = vmatprep.subr.bf16.mxu0 %v4130
    %4787 = vmatpush2.bf16.msra.mxu0 %v4129
    %4788 = vmatprep.subr.bf16.mxu0 %v4114
    %4789 = vmatpush2.bf16.msra.mxu0 %v4113
    %4790 = vmatprep.subr.bf16.mxu0 %v4098
    %4791 = vmatpush2.bf16.msra.mxu0 %v4097
    %4792 = vmatprep.subr.bf16.mxu0 %v4082
    %4793 = vmatpush2.bf16.msra.mxu0 %v4081
    %4794 = vmatprep.mubr.bf16.mxu0 0
    %4795 = vmatmul.mubr.bf16.gmra.mxu0 0
    %v4796 = vpop.f32.mrf.mxu0
    %v4797 = vadd.f32 %v4756, %v4796
    %v4798 = vpop.f32.mrf.mxu0
    %v4799 = vadd.f32 %v4758, %v4798
    %v4800 = vpop.f32.mrf.mxu0
    %v4801 = vpop.f32.mrf.mxu0
    %4802 = vdwg.mxu0
    %4803 = vmatprep.subr.bf16.mxu0 %v3812
    %4804 = vmatpush1.bf16.msra.mxu0 %v3811
    %4805 = vmatprep.subr.bf16.mxu0 %v3796
    %4806 = vmatpush1.bf16.msra.mxu0 %v3795
    %4807 = vmatprep.subr.bf16.mxu0 %v3780
    %4808 = vmatpush1.bf16.msra.mxu0 %v3779
    %4809 = vmatprep.subr.bf16.mxu0 %v3764
    %4810 = vmatpush1.bf16.msra.mxu0 %v3763
    %4811 = vmatprep.subr.bf16.mxu0 %v3748
    %4812 = vmatpush1.bf16.msra.mxu0 %v3747
    %4813 = vmatprep.subr.bf16.mxu0 %v3732
    %4814 = vmatpush1.bf16.msra.mxu0 %v3731
    %4815 = vmatprep.subr.bf16.mxu0 %v3716
    %4816 = vmatpush1.bf16.msra.mxu0 %v3715
    %4817 = vmatprep.subr.bf16.mxu0 %v3700
    %4818 = vmatpush1.bf16.msra.mxu0 %v3699
    %4819 = vmatprep.subr.bf16.mxu0 %v3940
    %4820 = vmatpush2.bf16.msra.mxu0 %v3939
    %4821 = vmatprep.subr.bf16.mxu0 %v3924
    %4822 = vmatpush2.bf16.msra.mxu0 %v3923
    %4823 = vmatprep.subr.bf16.mxu0 %v3908
    %4824 = vmatpush2.bf16.msra.mxu0 %v3907
    %4825 = vmatprep.subr.bf16.mxu0 %v3892
    %4826 = vmatpush2.bf16.msra.mxu0 %v3891
    %4827 = vmatprep.subr.bf16.mxu0 %v3876
    %4828 = vmatpush2.bf16.msra.mxu0 %v3875
    %4829 = vmatprep.subr.bf16.mxu0 %v3860
    %4830 = vmatpush2.bf16.msra.mxu0 %v3859
    %4831 = vmatprep.subr.bf16.mxu0 %v3844
    %4832 = vmatpush2.bf16.msra.mxu0 %v3843
    %4833 = vmatprep.subr.bf16.mxu0 %v3828
    %4834 = vmatpush2.bf16.msra.mxu0 %v3827
    %4835 = vmatprep.mubr.bf16.mxu0 0
    %4836 = vmatmul.mubr.bf16.gmra.mxu0 0
    %v4837 = vpop.f32.mrf.mxu0
    %v4838 = vadd.f32 0.0, %v4837
    %v4839 = vpop.f32.mrf.mxu0
    %v4840 = vadd.f32 0.0, %v4839
    %v4841 = vpop.f32.mrf.mxu0
    %v4842 = vpop.f32.mrf.mxu0
    %4843 = vdwg.mxu0
    %4844 = vmatprep.subr.bf16.mxu0 %v4068
    %4845 = vmatpush1.bf16.msra.mxu0 %v4067
    %4846 = vmatprep.subr.bf16.mxu0 %v4052
    %4847 = vmatpush1.bf16.msra.mxu0 %v4051
    %4848 = vmatprep.subr.bf16.mxu0 %v4036
    %4849 = vmatpush1.bf16.msra.mxu0 %v4035
    %4850 = vmatprep.subr.bf16.mxu0 %v4020
    %4851 = vmatpush1.bf16.msra.mxu0 %v4019
    %4852 = vmatprep.subr.bf16.mxu0 %v4004
    %4853 = vmatpush1.bf16.msra.mxu0 %v4003
    %4854 = vmatprep.subr.bf16.mxu0 %v3988
    %4855 = vmatpush1.bf16.msra.mxu0 %v3987
    %4856 = vmatprep.subr.bf16.mxu0 %v3972
    %4857 = vmatpush1.bf16.msra.mxu0 %v3971
    %4858 = vmatprep.subr.bf16.mxu0 %v3956
    %4859 = vmatpush1.bf16.msra.mxu0 %v3955
    %4860 = vmatprep.subr.bf16.mxu0 %v4196
    %4861 = vmatpush2.bf16.msra.mxu0 %v4195
    %4862 = vmatprep.subr.bf16.mxu0 %v4180
    %4863 = vmatpush2.bf16.msra.mxu0 %v4179
    %4864 = vmatprep.subr.bf16.mxu0 %v4164
    %4865 = vmatpush2.bf16.msra.mxu0 %v4163
    %4866 = vmatprep.subr.bf16.mxu0 %v4148
    %4867 = vmatpush2.bf16.msra.mxu0 %v4147
    %4868 = vmatprep.subr.bf16.mxu0 %v4132
    %4869 = vmatpush2.bf16.msra.mxu0 %v4131
    %4870 = vmatprep.subr.bf16.mxu0 %v4116
    %4871 = vmatpush2.bf16.msra.mxu0 %v4115
    %4872 = vmatprep.subr.bf16.mxu0 %v4100
    %4873 = vmatpush2.bf16.msra.mxu0 %v4099
    %4874 = vmatprep.subr.bf16.mxu0 %v4084
    %4875 = vmatpush2.bf16.msra.mxu0 %v4083
    %4876 = vmatprep.mubr.bf16.mxu0 0
    %4877 = vmatmul.mubr.bf16.gmra.mxu0 0
    %v4878 = vpop.f32.mrf.mxu0
    %v4879 = vadd.f32 %v4838, %v4878
    %v4880 = vpop.f32.mrf.mxu0
    %v4881 = vadd.f32 %v4840, %v4880
    %v4882 = vpop.f32.mrf.mxu0
    %v4883 = vpop.f32.mrf.mxu0
    %4884 = vdwg.mxu0
    %4885 = vmatprep.subr.bf16.mxu0 %v3814
    %4886 = vmatpush1.bf16.msra.mxu0 %v3813
    %4887 = vmatprep.subr.bf16.mxu0 %v3798
    %4888 = vmatpush1.bf16.msra.mxu0 %v3797
    %4889 = vmatprep.subr.bf16.mxu0 %v3782
    %4890 = vmatpush1.bf16.msra.mxu0 %v3781
    %4891 = vmatprep.subr.bf16.mxu0 %v3766
    %4892 = vmatpush1.bf16.msra.mxu0 %v3765
    %4893 = vmatprep.subr.bf16.mxu0 %v3750
    %4894 = vmatpush1.bf16.msra.mxu0 %v3749
    %4895 = vmatprep.subr.bf16.mxu0 %v3734
    %4896 = vmatpush1.bf16.msra.mxu0 %v3733
    %4897 = vmatprep.subr.bf16.mxu0 %v3718
    %4898 = vmatpush1.bf16.msra.mxu0 %v3717
    %4899 = vmatprep.subr.bf16.mxu0 %v3702
    %4900 = vmatpush1.bf16.msra.mxu0 %v3701
    %4901 = vmatprep.subr.bf16.mxu0 %v3942
    %4902 = vmatpush2.bf16.msra.mxu0 %v3941
    %4903 = vmatprep.subr.bf16.mxu0 %v3926
    %4904 = vmatpush2.bf16.msra.mxu0 %v3925
    %4905 = vmatprep.subr.bf16.mxu0 %v3910
    %4906 = vmatpush2.bf16.msra.mxu0 %v3909
    %4907 = vmatprep.subr.bf16.mxu0 %v3894
    %4908 = vmatpush2.bf16.msra.mxu0 %v3893
    %4909 = vmatprep.subr.bf16.mxu0 %v3878
    %4910 = vmatpush2.bf16.msra.mxu0 %v3877
    %4911 = vmatprep.subr.bf16.mxu0 %v3862
    %4912 = vmatpush2.bf16.msra.mxu0 %v3861
    %4913 = vmatprep.subr.bf16.mxu0 %v3846
    %4914 = vmatpush2.bf16.msra.mxu0 %v3845
    %4915 = vmatprep.subr.bf16.mxu0 %v3830
    %4916 = vmatpush2.bf16.msra.mxu0 %v3829
    %4917 = vmatprep.mubr.bf16.mxu0 0
    %4918 = vmatmul.mubr.bf16.gmra.mxu0 0
    %v4919 = vpop.f32.mrf.mxu0
    %v4920 = vadd.f32 0.0, %v4919
    %v4921 = vpop.f32.mrf.mxu0
    %v4922 = vadd.f32 0.0, %v4921
    %v4923 = vpop.f32.mrf.mxu0
    %v4924 = vpop.f32.mrf.mxu0
    %4925 = vdwg.mxu0
    %4926 = vmatprep.subr.bf16.mxu0 %v4070
    %4927 = vmatpush1.bf16.msra.mxu0 %v4069
    %4928 = vmatprep.subr.bf16.mxu0 %v4054
    %4929 = vmatpush1.bf16.msra.mxu0 %v4053
    %4930 = vmatprep.subr.bf16.mxu0 %v4038
    %4931 = vmatpush1.bf16.msra.mxu0 %v4037
    %4932 = vmatprep.subr.bf16.mxu0 %v4022
    %4933 = vmatpush1.bf16.msra.mxu0 %v4021
    %4934 = vmatprep.subr.bf16.mxu0 %v4006
    %4935 = vmatpush1.bf16.msra.mxu0 %v4005
    %4936 = vmatprep.subr.bf16.mxu0 %v3990
    %4937 = vmatpush1.bf16.msra.mxu0 %v3989
    %4938 = vmatprep.subr.bf16.mxu0 %v3974
    %4939 = vmatpush1.bf16.msra.mxu0 %v3973
    %4940 = vmatprep.subr.bf16.mxu0 %v3958
    %4941 = vmatpush1.bf16.msra.mxu0 %v3957
    %4942 = vmatprep.subr.bf16.mxu0 %v4198
    %4943 = vmatpush2.bf16.msra.mxu0 %v4197
    %4944 = vmatprep.subr.bf16.mxu0 %v4182
    %4945 = vmatpush2.bf16.msra.mxu0 %v4181
    %4946 = vmatprep.subr.bf16.mxu0 %v4166
    %4947 = vmatpush2.bf16.msra.mxu0 %v4165
    %4948 = vmatprep.subr.bf16.mxu0 %v4150
    %4949 = vmatpush2.bf16.msra.mxu0 %v4149
    %4950 = vmatprep.subr.bf16.mxu0 %v4134
    %4951 = vmatpush2.bf16.msra.mxu0 %v4133
    %4952 = vmatprep.subr.bf16.mxu0 %v4118
    %4953 = vmatpush2.bf16.msra.mxu0 %v4117
    %4954 = vmatprep.subr.bf16.mxu0 %v4102
    %4955 = vmatpush2.bf16.msra.mxu0 %v4101
    %4956 = vmatprep.subr.bf16.mxu0 %v4086
    %4957 = vmatpush2.bf16.msra.mxu0 %v4085
    %4958 = vmatprep.mubr.bf16.mxu0 0
    %4959 = vmatmul.mubr.bf16.gmra.mxu0 0
    %v4960 = vpop.f32.mrf.mxu0
    %v4961 = vadd.f32 %v4920, %v4960
    %v4962 = vpop.f32.mrf.mxu0
    %v4963 = vadd.f32 %v4922, %v4962
    %v4964 = vpop.f32.mrf.mxu0
    %v4965 = vpop.f32.mrf.mxu0
    %4966 = vdwg.mxu0
    %4967 = vmatprep.subr.bf16.mxu0 %v3816
    %4968 = vmatpush1.bf16.msra.mxu0 %v3815
    %4969 = vmatprep.subr.bf16.mxu0 %v3800
    %4970 = vmatpush1.bf16.msra.mxu0 %v3799
    %4971 = vmatprep.subr.bf16.mxu0 %v3784
    %4972 = vmatpush1.bf16.msra.mxu0 %v3783
    %4973 = vmatprep.subr.bf16.mxu0 %v3768
    %4974 = vmatpush1.bf16.msra.mxu0 %v3767
    %4975 = vmatprep.subr.bf16.mxu0 %v3752
    %4976 = vmatpush1.bf16.msra.mxu0 %v3751
    %4977 = vmatprep.subr.bf16.mxu0 %v3736
    %4978 = vmatpush1.bf16.msra.mxu0 %v3735
    %4979 = vmatprep.subr.bf16.mxu0 %v3720
    %4980 = vmatpush1.bf16.msra.mxu0 %v3719
    %4981 = vmatprep.subr.bf16.mxu0 %v3704
    %4982 = vmatpush1.bf16.msra.mxu0 %v3703
    %4983 = vmatprep.subr.bf16.mxu0 %v3944
    %4984 = vmatpush2.bf16.msra.mxu0 %v3943
    %4985 = vmatprep.subr.bf16.mxu0 %v3928
    %4986 = vmatpush2.bf16.msra.mxu0 %v3927
    %4987 = vmatprep.subr.bf16.mxu0 %v3912
    %4988 = vmatpush2.bf16.msra.mxu0 %v3911
    %4989 = vmatprep.subr.bf16.mxu0 %v3896
    %4990 = vmatpush2.bf16.msra.mxu0 %v3895
    %4991 = vmatprep.subr.bf16.mxu0 %v3880
    %4992 = vmatpush2.bf16.msra.mxu0 %v3879
    %4993 = vmatprep.subr.bf16.mxu0 %v3864
    %4994 = vmatpush2.bf16.msra.mxu0 %v3863
    %4995 = vmatprep.subr.bf16.mxu0 %v3848
    %4996 = vmatpush2.bf16.msra.mxu0 %v3847
    %4997 = vmatprep.subr.bf16.mxu0 %v3832
    %4998 = vmatpush2.bf16.msra.mxu0 %v3831
    %4999 = vmatprep.mubr.bf16.mxu0 0
    %5000 = vmatmul.mubr.bf16.gmra.mxu0 0
    %v5001 = vpop.f32.mrf.mxu0
    %v5002 = vadd.f32 0.0, %v5001
    %v5003 = vpop.f32.mrf.mxu0
    %v5004 = vadd.f32 0.0, %v5003
    %v5005 = vpop.f32.mrf.mxu0
    %v5006 = vpop.f32.mrf.mxu0
    %5007 = vdwg.mxu0
    %5008 = vmatprep.subr.bf16.mxu0 %v4072
    %5009 = vmatpush1.bf16.msra.mxu0 %v4071
    %5010 = vmatprep.subr.bf16.mxu0 %v4056
    %5011 = vmatpush1.bf16.msra.mxu0 %v4055
    %5012 = vmatprep.subr.bf16.mxu0 %v4040
    %5013 = vmatpush1.bf16.msra.mxu0 %v4039
    %5014 = vmatprep.subr.bf16.mxu0 %v4024
    %5015 = vmatpush1.bf16.msra.mxu0 %v4023
    %5016 = vmatprep.subr.bf16.mxu0 %v4008
    %5017 = vmatpush1.bf16.msra.mxu0 %v4007
    %5018 = vmatprep.subr.bf16.mxu0 %v3992
    %5019 = vmatpush1.bf16.msra.mxu0 %v3991
    %5020 = vmatprep.subr.bf16.mxu0 %v3976
    %5021 = vmatpush1.bf16.msra.mxu0 %v3975
    %5022 = vmatprep.subr.bf16.mxu0 %v3960
    %5023 = vmatpush1.bf16.msra.mxu0 %v3959
    %5024 = vmatprep.subr.bf16.mxu0 %v4200
    %5025 = vmatpush2.bf16.msra.mxu0 %v4199
    %5026 = vmatprep.subr.bf16.mxu0 %v4184
    %5027 = vmatpush2.bf16.msra.mxu0 %v4183
    %5028 = vmatprep.subr.bf16.mxu0 %v4168
    %5029 = vmatpush2.bf16.msra.mxu0 %v4167
    %5030 = vmatprep.subr.bf16.mxu0 %v4152
    %5031 = vmatpush2.bf16.msra.mxu0 %v4151
    %5032 = vmatprep.subr.bf16.mxu0 %v4136
    %5033 = vmatpush2.bf16.msra.mxu0 %v4135
    %5034 = vmatprep.subr.bf16.mxu0 %v4120
    %5035 = vmatpush2.bf16.msra.mxu0 %v4119
    %5036 = vmatprep.subr.bf16.mxu0 %v4104
    %5037 = vmatpush2.bf16.msra.mxu0 %v4103
    %5038 = vmatprep.subr.bf16.mxu0 %v4088
    %5039 = vmatpush2.bf16.msra.mxu0 %v4087
    %5040 = vmatprep.mubr.bf16.mxu0 0
    %5041 = vmatmul.mubr.bf16.gmra.mxu0 0
    %v5042 = vpop.f32.mrf.mxu0
    %v5043 = vadd.f32 %v5002, %v5042
    %v5044 = vpop.f32.mrf.mxu0
    %v5045 = vadd.f32 %v5004, %v5044
    %v5046 = vpop.f32.mrf.mxu0
    %v5047 = vpop.f32.mrf.mxu0
    %5048 = vdwg.mxu0
    %5049 = vmatprep.subr.bf16.mxu0 %v3818
    %5050 = vmatpush1.bf16.msra.mxu0 %v3817
    %5051 = vmatprep.subr.bf16.mxu0 %v3802
    %5052 = vmatpush1.bf16.msra.mxu0 %v3801
    %5053 = vmatprep.subr.bf16.mxu0 %v3786
    %5054 = vmatpush1.bf16.msra.mxu0 %v3785
    %5055 = vmatprep.subr.bf16.mxu0 %v3770
    %5056 = vmatpush1.bf16.msra.mxu0 %v3769
    %5057 = vmatprep.subr.bf16.mxu0 %v3754
    %5058 = vmatpush1.bf16.msra.mxu0 %v3753
    %5059 = vmatprep.subr.bf16.mxu0 %v3738
    %5060 = vmatpush1.bf16.msra.mxu0 %v3737
    %5061 = vmatprep.subr.bf16.mxu0 %v3722
    %5062 = vmatpush1.bf16.msra.mxu0 %v3721
    %5063 = vmatprep.subr.bf16.mxu0 %v3706
    %5064 = vmatpush1.bf16.msra.mxu0 %v3705
    %5065 = vmatprep.subr.bf16.mxu0 %v3946
    %5066 = vmatpush2.bf16.msra.mxu0 %v3945
    %5067 = vmatprep.subr.bf16.mxu0 %v3930
    %5068 = vmatpush2.bf16.msra.mxu0 %v3929
    %5069 = vmatprep.subr.bf16.mxu0 %v3914
    %5070 = vmatpush2.bf16.msra.mxu0 %v3913
    %5071 = vmatprep.subr.bf16.mxu0 %v3898
    %5072 = vmatpush2.bf16.msra.mxu0 %v3897
    %5073 = vmatprep.subr.bf16.mxu0 %v3882
    %5074 = vmatpush2.bf16.msra.mxu0 %v3881
    %5075 = vmatprep.subr.bf16.mxu0 %v3866
    %5076 = vmatpush2.bf16.msra.mxu0 %v3865
    %5077 = vmatprep.subr.bf16.mxu0 %v3850
    %5078 = vmatpush2.bf16.msra.mxu0 %v3849
    %5079 = vmatprep.subr.bf16.mxu0 %v3834
    %5080 = vmatpush2.bf16.msra.mxu0 %v3833
    %5081 = vmatprep.mubr.bf16.mxu0 0
    %5082 = vmatmul.mubr.bf16.gmra.mxu0 0
    %v5083 = vpop.f32.mrf.mxu0
    %v5084 = vadd.f32 0.0, %v5083
    %v5085 = vpop.f32.mrf.mxu0
    %v5086 = vadd.f32 0.0, %v5085
    %v5087 = vpop.f32.mrf.mxu0
    %v5088 = vpop.f32.mrf.mxu0
    %5089 = vdwg.mxu0
    %5090 = vmatprep.subr.bf16.mxu0 %v4074
    %5091 = vmatpush1.bf16.msra.mxu0 %v4073
    %5092 = vmatprep.subr.bf16.mxu0 %v4058
    %5093 = vmatpush1.bf16.msra.mxu0 %v4057
    %5094 = vmatprep.subr.bf16.mxu0 %v4042
    %5095 = vmatpush1.bf16.msra.mxu0 %v4041
    %5096 = vmatprep.subr.bf16.mxu0 %v4026
    %5097 = vmatpush1.bf16.msra.mxu0 %v4025
    %5098 = vmatprep.subr.bf16.mxu0 %v4010
    %5099 = vmatpush1.bf16.msra.mxu0 %v4009
    %5100 = vmatprep.subr.bf16.mxu0 %v3994
    %5101 = vmatpush1.bf16.msra.mxu0 %v3993
    %5102 = vmatprep.subr.bf16.mxu0 %v3978
    %5103 = vmatpush1.bf16.msra.mxu0 %v3977
    %5104 = vmatprep.subr.bf16.mxu0 %v3962
    %5105 = vmatpush1.bf16.msra.mxu0 %v3961
    %5106 = vmatprep.subr.bf16.mxu0 %v4202
    %5107 = vmatpush2.bf16.msra.mxu0 %v4201
    %5108 = vmatprep.subr.bf16.mxu0 %v4186
    %5109 = vmatpush2.bf16.msra.mxu0 %v4185
    %5110 = vmatprep.subr.bf16.mxu0 %v4170
    %5111 = vmatpush2.bf16.msra.mxu0 %v4169
    %5112 = vmatprep.subr.bf16.mxu0 %v4154
    %5113 = vmatpush2.bf16.msra.mxu0 %v4153
    %5114 = vmatprep.subr.bf16.mxu0 %v4138
    %5115 = vmatpush2.bf16.msra.mxu0 %v4137
    %5116 = vmatprep.subr.bf16.mxu0 %v4122
    %5117 = vmatpush2.bf16.msra.mxu0 %v4121
    %5118 = vmatprep.subr.bf16.mxu0 %v4106
    %5119 = vmatpush2.bf16.msra.mxu0 %v4105
    %5120 = vmatprep.subr.bf16.mxu0 %v4090
    %5121 = vmatpush2.bf16.msra.mxu0 %v4089
    %5122 = vmatprep.mubr.bf16.mxu0 0
    %5123 = vmatmul.mubr.bf16.gmra.mxu0 0
    %v5124 = vpop.f32.mrf.mxu0
    %v5125 = vadd.f32 %v5084, %v5124
    %v5126 = vpop.f32.mrf.mxu0
    %v5127 = vadd.f32 %v5086, %v5126
    %v5128 = vpop.f32.mrf.mxu0
    %v5129 = vpop.f32.mrf.mxu0
    %5130 = vdwg.mxu0
    %5131 = vmatprep.subr.bf16.mxu0 %v3820
    %5132 = vmatpush1.bf16.msra.mxu0 %v3819
    %5133 = vmatprep.subr.bf16.mxu0 %v3804
    %5134 = vmatpush1.bf16.msra.mxu0 %v3803
    %5135 = vmatprep.subr.bf16.mxu0 %v3788
    %5136 = vmatpush1.bf16.msra.mxu0 %v3787
    %5137 = vmatprep.subr.bf16.mxu0 %v3772
    %5138 = vmatpush1.bf16.msra.mxu0 %v3771
    %5139 = vmatprep.subr.bf16.mxu0 %v3756
    %5140 = vmatpush1.bf16.msra.mxu0 %v3755
    %5141 = vmatprep.subr.bf16.mxu0 %v3740
    %5142 = vmatpush1.bf16.msra.mxu0 %v3739
    %5143 = vmatprep.subr.bf16.mxu0 %v3724
    %5144 = vmatpush1.bf16.msra.mxu0 %v3723
    %5145 = vmatprep.subr.bf16.mxu0 %v3708
    %5146 = vmatpush1.bf16.msra.mxu0 %v3707
    %5147 = vmatprep.subr.bf16.mxu0 %v3948
    %5148 = vmatpush2.bf16.msra.mxu0 %v3947
    %5149 = vmatprep.subr.bf16.mxu0 %v3932
    %5150 = vmatpush2.bf16.msra.mxu0 %v3931
    %5151 = vmatprep.subr.bf16.mxu0 %v3916
    %5152 = vmatpush2.bf16.msra.mxu0 %v3915
    %5153 = vmatprep.subr.bf16.mxu0 %v3900
    %5154 = vmatpush2.bf16.msra.mxu0 %v3899
    %5155 = vmatprep.subr.bf16.mxu0 %v3884
    %5156 = vmatpush2.bf16.msra.mxu0 %v3883
    %5157 = vmatprep.subr.bf16.mxu0 %v3868
    %5158 = vmatpush2.bf16.msra.mxu0 %v3867
    %5159 = vmatprep.subr.bf16.mxu0 %v3852
    %5160 = vmatpush2.bf16.msra.mxu0 %v3851
    %5161 = vmatprep.subr.bf16.mxu0 %v3836
    %5162 = vmatpush2.bf16.msra.mxu0 %v3835
    %5163 = vmatprep.mubr.bf16.mxu0 0
    %5164 = vmatmul.mubr.bf16.gmra.mxu0 0
    %v5165 = vpop.f32.mrf.mxu0
    %v5166 = vadd.f32 0.0, %v5165
    %v5167 = vpop.f32.mrf.mxu0
    %v5168 = vadd.f32 0.0, %v5167
    %v5169 = vpop.f32.mrf.mxu0
    %v5170 = vpop.f32.mrf.mxu0
    %5171 = vdwg.mxu0
    %5172 = vmatprep.subr.bf16.mxu0 %v4076
    %5173 = vmatpush1.bf16.msra.mxu0 %v4075
    %5174 = vmatprep.subr.bf16.mxu0 %v4060
    %5175 = vmatpush1.bf16.msra.mxu0 %v4059
    %5176 = vmatprep.subr.bf16.mxu0 %v4044
    %5177 = vmatpush1.bf16.msra.mxu0 %v4043
    %5178 = vmatprep.subr.bf16.mxu0 %v4028
    %5179 = vmatpush1.bf16.msra.mxu0 %v4027
    %5180 = vmatprep.subr.bf16.mxu0 %v4012
    %5181 = vmatpush1.bf16.msra.mxu0 %v4011
    %5182 = vmatprep.subr.bf16.mxu0 %v3996
    %5183 = vmatpush1.bf16.msra.mxu0 %v3995
    %5184 = vmatprep.subr.bf16.mxu0 %v3980
    %5185 = vmatpush1.bf16.msra.mxu0 %v3979
    %5186 = vmatprep.subr.bf16.mxu0 %v3964
    %5187 = vmatpush1.bf16.msra.mxu0 %v3963
    %5188 = vmatprep.subr.bf16.mxu0 %v4204
    %5189 = vmatpush2.bf16.msra.mxu0 %v4203
    %5190 = vmatprep.subr.bf16.mxu0 %v4188
    %5191 = vmatpush2.bf16.msra.mxu0 %v4187
    %5192 = vmatprep.subr.bf16.mxu0 %v4172
    %5193 = vmatpush2.bf16.msra.mxu0 %v4171
    %5194 = vmatprep.subr.bf16.mxu0 %v4156
    %5195 = vmatpush2.bf16.msra.mxu0 %v4155
    %5196 = vmatprep.subr.bf16.mxu0 %v4140
    %5197 = vmatpush2.bf16.msra.mxu0 %v4139
    %5198 = vmatprep.subr.bf16.mxu0 %v4124
    %5199 = vmatpush2.bf16.msra.mxu0 %v4123
    %5200 = vmatprep.subr.bf16.mxu0 %v4108
    %5201 = vmatpush2.bf16.msra.mxu0 %v4107
    %5202 = vmatprep.subr.bf16.mxu0 %v4092
    %5203 = vmatpush2.bf16.msra.mxu0 %v4091
    %5204 = vmatprep.mubr.bf16.mxu0 0
    %5205 = vmatmul.mubr.bf16.gmra.mxu0 0
    %v5206 = vpop.f32.mrf.mxu0
    %v5207 = vadd.f32 %v5166, %v5206
    %v5208 = vpop.f32.mrf.mxu0
    %v5209 = vadd.f32 %v5168, %v5208
    %v5210 = vpop.f32.mrf.mxu0
    %v5211 = vpop.f32.mrf.mxu0
    %5212 = vdwg.mxu0
    %5213 = vmatprep.subr.bf16.mxu0 %v3822
    %5214 = vmatpush1.bf16.msra.mxu0 %v3821
    %5215 = vmatprep.subr.bf16.mxu0 %v3806
    %5216 = vmatpush1.bf16.msra.mxu0 %v3805
    %5217 = vmatprep.subr.bf16.mxu0 %v3790
    %5218 = vmatpush1.bf16.msra.mxu0 %v3789
    %5219 = vmatprep.subr.bf16.mxu0 %v3774
    %5220 = vmatpush1.bf16.msra.mxu0 %v3773
    %5221 = vmatprep.subr.bf16.mxu0 %v3758
    %5222 = vmatpush1.bf16.msra.mxu0 %v3757
    %5223 = vmatprep.subr.bf16.mxu0 %v3742
    %5224 = vmatpush1.bf16.msra.mxu0 %v3741
    %5225 = vmatprep.subr.bf16.mxu0 %v3726
    %5226 = vmatpush1.bf16.msra.mxu0 %v3725
    %5227 = vmatprep.subr.bf16.mxu0 %v3710
    %5228 = vmatpush1.bf16.msra.mxu0 %v3709
    %5229 = vmatprep.subr.bf16.mxu0 %v3950
    %5230 = vmatpush2.bf16.msra.mxu0 %v3949
    %5231 = vmatprep.subr.bf16.mxu0 %v3934
    %5232 = vmatpush2.bf16.msra.mxu0 %v3933
    %5233 = vmatprep.subr.bf16.mxu0 %v3918
    %5234 = vmatpush2.bf16.msra.mxu0 %v3917
    %5235 = vmatprep.subr.bf16.mxu0 %v3902
    %5236 = vmatpush2.bf16.msra.mxu0 %v3901
    %5237 = vmatprep.subr.bf16.mxu0 %v3886
    %5238 = vmatpush2.bf16.msra.mxu0 %v3885
    %5239 = vmatprep.subr.bf16.mxu0 %v3870
    %5240 = vmatpush2.bf16.msra.mxu0 %v3869
    %5241 = vmatprep.subr.bf16.mxu0 %v3854
    %5242 = vmatpush2.bf16.msra.mxu0 %v3853
    %5243 = vmatprep.subr.bf16.mxu0 %v3838
    %5244 = vmatpush2.bf16.msra.mxu0 %v3837
    %5245 = vmatprep.mubr.bf16.mxu0 0
    %5246 = vmatmul.mubr.bf16.gmra.mxu0 0
    %v5247 = vpop.f32.mrf.mxu0
    %v5248 = vadd.f32 0.0, %v5247
    %v5249 = vpop.f32.mrf.mxu0
    %v5250 = vadd.f32 0.0, %v5249
    %v5251 = vpop.f32.mrf.mxu0
    %v5252 = vpop.f32.mrf.mxu0
    %5253 = vdwg.mxu0
    %5254 = vmatprep.subr.bf16.mxu0 %v4078
    %5255 = vmatpush1.bf16.msra.mxu0 %v4077
    %5256 = vmatprep.subr.bf16.mxu0 %v4062
    %5257 = vmatpush1.bf16.msra.mxu0 %v4061
    %5258 = vmatprep.subr.bf16.mxu0 %v4046
    %5259 = vmatpush1.bf16.msra.mxu0 %v4045
    %5260 = vmatprep.subr.bf16.mxu0 %v4030
    %5261 = vmatpush1.bf16.msra.mxu0 %v4029
    %5262 = vmatprep.subr.bf16.mxu0 %v4014
    %5263 = vmatpush1.bf16.msra.mxu0 %v4013
    %5264 = vmatprep.subr.bf16.mxu0 %v3998
    %5265 = vmatpush1.bf16.msra.mxu0 %v3997
    %5266 = vmatprep.subr.bf16.mxu0 %v3982
    %5267 = vmatpush1.bf16.msra.mxu0 %v3981
    %5268 = vmatprep.subr.bf16.mxu0 %v3966
    %5269 = vmatpush1.bf16.msra.mxu0 %v3965
    %5270 = vmatprep.subr.bf16.mxu0 %v4206
    %5271 = vmatpush2.bf16.msra.mxu0 %v4205
    %5272 = vmatprep.subr.bf16.mxu0 %v4190
    %5273 = vmatpush2.bf16.msra.mxu0 %v4189
    %5274 = vmatprep.subr.bf16.mxu0 %v4174
    %5275 = vmatpush2.bf16.msra.mxu0 %v4173
    %5276 = vmatprep.subr.bf16.mxu0 %v4158
    %5277 = vmatpush2.bf16.msra.mxu0 %v4157
    %5278 = vmatprep.subr.bf16.mxu0 %v4142
    %5279 = vmatpush2.bf16.msra.mxu0 %v4141
    %5280 = vmatprep.subr.bf16.mxu0 %v4126
    %5281 = vmatpush2.bf16.msra.mxu0 %v4125
    %5282 = vmatprep.subr.bf16.mxu0 %v4110
    %5283 = vmatpush2.bf16.msra.mxu0 %v4109
    %5284 = vmatprep.subr.bf16.mxu0 %v4094
    %5285 = vmatpush2.bf16.msra.mxu0 %v4093
    %5286 = vmatprep.mubr.bf16.mxu0 0
    %5287 = vmatmul.mubr.bf16.gmra.mxu0 0
    %v5288 = vpop.f32.mrf.mxu0
    %v5289 = vadd.f32 %v5248, %v5288
    %v5290 = vpop.f32.mrf.mxu0
    %v5291 = vadd.f32 %v5250, %v5290
    %v5292 = vpop.f32.mrf.mxu0
    %v5293 = vpop.f32.mrf.mxu0
    %5294 = vdwg.mxu0
    %5295 = vmatprep.subr.bf16.mxu0 %v3824
    %5296 = vmatpush1.bf16.msra.mxu0 %v3823
    %5297 = vmatprep.subr.bf16.mxu0 %v3808
    %5298 = vmatpush1.bf16.msra.mxu0 %v3807
    %5299 = vmatprep.subr.bf16.mxu0 %v3792
    %5300 = vmatpush1.bf16.msra.mxu0 %v3791
    %5301 = vmatprep.subr.bf16.mxu0 %v3776
    %5302 = vmatpush1.bf16.msra.mxu0 %v3775
    %5303 = vmatprep.subr.bf16.mxu0 %v3760
    %5304 = vmatpush1.bf16.msra.mxu0 %v3759
    %5305 = vmatprep.subr.bf16.mxu0 %v3744
    %5306 = vmatpush1.bf16.msra.mxu0 %v3743
    %5307 = vmatprep.subr.bf16.mxu0 %v3728
    %5308 = vmatpush1.bf16.msra.mxu0 %v3727
    %5309 = vmatprep.subr.bf16.mxu0 %v3712
    %5310 = vmatpush1.bf16.msra.mxu0 %v3711
    %5311 = vmatprep.subr.bf16.mxu0 %v3952
    %5312 = vmatpush2.bf16.msra.mxu0 %v3951
    %5313 = vmatprep.subr.bf16.mxu0 %v3936
    %5314 = vmatpush2.bf16.msra.mxu0 %v3935
    %5315 = vmatprep.subr.bf16.mxu0 %v3920
    %5316 = vmatpush2.bf16.msra.mxu0 %v3919
    %5317 = vmatprep.subr.bf16.mxu0 %v3904
    %5318 = vmatpush2.bf16.msra.mxu0 %v3903
    %5319 = vmatprep.subr.bf16.mxu0 %v3888
    %5320 = vmatpush2.bf16.msra.mxu0 %v3887
    %5321 = vmatprep.subr.bf16.mxu0 %v3872
    %5322 = vmatpush2.bf16.msra.mxu0 %v3871
    %5323 = vmatprep.subr.bf16.mxu0 %v3856
    %5324 = vmatpush2.bf16.msra.mxu0 %v3855
    %5325 = vmatprep.subr.bf16.mxu0 %v3840
    %5326 = vmatpush2.bf16.msra.mxu0 %v3839
    %5327 = vmatprep.mubr.bf16.mxu0 0
    %5328 = vmatmul.mubr.bf16.gmra.mxu0 0
    %v5329 = vpop.f32.mrf.mxu0
    %v5330 = vadd.f32 0.0, %v5329
    %v5331 = vpop.f32.mrf.mxu0
    %v5332 = vadd.f32 0.0, %v5331
    %v5333 = vpop.f32.mrf.mxu0
    %v5334 = vpop.f32.mrf.mxu0
    %5335 = vdwg.mxu0
    %5336 = vmatprep.subr.bf16.mxu0 %v4080
    %5337 = vmatpush1.bf16.msra.mxu0 %v4079
    %5338 = vmatprep.subr.bf16.mxu0 %v4064
    %5339 = vmatpush1.bf16.msra.mxu0 %v4063
    %5340 = vmatprep.subr.bf16.mxu0 %v4048
    %5341 = vmatpush1.bf16.msra.mxu0 %v4047
    %5342 = vmatprep.subr.bf16.mxu0 %v4032
    %5343 = vmatpush1.bf16.msra.mxu0 %v4031
    %5344 = vmatprep.subr.bf16.mxu0 %v4016
    %5345 = vmatpush1.bf16.msra.mxu0 %v4015
    %5346 = vmatprep.subr.bf16.mxu0 %v4000
    %5347 = vmatpush1.bf16.msra.mxu0 %v3999
    %5348 = vmatprep.subr.bf16.mxu0 %v3984
    %5349 = vmatpush1.bf16.msra.mxu0 %v3983
    %5350 = vmatprep.subr.bf16.mxu0 %v3968
    %5351 = vmatpush1.bf16.msra.mxu0 %v3967
    %5352 = vmatprep.subr.bf16.mxu0 %v4208
    %5353 = vmatpush2.bf16.msra.mxu0 %v4207
    %5354 = vmatprep.subr.bf16.mxu0 %v4192
    %5355 = vmatpush2.bf16.msra.mxu0 %v4191
    %5356 = vmatprep.subr.bf16.mxu0 %v4176
    %5357 = vmatpush2.bf16.msra.mxu0 %v4175
    %5358 = vmatprep.subr.bf16.mxu0 %v4160
    %5359 = vmatpush2.bf16.msra.mxu0 %v4159
    %5360 = vmatprep.subr.bf16.mxu0 %v4144
    %5361 = vmatpush2.bf16.msra.mxu0 %v4143
    %5362 = vmatprep.subr.bf16.mxu0 %v4128
    %5363 = vmatpush2.bf16.msra.mxu0 %v4127
    %5364 = vmatprep.subr.bf16.mxu0 %v4112
    %5365 = vmatpush2.bf16.msra.mxu0 %v4111
    %5366 = vmatprep.subr.bf16.mxu0 %v4096
    %5367 = vmatpush2.bf16.msra.mxu0 %v4095
    %5368 = vmatprep.mubr.bf16.mxu0 0
    %5369 = vmatmul.mubr.bf16.gmra.mxu0 0
    %v5370 = vpop.f32.mrf.mxu0
    %v5371 = vadd.f32 %v5330, %v5370
    %v5372 = vpop.f32.mrf.mxu0
    %v5373 = vadd.f32 %v5332, %v5372
    %v5374 = vpop.f32.mrf.mxu0
    %v5375 = vpop.f32.mrf.mxu0
    %5376 = vdwg.mxu0
    %v5377 = vadd.f32 %v1633, %v4797
    %v5378 = vadd.f32 %v1634, %v4799
    %v5379 = vadd.f32 %v1635, %v4879
    %v5380 = vadd.f32 %v1636, %v4881
    %v5381 = vadd.f32 %v1637, %v4961
    %v5382 = vadd.f32 %v1638, %v4963
    %v5383 = vadd.f32 %v1639, %v5043
    %v5384 = vadd.f32 %v1640, %v5045
    %v5385 = vadd.f32 %v1641, %v5125
    %v5386 = vadd.f32 %v1642, %v5127
    %v5387 = vadd.f32 %v1643, %v5207
    %v5388 = vadd.f32 %v1644, %v5209
    %v5389 = vadd.f32 %v1645, %v5289
    %v5390 = vadd.f32 %v1646, %v5291
    %v5391 = vadd.f32 %v1647, %v5371
    %v5392 = vadd.f32 %v1648, %v5373
    %v5393 = vxor.u32 %v5377, 2147483648
    %v5394 = vxor.u32 %v5378, 2147483648
    %v5395 = vxor.u32 %v5379, 2147483648
    %v5396 = vxor.u32 %v5380, 2147483648
    %v5397 = vmul.f32 %v5393, 1.442695
    %v5398 = vpow.pop %v5397
    %v5399 = vmul.f32 %v5394, 1.442695
    %v5400 = vpow.pop %v5399
    %v5401 = vmul.f32 %v5395, 1.442695
    %v5402 = vpow.pop %v5401
    %v5403 = vmul.f32 %v5396, 1.442695
    %v5404 = vpow.pop %v5403
    %v5405 = vadd.f32 %v5398, 1.0
    %v5406 = vadd.f32 %v5400, 1.0
    %v5407 = vadd.f32 %v5402, 1.0
    %v5408 = vadd.f32 %v5404, 1.0
    %v5409 = vrcp.pop %v5405
    %v5410 = vmul.f32 1.0, %v5409
    %v5411 = vrcp.pop %v5406
    %v5412 = vmul.f32 1.0, %v5411
    %v5413 = vrcp.pop %v5407
    %v5414 = vmul.f32 1.0, %v5413
    %v5415 = vrcp.pop %v5408
    %v5416 = vmul.f32 1.0, %v5415
    %v5417 = vxor.u32 %v5381, 2147483648
    %v5418 = vxor.u32 %v5382, 2147483648
    %v5419 = vxor.u32 %v5383, 2147483648
    %v5420 = vxor.u32 %v5384, 2147483648
    %v5421 = vmul.f32 %v5417, 1.442695
    %v5422 = vpow.pop %v5421
    %v5423 = vmul.f32 %v5418, 1.442695
    %v5424 = vpow.pop %v5423
    %v5425 = vmul.f32 %v5419, 1.442695
    %v5426 = vpow.pop %v5425
    %v5427 = vmul.f32 %v5420, 1.442695
    %v5428 = vpow.pop %v5427
    %v5429 = vadd.f32 %v5422, 1.0
    %v5430 = vadd.f32 %v5424, 1.0
    %v5431 = vadd.f32 %v5426, 1.0
    %v5432 = vadd.f32 %v5428, 1.0
    %v5433 = vrcp.pop %v5429
    %v5434 = vmul.f32 1.0, %v5433
    %v5435 = vrcp.pop %v5430
    %v5436 = vmul.f32 1.0, %v5435
    %v5437 = vrcp.pop %v5431
    %v5438 = vmul.f32 1.0, %v5437
    %v5439 = vrcp.pop %v5432
    %v5440 = vmul.f32 1.0, %v5439
    %v5441 = vtanh.pop %v5385
    %v5442 = vtanh.pop %v5386
    %v5443 = vtanh.pop %v5387
    %v5444 = vtanh.pop %v5388
    %v5445 = vxor.u32 %v5389, 2147483648
    %v5446 = vxor.u32 %v5390, 2147483648
    %v5447 = vxor.u32 %v5391, 2147483648
    %v5448 = vxor.u32 %v5392, 2147483648
    %v5449 = vmul.f32 %v5445, 1.442695
    %v5450 = vpow.pop %v5449
    %v5451 = vmul.f32 %v5446, 1.442695
    %v5452 = vpow.pop %v5451
    %v5453 = vmul.f32 %v5447, 1.442695
    %v5454 = vpow.pop %v5453
    %v5455 = vmul.f32 %v5448, 1.442695
    %v5456 = vpow.pop %v5455
    %v5457 = vadd.f32 %v5450, 1.0
    %v5458 = vadd.f32 %v5452, 1.0
    %v5459 = vadd.f32 %v5454, 1.0
    %v5460 = vadd.f32 %v5456, 1.0
    %v5461 = vrcp.pop %v5457
    %v5462 = vmul.f32 1.0, %v5461
    %v5463 = vrcp.pop %v5458
    %v5464 = vmul.f32 1.0, %v5463
    %v5465 = vrcp.pop %v5459
    %v5466 = vmul.f32 1.0, %v5465
    %v5467 = vrcp.pop %v5460
    %v5468 = vmul.f32 1.0, %v5467
    %v5469 = vmul.f32 %v5434, 0.0
    %v5470 = vmul.f32 %v5436, 0.0
    %v5471 = vmul.f32 %v5438, 0.0
    %v5472 = vmul.f32 %v5440, 0.0
    %v5473 = vmul.f32 %v5410, %v5441
    %v5474 = vmul.f32 %v5412, %v5442
    %v5475 = vmul.f32 %v5414, %v5443
    %v5476 = vmul.f32 %v5416, %v5444
    %v5477 = vadd.f32 %v5469, %v5473
    %v5478 = vadd.f32 %v5470, %v5474
    %v5479 = vadd.f32 %v5471, %v5475
    %v5480 = vadd.f32 %v5472, %v5476
    %v5481 = vtanh.pop %v5477
    %v5482 = vtanh.pop %v5478
    %v5483 = vtanh.pop %v5479
    %v5484 = vtanh.pop %v5480
    %v5485 = vmul.f32 %v5462, %v5481
    %v5486 = vmul.f32 %v5464, %v5482
    %v5487 = vmul.f32 %v5466, %v5483
    %v5488 = vmul.f32 %v5468, %v5484
    %s5489 = smul.u32 1, 16
    %s5490 = smul.addr %s5489, 8
    %s5491 = scalar_lea.vmem [#allocation2], %s5490
    %v5492 = vld [vmem:[%s5491] sm:$0xff]
    %v5493 = vld [vmem:[%s5491 + $0x8] sm:$0xff]
    %v5494 = vld [vmem:[%s5491 + $0x10] sm:$0xff]
    %v5495 = vld [vmem:[%s5491 + $0x18] sm:$0xff]
    %v5496 = vld [vmem:[%s5491 + $0x20] sm:$0xff]
    %v5497 = vld [vmem:[%s5491 + $0x28] sm:$0xff]
    %v5498 = vld [vmem:[%s5491 + $0x30] sm:$0xff]
    %v5499 = vld [vmem:[%s5491 + $0x38] sm:$0xff]
    %v5500 = vld [vmem:[%s5491 + $0x40] sm:$0xff]
    %v5501 = vld [vmem:[%s5491 + $0x48] sm:$0xff]
    %v5502 = vld [vmem:[%s5491 + $0x50] sm:$0xff]
    %v5503 = vld [vmem:[%s5491 + $0x58] sm:$0xff]
    %v5504 = vld [vmem:[%s5491 + $0x60] sm:$0xff]
    %v5505 = vld [vmem:[%s5491 + $0x68] sm:$0xff]
    %v5506 = vld [vmem:[%s5491 + $0x70] sm:$0xff]
    %v5507 = vld [vmem:[%s5491 + $0x78] sm:$0xff]
    %v5508 = vpack.c.bf16 %v5485, %v5485
    %v5509 = vpack.c.bf16 %v5486, %v5486
    %v5510 = vpack.c.bf16 %v5487, %v5487
    %v5511 = vpack.c.bf16 %v5488, %v5488
    %5512 = vmatprep.subr.bf16.mxu0 %v3810
    %5513 = vmatpush1.bf16.msra.mxu0 %v3809
    %5514 = vmatprep.subr.bf16.mxu0 %v3794
    %5515 = vmatpush1.bf16.msra.mxu0 %v3793
    %5516 = vmatprep.subr.bf16.mxu0 %v3778
    %5517 = vmatpush1.bf16.msra.mxu0 %v3777
    %5518 = vmatprep.subr.bf16.mxu0 %v3762
    %5519 = vmatpush1.bf16.msra.mxu0 %v3761
    %5520 = vmatprep.subr.bf16.mxu0 %v3746
    %5521 = vmatpush1.bf16.msra.mxu0 %v3745
    %5522 = vmatprep.subr.bf16.mxu0 %v3730
    %5523 = vmatpush1.bf16.msra.mxu0 %v3729
    %5524 = vmatprep.subr.bf16.mxu0 %v3714
    %5525 = vmatpush1.bf16.msra.mxu0 %v3713
    %5526 = vmatprep.subr.bf16.mxu0 %v3698
    %5527 = vmatpush1.bf16.msra.mxu0 %v3697
    %5528 = vmatprep.subr.bf16.mxu0 %v3938
    %5529 = vmatpush2.bf16.msra.mxu0 %v3937
    %5530 = vmatprep.subr.bf16.mxu0 %v3922
    %5531 = vmatpush2.bf16.msra.mxu0 %v3921
    %5532 = vmatprep.subr.bf16.mxu0 %v3906
    %5533 = vmatpush2.bf16.msra.mxu0 %v3905
    %5534 = vmatprep.subr.bf16.mxu0 %v3890
    %5535 = vmatpush2.bf16.msra.mxu0 %v3889
    %5536 = vmatprep.subr.bf16.mxu0 %v3874
    %5537 = vmatpush2.bf16.msra.mxu0 %v3873
    %5538 = vmatprep.subr.bf16.mxu0 %v3858
    %5539 = vmatpush2.bf16.msra.mxu0 %v3857
    %5540 = vmatprep.subr.bf16.mxu0 %v3842
    %5541 = vmatpush2.bf16.msra.mxu0 %v3841
    %5542 = vmatprep.subr.bf16.mxu0 %v3826
    %5543 = vmatpush2.bf16.msra.mxu0 %v3825
    %5544 = vmatprep.mubr.bf16.mxu0 %v5509
    %5545 = vmatmul.mubr.bf16.gmra.mxu0 %v5508
    %v5546 = vpop.f32.mrf.mxu0
    %v5547 = vadd.f32 0.0, %v5546
    %v5548 = vpop.f32.mrf.mxu0
    %v5549 = vadd.f32 0.0, %v5548
    %v5550 = vpop.f32.mrf.mxu0
    %v5551 = vpop.f32.mrf.mxu0
    %5552 = vdwg.mxu0
    %5553 = vmatprep.subr.bf16.mxu0 %v4066
    %5554 = vmatpush1.bf16.msra.mxu0 %v4065
    %5555 = vmatprep.subr.bf16.mxu0 %v4050
    %5556 = vmatpush1.bf16.msra.mxu0 %v4049
    %5557 = vmatprep.subr.bf16.mxu0 %v4034
    %5558 = vmatpush1.bf16.msra.mxu0 %v4033
    %5559 = vmatprep.subr.bf16.mxu0 %v4018
    %5560 = vmatpush1.bf16.msra.mxu0 %v4017
    %5561 = vmatprep.subr.bf16.mxu0 %v4002
    %5562 = vmatpush1.bf16.msra.mxu0 %v4001
    %5563 = vmatprep.subr.bf16.mxu0 %v3986
    %5564 = vmatpush1.bf16.msra.mxu0 %v3985
    %5565 = vmatprep.subr.bf16.mxu0 %v3970
    %5566 = vmatpush1.bf16.msra.mxu0 %v3969
    %5567 = vmatprep.subr.bf16.mxu0 %v3954
    %5568 = vmatpush1.bf16.msra.mxu0 %v3953
    %5569 = vmatprep.subr.bf16.mxu0 %v4194
    %5570 = vmatpush2.bf16.msra.mxu0 %v4193
    %5571 = vmatprep.subr.bf16.mxu0 %v4178
    %5572 = vmatpush2.bf16.msra.mxu0 %v4177
    %5573 = vmatprep.subr.bf16.mxu0 %v4162
    %5574 = vmatpush2.bf16.msra.mxu0 %v4161
    %5575 = vmatprep.subr.bf16.mxu0 %v4146
    %5576 = vmatpush2.bf16.msra.mxu0 %v4145
    %5577 = vmatprep.subr.bf16.mxu0 %v4130
    %5578 = vmatpush2.bf16.msra.mxu0 %v4129
    %5579 = vmatprep.subr.bf16.mxu0 %v4114
    %5580 = vmatpush2.bf16.msra.mxu0 %v4113
    %5581 = vmatprep.subr.bf16.mxu0 %v4098
    %5582 = vmatpush2.bf16.msra.mxu0 %v4097
    %5583 = vmatprep.subr.bf16.mxu0 %v4082
    %5584 = vmatpush2.bf16.msra.mxu0 %v4081
    %5585 = vmatprep.mubr.bf16.mxu0 %v5511
    %5586 = vmatmul.mubr.bf16.gmra.mxu0 %v5510
    %v5587 = vpop.f32.mrf.mxu0
    %v5588 = vadd.f32 %v5547, %v5587
    %v5589 = vpop.f32.mrf.mxu0
    %v5590 = vadd.f32 %v5549, %v5589
    %v5591 = vpop.f32.mrf.mxu0
    %v5592 = vpop.f32.mrf.mxu0
    %5593 = vdwg.mxu0
    %5594 = vmatprep.subr.bf16.mxu0 %v3812
    %5595 = vmatpush1.bf16.msra.mxu0 %v3811
    %5596 = vmatprep.subr.bf16.mxu0 %v3796
    %5597 = vmatpush1.bf16.msra.mxu0 %v3795
    %5598 = vmatprep.subr.bf16.mxu0 %v3780
    %5599 = vmatpush1.bf16.msra.mxu0 %v3779
    %5600 = vmatprep.subr.bf16.mxu0 %v3764
    %5601 = vmatpush1.bf16.msra.mxu0 %v3763
    %5602 = vmatprep.subr.bf16.mxu0 %v3748
    %5603 = vmatpush1.bf16.msra.mxu0 %v3747
    %5604 = vmatprep.subr.bf16.mxu0 %v3732
    %5605 = vmatpush1.bf16.msra.mxu0 %v3731
    %5606 = vmatprep.subr.bf16.mxu0 %v3716
    %5607 = vmatpush1.bf16.msra.mxu0 %v3715
    %5608 = vmatprep.subr.bf16.mxu0 %v3700
    %5609 = vmatpush1.bf16.msra.mxu0 %v3699
    %5610 = vmatprep.subr.bf16.mxu0 %v3940
    %5611 = vmatpush2.bf16.msra.mxu0 %v3939
    %5612 = vmatprep.subr.bf16.mxu0 %v3924
    %5613 = vmatpush2.bf16.msra.mxu0 %v3923
    %5614 = vmatprep.subr.bf16.mxu0 %v3908
    %5615 = vmatpush2.bf16.msra.mxu0 %v3907
    %5616 = vmatprep.subr.bf16.mxu0 %v3892
    %5617 = vmatpush2.bf16.msra.mxu0 %v3891
    %5618 = vmatprep.subr.bf16.mxu0 %v3876
    %5619 = vmatpush2.bf16.msra.mxu0 %v3875
    %5620 = vmatprep.subr.bf16.mxu0 %v3860
    %5621 = vmatpush2.bf16.msra.mxu0 %v3859
    %5622 = vmatprep.subr.bf16.mxu0 %v3844
    %5623 = vmatpush2.bf16.msra.mxu0 %v3843
    %5624 = vmatprep.subr.bf16.mxu0 %v3828
    %5625 = vmatpush2.bf16.msra.mxu0 %v3827
    %5626 = vmatprep.mubr.bf16.mxu0 %v5509
    %5627 = vmatmul.mubr.bf16.gmra.mxu0 %v5508
    %v5628 = vpop.f32.mrf.mxu0
    %v5629 = vadd.f32 0.0, %v5628
    %v5630 = vpop.f32.mrf.mxu0
    %v5631 = vadd.f32 0.0, %v5630
    %v5632 = vpop.f32.mrf.mxu0
    %v5633 = vpop.f32.mrf.mxu0
    %5634 = vdwg.mxu0
    %5635 = vmatprep.subr.bf16.mxu0 %v4068
    %5636 = vmatpush1.bf16.msra.mxu0 %v4067
    %5637 = vmatprep.subr.bf16.mxu0 %v4052
    %5638 = vmatpush1.bf16.msra.mxu0 %v4051
    %5639 = vmatprep.subr.bf16.mxu0 %v4036
    %5640 = vmatpush1.bf16.msra.mxu0 %v4035
    %5641 = vmatprep.subr.bf16.mxu0 %v4020
    %5642 = vmatpush1.bf16.msra.mxu0 %v4019
    %5643 = vmatprep.subr.bf16.mxu0 %v4004
    %5644 = vmatpush1.bf16.msra.mxu0 %v4003
    %5645 = vmatprep.subr.bf16.mxu0 %v3988
    %5646 = vmatpush1.bf16.msra.mxu0 %v3987
    %5647 = vmatprep.subr.bf16.mxu0 %v3972
    %5648 = vmatpush1.bf16.msra.mxu0 %v3971
    %5649 = vmatprep.subr.bf16.mxu0 %v3956
    %5650 = vmatpush1.bf16.msra.mxu0 %v3955
    %5651 = vmatprep.subr.bf16.mxu0 %v4196
    %5652 = vmatpush2.bf16.msra.mxu0 %v4195
    %5653 = vmatprep.subr.bf16.mxu0 %v4180
    %5654 = vmatpush2.bf16.msra.mxu0 %v4179
    %5655 = vmatprep.subr.bf16.mxu0 %v4164
    %5656 = vmatpush2.bf16.msra.mxu0 %v4163
    %5657 = vmatprep.subr.bf16.mxu0 %v4148
    %5658 = vmatpush2.bf16.msra.mxu0 %v4147
    %5659 = vmatprep.subr.bf16.mxu0 %v4132
    %5660 = vmatpush2.bf16.msra.mxu0 %v4131
    %5661 = vmatprep.subr.bf16.mxu0 %v4116
    %5662 = vmatpush2.bf16.msra.mxu0 %v4115
    %5663 = vmatprep.subr.bf16.mxu0 %v4100
    %5664 = vmatpush2.bf16.msra.mxu0 %v4099
    %5665 = vmatprep.subr.bf16.mxu0 %v4084
    %5666 = vmatpush2.bf16.msra.mxu0 %v4083
    %5667 = vmatprep.mubr.bf16.mxu0 %v5511
    %5668 = vmatmul.mubr.bf16.gmra.mxu0 %v5510
    %v5669 = vpop.f32.mrf.mxu0
    %v5670 = vadd.f32 %v5629, %v5669
    %v5671 = vpop.f32.mrf.mxu0
    %v5672 = vadd.f32 %v5631, %v5671
    %v5673 = vpop.f32.mrf.mxu0
    %v5674 = vpop.f32.mrf.mxu0
    %5675 = vdwg.mxu0
    %5676 = vmatprep.subr.bf16.mxu0 %v3814
    %5677 = vmatpush1.bf16.msra.mxu0 %v3813
    %5678 = vmatprep.subr.bf16.mxu0 %v3798
    %5679 = vmatpush1.bf16.msra.mxu0 %v3797
    %5680 = vmatprep.subr.bf16.mxu0 %v3782
    %5681 = vmatpush1.bf16.msra.mxu0 %v3781
    %5682 = vmatprep.subr.bf16.mxu0 %v3766
    %5683 = vmatpush1.bf16.msra.mxu0 %v3765
    %5684 = vmatprep.subr.bf16.mxu0 %v3750
    %5685 = vmatpush1.bf16.msra.mxu0 %v3749
    %5686 = vmatprep.subr.bf16.mxu0 %v3734
    %5687 = vmatpush1.bf16.msra.mxu0 %v3733
    %5688 = vmatprep.subr.bf16.mxu0 %v3718
    %5689 = vmatpush1.bf16.msra.mxu0 %v3717
    %5690 = vmatprep.subr.bf16.mxu0 %v3702
    %5691 = vmatpush1.bf16.msra.mxu0 %v3701
    %5692 = vmatprep.subr.bf16.mxu0 %v3942
    %5693 = vmatpush2.bf16.msra.mxu0 %v3941
    %5694 = vmatprep.subr.bf16.mxu0 %v3926
    %5695 = vmatpush2.bf16.msra.mxu0 %v3925
    %5696 = vmatprep.subr.bf16.mxu0 %v3910
    %5697 = vmatpush2.bf16.msra.mxu0 %v3909
    %5698 = vmatprep.subr.bf16.mxu0 %v3894
    %5699 = vmatpush2.bf16.msra.mxu0 %v3893
    %5700 = vmatprep.subr.bf16.mxu0 %v3878
    %5701 = vmatpush2.bf16.msra.mxu0 %v3877
    %5702 = vmatprep.subr.bf16.mxu0 %v3862
    %5703 = vmatpush2.bf16.msra.mxu0 %v3861
    %5704 = vmatprep.subr.bf16.mxu0 %v3846
    %5705 = vmatpush2.bf16.msra.mxu0 %v3845
    %5706 = vmatprep.subr.bf16.mxu0 %v3830
    %5707 = vmatpush2.bf16.msra.mxu0 %v3829
    %5708 = vmatprep.mubr.bf16.mxu0 %v5509
    %5709 = vmatmul.mubr.bf16.gmra.mxu0 %v5508
    %v5710 = vpop.f32.mrf.mxu0
    %v5711 = vadd.f32 0.0, %v5710
    %v5712 = vpop.f32.mrf.mxu0
    %v5713 = vadd.f32 0.0, %v5712
    %v5714 = vpop.f32.mrf.mxu0
    %v5715 = vpop.f32.mrf.mxu0
    %5716 = vdwg.mxu0
    %5717 = vmatprep.subr.bf16.mxu0 %v4070
    %5718 = vmatpush1.bf16.msra.mxu0 %v4069
    %5719 = vmatprep.subr.bf16.mxu0 %v4054
    %5720 = vmatpush1.bf16.msra.mxu0 %v4053
    %5721 = vmatprep.subr.bf16.mxu0 %v4038
    %5722 = vmatpush1.bf16.msra.mxu0 %v4037
    %5723 = vmatprep.subr.bf16.mxu0 %v4022
    %5724 = vmatpush1.bf16.msra.mxu0 %v4021
    %5725 = vmatprep.subr.bf16.mxu0 %v4006
    %5726 = vmatpush1.bf16.msra.mxu0 %v4005
    %5727 = vmatprep.subr.bf16.mxu0 %v3990
    %5728 = vmatpush1.bf16.msra.mxu0 %v3989
    %5729 = vmatprep.subr.bf16.mxu0 %v3974
    %5730 = vmatpush1.bf16.msra.mxu0 %v3973
    %5731 = vmatprep.subr.bf16.mxu0 %v3958
    %5732 = vmatpush1.bf16.msra.mxu0 %v3957
    %5733 = vmatprep.subr.bf16.mxu0 %v4198
    %5734 = vmatpush2.bf16.msra.mxu0 %v4197
    %5735 = vmatprep.subr.bf16.mxu0 %v4182
    %5736 = vmatpush2.bf16.msra.mxu0 %v4181
    %5737 = vmatprep.subr.bf16.mxu0 %v4166
    %5738 = vmatpush2.bf16.msra.mxu0 %v4165
    %5739 = vmatprep.subr.bf16.mxu0 %v4150
    %5740 = vmatpush2.bf16.msra.mxu0 %v4149
    %5741 = vmatprep.subr.bf16.mxu0 %v4134
    %5742 = vmatpush2.bf16.msra.mxu0 %v4133
    %5743 = vmatprep.subr.bf16.mxu0 %v4118
    %5744 = vmatpush2.bf16.msra.mxu0 %v4117
    %5745 = vmatprep.subr.bf16.mxu0 %v4102
    %5746 = vmatpush2.bf16.msra.mxu0 %v4101
    %5747 = vmatprep.subr.bf16.mxu0 %v4086
    %5748 = vmatpush2.bf16.msra.mxu0 %v4085
    %5749 = vmatprep.mubr.bf16.mxu0 %v5511
    %5750 = vmatmul.mubr.bf16.gmra.mxu0 %v5510
    %v5751 = vpop.f32.mrf.mxu0
    %v5752 = vadd.f32 %v5711, %v5751
    %v5753 = vpop.f32.mrf.mxu0
    %v5754 = vadd.f32 %v5713, %v5753
    %v5755 = vpop.f32.mrf.mxu0
    %v5756 = vpop.f32.mrf.mxu0
    %5757 = vdwg.mxu0
    %5758 = vmatprep.subr.bf16.mxu0 %v3816
    %5759 = vmatpush1.bf16.msra.mxu0 %v3815
    %5760 = vmatprep.subr.bf16.mxu0 %v3800
    %5761 = vmatpush1.bf16.msra.mxu0 %v3799
    %5762 = vmatprep.subr.bf16.mxu0 %v3784
    %5763 = vmatpush1.bf16.msra.mxu0 %v3783
    %5764 = vmatprep.subr.bf16.mxu0 %v3768
    %5765 = vmatpush1.bf16.msra.mxu0 %v3767
    %5766 = vmatprep.subr.bf16.mxu0 %v3752
    %5767 = vmatpush1.bf16.msra.mxu0 %v3751
    %5768 = vmatprep.subr.bf16.mxu0 %v3736
    %5769 = vmatpush1.bf16.msra.mxu0 %v3735
    %5770 = vmatprep.subr.bf16.mxu0 %v3720
    %5771 = vmatpush1.bf16.msra.mxu0 %v3719
    %5772 = vmatprep.subr.bf16.mxu0 %v3704
    %5773 = vmatpush1.bf16.msra.mxu0 %v3703
    %5774 = vmatprep.subr.bf16.mxu0 %v3944
    %5775 = vmatpush2.bf16.msra.mxu0 %v3943
    %5776 = vmatprep.subr.bf16.mxu0 %v3928
    %5777 = vmatpush2.bf16.msra.mxu0 %v3927
    %5778 = vmatprep.subr.bf16.mxu0 %v3912
    %5779 = vmatpush2.bf16.msra.mxu0 %v3911
    %5780 = vmatprep.subr.bf16.mxu0 %v3896
    %5781 = vmatpush2.bf16.msra.mxu0 %v3895
    %5782 = vmatprep.subr.bf16.mxu0 %v3880
    %5783 = vmatpush2.bf16.msra.mxu0 %v3879
    %5784 = vmatprep.subr.bf16.mxu0 %v3864
    %5785 = vmatpush2.bf16.msra.mxu0 %v3863
    %5786 = vmatprep.subr.bf16.mxu0 %v3848
    %5787 = vmatpush2.bf16.msra.mxu0 %v3847
    %5788 = vmatprep.subr.bf16.mxu0 %v3832
    %5789 = vmatpush2.bf16.msra.mxu0 %v3831
    %5790 = vmatprep.mubr.bf16.mxu0 %v5509
    %5791 = vmatmul.mubr.bf16.gmra.mxu0 %v5508
    %v5792 = vpop.f32.mrf.mxu0
    %v5793 = vadd.f32 0.0, %v5792
    %v5794 = vpop.f32.mrf.mxu0
    %v5795 = vadd.f32 0.0, %v5794
    %v5796 = vpop.f32.mrf.mxu0
    %v5797 = vpop.f32.mrf.mxu0
    %5798 = vdwg.mxu0
    %5799 = vmatprep.subr.bf16.mxu0 %v4072
    %5800 = vmatpush1.bf16.msra.mxu0 %v4071
    %5801 = vmatprep.subr.bf16.mxu0 %v4056
    %5802 = vmatpush1.bf16.msra.mxu0 %v4055
    %5803 = vmatprep.subr.bf16.mxu0 %v4040
    %5804 = vmatpush1.bf16.msra.mxu0 %v4039
    %5805 = vmatprep.subr.bf16.mxu0 %v4024
    %5806 = vmatpush1.bf16.msra.mxu0 %v4023
    %5807 = vmatprep.subr.bf16.mxu0 %v4008
    %5808 = vmatpush1.bf16.msra.mxu0 %v4007
    %5809 = vmatprep.subr.bf16.mxu0 %v3992
    %5810 = vmatpush1.bf16.msra.mxu0 %v3991
    %5811 = vmatprep.subr.bf16.mxu0 %v3976
    %5812 = vmatpush1.bf16.msra.mxu0 %v3975
    %5813 = vmatprep.subr.bf16.mxu0 %v3960
    %5814 = vmatpush1.bf16.msra.mxu0 %v3959
    %5815 = vmatprep.subr.bf16.mxu0 %v4200
    %5816 = vmatpush2.bf16.msra.mxu0 %v4199
    %5817 = vmatprep.subr.bf16.mxu0 %v4184
    %5818 = vmatpush2.bf16.msra.mxu0 %v4183
    %5819 = vmatprep.subr.bf16.mxu0 %v4168
    %5820 = vmatpush2.bf16.msra.mxu0 %v4167
    %5821 = vmatprep.subr.bf16.mxu0 %v4152
    %5822 = vmatpush2.bf16.msra.mxu0 %v4151
    %5823 = vmatprep.subr.bf16.mxu0 %v4136
    %5824 = vmatpush2.bf16.msra.mxu0 %v4135
    %5825 = vmatprep.subr.bf16.mxu0 %v4120
    %5826 = vmatpush2.bf16.msra.mxu0 %v4119
    %5827 = vmatprep.subr.bf16.mxu0 %v4104
    %5828 = vmatpush2.bf16.msra.mxu0 %v4103
    %5829 = vmatprep.subr.bf16.mxu0 %v4088
    %5830 = vmatpush2.bf16.msra.mxu0 %v4087
    %5831 = vmatprep.mubr.bf16.mxu0 %v5511
    %5832 = vmatmul.mubr.bf16.gmra.mxu0 %v5510
    %v5833 = vpop.f32.mrf.mxu0
    %v5834 = vadd.f32 %v5793, %v5833
    %v5835 = vpop.f32.mrf.mxu0
    %v5836 = vadd.f32 %v5795, %v5835
    %v5837 = vpop.f32.mrf.mxu0
    %v5838 = vpop.f32.mrf.mxu0
    %5839 = vdwg.mxu0
    %5840 = vmatprep.subr.bf16.mxu0 %v3818
    %5841 = vmatpush1.bf16.msra.mxu0 %v3817
    %5842 = vmatprep.subr.bf16.mxu0 %v3802
    %5843 = vmatpush1.bf16.msra.mxu0 %v3801
    %5844 = vmatprep.subr.bf16.mxu0 %v3786
    %5845 = vmatpush1.bf16.msra.mxu0 %v3785
    %5846 = vmatprep.subr.bf16.mxu0 %v3770
    %5847 = vmatpush1.bf16.msra.mxu0 %v3769
    %5848 = vmatprep.subr.bf16.mxu0 %v3754
    %5849 = vmatpush1.bf16.msra.mxu0 %v3753
    %5850 = vmatprep.subr.bf16.mxu0 %v3738
    %5851 = vmatpush1.bf16.msra.mxu0 %v3737
    %5852 = vmatprep.subr.bf16.mxu0 %v3722
    %5853 = vmatpush1.bf16.msra.mxu0 %v3721
    %5854 = vmatprep.subr.bf16.mxu0 %v3706
    %5855 = vmatpush1.bf16.msra.mxu0 %v3705
    %5856 = vmatprep.subr.bf16.mxu0 %v3946
    %5857 = vmatpush2.bf16.msra.mxu0 %v3945
    %5858 = vmatprep.subr.bf16.mxu0 %v3930
    %5859 = vmatpush2.bf16.msra.mxu0 %v3929
    %5860 = vmatprep.subr.bf16.mxu0 %v3914
    %5861 = vmatpush2.bf16.msra.mxu0 %v3913
    %5862 = vmatprep.subr.bf16.mxu0 %v3898
    %5863 = vmatpush2.bf16.msra.mxu0 %v3897
    %5864 = vmatprep.subr.bf16.mxu0 %v3882
    %5865 = vmatpush2.bf16.msra.mxu0 %v3881
    %5866 = vmatprep.subr.bf16.mxu0 %v3866
    %5867 = vmatpush2.bf16.msra.mxu0 %v3865
    %5868 = vmatprep.subr.bf16.mxu0 %v3850
    %5869 = vmatpush2.bf16.msra.mxu0 %v3849
    %5870 = vmatprep.subr.bf16.mxu0 %v3834
    %5871 = vmatpush2.bf16.msra.mxu0 %v3833
    %5872 = vmatprep.mubr.bf16.mxu0 %v5509
    %5873 = vmatmul.mubr.bf16.gmra.mxu0 %v5508
    %v5874 = vpop.f32.mrf.mxu0
    %v5875 = vadd.f32 0.0, %v5874
    %v5876 = vpop.f32.mrf.mxu0
    %v5877 = vadd.f32 0.0, %v5876
    %v5878 = vpop.f32.mrf.mxu0
    %v5879 = vpop.f32.mrf.mxu0
    %5880 = vdwg.mxu0
    %5881 = vmatprep.subr.bf16.mxu0 %v4074
    %5882 = vmatpush1.bf16.msra.mxu0 %v4073
    %5883 = vmatprep.subr.bf16.mxu0 %v4058
    %5884 = vmatpush1.bf16.msra.mxu0 %v4057
    %5885 = vmatprep.subr.bf16.mxu0 %v4042
    %5886 = vmatpush1.bf16.msra.mxu0 %v4041
    %5887 = vmatprep.subr.bf16.mxu0 %v4026
    %5888 = vmatpush1.bf16.msra.mxu0 %v4025
    %5889 = vmatprep.subr.bf16.mxu0 %v4010
    %5890 = vmatpush1.bf16.msra.mxu0 %v4009
    %5891 = vmatprep.subr.bf16.mxu0 %v3994
    %5892 = vmatpush1.bf16.msra.mxu0 %v3993
    %5893 = vmatprep.subr.bf16.mxu0 %v3978
    %5894 = vmatpush1.bf16.msra.mxu0 %v3977
    %5895 = vmatprep.subr.bf16.mxu0 %v3962
    %5896 = vmatpush1.bf16.msra.mxu0 %v3961
    %5897 = vmatprep.subr.bf16.mxu0 %v4202
    %5898 = vmatpush2.bf16.msra.mxu0 %v4201
    %5899 = vmatprep.subr.bf16.mxu0 %v4186
    %5900 = vmatpush2.bf16.msra.mxu0 %v4185
    %5901 = vmatprep.subr.bf16.mxu0 %v4170
    %5902 = vmatpush2.bf16.msra.mxu0 %v4169
    %5903 = vmatprep.subr.bf16.mxu0 %v4154
    %5904 = vmatpush2.bf16.msra.mxu0 %v4153
    %5905 = vmatprep.subr.bf16.mxu0 %v4138
    %5906 = vmatpush2.bf16.msra.mxu0 %v4137
    %5907 = vmatprep.subr.bf16.mxu0 %v4122
    %5908 = vmatpush2.bf16.msra.mxu0 %v4121
    %5909 = vmatprep.subr.bf16.mxu0 %v4106
    %5910 = vmatpush2.bf16.msra.mxu0 %v4105
    %5911 = vmatprep.subr.bf16.mxu0 %v4090
    %5912 = vmatpush2.bf16.msra.mxu0 %v4089
    %5913 = vmatprep.mubr.bf16.mxu0 %v5511
    %5914 = vmatmul.mubr.bf16.gmra.mxu0 %v5510
    %v5915 = vpop.f32.mrf.mxu0
    %v5916 = vadd.f32 %v5875, %v5915
    %v5917 = vpop.f32.mrf.mxu0
    %v5918 = vadd.f32 %v5877, %v5917
    %v5919 = vpop.f32.mrf.mxu0
    %v5920 = vpop.f32.mrf.mxu0
    %5921 = vdwg.mxu0
    %5922 = vmatprep.subr.bf16.mxu0 %v3820
    %5923 = vmatpush1.bf16.msra.mxu0 %v3819
    %5924 = vmatprep.subr.bf16.mxu0 %v3804
    %5925 = vmatpush1.bf16.msra.mxu0 %v3803
    %5926 = vmatprep.subr.bf16.mxu0 %v3788
    %5927 = vmatpush1.bf16.msra.mxu0 %v3787
    %5928 = vmatprep.subr.bf16.mxu0 %v3772
    %5929 = vmatpush1.bf16.msra.mxu0 %v3771
    %5930 = vmatprep.subr.bf16.mxu0 %v3756
    %5931 = vmatpush1.bf16.msra.mxu0 %v3755
    %5932 = vmatprep.subr.bf16.mxu0 %v3740
    %5933 = vmatpush1.bf16.msra.mxu0 %v3739
    %5934 = vmatprep.subr.bf16.mxu0 %v3724
    %5935 = vmatpush1.bf16.msra.mxu0 %v3723
    %5936 = vmatprep.subr.bf16.mxu0 %v3708
    %5937 = vmatpush1.bf16.msra.mxu0 %v3707
    %5938 = vmatprep.subr.bf16.mxu0 %v3948
    %5939 = vmatpush2.bf16.msra.mxu0 %v3947
    %5940 = vmatprep.subr.bf16.mxu0 %v3932
    %5941 = vmatpush2.bf16.msra.mxu0 %v3931
    %5942 = vmatprep.subr.bf16.mxu0 %v3916
    %5943 = vmatpush2.bf16.msra.mxu0 %v3915
    %5944 = vmatprep.subr.bf16.mxu0 %v3900
    %5945 = vmatpush2.bf16.msra.mxu0 %v3899
    %5946 = vmatprep.subr.bf16.mxu0 %v3884
    %5947 = vmatpush2.bf16.msra.mxu0 %v3883
    %5948 = vmatprep.subr.bf16.mxu0 %v3868
    %5949 = vmatpush2.bf16.msra.mxu0 %v3867
    %5950 = vmatprep.subr.bf16.mxu0 %v3852
    %5951 = vmatpush2.bf16.msra.mxu0 %v3851
    %5952 = vmatprep.subr.bf16.mxu0 %v3836
    %5953 = vmatpush2.bf16.msra.mxu0 %v3835
    %5954 = vmatprep.mubr.bf16.mxu0 %v5509
    %5955 = vmatmul.mubr.bf16.gmra.mxu0 %v5508
    %v5956 = vpop.f32.mrf.mxu0
    %v5957 = vadd.f32 0.0, %v5956
    %v5958 = vpop.f32.mrf.mxu0
    %v5959 = vadd.f32 0.0, %v5958
    %v5960 = vpop.f32.mrf.mxu0
    %v5961 = vpop.f32.mrf.mxu0
    %5962 = vdwg.mxu0
    %5963 = vmatprep.subr.bf16.mxu0 %v4076
    %5964 = vmatpush1.bf16.msra.mxu0 %v4075
    %5965 = vmatprep.subr.bf16.mxu0 %v4060
    %5966 = vmatpush1.bf16.msra.mxu0 %v4059
    %5967 = vmatprep.subr.bf16.mxu0 %v4044
    %5968 = vmatpush1.bf16.msra.mxu0 %v4043
    %5969 = vmatprep.subr.bf16.mxu0 %v4028
    %5970 = vmatpush1.bf16.msra.mxu0 %v4027
    %5971 = vmatprep.subr.bf16.mxu0 %v4012
    %5972 = vmatpush1.bf16.msra.mxu0 %v4011
    %5973 = vmatprep.subr.bf16.mxu0 %v3996
    %5974 = vmatpush1.bf16.msra.mxu0 %v3995
    %5975 = vmatprep.subr.bf16.mxu0 %v3980
    %5976 = vmatpush1.bf16.msra.mxu0 %v3979
    %5977 = vmatprep.subr.bf16.mxu0 %v3964
    %5978 = vmatpush1.bf16.msra.mxu0 %v3963
    %5979 = vmatprep.subr.bf16.mxu0 %v4204
    %5980 = vmatpush2.bf16.msra.mxu0 %v4203
    %5981 = vmatprep.subr.bf16.mxu0 %v4188
    %5982 = vmatpush2.bf16.msra.mxu0 %v4187
    %5983 = vmatprep.subr.bf16.mxu0 %v4172
    %5984 = vmatpush2.bf16.msra.mxu0 %v4171
    %5985 = vmatprep.subr.bf16.mxu0 %v4156
    %5986 = vmatpush2.bf16.msra.mxu0 %v4155
    %5987 = vmatprep.subr.bf16.mxu0 %v4140
    %5988 = vmatpush2.bf16.msra.mxu0 %v4139
    %5989 = vmatprep.subr.bf16.mxu0 %v4124
    %5990 = vmatpush2.bf16.msra.mxu0 %v4123
    %5991 = vmatprep.subr.bf16.mxu0 %v4108
    %5992 = vmatpush2.bf16.msra.mxu0 %v4107
    %5993 = vmatprep.subr.bf16.mxu0 %v4092
    %5994 = vmatpush2.bf16.msra.mxu0 %v4091
    %5995 = vmatprep.mubr.bf16.mxu0 %v5511
    %5996 = vmatmul.mubr.bf16.gmra.mxu0 %v5510
    %v5997 = vpop.f32.mrf.mxu0
    %v5998 = vadd.f32 %v5957, %v5997
    %v5999 = vpop.f32.mrf.mxu0
    %v6000 = vadd.f32 %v5959, %v5999
    %v6001 = vpop.f32.mrf.mxu0
    %v6002 = vpop.f32.mrf.mxu0
    %6003 = vdwg.mxu0
    %6004 = vmatprep.subr.bf16.mxu0 %v3822
    %6005 = vmatpush1.bf16.msra.mxu0 %v3821
    %6006 = vmatprep.subr.bf16.mxu0 %v3806
    %6007 = vmatpush1.bf16.msra.mxu0 %v3805
    %6008 = vmatprep.subr.bf16.mxu0 %v3790
    %6009 = vmatpush1.bf16.msra.mxu0 %v3789
    %6010 = vmatprep.subr.bf16.mxu0 %v3774
    %6011 = vmatpush1.bf16.msra.mxu0 %v3773
    %6012 = vmatprep.subr.bf16.mxu0 %v3758
    %6013 = vmatpush1.bf16.msra.mxu0 %v3757
    %6014 = vmatprep.subr.bf16.mxu0 %v3742
    %6015 = vmatpush1.bf16.msra.mxu0 %v3741
    %6016 = vmatprep.subr.bf16.mxu0 %v3726
    %6017 = vmatpush1.bf16.msra.mxu0 %v3725
    %6018 = vmatprep.subr.bf16.mxu0 %v3710
    %6019 = vmatpush1.bf16.msra.mxu0 %v3709
    %6020 = vmatprep.subr.bf16.mxu0 %v3950
    %6021 = vmatpush2.bf16.msra.mxu0 %v3949
    %6022 = vmatprep.subr.bf16.mxu0 %v3934
    %6023 = vmatpush2.bf16.msra.mxu0 %v3933
    %6024 = vmatprep.subr.bf16.mxu0 %v3918
    %6025 = vmatpush2.bf16.msra.mxu0 %v3917
    %6026 = vmatprep.subr.bf16.mxu0 %v3902
    %6027 = vmatpush2.bf16.msra.mxu0 %v3901
    %6028 = vmatprep.subr.bf16.mxu0 %v3886
    %6029 = vmatpush2.bf16.msra.mxu0 %v3885
    %6030 = vmatprep.subr.bf16.mxu0 %v3870
    %6031 = vmatpush2.bf16.msra.mxu0 %v3869
    %6032 = vmatprep.subr.bf16.mxu0 %v3854
    %6033 = vmatpush2.bf16.msra.mxu0 %v3853
    %6034 = vmatprep.subr.bf16.mxu0 %v3838
    %6035 = vmatpush2.bf16.msra.mxu0 %v3837
    %6036 = vmatprep.mubr.bf16.mxu0 %v5509
    %6037 = vmatmul.mubr.bf16.gmra.mxu0 %v5508
    %v6038 = vpop.f32.mrf.mxu0
    %v6039 = vadd.f32 0.0, %v6038
    %v6040 = vpop.f32.mrf.mxu0
    %v6041 = vadd.f32 0.0, %v6040
    %v6042 = vpop.f32.mrf.mxu0
    %v6043 = vpop.f32.mrf.mxu0
    %6044 = vdwg.mxu0
    %6045 = vmatprep.subr.bf16.mxu0 %v4078
    %6046 = vmatpush1.bf16.msra.mxu0 %v4077
    %6047 = vmatprep.subr.bf16.mxu0 %v4062
    %6048 = vmatpush1.bf16.msra.mxu0 %v4061
    %6049 = vmatprep.subr.bf16.mxu0 %v4046
    %6050 = vmatpush1.bf16.msra.mxu0 %v4045
    %6051 = vmatprep.subr.bf16.mxu0 %v4030
    %6052 = vmatpush1.bf16.msra.mxu0 %v4029
    %6053 = vmatprep.subr.bf16.mxu0 %v4014
    %6054 = vmatpush1.bf16.msra.mxu0 %v4013
    %6055 = vmatprep.subr.bf16.mxu0 %v3998
    %6056 = vmatpush1.bf16.msra.mxu0 %v3997
    %6057 = vmatprep.subr.bf16.mxu0 %v3982
    %6058 = vmatpush1.bf16.msra.mxu0 %v3981
    %6059 = vmatprep.subr.bf16.mxu0 %v3966
    %6060 = vmatpush1.bf16.msra.mxu0 %v3965
    %6061 = vmatprep.subr.bf16.mxu0 %v4206
    %6062 = vmatpush2.bf16.msra.mxu0 %v4205
    %6063 = vmatprep.subr.bf16.mxu0 %v4190
    %6064 = vmatpush2.bf16.msra.mxu0 %v4189
    %6065 = vmatprep.subr.bf16.mxu0 %v4174
    %6066 = vmatpush2.bf16.msra.mxu0 %v4173
    %6067 = vmatprep.subr.bf16.mxu0 %v4158
    %6068 = vmatpush2.bf16.msra.mxu0 %v4157
    %6069 = vmatprep.subr.bf16.mxu0 %v4142
    %6070 = vmatpush2.bf16.msra.mxu0 %v4141
    %6071 = vmatprep.subr.bf16.mxu0 %v4126
    %6072 = vmatpush2.bf16.msra.mxu0 %v4125
    %6073 = vmatprep.subr.bf16.mxu0 %v4110
    %6074 = vmatpush2.bf16.msra.mxu0 %v4109
    %6075 = vmatprep.subr.bf16.mxu0 %v4094
    %6076 = vmatpush2.bf16.msra.mxu0 %v4093
    %6077 = vmatprep.mubr.bf16.mxu0 %v5511
    %6078 = vmatmul.mubr.bf16.gmra.mxu0 %v5510
    %v6079 = vpop.f32.mrf.mxu0
    %v6080 = vadd.f32 %v6039, %v6079
    %v6081 = vpop.f32.mrf.mxu0
    %v6082 = vadd.f32 %v6041, %v6081
    %v6083 = vpop.f32.mrf.mxu0
    %v6084 = vpop.f32.mrf.mxu0
    %6085 = vdwg.mxu0
    %6086 = vmatprep.subr.bf16.mxu0 %v3824
    %6087 = vmatpush1.bf16.msra.mxu0 %v3823
    %6088 = vmatprep.subr.bf16.mxu0 %v3808
    %6089 = vmatpush1.bf16.msra.mxu0 %v3807
    %6090 = vmatprep.subr.bf16.mxu0 %v3792
    %6091 = vmatpush1.bf16.msra.mxu0 %v3791
    %6092 = vmatprep.subr.bf16.mxu0 %v3776
    %6093 = vmatpush1.bf16.msra.mxu0 %v3775
    %6094 = vmatprep.subr.bf16.mxu0 %v3760
    %6095 = vmatpush1.bf16.msra.mxu0 %v3759
    %6096 = vmatprep.subr.bf16.mxu0 %v3744
    %6097 = vmatpush1.bf16.msra.mxu0 %v3743
    %6098 = vmatprep.subr.bf16.mxu0 %v3728
    %6099 = vmatpush1.bf16.msra.mxu0 %v3727
    %6100 = vmatprep.subr.bf16.mxu0 %v3712
    %6101 = vmatpush1.bf16.msra.mxu0 %v3711
    %6102 = vmatprep.subr.bf16.mxu0 %v3952
    %6103 = vmatpush2.bf16.msra.mxu0 %v3951
    %6104 = vmatprep.subr.bf16.mxu0 %v3936
    %6105 = vmatpush2.bf16.msra.mxu0 %v3935
    %6106 = vmatprep.subr.bf16.mxu0 %v3920
    %6107 = vmatpush2.bf16.msra.mxu0 %v3919
    %6108 = vmatprep.subr.bf16.mxu0 %v3904
    %6109 = vmatpush2.bf16.msra.mxu0 %v3903
    %6110 = vmatprep.subr.bf16.mxu0 %v3888
    %6111 = vmatpush2.bf16.msra.mxu0 %v3887
    %6112 = vmatprep.subr.bf16.mxu0 %v3872
    %6113 = vmatpush2.bf16.msra.mxu0 %v3871
    %6114 = vmatprep.subr.bf16.mxu0 %v3856
    %6115 = vmatpush2.bf16.msra.mxu0 %v3855
    %6116 = vmatprep.subr.bf16.mxu0 %v3840
    %6117 = vmatpush2.bf16.msra.mxu0 %v3839
    %6118 = vmatprep.mubr.bf16.mxu0 %v5509
    %6119 = vmatmul.mubr.bf16.gmra.mxu0 %v5508
    %v6120 = vpop.f32.mrf.mxu0
    %v6121 = vadd.f32 0.0, %v6120
    %v6122 = vpop.f32.mrf.mxu0
    %v6123 = vadd.f32 0.0, %v6122
    %v6124 = vpop.f32.mrf.mxu0
    %v6125 = vpop.f32.mrf.mxu0
    %6126 = vdwg.mxu0
    %6127 = vmatprep.subr.bf16.mxu0 %v4080
    %6128 = vmatpush1.bf16.msra.mxu0 %v4079
    %6129 = vmatprep.subr.bf16.mxu0 %v4064
    %6130 = vmatpush1.bf16.msra.mxu0 %v4063
    %6131 = vmatprep.subr.bf16.mxu0 %v4048
    %6132 = vmatpush1.bf16.msra.mxu0 %v4047
    %6133 = vmatprep.subr.bf16.mxu0 %v4032
    %6134 = vmatpush1.bf16.msra.mxu0 %v4031
    %6135 = vmatprep.subr.bf16.mxu0 %v4016
    %6136 = vmatpush1.bf16.msra.mxu0 %v4015
    %6137 = vmatprep.subr.bf16.mxu0 %v4000
    %6138 = vmatpush1.bf16.msra.mxu0 %v3999
    %6139 = vmatprep.subr.bf16.mxu0 %v3984
    %6140 = vmatpush1.bf16.msra.mxu0 %v3983
    %6141 = vmatprep.subr.bf16.mxu0 %v3968
    %6142 = vmatpush1.bf16.msra.mxu0 %v3967
    %6143 = vmatprep.subr.bf16.mxu0 %v4208
    %6144 = vmatpush2.bf16.msra.mxu0 %v4207
    %6145 = vmatprep.subr.bf16.mxu0 %v4192
    %6146 = vmatpush2.bf16.msra.mxu0 %v4191
    %6147 = vmatprep.subr.bf16.mxu0 %v4176
    %6148 = vmatpush2.bf16.msra.mxu0 %v4175
    %6149 = vmatprep.subr.bf16.mxu0 %v4160
    %6150 = vmatpush2.bf16.msra.mxu0 %v4159
    %6151 = vmatprep.subr.bf16.mxu0 %v4144
    %6152 = vmatpush2.bf16.msra.mxu0 %v4143
    %6153 = vmatprep.subr.bf16.mxu0 %v4128
    %6154 = vmatpush2.bf16.msra.mxu0 %v4127
    %6155 = vmatprep.subr.bf16.mxu0 %v4112
    %6156 = vmatpush2.bf16.msra.mxu0 %v4111
    %6157 = vmatprep.subr.bf16.mxu0 %v4096
    %6158 = vmatpush2.bf16.msra.mxu0 %v4095
    %6159 = vmatprep.mubr.bf16.mxu0 %v5511
    %6160 = vmatmul.mubr.bf16.gmra.mxu0 %v5510
    %v6161 = vpop.f32.mrf.mxu0
    %v6162 = vadd.f32 %v6121, %v6161
    %v6163 = vpop.f32.mrf.mxu0
    %v6164 = vadd.f32 %v6123, %v6163
    %v6165 = vpop.f32.mrf.mxu0
    %v6166 = vpop.f32.mrf.mxu0
    %6167 = vdwg.mxu0
    %v6168 = vadd.f32 %v5492, %v5588
    %v6169 = vadd.f32 %v5493, %v5590
    %v6170 = vadd.f32 %v5494, %v5670
    %v6171 = vadd.f32 %v5495, %v5672
    %v6172 = vadd.f32 %v5496, %v5752
    %v6173 = vadd.f32 %v5497, %v5754
    %v6174 = vadd.f32 %v5498, %v5834
    %v6175 = vadd.f32 %v5499, %v5836
    %v6176 = vadd.f32 %v5500, %v5916
    %v6177 = vadd.f32 %v5501, %v5918
    %v6178 = vadd.f32 %v5502, %v5998
    %v6179 = vadd.f32 %v5503, %v6000
    %v6180 = vadd.f32 %v5504, %v6080
    %v6181 = vadd.f32 %v5505, %v6082
    %v6182 = vadd.f32 %v5506, %v6162
    %v6183 = vadd.f32 %v5507, %v6164
    %v6184 = vxor.u32 %v6168, 2147483648
    %v6185 = vxor.u32 %v6169, 2147483648
    %v6186 = vxor.u32 %v6170, 2147483648
    %v6187 = vxor.u32 %v6171, 2147483648
    %v6188 = vmul.f32 %v6184, 1.442695
    %v6189 = vpow.pop %v6188
    %v6190 = vmul.f32 %v6185, 1.442695
    %v6191 = vpow.pop %v6190
    %v6192 = vmul.f32 %v6186, 1.442695
    %v6193 = vpow.pop %v6192
    %v6194 = vmul.f32 %v6187, 1.442695
    %v6195 = vpow.pop %v6194
    %v6196 = vadd.f32 %v6189, 1.0
    %v6197 = vadd.f32 %v6191, 1.0
    %v6198 = vadd.f32 %v6193, 1.0
    %v6199 = vadd.f32 %v6195, 1.0
    %v6200 = vrcp.pop %v6196
    %v6201 = vmul.f32 1.0, %v6200
    %v6202 = vrcp.pop %v6197
    %v6203 = vmul.f32 1.0, %v6202
    %v6204 = vrcp.pop %v6198
    %v6205 = vmul.f32 1.0, %v6204
    %v6206 = vrcp.pop %v6199
    %v6207 = vmul.f32 1.0, %v6206
    %v6208 = vxor.u32 %v6172, 2147483648
    %v6209 = vxor.u32 %v6173, 2147483648
    %v6210 = vxor.u32 %v6174, 2147483648
    %v6211 = vxor.u32 %v6175, 2147483648
    %v6212 = vmul.f32 %v6208, 1.442695
    %v6213 = vpow.pop %v6212
    %v6214 = vmul.f32 %v6209, 1.442695
    %v6215 = vpow.pop %v6214
    %v6216 = vmul.f32 %v6210, 1.442695
    %v6217 = vpow.pop %v6216
    %v6218 = vmul.f32 %v6211, 1.442695
    %v6219 = vpow.pop %v6218
    %v6220 = vadd.f32 %v6213, 1.0
    %v6221 = vadd.f32 %v6215, 1.0
    %v6222 = vadd.f32 %v6217, 1.0
    %v6223 = vadd.f32 %v6219, 1.0
    %v6224 = vrcp.pop %v6220
    %v6225 = vmul.f32 1.0, %v6224
    %v6226 = vrcp.pop %v6221
    %v6227 = vmul.f32 1.0, %v6226
    %v6228 = vrcp.pop %v6222
    %v6229 = vmul.f32 1.0, %v6228
    %v6230 = vrcp.pop %v6223
    %v6231 = vmul.f32 1.0, %v6230
    %v6232 = vtanh.pop %v6176
    %v6233 = vtanh.pop %v6177
    %v6234 = vtanh.pop %v6178
    %v6235 = vtanh.pop %v6179
    %v6236 = vxor.u32 %v6180, 2147483648
    %v6237 = vxor.u32 %v6181, 2147483648
    %v6238 = vxor.u32 %v6182, 2147483648
    %v6239 = vxor.u32 %v6183, 2147483648
    %v6240 = vmul.f32 %v6236, 1.442695
    %v6241 = vpow.pop %v6240
    %v6242 = vmul.f32 %v6237, 1.442695
    %v6243 = vpow.pop %v6242
    %v6244 = vmul.f32 %v6238, 1.442695
    %v6245 = vpow.pop %v6244
    %v6246 = vmul.f32 %v6239, 1.442695
    %v6247 = vpow.pop %v6246
    %v6248 = vadd.f32 %v6241, 1.0
    %v6249 = vadd.f32 %v6243, 1.0
    %v6250 = vadd.f32 %v6245, 1.0
    %v6251 = vadd.f32 %v6247, 1.0
    %v6252 = vrcp.pop %v6248
    %v6253 = vmul.f32 1.0, %v6252
    %v6254 = vrcp.pop %v6249
    %v6255 = vmul.f32 1.0, %v6254
    %v6256 = vrcp.pop %v6250
    %v6257 = vmul.f32 1.0, %v6256
    %v6258 = vrcp.pop %v6251
    %v6259 = vmul.f32 1.0, %v6258
    %v6260 = vmul.f32 %v6225, %v5477
    %v6261 = vmul.f32 %v6227, %v5478
    %v6262 = vmul.f32 %v6229, %v5479
    %v6263 = vmul.f32 %v6231, %v5480
    %v6264 = vmul.f32 %v6201, %v6232
    %v6265 = vmul.f32 %v6203, %v6233
    %v6266 = vmul.f32 %v6205, %v6234
    %v6267 = vmul.f32 %v6207, %v6235
    %v6268 = vadd.f32 %v6260, %v6264
    %v6269 = vadd.f32 %v6261, %v6265
    %v6270 = vadd.f32 %v6262, %v6266
    %v6271 = vadd.f32 %v6263, %v6267
    %v6272 = vtanh.pop %v6268
    %v6273 = vtanh.pop %v6269
    %v6274 = vtanh.pop %v6270
    %v6275 = vtanh.pop %v6271
    %v6276 = vmul.f32 %v6253, %v6272
    %v6277 = vmul.f32 %v6255, %v6273
    %v6278 = vmul.f32 %v6257, %v6274
    %v6279 = vmul.f32 %v6259, %v6275
    %s6280 = smul.u32 2, 16
    %s6281 = smul.addr %s6280, 8
    %s6282 = scalar_lea.vmem [#allocation2], %s6281
    %v6283 = vld [vmem:[%s6282] sm:$0xff]
    %v6284 = vld [vmem:[%s6282 + $0x8] sm:$0xff]
    %v6285 = vld [vmem:[%s6282 + $0x10] sm:$0xff]
    %v6286 = vld [vmem:[%s6282 + $0x18] sm:$0xff]
    %v6287 = vld [vmem:[%s6282 + $0x20] sm:$0xff]
    %v6288 = vld [vmem:[%s6282 + $0x28] sm:$0xff]
    %v6289 = vld [vmem:[%s6282 + $0x30] sm:$0xff]
    %v6290 = vld [vmem:[%s6282 + $0x38] sm:$0xff]
    %v6291 = vld [vmem:[%s6282 + $0x40] sm:$0xff]
    %v6292 = vld [vmem:[%s6282 + $0x48] sm:$0xff]
    %v6293 = vld [vmem:[%s6282 + $0x50] sm:$0xff]
    %v6294 = vld [vmem:[%s6282 + $0x58] sm:$0xff]
    %v6295 = vld [vmem:[%s6282 + $0x60] sm:$0xff]
    %v6296 = vld [vmem:[%s6282 + $0x68] sm:$0xff]
    %v6297 = vld [vmem:[%s6282 + $0x70] sm:$0xff]
    %v6298 = vld [vmem:[%s6282 + $0x78] sm:$0xff]
    %v6299 = vpack.c.bf16 %v6276, %v6276
    %v6300 = vpack.c.bf16 %v6277, %v6277
    %v6301 = vpack.c.bf16 %v6278, %v6278
    %v6302 = vpack.c.bf16 %v6279, %v6279
    %6303 = vmatprep.subr.bf16.mxu0 %v3810
    %6304 = vmatpush1.bf16.msra.mxu0 %v3809
    %6305 = vmatprep.subr.bf16.mxu0 %v3794
    %6306 = vmatpush1.bf16.msra.mxu0 %v3793
    %6307 = vmatprep.subr.bf16.mxu0 %v3778
    %6308 = vmatpush1.bf16.msra.mxu0 %v3777
    %6309 = vmatprep.subr.bf16.mxu0 %v3762
    %6310 = vmatpush1.bf16.msra.mxu0 %v3761
    %6311 = vmatprep.subr.bf16.mxu0 %v3746
    %6312 = vmatpush1.bf16.msra.mxu0 %v3745
    %6313 = vmatprep.subr.bf16.mxu0 %v3730
    %6314 = vmatpush1.bf16.msra.mxu0 %v3729
    %6315 = vmatprep.subr.bf16.mxu0 %v3714
    %6316 = vmatpush1.bf16.msra.mxu0 %v3713
    %6317 = vmatprep.subr.bf16.mxu0 %v3698
    %6318 = vmatpush1.bf16.msra.mxu0 %v3697
    %6319 = vmatprep.subr.bf16.mxu0 %v3938
    %6320 = vmatpush2.bf16.msra.mxu0 %v3937
    %6321 = vmatprep.subr.bf16.mxu0 %v3922
    %6322 = vmatpush2.bf16.msra.mxu0 %v3921
    %6323 = vmatprep.subr.bf16.mxu0 %v3906
    %6324 = vmatpush2.bf16.msra.mxu0 %v3905
    %6325 = vmatprep.subr.bf16.mxu0 %v3890
    %6326 = vmatpush2.bf16.msra.mxu0 %v3889
    %6327 = vmatprep.subr.bf16.mxu0 %v3874
    %6328 = vmatpush2.bf16.msra.mxu0 %v3873
    %6329 = vmatprep.subr.bf16.mxu0 %v3858
    %6330 = vmatpush2.bf16.msra.mxu0 %v3857
    %6331 = vmatprep.subr.bf16.mxu0 %v3842
    %6332 = vmatpush2.bf16.msra.mxu0 %v3841
    %6333 = vmatprep.subr.bf16.mxu0 %v3826
    %6334 = vmatpush2.bf16.msra.mxu0 %v3825
    %6335 = vmatprep.mubr.bf16.mxu0 %v6300
    %6336 = vmatmul.mubr.bf16.gmra.mxu0 %v6299
    %v6337 = vpop.f32.mrf.mxu0
    %v6338 = vadd.f32 0.0, %v6337
    %v6339 = vpop.f32.mrf.mxu0
    %v6340 = vadd.f32 0.0, %v6339
    %v6341 = vpop.f32.mrf.mxu0
    %v6342 = vpop.f32.mrf.mxu0
    %6343 = vdwg.mxu0
    %6344 = vmatprep.subr.bf16.mxu0 %v4066
    %6345 = vmatpush1.bf16.msra.mxu0 %v4065
    %6346 = vmatprep.subr.bf16.mxu0 %v4050
    %6347 = vmatpush1.bf16.msra.mxu0 %v4049
    %6348 = vmatprep.subr.bf16.mxu0 %v4034
    %6349 = vmatpush1.bf16.msra.mxu0 %v4033
    %6350 = vmatprep.subr.bf16.mxu0 %v4018
    %6351 = vmatpush1.bf16.msra.mxu0 %v4017
    %6352 = vmatprep.subr.bf16.mxu0 %v4002
    %6353 = vmatpush1.bf16.msra.mxu0 %v4001
    %6354 = vmatprep.subr.bf16.mxu0 %v3986
    %6355 = vmatpush1.bf16.msra.mxu0 %v3985
    %6356 = vmatprep.subr.bf16.mxu0 %v3970
    %6357 = vmatpush1.bf16.msra.mxu0 %v3969
    %6358 = vmatprep.subr.bf16.mxu0 %v3954
    %6359 = vmatpush1.bf16.msra.mxu0 %v3953
    %6360 = vmatprep.subr.bf16.mxu0 %v4194
    %6361 = vmatpush2.bf16.msra.mxu0 %v4193
    %6362 = vmatprep.subr.bf16.mxu0 %v4178
    %6363 = vmatpush2.bf16.msra.mxu0 %v4177
    %6364 = vmatprep.subr.bf16.mxu0 %v4162
    %6365 = vmatpush2.bf16.msra.mxu0 %v4161
    %6366 = vmatprep.subr.bf16.mxu0 %v4146
    %6367 = vmatpush2.bf16.msra.mxu0 %v4145
    %6368 = vmatprep.subr.bf16.mxu0 %v4130
    %6369 = vmatpush2.bf16.msra.mxu0 %v4129
    %6370 = vmatprep.subr.bf16.mxu0 %v4114
    %6371 = vmatpush2.bf16.msra.mxu0 %v4113
    %6372 = vmatprep.subr.bf16.mxu0 %v4098
    %6373 = vmatpush2.bf16.msra.mxu0 %v4097
    %6374 = vmatprep.subr.bf16.mxu0 %v4082
    %6375 = vmatpush2.bf16.msra.mxu0 %v4081
    %6376 = vmatprep.mubr.bf16.mxu0 %v6302
    %6377 = vmatmul.mubr.bf16.gmra.mxu0 %v6301
    %v6378 = vpop.f32.mrf.mxu0
    %v6379 = vadd.f32 %v6338, %v6378
    %v6380 = vpop.f32.mrf.mxu0
    %v6381 = vadd.f32 %v6340, %v6380
    %v6382 = vpop.f32.mrf.mxu0
    %v6383 = vpop.f32.mrf.mxu0
    %6384 = vdwg.mxu0
    %6385 = vmatprep.subr.bf16.mxu0 %v3812
    %6386 = vmatpush1.bf16.msra.mxu0 %v3811
    %6387 = vmatprep.subr.bf16.mxu0 %v3796
    %6388 = vmatpush1.bf16.msra.mxu0 %v3795
    %6389 = vmatprep.subr.bf16.mxu0 %v3780
    %6390 = vmatpush1.bf16.msra.mxu0 %v3779
    %6391 = vmatprep.subr.bf16.mxu0 %v3764
    %6392 = vmatpush1.bf16.msra.mxu0 %v3763
    %6393 = vmatprep.subr.bf16.mxu0 %v3748
    %6394 = vmatpush1.bf16.msra.mxu0 %v3747
    %6395 = vmatprep.subr.bf16.mxu0 %v3732
    %6396 = vmatpush1.bf16.msra.mxu0 %v3731
    %6397 = vmatprep.subr.bf16.mxu0 %v3716
    %6398 = vmatpush1.bf16.msra.mxu0 %v3715
    %6399 = vmatprep.subr.bf16.mxu0 %v3700
    %6400 = vmatpush1.bf16.msra.mxu0 %v3699
    %6401 = vmatprep.subr.bf16.mxu0 %v3940
    %6402 = vmatpush2.bf16.msra.mxu0 %v3939
    %6403 = vmatprep.subr.bf16.mxu0 %v3924
    %6404 = vmatpush2.bf16.msra.mxu0 %v3923
    %6405 = vmatprep.subr.bf16.mxu0 %v3908
    %6406 = vmatpush2.bf16.msra.mxu0 %v3907
    %6407 = vmatprep.subr.bf16.mxu0 %v3892
    %6408 = vmatpush2.bf16.msra.mxu0 %v3891
    %6409 = vmatprep.subr.bf16.mxu0 %v3876
    %6410 = vmatpush2.bf16.msra.mxu0 %v3875
    %6411 = vmatprep.subr.bf16.mxu0 %v3860
    %6412 = vmatpush2.bf16.msra.mxu0 %v3859
    %6413 = vmatprep.subr.bf16.mxu0 %v3844
    %6414 = vmatpush2.bf16.msra.mxu0 %v3843
    %6415 = vmatprep.subr.bf16.mxu0 %v3828
    %6416 = vmatpush2.bf16.msra.mxu0 %v3827
    %6417 = vmatprep.mubr.bf16.mxu0 %v6300
    %6418 = vmatmul.mubr.bf16.gmra.mxu0 %v6299
    %v6419 = vpop.f32.mrf.mxu0
    %v6420 = vadd.f32 0.0, %v6419
    %v6421 = vpop.f32.mrf.mxu0
    %v6422 = vadd.f32 0.0, %v6421
    %v6423 = vpop.f32.mrf.mxu0
    %v6424 = vpop.f32.mrf.mxu0
    %6425 = vdwg.mxu0
    %6426 = vmatprep.subr.bf16.mxu0 %v4068
    %6427 = vmatpush1.bf16.msra.mxu0 %v4067
    %6428 = vmatprep.subr.bf16.mxu0 %v4052
    %6429 = vmatpush1.bf16.msra.mxu0 %v4051
    %6430 = vmatprep.subr.bf16.mxu0 %v4036
    %6431 = vmatpush1.bf16.msra.mxu0 %v4035
    %6432 = vmatprep.subr.bf16.mxu0 %v4020
    %6433 = vmatpush1.bf16.msra.mxu0 %v4019
    %6434 = vmatprep.subr.bf16.mxu0 %v4004
    %6435 = vmatpush1.bf16.msra.mxu0 %v4003
    %6436 = vmatprep.subr.bf16.mxu0 %v3988
    %6437 = vmatpush1.bf16.msra.mxu0 %v3987
    %6438 = vmatprep.subr.bf16.mxu0 %v3972
    %6439 = vmatpush1.bf16.msra.mxu0 %v3971
    %6440 = vmatprep.subr.bf16.mxu0 %v3956
    %6441 = vmatpush1.bf16.msra.mxu0 %v3955
    %6442 = vmatprep.subr.bf16.mxu0 %v4196
    %6443 = vmatpush2.bf16.msra.mxu0 %v4195
    %6444 = vmatprep.subr.bf16.mxu0 %v4180
    %6445 = vmatpush2.bf16.msra.mxu0 %v4179
    %6446 = vmatprep.subr.bf16.mxu0 %v4164
    %6447 = vmatpush2.bf16.msra.mxu0 %v4163
    %6448 = vmatprep.subr.bf16.mxu0 %v4148
    %6449 = vmatpush2.bf16.msra.mxu0 %v4147
    %6450 = vmatprep.subr.bf16.mxu0 %v4132
    %6451 = vmatpush2.bf16.msra.mxu0 %v4131
    %6452 = vmatprep.subr.bf16.mxu0 %v4116
    %6453 = vmatpush2.bf16.msra.mxu0 %v4115
    %6454 = vmatprep.subr.bf16.mxu0 %v4100
    %6455 = vmatpush2.bf16.msra.mxu0 %v4099
    %6456 = vmatprep.subr.bf16.mxu0 %v4084
    %6457 = vmatpush2.bf16.msra.mxu0 %v4083
    %6458 = vmatprep.mubr.bf16.mxu0 %v6302
    %6459 = vmatmul.mubr.bf16.gmra.mxu0 %v6301
    %v6460 = vpop.f32.mrf.mxu0
    %v6461 = vadd.f32 %v6420, %v6460
    %v6462 = vpop.f32.mrf.mxu0
    %v6463 = vadd.f32 %v6422, %v6462
    %v6464 = vpop.f32.mrf.mxu0
    %v6465 = vpop.f32.mrf.mxu0
    %6466 = vdwg.mxu0
    %6467 = vmatprep.subr.bf16.mxu0 %v3814
    %6468 = vmatpush1.bf16.msra.mxu0 %v3813
    %6469 = vmatprep.subr.bf16.mxu0 %v3798
    %6470 = vmatpush1.bf16.msra.mxu0 %v3797
    %6471 = vmatprep.subr.bf16.mxu0 %v3782
    %6472 = vmatpush1.bf16.msra.mxu0 %v3781
    %6473 = vmatprep.subr.bf16.mxu0 %v3766
    %6474 = vmatpush1.bf16.msra.mxu0 %v3765
    %6475 = vmatprep.subr.bf16.mxu0 %v3750
    %6476 = vmatpush1.bf16.msra.mxu0 %v3749
    %6477 = vmatprep.subr.bf16.mxu0 %v3734
    %6478 = vmatpush1.bf16.msra.mxu0 %v3733
    %6479 = vmatprep.subr.bf16.mxu0 %v3718
    %6480 = vmatpush1.bf16.msra.mxu0 %v3717
    %6481 = vmatprep.subr.bf16.mxu0 %v3702
    %6482 = vmatpush1.bf16.msra.mxu0 %v3701
    %6483 = vmatprep.subr.bf16.mxu0 %v3942
    %6484 = vmatpush2.bf16.msra.mxu0 %v3941
    %6485 = vmatprep.subr.bf16.mxu0 %v3926
    %6486 = vmatpush2.bf16.msra.mxu0 %v3925
    %6487 = vmatprep.subr.bf16.mxu0 %v3910
    %6488 = vmatpush2.bf16.msra.mxu0 %v3909
    %6489 = vmatprep.subr.bf16.mxu0 %v3894
    %6490 = vmatpush2.bf16.msra.mxu0 %v3893
    %6491 = vmatprep.subr.bf16.mxu0 %v3878
    %6492 = vmatpush2.bf16.msra.mxu0 %v3877
    %6493 = vmatprep.subr.bf16.mxu0 %v3862
    %6494 = vmatpush2.bf16.msra.mxu0 %v3861
    %6495 = vmatprep.subr.bf16.mxu0 %v3846
    %6496 = vmatpush2.bf16.msra.mxu0 %v3845
    %6497 = vmatprep.subr.bf16.mxu0 %v3830
    %6498 = vmatpush2.bf16.msra.mxu0 %v3829
    %6499 = vmatprep.mubr.bf16.mxu0 %v6300
    %6500 = vmatmul.mubr.bf16.gmra.mxu0 %v6299
    %v6501 = vpop.f32.mrf.mxu0
    %v6502 = vadd.f32 0.0, %v6501
    %v6503 = vpop.f32.mrf.mxu0
    %v6504 = vadd.f32 0.0, %v6503
    %v6505 = vpop.f32.mrf.mxu0
    %v6506 = vpop.f32.mrf.mxu0
    %6507 = vdwg.mxu0
    %6508 = vmatprep.subr.bf16.mxu0 %v4070
    %6509 = vmatpush1.bf16.msra.mxu0 %v4069
    %6510 = vmatprep.subr.bf16.mxu0 %v4054
    %6511 = vmatpush1.bf16.msra.mxu0 %v4053
    %6512 = vmatprep.subr.bf16.mxu0 %v4038
    %6513 = vmatpush1.bf16.msra.mxu0 %v4037
    %6514 = vmatprep.subr.bf16.mxu0 %v4022
    %6515 = vmatpush1.bf16.msra.mxu0 %v4021
    %6516 = vmatprep.subr.bf16.mxu0 %v4006
    %6517 = vmatpush1.bf16.msra.mxu0 %v4005
    %6518 = vmatprep.subr.bf16.mxu0 %v3990
    %6519 = vmatpush1.bf16.msra.mxu0 %v3989
    %6520 = vmatprep.subr.bf16.mxu0 %v3974
    %6521 = vmatpush1.bf16.msra.mxu0 %v3973
    %6522 = vmatprep.subr.bf16.mxu0 %v3958
    %6523 = vmatpush1.bf16.msra.mxu0 %v3957
    %6524 = vmatprep.subr.bf16.mxu0 %v4198
    %6525 = vmatpush2.bf16.msra.mxu0 %v4197
    %6526 = vmatprep.subr.bf16.mxu0 %v4182
    %6527 = vmatpush2.bf16.msra.mxu0 %v4181
    %6528 = vmatprep.subr.bf16.mxu0 %v4166
    %6529 = vmatpush2.bf16.msra.mxu0 %v4165
    %6530 = vmatprep.subr.bf16.mxu0 %v4150
    %6531 = vmatpush2.bf16.msra.mxu0 %v4149
    %6532 = vmatprep.subr.bf16.mxu0 %v4134
    %6533 = vmatpush2.bf16.msra.mxu0 %v4133
    %6534 = vmatprep.subr.bf16.mxu0 %v4118
    %6535 = vmatpush2.bf16.msra.mxu0 %v4117
    %6536 = vmatprep.subr.bf16.mxu0 %v4102
    %6537 = vmatpush2.bf16.msra.mxu0 %v4101
    %6538 = vmatprep.subr.bf16.mxu0 %v4086
    %6539 = vmatpush2.bf16.msra.mxu0 %v4085
    %6540 = vmatprep.mubr.bf16.mxu0 %v6302
    %6541 = vmatmul.mubr.bf16.gmra.mxu0 %v6301
    %v6542 = vpop.f32.mrf.mxu0
    %v6543 = vadd.f32 %v6502, %v6542
    %v6544 = vpop.f32.mrf.mxu0
    %v6545 = vadd.f32 %v6504, %v6544
    %v6546 = vpop.f32.mrf.mxu0
    %v6547 = vpop.f32.mrf.mxu0
    %6548 = vdwg.mxu0
    %6549 = vmatprep.subr.bf16.mxu0 %v3816
    %6550 = vmatpush1.bf16.msra.mxu0 %v3815
    %6551 = vmatprep.subr.bf16.mxu0 %v3800
    %6552 = vmatpush1.bf16.msra.mxu0 %v3799
    %6553 = vmatprep.subr.bf16.mxu0 %v3784
    %6554 = vmatpush1.bf16.msra.mxu0 %v3783
    %6555 = vmatprep.subr.bf16.mxu0 %v3768
    %6556 = vmatpush1.bf16.msra.mxu0 %v3767
    %6557 = vmatprep.subr.bf16.mxu0 %v3752
    %6558 = vmatpush1.bf16.msra.mxu0 %v3751
    %6559 = vmatprep.subr.bf16.mxu0 %v3736
    %6560 = vmatpush1.bf16.msra.mxu0 %v3735
    %6561 = vmatprep.subr.bf16.mxu0 %v3720
    %6562 = vmatpush1.bf16.msra.mxu0 %v3719
    %6563 = vmatprep.subr.bf16.mxu0 %v3704
    %6564 = vmatpush1.bf16.msra.mxu0 %v3703
    %6565 = vmatprep.subr.bf16.mxu0 %v3944
    %6566 = vmatpush2.bf16.msra.mxu0 %v3943
    %6567 = vmatprep.subr.bf16.mxu0 %v3928
    %6568 = vmatpush2.bf16.msra.mxu0 %v3927
    %6569 = vmatprep.subr.bf16.mxu0 %v3912
    %6570 = vmatpush2.bf16.msra.mxu0 %v3911
    %6571 = vmatprep.subr.bf16.mxu0 %v3896
    %6572 = vmatpush2.bf16.msra.mxu0 %v3895
    %6573 = vmatprep.subr.bf16.mxu0 %v3880
    %6574 = vmatpush2.bf16.msra.mxu0 %v3879
    %6575 = vmatprep.subr.bf16.mxu0 %v3864
    %6576 = vmatpush2.bf16.msra.mxu0 %v3863
    %6577 = vmatprep.subr.bf16.mxu0 %v3848
    %6578 = vmatpush2.bf16.msra.mxu0 %v3847
    %6579 = vmatprep.subr.bf16.mxu0 %v3832
    %6580 = vmatpush2.bf16.msra.mxu0 %v3831
    %6581 = vmatprep.mubr.bf16.mxu0 %v6300
    %6582 = vmatmul.mubr.bf16.gmra.mxu0 %v6299
    %v6583 = vpop.f32.mrf.mxu0
    %v6584 = vadd.f32 0.0, %v6583
    %v6585 = vpop.f32.mrf.mxu0
    %v6586 = vadd.f32 0.0, %v6585
    %v6587 = vpop.f32.mrf.mxu0
    %v6588 = vpop.f32.mrf.mxu0
    %6589 = vdwg.mxu0
    %6590 = vmatprep.subr.bf16.mxu0 %v4072
    %6591 = vmatpush1.bf16.msra.mxu0 %v4071
    %6592 = vmatprep.subr.bf16.mxu0 %v4056
    %6593 = vmatpush1.bf16.msra.mxu0 %v4055
    %6594 = vmatprep.subr.bf16.mxu0 %v4040
    %6595 = vmatpush1.bf16.msra.mxu0 %v4039
    %6596 = vmatprep.subr.bf16.mxu0 %v4024
    %6597 = vmatpush1.bf16.msra.mxu0 %v4023
    %6598 = vmatprep.subr.bf16.mxu0 %v4008
    %6599 = vmatpush1.bf16.msra.mxu0 %v4007
    %6600 = vmatprep.subr.bf16.mxu0 %v3992
    %6601 = vmatpush1.bf16.msra.mxu0 %v3991
    %6602 = vmatprep.subr.bf16.mxu0 %v3976
    %6603 = vmatpush1.bf16.msra.mxu0 %v3975
    %6604 = vmatprep.subr.bf16.mxu0 %v3960
    %6605 = vmatpush1.bf16.msra.mxu0 %v3959
    %6606 = vmatprep.subr.bf16.mxu0 %v4200
    %6607 = vmatpush2.bf16.msra.mxu0 %v4199
    %6608 = vmatprep.subr.bf16.mxu0 %v4184
    %6609 = vmatpush2.bf16.msra.mxu0 %v4183
    %6610 = vmatprep.subr.bf16.mxu0 %v4168
    %6611 = vmatpush2.bf16.msra.mxu0 %v4167
    %6612 = vmatprep.subr.bf16.mxu0 %v4152
    %6613 = vmatpush2.bf16.msra.mxu0 %v4151
    %6614 = vmatprep.subr.bf16.mxu0 %v4136
    %6615 = vmatpush2.bf16.msra.mxu0 %v4135
    %6616 = vmatprep.subr.bf16.mxu0 %v4120
    %6617 = vmatpush2.bf16.msra.mxu0 %v4119
    %6618 = vmatprep.subr.bf16.mxu0 %v4104
    %6619 = vmatpush2.bf16.msra.mxu0 %v4103
    %6620 = vmatprep.subr.bf16.mxu0 %v4088
    %6621 = vmatpush2.bf16.msra.mxu0 %v4087
    %6622 = vmatprep.mubr.bf16.mxu0 %v6302
    %6623 = vmatmul.mubr.bf16.gmra.mxu0 %v6301
    %v6624 = vpop.f32.mrf.mxu0
    %v6625 = vadd.f32 %v6584, %v6624
    %v6626 = vpop.f32.mrf.mxu0
    %v6627 = vadd.f32 %v6586, %v6626
    %v6628 = vpop.f32.mrf.mxu0
    %v6629 = vpop.f32.mrf.mxu0
    %6630 = vdwg.mxu0
    %6631 = vmatprep.subr.bf16.mxu0 %v3818
    %6632 = vmatpush1.bf16.msra.mxu0 %v3817
    %6633 = vmatprep.subr.bf16.mxu0 %v3802
    %6634 = vmatpush1.bf16.msra.mxu0 %v3801
    %6635 = vmatprep.subr.bf16.mxu0 %v3786
    %6636 = vmatpush1.bf16.msra.mxu0 %v3785
    %6637 = vmatprep.subr.bf16.mxu0 %v3770
    %6638 = vmatpush1.bf16.msra.mxu0 %v3769
    %6639 = vmatprep.subr.bf16.mxu0 %v3754
    %6640 = vmatpush1.bf16.msra.mxu0 %v3753
    %6641 = vmatprep.subr.bf16.mxu0 %v3738
    %6642 = vmatpush1.bf16.msra.mxu0 %v3737
    %6643 = vmatprep.subr.bf16.mxu0 %v3722
    %6644 = vmatpush1.bf16.msra.mxu0 %v3721
    %6645 = vmatprep.subr.bf16.mxu0 %v3706
    %6646 = vmatpush1.bf16.msra.mxu0 %v3705
    %6647 = vmatprep.subr.bf16.mxu0 %v3946
    %6648 = vmatpush2.bf16.msra.mxu0 %v3945
    %6649 = vmatprep.subr.bf16.mxu0 %v3930
    %6650 = vmatpush2.bf16.msra.mxu0 %v3929
    %6651 = vmatprep.subr.bf16.mxu0 %v3914
    %6652 = vmatpush2.bf16.msra.mxu0 %v3913
    %6653 = vmatprep.subr.bf16.mxu0 %v3898
    %6654 = vmatpush2.bf16.msra.mxu0 %v3897
    %6655 = vmatprep.subr.bf16.mxu0 %v3882
    %6656 = vmatpush2.bf16.msra.mxu0 %v3881
    %6657 = vmatprep.subr.bf16.mxu0 %v3866
    %6658 = vmatpush2.bf16.msra.mxu0 %v3865
    %6659 = vmatprep.subr.bf16.mxu0 %v3850
    %6660 = vmatpush2.bf16.msra.mxu0 %v3849
    %6661 = vmatprep.subr.bf16.mxu0 %v3834
    %6662 = vmatpush2.bf16.msra.mxu0 %v3833
    %6663 = vmatprep.mubr.bf16.mxu0 %v6300
    %6664 = vmatmul.mubr.bf16.gmra.mxu0 %v6299
    %v6665 = vpop.f32.mrf.mxu0
    %v6666 = vadd.f32 0.0, %v6665
    %v6667 = vpop.f32.mrf.mxu0
    %v6668 = vadd.f32 0.0, %v6667
    %v6669 = vpop.f32.mrf.mxu0
    %v6670 = vpop.f32.mrf.mxu0
    %6671 = vdwg.mxu0
    %6672 = vmatprep.subr.bf16.mxu0 %v4074
    %6673 = vmatpush1.bf16.msra.mxu0 %v4073
    %6674 = vmatprep.subr.bf16.mxu0 %v4058
    %6675 = vmatpush1.bf16.msra.mxu0 %v4057
    %6676 = vmatprep.subr.bf16.mxu0 %v4042
    %6677 = vmatpush1.bf16.msra.mxu0 %v4041
    %6678 = vmatprep.subr.bf16.mxu0 %v4026
    %6679 = vmatpush1.bf16.msra.mxu0 %v4025
    %6680 = vmatprep.subr.bf16.mxu0 %v4010
    %6681 = vmatpush1.bf16.msra.mxu0 %v4009
    %6682 = vmatprep.subr.bf16.mxu0 %v3994
    %6683 = vmatpush1.bf16.msra.mxu0 %v3993
    %6684 = vmatprep.subr.bf16.mxu0 %v3978
    %6685 = vmatpush1.bf16.msra.mxu0 %v3977
    %6686 = vmatprep.subr.bf16.mxu0 %v3962
    %6687 = vmatpush1.bf16.msra.mxu0 %v3961
    %6688 = vmatprep.subr.bf16.mxu0 %v4202
    %6689 = vmatpush2.bf16.msra.mxu0 %v4201
    %6690 = vmatprep.subr.bf16.mxu0 %v4186
    %6691 = vmatpush2.bf16.msra.mxu0 %v4185
    %6692 = vmatprep.subr.bf16.mxu0 %v4170
    %6693 = vmatpush2.bf16.msra.mxu0 %v4169
    %6694 = vmatprep.subr.bf16.mxu0 %v4154
    %6695 = vmatpush2.bf16.msra.mxu0 %v4153
    %6696 = vmatprep.subr.bf16.mxu0 %v4138
    %6697 = vmatpush2.bf16.msra.mxu0 %v4137
    %6698 = vmatprep.subr.bf16.mxu0 %v4122
    %6699 = vmatpush2.bf16.msra.mxu0 %v4121
    %6700 = vmatprep.subr.bf16.mxu0 %v4106
    %6701 = vmatpush2.bf16.msra.mxu0 %v4105
    %6702 = vmatprep.subr.bf16.mxu0 %v4090
    %6703 = vmatpush2.bf16.msra.mxu0 %v4089
    %6704 = vmatprep.mubr.bf16.mxu0 %v6302
    %6705 = vmatmul.mubr.bf16.gmra.mxu0 %v6301
    %v6706 = vpop.f32.mrf.mxu0
    %v6707 = vadd.f32 %v6666, %v6706
    %v6708 = vpop.f32.mrf.mxu0
    %v6709 = vadd.f32 %v6668, %v6708
    %v6710 = vpop.f32.mrf.mxu0
    %v6711 = vpop.f32.mrf.mxu0
    %6712 = vdwg.mxu0
    %6713 = vmatprep.subr.bf16.mxu0 %v3820
    %6714 = vmatpush1.bf16.msra.mxu0 %v3819
    %6715 = vmatprep.subr.bf16.mxu0 %v3804
    %6716 = vmatpush1.bf16.msra.mxu0 %v3803
    %6717 = vmatprep.subr.bf16.mxu0 %v3788
    %6718 = vmatpush1.bf16.msra.mxu0 %v3787
    %6719 = vmatprep.subr.bf16.mxu0 %v3772
    %6720 = vmatpush1.bf16.msra.mxu0 %v3771
    %6721 = vmatprep.subr.bf16.mxu0 %v3756
    %6722 = vmatpush1.bf16.msra.mxu0 %v3755
    %6723 = vmatprep.subr.bf16.mxu0 %v3740
    %6724 = vmatpush1.bf16.msra.mxu0 %v3739
    %6725 = vmatprep.subr.bf16.mxu0 %v3724
    %6726 = vmatpush1.bf16.msra.mxu0 %v3723
    %6727 = vmatprep.subr.bf16.mxu0 %v3708
    %6728 = vmatpush1.bf16.msra.mxu0 %v3707
    %6729 = vmatprep.subr.bf16.mxu0 %v3948
    %6730 = vmatpush2.bf16.msra.mxu0 %v3947
    %6731 = vmatprep.subr.bf16.mxu0 %v3932
    %6732 = vmatpush2.bf16.msra.mxu0 %v3931
    %6733 = vmatprep.subr.bf16.mxu0 %v3916
    %6734 = vmatpush2.bf16.msra.mxu0 %v3915
    %6735 = vmatprep.subr.bf16.mxu0 %v3900
    %6736 = vmatpush2.bf16.msra.mxu0 %v3899
    %6737 = vmatprep.subr.bf16.mxu0 %v3884
    %6738 = vmatpush2.bf16.msra.mxu0 %v3883
    %6739 = vmatprep.subr.bf16.mxu0 %v3868
    %6740 = vmatpush2.bf16.msra.mxu0 %v3867
    %6741 = vmatprep.subr.bf16.mxu0 %v3852
    %6742 = vmatpush2.bf16.msra.mxu0 %v3851
    %6743 = vmatprep.subr.bf16.mxu0 %v3836
    %6744 = vmatpush2.bf16.msra.mxu0 %v3835
    %6745 = vmatprep.mubr.bf16.mxu0 %v6300
    %6746 = vmatmul.mubr.bf16.gmra.mxu0 %v6299
    %v6747 = vpop.f32.mrf.mxu0
    %v6748 = vadd.f32 0.0, %v6747
    %v6749 = vpop.f32.mrf.mxu0
    %v6750 = vadd.f32 0.0, %v6749
    %v6751 = vpop.f32.mrf.mxu0
    %v6752 = vpop.f32.mrf.mxu0
    %6753 = vdwg.mxu0
    %6754 = vmatprep.subr.bf16.mxu0 %v4076
    %6755 = vmatpush1.bf16.msra.mxu0 %v4075
    %6756 = vmatprep.subr.bf16.mxu0 %v4060
    %6757 = vmatpush1.bf16.msra.mxu0 %v4059
    %6758 = vmatprep.subr.bf16.mxu0 %v4044
    %6759 = vmatpush1.bf16.msra.mxu0 %v4043
    %6760 = vmatprep.subr.bf16.mxu0 %v4028
    %6761 = vmatpush1.bf16.msra.mxu0 %v4027
    %6762 = vmatprep.subr.bf16.mxu0 %v4012
    %6763 = vmatpush1.bf16.msra.mxu0 %v4011
    %6764 = vmatprep.subr.bf16.mxu0 %v3996
    %6765 = vmatpush1.bf16.msra.mxu0 %v3995
    %6766 = vmatprep.subr.bf16.mxu0 %v3980
    %6767 = vmatpush1.bf16.msra.mxu0 %v3979
    %6768 = vmatprep.subr.bf16.mxu0 %v3964
    %6769 = vmatpush1.bf16.msra.mxu0 %v3963
    %6770 = vmatprep.subr.bf16.mxu0 %v4204
    %6771 = vmatpush2.bf16.msra.mxu0 %v4203
    %6772 = vmatprep.subr.bf16.mxu0 %v4188
    %6773 = vmatpush2.bf16.msra.mxu0 %v4187
    %6774 = vmatprep.subr.bf16.mxu0 %v4172
    %6775 = vmatpush2.bf16.msra.mxu0 %v4171
    %6776 = vmatprep.subr.bf16.mxu0 %v4156
    %6777 = vmatpush2.bf16.msra.mxu0 %v4155
    %6778 = vmatprep.subr.bf16.mxu0 %v4140
    %6779 = vmatpush2.bf16.msra.mxu0 %v4139
    %6780 = vmatprep.subr.bf16.mxu0 %v4124
    %6781 = vmatpush2.bf16.msra.mxu0 %v4123
    %6782 = vmatprep.subr.bf16.mxu0 %v4108
    %6783 = vmatpush2.bf16.msra.mxu0 %v4107
    %6784 = vmatprep.subr.bf16.mxu0 %v4092
    %6785 = vmatpush2.bf16.msra.mxu0 %v4091
    %6786 = vmatprep.mubr.bf16.mxu0 %v6302
    %6787 = vmatmul.mubr.bf16.gmra.mxu0 %v6301
    %v6788 = vpop.f32.mrf.mxu0
    %v6789 = vadd.f32 %v6748, %v6788
    %v6790 = vpop.f32.mrf.mxu0
    %v6791 = vadd.f32 %v6750, %v6790
    %v6792 = vpop.f32.mrf.mxu0
    %v6793 = vpop.f32.mrf.mxu0
    %6794 = vdwg.mxu0
    %6795 = vmatprep.subr.bf16.mxu0 %v3822
    %6796 = vmatpush1.bf16.msra.mxu0 %v3821
    %6797 = vmatprep.subr.bf16.mxu0 %v3806
    %6798 = vmatpush1.bf16.msra.mxu0 %v3805
    %6799 = vmatprep.subr.bf16.mxu0 %v3790
    %6800 = vmatpush1.bf16.msra.mxu0 %v3789
    %6801 = vmatprep.subr.bf16.mxu0 %v3774
    %6802 = vmatpush1.bf16.msra.mxu0 %v3773
    %6803 = vmatprep.subr.bf16.mxu0 %v3758
    %6804 = vmatpush1.bf16.msra.mxu0 %v3757
    %6805 = vmatprep.subr.bf16.mxu0 %v3742
    %6806 = vmatpush1.bf16.msra.mxu0 %v3741
    %6807 = vmatprep.subr.bf16.mxu0 %v3726
    %6808 = vmatpush1.bf16.msra.mxu0 %v3725
    %6809 = vmatprep.subr.bf16.mxu0 %v3710
    %6810 = vmatpush1.bf16.msra.mxu0 %v3709
    %6811 = vmatprep.subr.bf16.mxu0 %v3950
    %6812 = vmatpush2.bf16.msra.mxu0 %v3949
    %6813 = vmatprep.subr.bf16.mxu0 %v3934
    %6814 = vmatpush2.bf16.msra.mxu0 %v3933
    %6815 = vmatprep.subr.bf16.mxu0 %v3918
    %6816 = vmatpush2.bf16.msra.mxu0 %v3917
    %6817 = vmatprep.subr.bf16.mxu0 %v3902
    %6818 = vmatpush2.bf16.msra.mxu0 %v3901
    %6819 = vmatprep.subr.bf16.mxu0 %v3886
    %6820 = vmatpush2.bf16.msra.mxu0 %v3885
    %6821 = vmatprep.subr.bf16.mxu0 %v3870
    %6822 = vmatpush2.bf16.msra.mxu0 %v3869
    %6823 = vmatprep.subr.bf16.mxu0 %v3854
    %6824 = vmatpush2.bf16.msra.mxu0 %v3853
    %6825 = vmatprep.subr.bf16.mxu0 %v3838
    %6826 = vmatpush2.bf16.msra.mxu0 %v3837
    %6827 = vmatprep.mubr.bf16.mxu0 %v6300
    %6828 = vmatmul.mubr.bf16.gmra.mxu0 %v6299
    %v6829 = vpop.f32.mrf.mxu0
    %v6830 = vadd.f32 0.0, %v6829
    %v6831 = vpop.f32.mrf.mxu0
    %v6832 = vadd.f32 0.0, %v6831
    %v6833 = vpop.f32.mrf.mxu0
    %v6834 = vpop.f32.mrf.mxu0
    %6835 = vdwg.mxu0
    %6836 = vmatprep.subr.bf16.mxu0 %v4078
    %6837 = vmatpush1.bf16.msra.mxu0 %v4077
    %6838 = vmatprep.subr.bf16.mxu0 %v4062
    %6839 = vmatpush1.bf16.msra.mxu0 %v4061
    %6840 = vmatprep.subr.bf16.mxu0 %v4046
    %6841 = vmatpush1.bf16.msra.mxu0 %v4045
    %6842 = vmatprep.subr.bf16.mxu0 %v4030
    %6843 = vmatpush1.bf16.msra.mxu0 %v4029
    %6844 = vmatprep.subr.bf16.mxu0 %v4014
    %6845 = vmatpush1.bf16.msra.mxu0 %v4013
    %6846 = vmatprep.subr.bf16.mxu0 %v3998
    %6847 = vmatpush1.bf16.msra.mxu0 %v3997
    %6848 = vmatprep.subr.bf16.mxu0 %v3982
    %6849 = vmatpush1.bf16.msra.mxu0 %v3981
    %6850 = vmatprep.subr.bf16.mxu0 %v3966
    %6851 = vmatpush1.bf16.msra.mxu0 %v3965
    %6852 = vmatprep.subr.bf16.mxu0 %v4206
    %6853 = vmatpush2.bf16.msra.mxu0 %v4205
    %6854 = vmatprep.subr.bf16.mxu0 %v4190
    %6855 = vmatpush2.bf16.msra.mxu0 %v4189
    %6856 = vmatprep.subr.bf16.mxu0 %v4174
    %6857 = vmatpush2.bf16.msra.mxu0 %v4173
    %6858 = vmatprep.subr.bf16.mxu0 %v4158
    %6859 = vmatpush2.bf16.msra.mxu0 %v4157
    %6860 = vmatprep.subr.bf16.mxu0 %v4142
    %6861 = vmatpush2.bf16.msra.mxu0 %v4141
    %6862 = vmatprep.subr.bf16.mxu0 %v4126
    %6863 = vmatpush2.bf16.msra.mxu0 %v4125
    %6864 = vmatprep.subr.bf16.mxu0 %v4110
    %6865 = vmatpush2.bf16.msra.mxu0 %v4109
    %6866 = vmatprep.subr.bf16.mxu0 %v4094
    %6867 = vmatpush2.bf16.msra.mxu0 %v4093
    %6868 = vmatprep.mubr.bf16.mxu0 %v6302
    %6869 = vmatmul.mubr.bf16.gmra.mxu0 %v6301
    %v6870 = vpop.f32.mrf.mxu0
    %v6871 = vadd.f32 %v6830, %v6870
    %v6872 = vpop.f32.mrf.mxu0
    %v6873 = vadd.f32 %v6832, %v6872
    %v6874 = vpop.f32.mrf.mxu0
    %v6875 = vpop.f32.mrf.mxu0
    %6876 = vdwg.mxu0
    %6877 = vmatprep.subr.bf16.mxu0 %v3824
    %6878 = vmatpush1.bf16.msra.mxu0 %v3823
    %6879 = vmatprep.subr.bf16.mxu0 %v3808
    %6880 = vmatpush1.bf16.msra.mxu0 %v3807
    %6881 = vmatprep.subr.bf16.mxu0 %v3792
    %6882 = vmatpush1.bf16.msra.mxu0 %v3791
    %6883 = vmatprep.subr.bf16.mxu0 %v3776
    %6884 = vmatpush1.bf16.msra.mxu0 %v3775
    %6885 = vmatprep.subr.bf16.mxu0 %v3760
    %6886 = vmatpush1.bf16.msra.mxu0 %v3759
    %6887 = vmatprep.subr.bf16.mxu0 %v3744
    %6888 = vmatpush1.bf16.msra.mxu0 %v3743
    %6889 = vmatprep.subr.bf16.mxu0 %v3728
    %6890 = vmatpush1.bf16.msra.mxu0 %v3727
    %6891 = vmatprep.subr.bf16.mxu0 %v3712
    %6892 = vmatpush1.bf16.msra.mxu0 %v3711
    %6893 = vmatprep.subr.bf16.mxu0 %v3952
    %6894 = vmatpush2.bf16.msra.mxu0 %v3951
    %6895 = vmatprep.subr.bf16.mxu0 %v3936
    %6896 = vmatpush2.bf16.msra.mxu0 %v3935
    %6897 = vmatprep.subr.bf16.mxu0 %v3920
    %6898 = vmatpush2.bf16.msra.mxu0 %v3919
    %6899 = vmatprep.subr.bf16.mxu0 %v3904
    %6900 = vmatpush2.bf16.msra.mxu0 %v3903
    %6901 = vmatprep.subr.bf16.mxu0 %v3888
    %6902 = vmatpush2.bf16.msra.mxu0 %v3887
    %6903 = vmatprep.subr.bf16.mxu0 %v3872
    %6904 = vmatpush2.bf16.msra.mxu0 %v3871
    %6905 = vmatprep.subr.bf16.mxu0 %v3856
    %6906 = vmatpush2.bf16.msra.mxu0 %v3855
    %6907 = vmatprep.subr.bf16.mxu0 %v3840
    %6908 = vmatpush2.bf16.msra.mxu0 %v3839
    %6909 = vmatprep.mubr.bf16.mxu0 %v6300
    %6910 = vmatmul.mubr.bf16.gmra.mxu0 %v6299
    %v6911 = vpop.f32.mrf.mxu0
    %v6912 = vadd.f32 0.0, %v6911
    %v6913 = vpop.f32.mrf.mxu0
    %v6914 = vadd.f32 0.0, %v6913
    %v6915 = vpop.f32.mrf.mxu0
    %v6916 = vpop.f32.mrf.mxu0
    %6917 = vdwg.mxu0
    %6918 = vmatprep.subr.bf16.mxu0 %v4080
    %6919 = vmatpush1.bf16.msra.mxu0 %v4079
    %6920 = vmatprep.subr.bf16.mxu0 %v4064
    %6921 = vmatpush1.bf16.msra.mxu0 %v4063
    %6922 = vmatprep.subr.bf16.mxu0 %v4048
    %6923 = vmatpush1.bf16.msra.mxu0 %v4047
    %6924 = vmatprep.subr.bf16.mxu0 %v4032
    %6925 = vmatpush1.bf16.msra.mxu0 %v4031
    %6926 = vmatprep.subr.bf16.mxu0 %v4016
    %6927 = vmatpush1.bf16.msra.mxu0 %v4015
    %6928 = vmatprep.subr.bf16.mxu0 %v4000
    %6929 = vmatpush1.bf16.msra.mxu0 %v3999
    %6930 = vmatprep.subr.bf16.mxu0 %v3984
    %6931 = vmatpush1.bf16.msra.mxu0 %v3983
    %6932 = vmatprep.subr.bf16.mxu0 %v3968
    %6933 = vmatpush1.bf16.msra.mxu0 %v3967
    %6934 = vmatprep.subr.bf16.mxu0 %v4208
    %6935 = vmatpush2.bf16.msra.mxu0 %v4207
    %6936 = vmatprep.subr.bf16.mxu0 %v4192
    %6937 = vmatpush2.bf16.msra.mxu0 %v4191
    %6938 = vmatprep.subr.bf16.mxu0 %v4176
    %6939 = vmatpush2.bf16.msra.mxu0 %v4175
    %6940 = vmatprep.subr.bf16.mxu0 %v4160
    %6941 = vmatpush2.bf16.msra.mxu0 %v4159
    %6942 = vmatprep.subr.bf16.mxu0 %v4144
    %6943 = vmatpush2.bf16.msra.mxu0 %v4143
    %6944 = vmatprep.subr.bf16.mxu0 %v4128
    %6945 = vmatpush2.bf16.msra.mxu0 %v4127
    %6946 = vmatprep.subr.bf16.mxu0 %v4112
    %6947 = vmatpush2.bf16.msra.mxu0 %v4111
    %6948 = vmatprep.subr.bf16.mxu0 %v4096
    %6949 = vmatpush2.bf16.msra.mxu0 %v4095
    %6950 = vmatprep.mubr.bf16.mxu0 %v6302
    %6951 = vmatmul.mubr.bf16.gmra.mxu0 %v6301
    %v6952 = vpop.f32.mrf.mxu0
    %v6953 = vadd.f32 %v6912, %v6952
    %v6954 = vpop.f32.mrf.mxu0
    %v6955 = vadd.f32 %v6914, %v6954
    %v6956 = vpop.f32.mrf.mxu0
    %v6957 = vpop.f32.mrf.mxu0
    %6958 = vdwg.mxu0
    %v6959 = vadd.f32 %v6283, %v6379
    %v6960 = vadd.f32 %v6284, %v6381
    %v6961 = vadd.f32 %v6285, %v6461
    %v6962 = vadd.f32 %v6286, %v6463
    %v6963 = vadd.f32 %v6287, %v6543
    %v6964 = vadd.f32 %v6288, %v6545
    %v6965 = vadd.f32 %v6289, %v6625
    %v6966 = vadd.f32 %v6290, %v6627
    %v6967 = vadd.f32 %v6291, %v6707
    %v6968 = vadd.f32 %v6292, %v6709
    %v6969 = vadd.f32 %v6293, %v6789
    %v6970 = vadd.f32 %v6294, %v6791
    %v6971 = vadd.f32 %v6295, %v6871
    %v6972 = vadd.f32 %v6296, %v6873
    %v6973 = vadd.f32 %v6297, %v6953
    %v6974 = vadd.f32 %v6298, %v6955
    %v6975 = vxor.u32 %v6959, 2147483648
    %v6976 = vxor.u32 %v6960, 2147483648
    %v6977 = vxor.u32 %v6961, 2147483648
    %v6978 = vxor.u32 %v6962, 2147483648
    %v6979 = vmul.f32 %v6975, 1.442695
    %v6980 = vpow.pop %v6979
    %v6981 = vmul.f32 %v6976, 1.442695
    %v6982 = vpow.pop %v6981
    %v6983 = vmul.f32 %v6977, 1.442695
    %v6984 = vpow.pop %v6983
    %v6985 = vmul.f32 %v6978, 1.442695
    %v6986 = vpow.pop %v6985
    %v6987 = vadd.f32 %v6980, 1.0
    %v6988 = vadd.f32 %v6982, 1.0
    %v6989 = vadd.f32 %v6984, 1.0
    %v6990 = vadd.f32 %v6986, 1.0
    %v6991 = vrcp.pop %v6987
    %v6992 = vmul.f32 1.0, %v6991
    %v6993 = vrcp.pop %v6988
    %v6994 = vmul.f32 1.0, %v6993
    %v6995 = vrcp.pop %v6989
    %v6996 = vmul.f32 1.0, %v6995
    %v6997 = vrcp.pop %v6990
    %v6998 = vmul.f32 1.0, %v6997
    %v6999 = vxor.u32 %v6963, 2147483648
    %v7000 = vxor.u32 %v6964, 2147483648
    %v7001 = vxor.u32 %v6965, 2147483648
    %v7002 = vxor.u32 %v6966, 2147483648
    %v7003 = vmul.f32 %v6999, 1.442695
    %v7004 = vpow.pop %v7003
    %v7005 = vmul.f32 %v7000, 1.442695
    %v7006 = vpow.pop %v7005
    %v7007 = vmul.f32 %v7001, 1.442695
    %v7008 = vpow.pop %v7007
    %v7009 = vmul.f32 %v7002, 1.442695
    %v7010 = vpow.pop %v7009
    %v7011 = vadd.f32 %v7004, 1.0
    %v7012 = vadd.f32 %v7006, 1.0
    %v7013 = vadd.f32 %v7008, 1.0
    %v7014 = vadd.f32 %v7010, 1.0
    %v7015 = vrcp.pop %v7011
    %v7016 = vmul.f32 1.0, %v7015
    %v7017 = vrcp.pop %v7012
    %v7018 = vmul.f32 1.0, %v7017
    %v7019 = vrcp.pop %v7013
    %v7020 = vmul.f32 1.0, %v7019
    %v7021 = vrcp.pop %v7014
    %v7022 = vmul.f32 1.0, %v7021
    %v7023 = vtanh.pop %v6967
    %v7024 = vtanh.pop %v6968
    %v7025 = vtanh.pop %v6969
    %v7026 = vtanh.pop %v6970
    %v7027 = vxor.u32 %v6971, 2147483648
    %v7028 = vxor.u32 %v6972, 2147483648
    %v7029 = vxor.u32 %v6973, 2147483648
    %v7030 = vxor.u32 %v6974, 2147483648
    %v7031 = vmul.f32 %v7027, 1.442695
    %v7032 = vpow.pop %v7031
    %v7033 = vmul.f32 %v7028, 1.442695
    %v7034 = vpow.pop %v7033
    %v7035 = vmul.f32 %v7029, 1.442695
    %v7036 = vpow.pop %v7035
    %v7037 = vmul.f32 %v7030, 1.442695
    %v7038 = vpow.pop %v7037
    %v7039 = vadd.f32 %v7032, 1.0
    %v7040 = vadd.f32 %v7034, 1.0
    %v7041 = vadd.f32 %v7036, 1.0
    %v7042 = vadd.f32 %v7038, 1.0
    %v7043 = vrcp.pop %v7039
    %v7044 = vmul.f32 1.0, %v7043
    %v7045 = vrcp.pop %v7040
    %v7046 = vmul.f32 1.0, %v7045
    %v7047 = vrcp.pop %v7041
    %v7048 = vmul.f32 1.0, %v7047
    %v7049 = vrcp.pop %v7042
    %v7050 = vmul.f32 1.0, %v7049
    %v7051 = vmul.f32 %v7016, %v6268
    %v7052 = vmul.f32 %v7018, %v6269
    %v7053 = vmul.f32 %v7020, %v6270
    %v7054 = vmul.f32 %v7022, %v6271
    %v7055 = vmul.f32 %v6992, %v7023
    %v7056 = vmul.f32 %v6994, %v7024
    %v7057 = vmul.f32 %v6996, %v7025
    %v7058 = vmul.f32 %v6998, %v7026
    %v7059 = vadd.f32 %v7051, %v7055
    %v7060 = vadd.f32 %v7052, %v7056
    %v7061 = vadd.f32 %v7053, %v7057
    %v7062 = vadd.f32 %v7054, %v7058
    %v7063 = vtanh.pop %v7059
    %v7064 = vtanh.pop %v7060
    %v7065 = vtanh.pop %v7061
    %v7066 = vtanh.pop %v7062
    %v7067 = vmul.f32 %v7044, %v7063
    %v7068 = vmul.f32 %v7046, %v7064
    %v7069 = vmul.f32 %v7048, %v7065
    %v7070 = vmul.f32 %v7050, %v7066
    %s7071 = smul.u32 3, 16
    %s7072 = smul.addr %s7071, 8
    %s7073 = scalar_lea.vmem [#allocation2], %s7072
    %v7074 = vld [vmem:[%s7073] sm:$0xff]
    %v7075 = vld [vmem:[%s7073 + $0x8] sm:$0xff]
    %v7076 = vld [vmem:[%s7073 + $0x10] sm:$0xff]
    %v7077 = vld [vmem:[%s7073 + $0x18] sm:$0xff]
    %v7078 = vld [vmem:[%s7073 + $0x20] sm:$0xff]
    %v7079 = vld [vmem:[%s7073 + $0x28] sm:$0xff]
    %v7080 = vld [vmem:[%s7073 + $0x30] sm:$0xff]
    %v7081 = vld [vmem:[%s7073 + $0x38] sm:$0xff]
    %v7082 = vld [vmem:[%s7073 + $0x40] sm:$0xff]
    %v7083 = vld [vmem:[%s7073 + $0x48] sm:$0xff]
    %v7084 = vld [vmem:[%s7073 + $0x50] sm:$0xff]
    %v7085 = vld [vmem:[%s7073 + $0x58] sm:$0xff]
    %v7086 = vld [vmem:[%s7073 + $0x60] sm:$0xff]
    %v7087 = vld [vmem:[%s7073 + $0x68] sm:$0xff]
    %v7088 = vld [vmem:[%s7073 + $0x70] sm:$0xff]
    %v7089 = vld [vmem:[%s7073 + $0x78] sm:$0xff]
    %v7090 = vpack.c.bf16 %v7067, %v7067
    %v7091 = vpack.c.bf16 %v7068, %v7068
    %v7092 = vpack.c.bf16 %v7069, %v7069
    %v7093 = vpack.c.bf16 %v7070, %v7070
    %7094 = vmatprep.subr.bf16.mxu0 %v3810
    %7095 = vmatpush1.bf16.msra.mxu0 %v3809
    %7096 = vmatprep.subr.bf16.mxu0 %v3794
    %7097 = vmatpush1.bf16.msra.mxu0 %v3793
    %7098 = vmatprep.subr.bf16.mxu0 %v3778
    %7099 = vmatpush1.bf16.msra.mxu0 %v3777
    %7100 = vmatprep.subr.bf16.mxu0 %v3762
    %7101 = vmatpush1.bf16.msra.mxu0 %v3761
    %7102 = vmatprep.subr.bf16.mxu0 %v3746
    %7103 = vmatpush1.bf16.msra.mxu0 %v3745
    %7104 = vmatprep.subr.bf16.mxu0 %v3730
    %7105 = vmatpush1.bf16.msra.mxu0 %v3729
    %7106 = vmatprep.subr.bf16.mxu0 %v3714
    %7107 = vmatpush1.bf16.msra.mxu0 %v3713
    %7108 = vmatprep.subr.bf16.mxu0 %v3698
    %7109 = vmatpush1.bf16.msra.mxu0 %v3697
    %7110 = vmatprep.subr.bf16.mxu0 %v3938
    %7111 = vmatpush2.bf16.msra.mxu0 %v3937
    %7112 = vmatprep.subr.bf16.mxu0 %v3922
    %7113 = vmatpush2.bf16.msra.mxu0 %v3921
    %7114 = vmatprep.subr.bf16.mxu0 %v3906
    %7115 = vmatpush2.bf16.msra.mxu0 %v3905
    %7116 = vmatprep.subr.bf16.mxu0 %v3890
    %7117 = vmatpush2.bf16.msra.mxu0 %v3889
    %7118 = vmatprep.subr.bf16.mxu0 %v3874
    %7119 = vmatpush2.bf16.msra.mxu0 %v3873
    %7120 = vmatprep.subr.bf16.mxu0 %v3858
    %7121 = vmatpush2.bf16.msra.mxu0 %v3857
    %7122 = vmatprep.subr.bf16.mxu0 %v3842
    %7123 = vmatpush2.bf16.msra.mxu0 %v3841
    %7124 = vmatprep.subr.bf16.mxu0 %v3826
    %7125 = vmatpush2.bf16.msra.mxu0 %v3825
    %7126 = vmatprep.mubr.bf16.mxu0 %v7091
    %7127 = vmatmul.mubr.bf16.gmra.mxu0 %v7090
    %v7128 = vpop.f32.mrf.mxu0
    %v7129 = vadd.f32 0.0, %v7128
    %v7130 = vpop.f32.mrf.mxu0
    %v7131 = vadd.f32 0.0, %v7130
    %v7132 = vpop.f32.mrf.mxu0
    %v7133 = vpop.f32.mrf.mxu0
    %7134 = vdwg.mxu0
    %7135 = vmatprep.subr.bf16.mxu0 %v4066
    %7136 = vmatpush1.bf16.msra.mxu0 %v4065
    %7137 = vmatprep.subr.bf16.mxu0 %v4050
    %7138 = vmatpush1.bf16.msra.mxu0 %v4049
    %7139 = vmatprep.subr.bf16.mxu0 %v4034
    %7140 = vmatpush1.bf16.msra.mxu0 %v4033
    %7141 = vmatprep.subr.bf16.mxu0 %v4018
    %7142 = vmatpush1.bf16.msra.mxu0 %v4017
    %7143 = vmatprep.subr.bf16.mxu0 %v4002
    %7144 = vmatpush1.bf16.msra.mxu0 %v4001
    %7145 = vmatprep.subr.bf16.mxu0 %v3986
    %7146 = vmatpush1.bf16.msra.mxu0 %v3985
    %7147 = vmatprep.subr.bf16.mxu0 %v3970
    %7148 = vmatpush1.bf16.msra.mxu0 %v3969
    %7149 = vmatprep.subr.bf16.mxu0 %v3954
    %7150 = vmatpush1.bf16.msra.mxu0 %v3953
    %7151 = vmatprep.subr.bf16.mxu0 %v4194
    %7152 = vmatpush2.bf16.msra.mxu0 %v4193
    %7153 = vmatprep.subr.bf16.mxu0 %v4178
    %7154 = vmatpush2.bf16.msra.mxu0 %v4177
    %7155 = vmatprep.subr.bf16.mxu0 %v4162
    %7156 = vmatpush2.bf16.msra.mxu0 %v4161
    %7157 = vmatprep.subr.bf16.mxu0 %v4146
    %7158 = vmatpush2.bf16.msra.mxu0 %v4145
    %7159 = vmatprep.subr.bf16.mxu0 %v4130
    %7160 = vmatpush2.bf16.msra.mxu0 %v4129
    %7161 = vmatprep.subr.bf16.mxu0 %v4114
    %7162 = vmatpush2.bf16.msra.mxu0 %v4113
    %7163 = vmatprep.subr.bf16.mxu0 %v4098
    %7164 = vmatpush2.bf16.msra.mxu0 %v4097
    %7165 = vmatprep.subr.bf16.mxu0 %v4082
    %7166 = vmatpush2.bf16.msra.mxu0 %v4081
    %7167 = vmatprep.mubr.bf16.mxu0 %v7093
    %7168 = vmatmul.mubr.bf16.gmra.mxu0 %v7092
    %v7169 = vpop.f32.mrf.mxu0
    %v7170 = vadd.f32 %v7129, %v7169
    %v7171 = vpop.f32.mrf.mxu0
    %v7172 = vadd.f32 %v7131, %v7171
    %v7173 = vpop.f32.mrf.mxu0
    %v7174 = vpop.f32.mrf.mxu0
    %7175 = vdwg.mxu0
    %7176 = vmatprep.subr.bf16.mxu0 %v3812
    %7177 = vmatpush1.bf16.msra.mxu0 %v3811
    %7178 = vmatprep.subr.bf16.mxu0 %v3796
    %7179 = vmatpush1.bf16.msra.mxu0 %v3795
    %7180 = vmatprep.subr.bf16.mxu0 %v3780
    %7181 = vmatpush1.bf16.msra.mxu0 %v3779
    %7182 = vmatprep.subr.bf16.mxu0 %v3764
    %7183 = vmatpush1.bf16.msra.mxu0 %v3763
    %7184 = vmatprep.subr.bf16.mxu0 %v3748
    %7185 = vmatpush1.bf16.msra.mxu0 %v3747
    %7186 = vmatprep.subr.bf16.mxu0 %v3732
    %7187 = vmatpush1.bf16.msra.mxu0 %v3731
    %7188 = vmatprep.subr.bf16.mxu0 %v3716
    %7189 = vmatpush1.bf16.msra.mxu0 %v3715
    %7190 = vmatprep.subr.bf16.mxu0 %v3700
    %7191 = vmatpush1.bf16.msra.mxu0 %v3699
    %7192 = vmatprep.subr.bf16.mxu0 %v3940
    %7193 = vmatpush2.bf16.msra.mxu0 %v3939
    %7194 = vmatprep.subr.bf16.mxu0 %v3924
    %7195 = vmatpush2.bf16.msra.mxu0 %v3923
    %7196 = vmatprep.subr.bf16.mxu0 %v3908
    %7197 = vmatpush2.bf16.msra.mxu0 %v3907
    %7198 = vmatprep.subr.bf16.mxu0 %v3892
    %7199 = vmatpush2.bf16.msra.mxu0 %v3891
    %7200 = vmatprep.subr.bf16.mxu0 %v3876
    %7201 = vmatpush2.bf16.msra.mxu0 %v3875
    %7202 = vmatprep.subr.bf16.mxu0 %v3860
    %7203 = vmatpush2.bf16.msra.mxu0 %v3859
    %7204 = vmatprep.subr.bf16.mxu0 %v3844
    %7205 = vmatpush2.bf16.msra.mxu0 %v3843
    %7206 = vmatprep.subr.bf16.mxu0 %v3828
    %7207 = vmatpush2.bf16.msra.mxu0 %v3827
    %7208 = vmatprep.mubr.bf16.mxu0 %v7091
    %7209 = vmatmul.mubr.bf16.gmra.mxu0 %v7090
    %v7210 = vpop.f32.mrf.mxu0
    %v7211 = vadd.f32 0.0, %v7210
    %v7212 = vpop.f32.mrf.mxu0
    %v7213 = vadd.f32 0.0, %v7212
    %v7214 = vpop.f32.mrf.mxu0
    %v7215 = vpop.f32.mrf.mxu0
    %7216 = vdwg.mxu0
    %7217 = vmatprep.subr.bf16.mxu0 %v4068
    %7218 = vmatpush1.bf16.msra.mxu0 %v4067
    %7219 = vmatprep.subr.bf16.mxu0 %v4052
    %7220 = vmatpush1.bf16.msra.mxu0 %v4051
    %7221 = vmatprep.subr.bf16.mxu0 %v4036
    %7222 = vmatpush1.bf16.msra.mxu0 %v4035
    %7223 = vmatprep.subr.bf16.mxu0 %v4020
    %7224 = vmatpush1.bf16.msra.mxu0 %v4019
    %7225 = vmatprep.subr.bf16.mxu0 %v4004
    %7226 = vmatpush1.bf16.msra.mxu0 %v4003
    %7227 = vmatprep.subr.bf16.mxu0 %v3988
    %7228 = vmatpush1.bf16.msra.mxu0 %v3987
    %7229 = vmatprep.subr.bf16.mxu0 %v3972
    %7230 = vmatpush1.bf16.msra.mxu0 %v3971
    %7231 = vmatprep.subr.bf16.mxu0 %v3956
    %7232 = vmatpush1.bf16.msra.mxu0 %v3955
    %7233 = vmatprep.subr.bf16.mxu0 %v4196
    %7234 = vmatpush2.bf16.msra.mxu0 %v4195
    %7235 = vmatprep.subr.bf16.mxu0 %v4180
    %7236 = vmatpush2.bf16.msra.mxu0 %v4179
    %7237 = vmatprep.subr.bf16.mxu0 %v4164
    %7238 = vmatpush2.bf16.msra.mxu0 %v4163
    %7239 = vmatprep.subr.bf16.mxu0 %v4148
    %7240 = vmatpush2.bf16.msra.mxu0 %v4147
    %7241 = vmatprep.subr.bf16.mxu0 %v4132
    %7242 = vmatpush2.bf16.msra.mxu0 %v4131
    %7243 = vmatprep.subr.bf16.mxu0 %v4116
    %7244 = vmatpush2.bf16.msra.mxu0 %v4115
    %7245 = vmatprep.subr.bf16.mxu0 %v4100
    %7246 = vmatpush2.bf16.msra.mxu0 %v4099
    %7247 = vmatprep.subr.bf16.mxu0 %v4084
    %7248 = vmatpush2.bf16.msra.mxu0 %v4083
    %7249 = vmatprep.mubr.bf16.mxu0 %v7093
    %7250 = vmatmul.mubr.bf16.gmra.mxu0 %v7092
    %v7251 = vpop.f32.mrf.mxu0
    %v7252 = vadd.f32 %v7211, %v7251
    %v7253 = vpop.f32.mrf.mxu0
    %v7254 = vadd.f32 %v7213, %v7253
    %v7255 = vpop.f32.mrf.mxu0
    %v7256 = vpop.f32.mrf.mxu0
    %7257 = vdwg.mxu0
    %7258 = vmatprep.subr.bf16.mxu0 %v3814
    %7259 = vmatpush1.bf16.msra.mxu0 %v3813
    %7260 = vmatprep.subr.bf16.mxu0 %v3798
    %7261 = vmatpush1.bf16.msra.mxu0 %v3797
    %7262 = vmatprep.subr.bf16.mxu0 %v3782
    %7263 = vmatpush1.bf16.msra.mxu0 %v3781
    %7264 = vmatprep.subr.bf16.mxu0 %v3766
    %7265 = vmatpush1.bf16.msra.mxu0 %v3765
    %7266 = vmatprep.subr.bf16.mxu0 %v3750
    %7267 = vmatpush1.bf16.msra.mxu0 %v3749
    %7268 = vmatprep.subr.bf16.mxu0 %v3734
    %7269 = vmatpush1.bf16.msra.mxu0 %v3733
    %7270 = vmatprep.subr.bf16.mxu0 %v3718
    %7271 = vmatpush1.bf16.msra.mxu0 %v3717
    %7272 = vmatprep.subr.bf16.mxu0 %v3702
    %7273 = vmatpush1.bf16.msra.mxu0 %v3701
    %7274 = vmatprep.subr.bf16.mxu0 %v3942
    %7275 = vmatpush2.bf16.msra.mxu0 %v3941
    %7276 = vmatprep.subr.bf16.mxu0 %v3926
    %7277 = vmatpush2.bf16.msra.mxu0 %v3925
    %7278 = vmatprep.subr.bf16.mxu0 %v3910
    %7279 = vmatpush2.bf16.msra.mxu0 %v3909
    %7280 = vmatprep.subr.bf16.mxu0 %v3894
    %7281 = vmatpush2.bf16.msra.mxu0 %v3893
    %7282 = vmatprep.subr.bf16.mxu0 %v3878
    %7283 = vmatpush2.bf16.msra.mxu0 %v3877
    %7284 = vmatprep.subr.bf16.mxu0 %v3862
    %7285 = vmatpush2.bf16.msra.mxu0 %v3861
    %7286 = vmatprep.subr.bf16.mxu0 %v3846
    %7287 = vmatpush2.bf16.msra.mxu0 %v3845
    %7288 = vmatprep.subr.bf16.mxu0 %v3830
    %7289 = vmatpush2.bf16.msra.mxu0 %v3829
    %7290 = vmatprep.mubr.bf16.mxu0 %v7091
    %7291 = vmatmul.mubr.bf16.gmra.mxu0 %v7090
    %v7292 = vpop.f32.mrf.mxu0
    %v7293 = vadd.f32 0.0, %v7292
    %v7294 = vpop.f32.mrf.mxu0
    %v7295 = vadd.f32 0.0, %v7294
    %v7296 = vpop.f32.mrf.mxu0
    %v7297 = vpop.f32.mrf.mxu0
    %7298 = vdwg.mxu0
    %7299 = vmatprep.subr.bf16.mxu0 %v4070
    %7300 = vmatpush1.bf16.msra.mxu0 %v4069
    %7301 = vmatprep.subr.bf16.mxu0 %v4054
    %7302 = vmatpush1.bf16.msra.mxu0 %v4053
    %7303 = vmatprep.subr.bf16.mxu0 %v4038
    %7304 = vmatpush1.bf16.msra.mxu0 %v4037
    %7305 = vmatprep.subr.bf16.mxu0 %v4022
    %7306 = vmatpush1.bf16.msra.mxu0 %v4021
    %7307 = vmatprep.subr.bf16.mxu0 %v4006
    %7308 = vmatpush1.bf16.msra.mxu0 %v4005
    %7309 = vmatprep.subr.bf16.mxu0 %v3990
    %7310 = vmatpush1.bf16.msra.mxu0 %v3989
    %7311 = vmatprep.subr.bf16.mxu0 %v3974
    %7312 = vmatpush1.bf16.msra.mxu0 %v3973
    %7313 = vmatprep.subr.bf16.mxu0 %v3958
    %7314 = vmatpush1.bf16.msra.mxu0 %v3957
    %7315 = vmatprep.subr.bf16.mxu0 %v4198
    %7316 = vmatpush2.bf16.msra.mxu0 %v4197
    %7317 = vmatprep.subr.bf16.mxu0 %v4182
    %7318 = vmatpush2.bf16.msra.mxu0 %v4181
    %7319 = vmatprep.subr.bf16.mxu0 %v4166
    %7320 = vmatpush2.bf16.msra.mxu0 %v4165
    %7321 = vmatprep.subr.bf16.mxu0 %v4150
    %7322 = vmatpush2.bf16.msra.mxu0 %v4149
    %7323 = vmatprep.subr.bf16.mxu0 %v4134
    %7324 = vmatpush2.bf16.msra.mxu0 %v4133
    %7325 = vmatprep.subr.bf16.mxu0 %v4118
    %7326 = vmatpush2.bf16.msra.mxu0 %v4117
    %7327 = vmatprep.subr.bf16.mxu0 %v4102
    %7328 = vmatpush2.bf16.msra.mxu0 %v4101
    %7329 = vmatprep.subr.bf16.mxu0 %v4086
    %7330 = vmatpush2.bf16.msra.mxu0 %v4085
    %7331 = vmatprep.mubr.bf16.mxu0 %v7093
    %7332 = vmatmul.mubr.bf16.gmra.mxu0 %v7092
    %v7333 = vpop.f32.mrf.mxu0
    %v7334 = vadd.f32 %v7293, %v7333
    %v7335 = vpop.f32.mrf.mxu0
    %v7336 = vadd.f32 %v7295, %v7335
    %v7337 = vpop.f32.mrf.mxu0
    %v7338 = vpop.f32.mrf.mxu0
    %7339 = vdwg.mxu0
    %7340 = vmatprep.subr.bf16.mxu0 %v3816
    %7341 = vmatpush1.bf16.msra.mxu0 %v3815
    %7342 = vmatprep.subr.bf16.mxu0 %v3800
    %7343 = vmatpush1.bf16.msra.mxu0 %v3799
    %7344 = vmatprep.subr.bf16.mxu0 %v3784
    %7345 = vmatpush1.bf16.msra.mxu0 %v3783
    %7346 = vmatprep.subr.bf16.mxu0 %v3768
    %7347 = vmatpush1.bf16.msra.mxu0 %v3767
    %7348 = vmatprep.subr.bf16.mxu0 %v3752
    %7349 = vmatpush1.bf16.msra.mxu0 %v3751
    %7350 = vmatprep.subr.bf16.mxu0 %v3736
    %7351 = vmatpush1.bf16.msra.mxu0 %v3735
    %7352 = vmatprep.subr.bf16.mxu0 %v3720
    %7353 = vmatpush1.bf16.msra.mxu0 %v3719
    %7354 = vmatprep.subr.bf16.mxu0 %v3704
    %7355 = vmatpush1.bf16.msra.mxu0 %v3703
    %7356 = vmatprep.subr.bf16.mxu0 %v3944
    %7357 = vmatpush2.bf16.msra.mxu0 %v3943
    %7358 = vmatprep.subr.bf16.mxu0 %v3928
    %7359 = vmatpush2.bf16.msra.mxu0 %v3927
    %7360 = vmatprep.subr.bf16.mxu0 %v3912
    %7361 = vmatpush2.bf16.msra.mxu0 %v3911
    %7362 = vmatprep.subr.bf16.mxu0 %v3896
    %7363 = vmatpush2.bf16.msra.mxu0 %v3895
    %7364 = vmatprep.subr.bf16.mxu0 %v3880
    %7365 = vmatpush2.bf16.msra.mxu0 %v3879
    %7366 = vmatprep.subr.bf16.mxu0 %v3864
    %7367 = vmatpush2.bf16.msra.mxu0 %v3863
    %7368 = vmatprep.subr.bf16.mxu0 %v3848
    %7369 = vmatpush2.bf16.msra.mxu0 %v3847
    %7370 = vmatprep.subr.bf16.mxu0 %v3832
    %7371 = vmatpush2.bf16.msra.mxu0 %v3831
    %7372 = vmatprep.mubr.bf16.mxu0 %v7091
    %7373 = vmatmul.mubr.bf16.gmra.mxu0 %v7090
    %v7374 = vpop.f32.mrf.mxu0
    %v7375 = vadd.f32 0.0, %v7374
    %v7376 = vpop.f32.mrf.mxu0
    %v7377 = vadd.f32 0.0, %v7376
    %v7378 = vpop.f32.mrf.mxu0
    %v7379 = vpop.f32.mrf.mxu0
    %7380 = vdwg.mxu0
    %7381 = vmatprep.subr.bf16.mxu0 %v4072
    %7382 = vmatpush1.bf16.msra.mxu0 %v4071
    %7383 = vmatprep.subr.bf16.mxu0 %v4056
    %7384 = vmatpush1.bf16.msra.mxu0 %v4055
    %7385 = vmatprep.subr.bf16.mxu0 %v4040
    %7386 = vmatpush1.bf16.msra.mxu0 %v4039
    %7387 = vmatprep.subr.bf16.mxu0 %v4024
    %7388 = vmatpush1.bf16.msra.mxu0 %v4023
    %7389 = vmatprep.subr.bf16.mxu0 %v4008
    %7390 = vmatpush1.bf16.msra.mxu0 %v4007
    %7391 = vmatprep.subr.bf16.mxu0 %v3992
    %7392 = vmatpush1.bf16.msra.mxu0 %v3991
    %7393 = vmatprep.subr.bf16.mxu0 %v3976
    %7394 = vmatpush1.bf16.msra.mxu0 %v3975
    %7395 = vmatprep.subr.bf16.mxu0 %v3960
    %7396 = vmatpush1.bf16.msra.mxu0 %v3959
    %7397 = vmatprep.subr.bf16.mxu0 %v4200
    %7398 = vmatpush2.bf16.msra.mxu0 %v4199
    %7399 = vmatprep.subr.bf16.mxu0 %v4184
    %7400 = vmatpush2.bf16.msra.mxu0 %v4183
    %7401 = vmatprep.subr.bf16.mxu0 %v4168
    %7402 = vmatpush2.bf16.msra.mxu0 %v4167
    %7403 = vmatprep.subr.bf16.mxu0 %v4152
    %7404 = vmatpush2.bf16.msra.mxu0 %v4151
    %7405 = vmatprep.subr.bf16.mxu0 %v4136
    %7406 = vmatpush2.bf16.msra.mxu0 %v4135
    %7407 = vmatprep.subr.bf16.mxu0 %v4120
    %7408 = vmatpush2.bf16.msra.mxu0 %v4119
    %7409 = vmatprep.subr.bf16.mxu0 %v4104
    %7410 = vmatpush2.bf16.msra.mxu0 %v4103
    %7411 = vmatprep.subr.bf16.mxu0 %v4088
    %7412 = vmatpush2.bf16.msra.mxu0 %v4087
    %7413 = vmatprep.mubr.bf16.mxu0 %v7093
    %7414 = vmatmul.mubr.bf16.gmra.mxu0 %v7092
    %v7415 = vpop.f32.mrf.mxu0
    %v7416 = vadd.f32 %v7375, %v7415
    %v7417 = vpop.f32.mrf.mxu0
    %v7418 = vadd.f32 %v7377, %v7417
    %v7419 = vpop.f32.mrf.mxu0
    %v7420 = vpop.f32.mrf.mxu0
    %7421 = vdwg.mxu0
    %7422 = vmatprep.subr.bf16.mxu0 %v3818
    %7423 = vmatpush1.bf16.msra.mxu0 %v3817
    %7424 = vmatprep.subr.bf16.mxu0 %v3802
    %7425 = vmatpush1.bf16.msra.mxu0 %v3801
    %7426 = vmatprep.subr.bf16.mxu0 %v3786
    %7427 = vmatpush1.bf16.msra.mxu0 %v3785
    %7428 = vmatprep.subr.bf16.mxu0 %v3770
    %7429 = vmatpush1.bf16.msra.mxu0 %v3769
    %7430 = vmatprep.subr.bf16.mxu0 %v3754
    %7431 = vmatpush1.bf16.msra.mxu0 %v3753
    %7432 = vmatprep.subr.bf16.mxu0 %v3738
    %7433 = vmatpush1.bf16.msra.mxu0 %v3737
    %7434 = vmatprep.subr.bf16.mxu0 %v3722
    %7435 = vmatpush1.bf16.msra.mxu0 %v3721
    %7436 = vmatprep.subr.bf16.mxu0 %v3706
    %7437 = vmatpush1.bf16.msra.mxu0 %v3705
    %7438 = vmatprep.subr.bf16.mxu0 %v3946
    %7439 = vmatpush2.bf16.msra.mxu0 %v3945
    %7440 = vmatprep.subr.bf16.mxu0 %v3930
    %7441 = vmatpush2.bf16.msra.mxu0 %v3929
    %7442 = vmatprep.subr.bf16.mxu0 %v3914
    %7443 = vmatpush2.bf16.msra.mxu0 %v3913
    %7444 = vmatprep.subr.bf16.mxu0 %v3898
    %7445 = vmatpush2.bf16.msra.mxu0 %v3897
    %7446 = vmatprep.subr.bf16.mxu0 %v3882
    %7447 = vmatpush2.bf16.msra.mxu0 %v3881
    %7448 = vmatprep.subr.bf16.mxu0 %v3866
    %7449 = vmatpush2.bf16.msra.mxu0 %v3865
    %7450 = vmatprep.subr.bf16.mxu0 %v3850
    %7451 = vmatpush2.bf16.msra.mxu0 %v3849
    %7452 = vmatprep.subr.bf16.mxu0 %v3834
    %7453 = vmatpush2.bf16.msra.mxu0 %v3833
    %7454 = vmatprep.mubr.bf16.mxu0 %v7091
    %7455 = vmatmul.mubr.bf16.gmra.mxu0 %v7090
    %v7456 = vpop.f32.mrf.mxu0
    %v7457 = vadd.f32 0.0, %v7456
    %v7458 = vpop.f32.mrf.mxu0
    %v7459 = vadd.f32 0.0, %v7458
    %v7460 = vpop.f32.mrf.mxu0
    %v7461 = vpop.f32.mrf.mxu0
    %7462 = vdwg.mxu0
    %7463 = vmatprep.subr.bf16.mxu0 %v4074
    %7464 = vmatpush1.bf16.msra.mxu0 %v4073
    %7465 = vmatprep.subr.bf16.mxu0 %v4058
    %7466 = vmatpush1.bf16.msra.mxu0 %v4057
    %7467 = vmatprep.subr.bf16.mxu0 %v4042
    %7468 = vmatpush1.bf16.msra.mxu0 %v4041
    %7469 = vmatprep.subr.bf16.mxu0 %v4026
    %7470 = vmatpush1.bf16.msra.mxu0 %v4025
    %7471 = vmatprep.subr.bf16.mxu0 %v4010
    %7472 = vmatpush1.bf16.msra.mxu0 %v4009
    %7473 = vmatprep.subr.bf16.mxu0 %v3994
    %7474 = vmatpush1.bf16.msra.mxu0 %v3993
    %7475 = vmatprep.subr.bf16.mxu0 %v3978
    %7476 = vmatpush1.bf16.msra.mxu0 %v3977
    %7477 = vmatprep.subr.bf16.mxu0 %v3962
    %7478 = vmatpush1.bf16.msra.mxu0 %v3961
    %7479 = vmatprep.subr.bf16.mxu0 %v4202
    %7480 = vmatpush2.bf16.msra.mxu0 %v4201
    %7481 = vmatprep.subr.bf16.mxu0 %v4186
    %7482 = vmatpush2.bf16.msra.mxu0 %v4185
    %7483 = vmatprep.subr.bf16.mxu0 %v4170
    %7484 = vmatpush2.bf16.msra.mxu0 %v4169
    %7485 = vmatprep.subr.bf16.mxu0 %v4154
    %7486 = vmatpush2.bf16.msra.mxu0 %v4153
    %7487 = vmatprep.subr.bf16.mxu0 %v4138
    %7488 = vmatpush2.bf16.msra.mxu0 %v4137
    %7489 = vmatprep.subr.bf16.mxu0 %v4122
    %7490 = vmatpush2.bf16.msra.mxu0 %v4121
    %7491 = vmatprep.subr.bf16.mxu0 %v4106
    %7492 = vmatpush2.bf16.msra.mxu0 %v4105
    %7493 = vmatprep.subr.bf16.mxu0 %v4090
    %7494 = vmatpush2.bf16.msra.mxu0 %v4089
    %7495 = vmatprep.mubr.bf16.mxu0 %v7093
    %7496 = vmatmul.mubr.bf16.gmra.mxu0 %v7092
    %v7497 = vpop.f32.mrf.mxu0
    %v7498 = vadd.f32 %v7457, %v7497
    %v7499 = vpop.f32.mrf.mxu0
    %v7500 = vadd.f32 %v7459, %v7499
    %v7501 = vpop.f32.mrf.mxu0
    %v7502 = vpop.f32.mrf.mxu0
    %7503 = vdwg.mxu0
    %7504 = vmatprep.subr.bf16.mxu0 %v3820
    %7505 = vmatpush1.bf16.msra.mxu0 %v3819
    %7506 = vmatprep.subr.bf16.mxu0 %v3804
    %7507 = vmatpush1.bf16.msra.mxu0 %v3803
    %7508 = vmatprep.subr.bf16.mxu0 %v3788
    %7509 = vmatpush1.bf16.msra.mxu0 %v3787
    %7510 = vmatprep.subr.bf16.mxu0 %v3772
    %7511 = vmatpush1.bf16.msra.mxu0 %v3771
    %7512 = vmatprep.subr.bf16.mxu0 %v3756
    %7513 = vmatpush1.bf16.msra.mxu0 %v3755
    %7514 = vmatprep.subr.bf16.mxu0 %v3740
    %7515 = vmatpush1.bf16.msra.mxu0 %v3739
    %7516 = vmatprep.subr.bf16.mxu0 %v3724
    %7517 = vmatpush1.bf16.msra.mxu0 %v3723
    %7518 = vmatprep.subr.bf16.mxu0 %v3708
    %7519 = vmatpush1.bf16.msra.mxu0 %v3707
    %7520 = vmatprep.subr.bf16.mxu0 %v3948
    %7521 = vmatpush2.bf16.msra.mxu0 %v3947
    %7522 = vmatprep.subr.bf16.mxu0 %v3932
    %7523 = vmatpush2.bf16.msra.mxu0 %v3931
    %7524 = vmatprep.subr.bf16.mxu0 %v3916
    %7525 = vmatpush2.bf16.msra.mxu0 %v3915
    %7526 = vmatprep.subr.bf16.mxu0 %v3900
    %7527 = vmatpush2.bf16.msra.mxu0 %v3899
    %7528 = vmatprep.subr.bf16.mxu0 %v3884
    %7529 = vmatpush2.bf16.msra.mxu0 %v3883
    %7530 = vmatprep.subr.bf16.mxu0 %v3868
    %7531 = vmatpush2.bf16.msra.mxu0 %v3867
    %7532 = vmatprep.subr.bf16.mxu0 %v3852
    %7533 = vmatpush2.bf16.msra.mxu0 %v3851
    %7534 = vmatprep.subr.bf16.mxu0 %v3836
    %7535 = vmatpush2.bf16.msra.mxu0 %v3835
    %7536 = vmatprep.mubr.bf16.mxu0 %v7091
    %7537 = vmatmul.mubr.bf16.gmra.mxu0 %v7090
    %v7538 = vpop.f32.mrf.mxu0
    %v7539 = vadd.f32 0.0, %v7538
    %v7540 = vpop.f32.mrf.mxu0
    %v7541 = vadd.f32 0.0, %v7540
    %v7542 = vpop.f32.mrf.mxu0
    %v7543 = vpop.f32.mrf.mxu0
    %7544 = vdwg.mxu0
    %7545 = vmatprep.subr.bf16.mxu0 %v4076
    %7546 = vmatpush1.bf16.msra.mxu0 %v4075
    %7547 = vmatprep.subr.bf16.mxu0 %v4060
    %7548 = vmatpush1.bf16.msra.mxu0 %v4059
    %7549 = vmatprep.subr.bf16.mxu0 %v4044
    %7550 = vmatpush1.bf16.msra.mxu0 %v4043
    %7551 = vmatprep.subr.bf16.mxu0 %v4028
    %7552 = vmatpush1.bf16.msra.mxu0 %v4027
    %7553 = vmatprep.subr.bf16.mxu0 %v4012
    %7554 = vmatpush1.bf16.msra.mxu0 %v4011
    %7555 = vmatprep.subr.bf16.mxu0 %v3996
    %7556 = vmatpush1.bf16.msra.mxu0 %v3995
    %7557 = vmatprep.subr.bf16.mxu0 %v3980
    %7558 = vmatpush1.bf16.msra.mxu0 %v3979
    %7559 = vmatprep.subr.bf16.mxu0 %v3964
    %7560 = vmatpush1.bf16.msra.mxu0 %v3963
    %7561 = vmatprep.subr.bf16.mxu0 %v4204
    %7562 = vmatpush2.bf16.msra.mxu0 %v4203
    %7563 = vmatprep.subr.bf16.mxu0 %v4188
    %7564 = vmatpush2.bf16.msra.mxu0 %v4187
    %7565 = vmatprep.subr.bf16.mxu0 %v4172
    %7566 = vmatpush2.bf16.msra.mxu0 %v4171
    %7567 = vmatprep.subr.bf16.mxu0 %v4156
    %7568 = vmatpush2.bf16.msra.mxu0 %v4155
    %7569 = vmatprep.subr.bf16.mxu0 %v4140
    %7570 = vmatpush2.bf16.msra.mxu0 %v4139
    %7571 = vmatprep.subr.bf16.mxu0 %v4124
    %7572 = vmatpush2.bf16.msra.mxu0 %v4123
    %7573 = vmatprep.subr.bf16.mxu0 %v4108
    %7574 = vmatpush2.bf16.msra.mxu0 %v4107
    %7575 = vmatprep.subr.bf16.mxu0 %v4092
    %7576 = vmatpush2.bf16.msra.mxu0 %v4091
    %7577 = vmatprep.mubr.bf16.mxu0 %v7093
    %7578 = vmatmul.mubr.bf16.gmra.mxu0 %v7092
    %v7579 = vpop.f32.mrf.mxu0
    %v7580 = vadd.f32 %v7539, %v7579
    %v7581 = vpop.f32.mrf.mxu0
    %v7582 = vadd.f32 %v7541, %v7581
    %v7583 = vpop.f32.mrf.mxu0
    %v7584 = vpop.f32.mrf.mxu0
    %7585 = vdwg.mxu0
    %7586 = vmatprep.subr.bf16.mxu0 %v3822
    %7587 = vmatpush1.bf16.msra.mxu0 %v3821
    %7588 = vmatprep.subr.bf16.mxu0 %v3806
    %7589 = vmatpush1.bf16.msra.mxu0 %v3805
    %7590 = vmatprep.subr.bf16.mxu0 %v3790
    %7591 = vmatpush1.bf16.msra.mxu0 %v3789
    %7592 = vmatprep.subr.bf16.mxu0 %v3774
    %7593 = vmatpush1.bf16.msra.mxu0 %v3773
    %7594 = vmatprep.subr.bf16.mxu0 %v3758
    %7595 = vmatpush1.bf16.msra.mxu0 %v3757
    %7596 = vmatprep.subr.bf16.mxu0 %v3742
    %7597 = vmatpush1.bf16.msra.mxu0 %v3741
    %7598 = vmatprep.subr.bf16.mxu0 %v3726
    %7599 = vmatpush1.bf16.msra.mxu0 %v3725
    %7600 = vmatprep.subr.bf16.mxu0 %v3710
    %7601 = vmatpush1.bf16.msra.mxu0 %v3709
    %7602 = vmatprep.subr.bf16.mxu0 %v3950
    %7603 = vmatpush2.bf16.msra.mxu0 %v3949
    %7604 = vmatprep.subr.bf16.mxu0 %v3934
    %7605 = vmatpush2.bf16.msra.mxu0 %v3933
    %7606 = vmatprep.subr.bf16.mxu0 %v3918
    %7607 = vmatpush2.bf16.msra.mxu0 %v3917
    %7608 = vmatprep.subr.bf16.mxu0 %v3902
    %7609 = vmatpush2.bf16.msra.mxu0 %v3901
    %7610 = vmatprep.subr.bf16.mxu0 %v3886
    %7611 = vmatpush2.bf16.msra.mxu0 %v3885
    %7612 = vmatprep.subr.bf16.mxu0 %v3870
    %7613 = vmatpush2.bf16.msra.mxu0 %v3869
    %7614 = vmatprep.subr.bf16.mxu0 %v3854
    %7615 = vmatpush2.bf16.msra.mxu0 %v3853
    %7616 = vmatprep.subr.bf16.mxu0 %v3838
    %7617 = vmatpush2.bf16.msra.mxu0 %v3837
    %7618 = vmatprep.mubr.bf16.mxu0 %v7091
    %7619 = vmatmul.mubr.bf16.gmra.mxu0 %v7090
    %v7620 = vpop.f32.mrf.mxu0
    %v7621 = vadd.f32 0.0, %v7620
    %v7622 = vpop.f32.mrf.mxu0
    %v7623 = vadd.f32 0.0, %v7622
    %v7624 = vpop.f32.mrf.mxu0
    %v7625 = vpop.f32.mrf.mxu0
    %7626 = vdwg.mxu0
    %7627 = vmatprep.subr.bf16.mxu0 %v4078
    %7628 = vmatpush1.bf16.msra.mxu0 %v4077
    %7629 = vmatprep.subr.bf16.mxu0 %v4062
    %7630 = vmatpush1.bf16.msra.mxu0 %v4061
    %7631 = vmatprep.subr.bf16.mxu0 %v4046
    %7632 = vmatpush1.bf16.msra.mxu0 %v4045
    %7633 = vmatprep.subr.bf16.mxu0 %v4030
    %7634 = vmatpush1.bf16.msra.mxu0 %v4029
    %7635 = vmatprep.subr.bf16.mxu0 %v4014
    %7636 = vmatpush1.bf16.msra.mxu0 %v4013
    %7637 = vmatprep.subr.bf16.mxu0 %v3998
    %7638 = vmatpush1.bf16.msra.mxu0 %v3997
    %7639 = vmatprep.subr.bf16.mxu0 %v3982
    %7640 = vmatpush1.bf16.msra.mxu0 %v3981
    %7641 = vmatprep.subr.bf16.mxu0 %v3966
    %7642 = vmatpush1.bf16.msra.mxu0 %v3965
    %7643 = vmatprep.subr.bf16.mxu0 %v4206
    %7644 = vmatpush2.bf16.msra.mxu0 %v4205
    %7645 = vmatprep.subr.bf16.mxu0 %v4190
    %7646 = vmatpush2.bf16.msra.mxu0 %v4189
    %7647 = vmatprep.subr.bf16.mxu0 %v4174
    %7648 = vmatpush2.bf16.msra.mxu0 %v4173
    %7649 = vmatprep.subr.bf16.mxu0 %v4158
    %7650 = vmatpush2.bf16.msra.mxu0 %v4157
    %7651 = vmatprep.subr.bf16.mxu0 %v4142
    %7652 = vmatpush2.bf16.msra.mxu0 %v4141
    %7653 = vmatprep.subr.bf16.mxu0 %v4126
    %7654 = vmatpush2.bf16.msra.mxu0 %v4125
    %7655 = vmatprep.subr.bf16.mxu0 %v4110
    %7656 = vmatpush2.bf16.msra.mxu0 %v4109
    %7657 = vmatprep.subr.bf16.mxu0 %v4094
    %7658 = vmatpush2.bf16.msra.mxu0 %v4093
    %7659 = vmatprep.mubr.bf16.mxu0 %v7093
    %7660 = vmatmul.mubr.bf16.gmra.mxu0 %v7092
    %v7661 = vpop.f32.mrf.mxu0
    %v7662 = vadd.f32 %v7621, %v7661
    %v7663 = vpop.f32.mrf.mxu0
    %v7664 = vadd.f32 %v7623, %v7663
    %v7665 = vpop.f32.mrf.mxu0
    %v7666 = vpop.f32.mrf.mxu0
    %7667 = vdwg.mxu0
    %7668 = vmatprep.subr.bf16.mxu0 %v3824
    %7669 = vmatpush1.bf16.msra.mxu0 %v3823
    %7670 = vmatprep.subr.bf16.mxu0 %v3808
    %7671 = vmatpush1.bf16.msra.mxu0 %v3807
    %7672 = vmatprep.subr.bf16.mxu0 %v3792
    %7673 = vmatpush1.bf16.msra.mxu0 %v3791
    %7674 = vmatprep.subr.bf16.mxu0 %v3776
    %7675 = vmatpush1.bf16.msra.mxu0 %v3775
    %7676 = vmatprep.subr.bf16.mxu0 %v3760
    %7677 = vmatpush1.bf16.msra.mxu0 %v3759
    %7678 = vmatprep.subr.bf16.mxu0 %v3744
    %7679 = vmatpush1.bf16.msra.mxu0 %v3743
    %7680 = vmatprep.subr.bf16.mxu0 %v3728
    %7681 = vmatpush1.bf16.msra.mxu0 %v3727
    %7682 = vmatprep.subr.bf16.mxu0 %v3712
    %7683 = vmatpush1.bf16.msra.mxu0 %v3711
    %7684 = vmatprep.subr.bf16.mxu0 %v3952
    %7685 = vmatpush2.bf16.msra.mxu0 %v3951
    %7686 = vmatprep.subr.bf16.mxu0 %v3936
    %7687 = vmatpush2.bf16.msra.mxu0 %v3935
    %7688 = vmatprep.subr.bf16.mxu0 %v3920
    %7689 = vmatpush2.bf16.msra.mxu0 %v3919
    %7690 = vmatprep.subr.bf16.mxu0 %v3904
    %7691 = vmatpush2.bf16.msra.mxu0 %v3903
    %7692 = vmatprep.subr.bf16.mxu0 %v3888
    %7693 = vmatpush2.bf16.msra.mxu0 %v3887
    %7694 = vmatprep.subr.bf16.mxu0 %v3872
    %7695 = vmatpush2.bf16.msra.mxu0 %v3871
    %7696 = vmatprep.subr.bf16.mxu0 %v3856
    %7697 = vmatpush2.bf16.msra.mxu0 %v3855
    %7698 = vmatprep.subr.bf16.mxu0 %v3840
    %7699 = vmatpush2.bf16.msra.mxu0 %v3839
    %7700 = vmatprep.mubr.bf16.mxu0 %v7091
    %7701 = vmatmul.mubr.bf16.gmra.mxu0 %v7090
    %v7702 = vpop.f32.mrf.mxu0
    %v7703 = vadd.f32 0.0, %v7702
    %v7704 = vpop.f32.mrf.mxu0
    %v7705 = vadd.f32 0.0, %v7704
    %v7706 = vpop.f32.mrf.mxu0
    %v7707 = vpop.f32.mrf.mxu0
    %7708 = vdwg.mxu0
    %7709 = vmatprep.subr.bf16.mxu0 %v4080
    %7710 = vmatpush1.bf16.msra.mxu0 %v4079
    %7711 = vmatprep.subr.bf16.mxu0 %v4064
    %7712 = vmatpush1.bf16.msra.mxu0 %v4063
    %7713 = vmatprep.subr.bf16.mxu0 %v4048
    %7714 = vmatpush1.bf16.msra.mxu0 %v4047
    %7715 = vmatprep.subr.bf16.mxu0 %v4032
    %7716 = vmatpush1.bf16.msra.mxu0 %v4031
    %7717 = vmatprep.subr.bf16.mxu0 %v4016
    %7718 = vmatpush1.bf16.msra.mxu0 %v4015
    %7719 = vmatprep.subr.bf16.mxu0 %v4000
    %7720 = vmatpush1.bf16.msra.mxu0 %v3999
    %7721 = vmatprep.subr.bf16.mxu0 %v3984
    %7722 = vmatpush1.bf16.msra.mxu0 %v3983
    %7723 = vmatprep.subr.bf16.mxu0 %v3968
    %7724 = vmatpush1.bf16.msra.mxu0 %v3967
    %7725 = vmatprep.subr.bf16.mxu0 %v4208
    %7726 = vmatpush2.bf16.msra.mxu0 %v4207
    %7727 = vmatprep.subr.bf16.mxu0 %v4192
    %7728 = vmatpush2.bf16.msra.mxu0 %v4191
    %7729 = vmatprep.subr.bf16.mxu0 %v4176
    %7730 = vmatpush2.bf16.msra.mxu0 %v4175
    %7731 = vmatprep.subr.bf16.mxu0 %v4160
    %7732 = vmatpush2.bf16.msra.mxu0 %v4159
    %7733 = vmatprep.subr.bf16.mxu0 %v4144
    %7734 = vmatpush2.bf16.msra.mxu0 %v4143
    %7735 = vmatprep.subr.bf16.mxu0 %v4128
    %7736 = vmatpush2.bf16.msra.mxu0 %v4127
    %7737 = vmatprep.subr.bf16.mxu0 %v4112
    %7738 = vmatpush2.bf16.msra.mxu0 %v4111
    %7739 = vmatprep.subr.bf16.mxu0 %v4096
    %7740 = vmatpush2.bf16.msra.mxu0 %v4095
    %7741 = vmatprep.mubr.bf16.mxu0 %v7093
    %7742 = vmatmul.mubr.bf16.gmra.mxu0 %v7092
    %v7743 = vpop.f32.mrf.mxu0
    %v7744 = vadd.f32 %v7703, %v7743
    %v7745 = vpop.f32.mrf.mxu0
    %v7746 = vadd.f32 %v7705, %v7745
    %v7747 = vpop.f32.mrf.mxu0
    %v7748 = vpop.f32.mrf.mxu0
    %7749 = vdwg.mxu0
    %v7750 = vadd.f32 %v7074, %v7170
    %v7751 = vadd.f32 %v7075, %v7172
    %v7752 = vadd.f32 %v7076, %v7252
    %v7753 = vadd.f32 %v7077, %v7254
    %v7754 = vadd.f32 %v7078, %v7334
    %v7755 = vadd.f32 %v7079, %v7336
    %v7756 = vadd.f32 %v7080, %v7416
    %v7757 = vadd.f32 %v7081, %v7418
    %v7758 = vadd.f32 %v7082, %v7498
    %v7759 = vadd.f32 %v7083, %v7500
    %v7760 = vadd.f32 %v7084, %v7580
    %v7761 = vadd.f32 %v7085, %v7582
    %v7762 = vadd.f32 %v7086, %v7662
    %v7763 = vadd.f32 %v7087, %v7664
    %v7764 = vadd.f32 %v7088, %v7744
    %v7765 = vadd.f32 %v7089, %v7746
    %v7766 = vxor.u32 %v7750, 2147483648
    %v7767 = vxor.u32 %v7751, 2147483648
    %v7768 = vxor.u32 %v7752, 2147483648
    %v7769 = vxor.u32 %v7753, 2147483648
    %v7770 = vmul.f32 %v7766, 1.442695
    %v7771 = vpow.pop %v7770
    %v7772 = vmul.f32 %v7767, 1.442695
    %v7773 = vpow.pop %v7772
    %v7774 = vmul.f32 %v7768, 1.442695
    %v7775 = vpow.pop %v7774
    %v7776 = vmul.f32 %v7769, 1.442695
    %v7777 = vpow.pop %v7776
    %v7778 = vadd.f32 %v7771, 1.0
    %v7779 = vadd.f32 %v7773, 1.0
    %v7780 = vadd.f32 %v7775, 1.0
    %v7781 = vadd.f32 %v7777, 1.0
    %v7782 = vrcp.pop %v7778
    %v7783 = vmul.f32 1.0, %v7782
    %v7784 = vrcp.pop %v7779
    %v7785 = vmul.f32 1.0, %v7784
    %v7786 = vrcp.pop %v7780
    %v7787 = vmul.f32 1.0, %v7786
    %v7788 = vrcp.pop %v7781
    %v7789 = vmul.f32 1.0, %v7788
    %v7790 = vxor.u32 %v7754, 2147483648
    %v7791 = vxor.u32 %v7755, 2147483648
    %v7792 = vxor.u32 %v7756, 2147483648
    %v7793 = vxor.u32 %v7757, 2147483648
    %v7794 = vmul.f32 %v7790, 1.442695
    %v7795 = vpow.pop %v7794
    %v7796 = vmul.f32 %v7791, 1.442695
    %v7797 = vpow.pop %v7796
    %v7798 = vmul.f32 %v7792, 1.442695
    %v7799 = vpow.pop %v7798
    %v7800 = vmul.f32 %v7793, 1.442695
    %v7801 = vpow.pop %v7800
    %v7802 = vadd.f32 %v7795, 1.0
    %v7803 = vadd.f32 %v7797, 1.0
    %v7804 = vadd.f32 %v7799, 1.0
    %v7805 = vadd.f32 %v7801, 1.0
    %v7806 = vrcp.pop %v7802
    %v7807 = vmul.f32 1.0, %v7806
    %v7808 = vrcp.pop %v7803
    %v7809 = vmul.f32 1.0, %v7808
    %v7810 = vrcp.pop %v7804
    %v7811 = vmul.f32 1.0, %v7810
    %v7812 = vrcp.pop %v7805
    %v7813 = vmul.f32 1.0, %v7812
    %v7814 = vtanh.pop %v7758
    %v7815 = vtanh.pop %v7759
    %v7816 = vtanh.pop %v7760
    %v7817 = vtanh.pop %v7761
    %v7818 = vxor.u32 %v7762, 2147483648
    %v7819 = vxor.u32 %v7763, 2147483648
    %v7820 = vxor.u32 %v7764, 2147483648
    %v7821 = vxor.u32 %v7765, 2147483648
    %v7822 = vmul.f32 %v7818, 1.442695
    %v7823 = vpow.pop %v7822
    %v7824 = vmul.f32 %v7819, 1.442695
    %v7825 = vpow.pop %v7824
    %v7826 = vmul.f32 %v7820, 1.442695
    %v7827 = vpow.pop %v7826
    %v7828 = vmul.f32 %v7821, 1.442695
    %v7829 = vpow.pop %v7828
    %v7830 = vadd.f32 %v7823, 1.0
    %v7831 = vadd.f32 %v7825, 1.0
    %v7832 = vadd.f32 %v7827, 1.0
    %v7833 = vadd.f32 %v7829, 1.0
    %v7834 = vrcp.pop %v7830
    %v7835 = vmul.f32 1.0, %v7834
    %v7836 = vrcp.pop %v7831
    %v7837 = vmul.f32 1.0, %v7836
    %v7838 = vrcp.pop %v7832
    %v7839 = vmul.f32 1.0, %v7838
    %v7840 = vrcp.pop %v7833
    %v7841 = vmul.f32 1.0, %v7840
    %v7842 = vmul.f32 %v7807, %v7059
    %v7843 = vmul.f32 %v7809, %v7060
    %v7844 = vmul.f32 %v7811, %v7061
    %v7845 = vmul.f32 %v7813, %v7062
    %v7846 = vmul.f32 %v7783, %v7814
    %v7847 = vmul.f32 %v7785, %v7815
    %v7848 = vmul.f32 %v7787, %v7816
    %v7849 = vmul.f32 %v7789, %v7817
    %v7850 = vadd.f32 %v7842, %v7846
    %v7851 = vadd.f32 %v7843, %v7847
    %v7852 = vadd.f32 %v7844, %v7848
    %v7853 = vadd.f32 %v7845, %v7849
    %v7854 = vtanh.pop %v7850
    %v7855 = vtanh.pop %v7851
    %v7856 = vtanh.pop %v7852
    %v7857 = vtanh.pop %v7853
    %v7858 = vmul.f32 %v7835, %v7854
    %v7859 = vmul.f32 %v7837, %v7855
    %v7860 = vmul.f32 %v7839, %v7856
    %v7861 = vmul.f32 %v7841, %v7857
    %s7862 = smul.u32 4, 16
    %s7863 = smul.addr %s7862, 8
    %s7864 = scalar_lea.vmem [#allocation2], %s7863
    %v7865 = vld [vmem:[%s7864] sm:$0xff]
    %v7866 = vld [vmem:[%s7864 + $0x8] sm:$0xff]
    %v7867 = vld [vmem:[%s7864 + $0x10] sm:$0xff]
    %v7868 = vld [vmem:[%s7864 + $0x18] sm:$0xff]
    %v7869 = vld [vmem:[%s7864 + $0x20] sm:$0xff]
    %v7870 = vld [vmem:[%s7864 + $0x28] sm:$0xff]
    %v7871 = vld [vmem:[%s7864 + $0x30] sm:$0xff]
    %v7872 = vld [vmem:[%s7864 + $0x38] sm:$0xff]
    %v7873 = vld [vmem:[%s7864 + $0x40] sm:$0xff]
    %v7874 = vld [vmem:[%s7864 + $0x48] sm:$0xff]
    %v7875 = vld [vmem:[%s7864 + $0x50] sm:$0xff]
    %v7876 = vld [vmem:[%s7864 + $0x58] sm:$0xff]
    %v7877 = vld [vmem:[%s7864 + $0x60] sm:$0xff]
    %v7878 = vld [vmem:[%s7864 + $0x68] sm:$0xff]
    %v7879 = vld [vmem:[%s7864 + $0x70] sm:$0xff]
    %v7880 = vld [vmem:[%s7864 + $0x78] sm:$0xff]
    %v7881 = vpack.c.bf16 %v7858, %v7858
    %v7882 = vpack.c.bf16 %v7859, %v7859
    %v7883 = vpack.c.bf16 %v7860, %v7860
    %v7884 = vpack.c.bf16 %v7861, %v7861
    %7885 = vmatprep.subr.bf16.mxu0 %v3810
    %7886 = vmatpush1.bf16.msra.mxu0 %v3809
    %7887 = vmatprep.subr.bf16.mxu0 %v3794
    %7888 = vmatpush1.bf16.msra.mxu0 %v3793
    %7889 = vmatprep.subr.bf16.mxu0 %v3778
    %7890 = vmatpush1.bf16.msra.mxu0 %v3777
    %7891 = vmatprep.subr.bf16.mxu0 %v3762
    %7892 = vmatpush1.bf16.msra.mxu0 %v3761
    %7893 = vmatprep.subr.bf16.mxu0 %v3746
    %7894 = vmatpush1.bf16.msra.mxu0 %v3745
    %7895 = vmatprep.subr.bf16.mxu0 %v3730
    %7896 = vmatpush1.bf16.msra.mxu0 %v3729
    %7897 = vmatprep.subr.bf16.mxu0 %v3714
    %7898 = vmatpush1.bf16.msra.mxu0 %v3713
    %7899 = vmatprep.subr.bf16.mxu0 %v3698
    %7900 = vmatpush1.bf16.msra.mxu0 %v3697
    %7901 = vmatprep.subr.bf16.mxu0 %v3938
    %7902 = vmatpush2.bf16.msra.mxu0 %v3937
    %7903 = vmatprep.subr.bf16.mxu0 %v3922
    %7904 = vmatpush2.bf16.msra.mxu0 %v3921
    %7905 = vmatprep.subr.bf16.mxu0 %v3906
    %7906 = vmatpush2.bf16.msra.mxu0 %v3905
    %7907 = vmatprep.subr.bf16.mxu0 %v3890
    %7908 = vmatpush2.bf16.msra.mxu0 %v3889
    %7909 = vmatprep.subr.bf16.mxu0 %v3874
    %7910 = vmatpush2.bf16.msra.mxu0 %v3873
    %7911 = vmatprep.subr.bf16.mxu0 %v3858
    %7912 = vmatpush2.bf16.msra.mxu0 %v3857
    %7913 = vmatprep.subr.bf16.mxu0 %v3842
    %7914 = vmatpush2.bf16.msra.mxu0 %v3841
    %7915 = vmatprep.subr.bf16.mxu0 %v3826
    %7916 = vmatpush2.bf16.msra.mxu0 %v3825
    %7917 = vmatprep.mubr.bf16.mxu0 %v7882
    %7918 = vmatmul.mubr.bf16.gmra.mxu0 %v7881
    %v7919 = vpop.f32.mrf.mxu0
    %v7920 = vadd.f32 0.0, %v7919
    %v7921 = vpop.f32.mrf.mxu0
    %v7922 = vadd.f32 0.0, %v7921
    %v7923 = vpop.f32.mrf.mxu0
    %v7924 = vpop.f32.mrf.mxu0
    %7925 = vdwg.mxu0
    %7926 = vmatprep.subr.bf16.mxu0 %v4066
    %7927 = vmatpush1.bf16.msra.mxu0 %v4065
    %7928 = vmatprep.subr.bf16.mxu0 %v4050
    %7929 = vmatpush1.bf16.msra.mxu0 %v4049
    %7930 = vmatprep.subr.bf16.mxu0 %v4034
    %7931 = vmatpush1.bf16.msra.mxu0 %v4033
    %7932 = vmatprep.subr.bf16.mxu0 %v4018
    %7933 = vmatpush1.bf16.msra.mxu0 %v4017
    %7934 = vmatprep.subr.bf16.mxu0 %v4002
    %7935 = vmatpush1.bf16.msra.mxu0 %v4001
    %7936 = vmatprep.subr.bf16.mxu0 %v3986
    %7937 = vmatpush1.bf16.msra.mxu0 %v3985
    %7938 = vmatprep.subr.bf16.mxu0 %v3970
    %7939 = vmatpush1.bf16.msra.mxu0 %v3969
    %7940 = vmatprep.subr.bf16.mxu0 %v3954
    %7941 = vmatpush1.bf16.msra.mxu0 %v3953
    %7942 = vmatprep.subr.bf16.mxu0 %v4194
    %7943 = vmatpush2.bf16.msra.mxu0 %v4193
    %7944 = vmatprep.subr.bf16.mxu0 %v4178
    %7945 = vmatpush2.bf16.msra.mxu0 %v4177
    %7946 = vmatprep.subr.bf16.mxu0 %v4162
    %7947 = vmatpush2.bf16.msra.mxu0 %v4161
    %7948 = vmatprep.subr.bf16.mxu0 %v4146
    %7949 = vmatpush2.bf16.msra.mxu0 %v4145
    %7950 = vmatprep.subr.bf16.mxu0 %v4130
    %7951 = vmatpush2.bf16.msra.mxu0 %v4129
    %7952 = vmatprep.subr.bf16.mxu0 %v4114
    %7953 = vmatpush2.bf16.msra.mxu0 %v4113
    %7954 = vmatprep.subr.bf16.mxu0 %v4098
    %7955 = vmatpush2.bf16.msra.mxu0 %v4097
    %7956 = vmatprep.subr.bf16.mxu0 %v4082
    %7957 = vmatpush2.bf16.msra.mxu0 %v4081
    %7958 = vmatprep.mubr.bf16.mxu0 %v7884
    %7959 = vmatmul.mubr.bf16.gmra.mxu0 %v7883
    %v7960 = vpop.f32.mrf.mxu0
    %v7961 = vadd.f32 %v7920, %v7960
    %v7962 = vpop.f32.mrf.mxu0
    %v7963 = vadd.f32 %v7922, %v7962
    %v7964 = vpop.f32.mrf.mxu0
    %v7965 = vpop.f32.mrf.mxu0
    %7966 = vdwg.mxu0
    %7967 = vmatprep.subr.bf16.mxu0 %v3812
    %7968 = vmatpush1.bf16.msra.mxu0 %v3811
    %7969 = vmatprep.subr.bf16.mxu0 %v3796
    %7970 = vmatpush1.bf16.msra.mxu0 %v3795
    %7971 = vmatprep.subr.bf16.mxu0 %v3780
    %7972 = vmatpush1.bf16.msra.mxu0 %v3779
    %7973 = vmatprep.subr.bf16.mxu0 %v3764
    %7974 = vmatpush1.bf16.msra.mxu0 %v3763
    %7975 = vmatprep.subr.bf16.mxu0 %v3748
    %7976 = vmatpush1.bf16.msra.mxu0 %v3747
    %7977 = vmatprep.subr.bf16.mxu0 %v3732
    %7978 = vmatpush1.bf16.msra.mxu0 %v3731
    %7979 = vmatprep.subr.bf16.mxu0 %v3716
    %7980 = vmatpush1.bf16.msra.mxu0 %v3715
    %7981 = vmatprep.subr.bf16.mxu0 %v3700
    %7982 = vmatpush1.bf16.msra.mxu0 %v3699
    %7983 = vmatprep.subr.bf16.mxu0 %v3940
    %7984 = vmatpush2.bf16.msra.mxu0 %v3939
    %7985 = vmatprep.subr.bf16.mxu0 %v3924
    %7986 = vmatpush2.bf16.msra.mxu0 %v3923
    %7987 = vmatprep.subr.bf16.mxu0 %v3908
    %7988 = vmatpush2.bf16.msra.mxu0 %v3907
    %7989 = vmatprep.subr.bf16.mxu0 %v3892
    %7990 = vmatpush2.bf16.msra.mxu0 %v3891
    %7991 = vmatprep.subr.bf16.mxu0 %v3876
    %7992 = vmatpush2.bf16.msra.mxu0 %v3875
    %7993 = vmatprep.subr.bf16.mxu0 %v3860
    %7994 = vmatpush2.bf16.msra.mxu0 %v3859
    %7995 = vmatprep.subr.bf16.mxu0 %v3844
    %7996 = vmatpush2.bf16.msra.mxu0 %v3843
    %7997 = vmatprep.subr.bf16.mxu0 %v3828
    %7998 = vmatpush2.bf16.msra.mxu0 %v3827
    %7999 = vmatprep.mubr.bf16.mxu0 %v7882
    %8000 = vmatmul.mubr.bf16.gmra.mxu0 %v7881
    %v8001 = vpop.f32.mrf.mxu0
    %v8002 = vadd.f32 0.0, %v8001
    %v8003 = vpop.f32.mrf.mxu0
    %v8004 = vadd.f32 0.0, %v8003
    %v8005 = vpop.f32.mrf.mxu0
    %v8006 = vpop.f32.mrf.mxu0
    %8007 = vdwg.mxu0
    %8008 = vmatprep.subr.bf16.mxu0 %v4068
    %8009 = vmatpush1.bf16.msra.mxu0 %v4067
    %8010 = vmatprep.subr.bf16.mxu0 %v4052
    %8011 = vmatpush1.bf16.msra.mxu0 %v4051
    %8012 = vmatprep.subr.bf16.mxu0 %v4036
    %8013 = vmatpush1.bf16.msra.mxu0 %v4035
    %8014 = vmatprep.subr.bf16.mxu0 %v4020
    %8015 = vmatpush1.bf16.msra.mxu0 %v4019
    %8016 = vmatprep.subr.bf16.mxu0 %v4004
    %8017 = vmatpush1.bf16.msra.mxu0 %v4003
    %8018 = vmatprep.subr.bf16.mxu0 %v3988
    %8019 = vmatpush1.bf16.msra.mxu0 %v3987
    %8020 = vmatprep.subr.bf16.mxu0 %v3972
    %8021 = vmatpush1.bf16.msra.mxu0 %v3971
    %8022 = vmatprep.subr.bf16.mxu0 %v3956
    %8023 = vmatpush1.bf16.msra.mxu0 %v3955
    %8024 = vmatprep.subr.bf16.mxu0 %v4196
    %8025 = vmatpush2.bf16.msra.mxu0 %v4195
    %8026 = vmatprep.subr.bf16.mxu0 %v4180
    %8027 = vmatpush2.bf16.msra.mxu0 %v4179
    %8028 = vmatprep.subr.bf16.mxu0 %v4164
    %8029 = vmatpush2.bf16.msra.mxu0 %v4163
    %8030 = vmatprep.subr.bf16.mxu0 %v4148
    %8031 = vmatpush2.bf16.msra.mxu0 %v4147
    %8032 = vmatprep.subr.bf16.mxu0 %v4132
    %8033 = vmatpush2.bf16.msra.mxu0 %v4131
    %8034 = vmatprep.subr.bf16.mxu0 %v4116
    %8035 = vmatpush2.bf16.msra.mxu0 %v4115
    %8036 = vmatprep.subr.bf16.mxu0 %v4100
    %8037 = vmatpush2.bf16.msra.mxu0 %v4099
    %8038 = vmatprep.subr.bf16.mxu0 %v4084
    %8039 = vmatpush2.bf16.msra.mxu0 %v4083
    %8040 = vmatprep.mubr.bf16.mxu0 %v7884
    %8041 = vmatmul.mubr.bf16.gmra.mxu0 %v7883
    %v8042 = vpop.f32.mrf.mxu0
    %v8043 = vadd.f32 %v8002, %v8042
    %v8044 = vpop.f32.mrf.mxu0
    %v8045 = vadd.f32 %v8004, %v8044
    %v8046 = vpop.f32.mrf.mxu0
    %v8047 = vpop.f32.mrf.mxu0
    %8048 = vdwg.mxu0
    %8049 = vmatprep.subr.bf16.mxu0 %v3814
    %8050 = vmatpush1.bf16.msra.mxu0 %v3813
    %8051 = vmatprep.subr.bf16.mxu0 %v3798
    %8052 = vmatpush1.bf16.msra.mxu0 %v3797
    %8053 = vmatprep.subr.bf16.mxu0 %v3782
    %8054 = vmatpush1.bf16.msra.mxu0 %v3781
    %8055 = vmatprep.subr.bf16.mxu0 %v3766
    %8056 = vmatpush1.bf16.msra.mxu0 %v3765
    %8057 = vmatprep.subr.bf16.mxu0 %v3750
    %8058 = vmatpush1.bf16.msra.mxu0 %v3749
    %8059 = vmatprep.subr.bf16.mxu0 %v3734
    %8060 = vmatpush1.bf16.msra.mxu0 %v3733
    %8061 = vmatprep.subr.bf16.mxu0 %v3718
    %8062 = vmatpush1.bf16.msra.mxu0 %v3717
    %8063 = vmatprep.subr.bf16.mxu0 %v3702
    %8064 = vmatpush1.bf16.msra.mxu0 %v3701
    %8065 = vmatprep.subr.bf16.mxu0 %v3942
    %8066 = vmatpush2.bf16.msra.mxu0 %v3941
    %8067 = vmatprep.subr.bf16.mxu0 %v3926
    %8068 = vmatpush2.bf16.msra.mxu0 %v3925
    %8069 = vmatprep.subr.bf16.mxu0 %v3910
    %8070 = vmatpush2.bf16.msra.mxu0 %v3909
    %8071 = vmatprep.subr.bf16.mxu0 %v3894
    %8072 = vmatpush2.bf16.msra.mxu0 %v3893
    %8073 = vmatprep.subr.bf16.mxu0 %v3878
    %8074 = vmatpush2.bf16.msra.mxu0 %v3877
    %8075 = vmatprep.subr.bf16.mxu0 %v3862
    %8076 = vmatpush2.bf16.msra.mxu0 %v3861
    %8077 = vmatprep.subr.bf16.mxu0 %v3846
    %8078 = vmatpush2.bf16.msra.mxu0 %v3845
    %8079 = vmatprep.subr.bf16.mxu0 %v3830
    %8080 = vmatpush2.bf16.msra.mxu0 %v3829
    %8081 = vmatprep.mubr.bf16.mxu0 %v7882
    %8082 = vmatmul.mubr.bf16.gmra.mxu0 %v7881
    %v8083 = vpop.f32.mrf.mxu0
    %v8084 = vadd.f32 0.0, %v8083
    %v8085 = vpop.f32.mrf.mxu0
    %v8086 = vadd.f32 0.0, %v8085
    %v8087 = vpop.f32.mrf.mxu0
    %v8088 = vpop.f32.mrf.mxu0
    %8089 = vdwg.mxu0
    %8090 = vmatprep.subr.bf16.mxu0 %v4070
    %8091 = vmatpush1.bf16.msra.mxu0 %v4069
    %8092 = vmatprep.subr.bf16.mxu0 %v4054
    %8093 = vmatpush1.bf16.msra.mxu0 %v4053
    %8094 = vmatprep.subr.bf16.mxu0 %v4038
    %8095 = vmatpush1.bf16.msra.mxu0 %v4037
    %8096 = vmatprep.subr.bf16.mxu0 %v4022
    %8097 = vmatpush1.bf16.msra.mxu0 %v4021
    %8098 = vmatprep.subr.bf16.mxu0 %v4006
    %8099 = vmatpush1.bf16.msra.mxu0 %v4005
    %8100 = vmatprep.subr.bf16.mxu0 %v3990
    %8101 = vmatpush1.bf16.msra.mxu0 %v3989
    %8102 = vmatprep.subr.bf16.mxu0 %v3974
    %8103 = vmatpush1.bf16.msra.mxu0 %v3973
    %8104 = vmatprep.subr.bf16.mxu0 %v3958
    %8105 = vmatpush1.bf16.msra.mxu0 %v3957
    %8106 = vmatprep.subr.bf16.mxu0 %v4198
    %8107 = vmatpush2.bf16.msra.mxu0 %v4197
    %8108 = vmatprep.subr.bf16.mxu0 %v4182
    %8109 = vmatpush2.bf16.msra.mxu0 %v4181
    %8110 = vmatprep.subr.bf16.mxu0 %v4166
    %8111 = vmatpush2.bf16.msra.mxu0 %v4165
    %8112 = vmatprep.subr.bf16.mxu0 %v4150
    %8113 = vmatpush2.bf16.msra.mxu0 %v4149
    %8114 = vmatprep.subr.bf16.mxu0 %v4134
    %8115 = vmatpush2.bf16.msra.mxu0 %v4133
    %8116 = vmatprep.subr.bf16.mxu0 %v4118
    %8117 = vmatpush2.bf16.msra.mxu0 %v4117
    %8118 = vmatprep.subr.bf16.mxu0 %v4102
    %8119 = vmatpush2.bf16.msra.mxu0 %v4101
    %8120 = vmatprep.subr.bf16.mxu0 %v4086
    %8121 = vmatpush2.bf16.msra.mxu0 %v4085
    %8122 = vmatprep.mubr.bf16.mxu0 %v7884
    %8123 = vmatmul.mubr.bf16.gmra.mxu0 %v7883
    %v8124 = vpop.f32.mrf.mxu0
    %v8125 = vadd.f32 %v8084, %v8124
    %v8126 = vpop.f32.mrf.mxu0
    %v8127 = vadd.f32 %v8086, %v8126
    %v8128 = vpop.f32.mrf.mxu0
    %v8129 = vpop.f32.mrf.mxu0
    %8130 = vdwg.mxu0
    %8131 = vmatprep.subr.bf16.mxu0 %v3816
    %8132 = vmatpush1.bf16.msra.mxu0 %v3815
    %8133 = vmatprep.subr.bf16.mxu0 %v3800
    %8134 = vmatpush1.bf16.msra.mxu0 %v3799
    %8135 = vmatprep.subr.bf16.mxu0 %v3784
    %8136 = vmatpush1.bf16.msra.mxu0 %v3783
    %8137 = vmatprep.subr.bf16.mxu0 %v3768
    %8138 = vmatpush1.bf16.msra.mxu0 %v3767
    %8139 = vmatprep.subr.bf16.mxu0 %v3752
    %8140 = vmatpush1.bf16.msra.mxu0 %v3751
    %8141 = vmatprep.subr.bf16.mxu0 %v3736
    %8142 = vmatpush1.bf16.msra.mxu0 %v3735
    %8143 = vmatprep.subr.bf16.mxu0 %v3720
    %8144 = vmatpush1.bf16.msra.mxu0 %v3719
    %8145 = vmatprep.subr.bf16.mxu0 %v3704
    %8146 = vmatpush1.bf16.msra.mxu0 %v3703
    %8147 = vmatprep.subr.bf16.mxu0 %v3944
    %8148 = vmatpush2.bf16.msra.mxu0 %v3943
    %8149 = vmatprep.subr.bf16.mxu0 %v3928
    %8150 = vmatpush2.bf16.msra.mxu0 %v3927
    %8151 = vmatprep.subr.bf16.mxu0 %v3912
    %8152 = vmatpush2.bf16.msra.mxu0 %v3911
    %8153 = vmatprep.subr.bf16.mxu0 %v3896
    %8154 = vmatpush2.bf16.msra.mxu0 %v3895
    %8155 = vmatprep.subr.bf16.mxu0 %v3880
    %8156 = vmatpush2.bf16.msra.mxu0 %v3879
    %8157 = vmatprep.subr.bf16.mxu0 %v3864
    %8158 = vmatpush2.bf16.msra.mxu0 %v3863
    %8159 = vmatprep.subr.bf16.mxu0 %v3848
    %8160 = vmatpush2.bf16.msra.mxu0 %v3847
    %8161 = vmatprep.subr.bf16.mxu0 %v3832
    %8162 = vmatpush2.bf16.msra.mxu0 %v3831
    %8163 = vmatprep.mubr.bf16.mxu0 %v7882
    %8164 = vmatmul.mubr.bf16.gmra.mxu0 %v7881
    %v8165 = vpop.f32.mrf.mxu0
    %v8166 = vadd.f32 0.0, %v8165
    %v8167 = vpop.f32.mrf.mxu0
    %v8168 = vadd.f32 0.0, %v8167
    %v8169 = vpop.f32.mrf.mxu0
    %v8170 = vpop.f32.mrf.mxu0
    %8171 = vdwg.mxu0
    %8172 = vmatprep.subr.bf16.mxu0 %v4072
    %8173 = vmatpush1.bf16.msra.mxu0 %v4071
    %8174 = vmatprep.subr.bf16.mxu0 %v4056
    %8175 = vmatpush1.bf16.msra.mxu0 %v4055
    %8176 = vmatprep.subr.bf16.mxu0 %v4040
    %8177 = vmatpush1.bf16.msra.mxu0 %v4039
    %8178 = vmatprep.subr.bf16.mxu0 %v4024
    %8179 = vmatpush1.bf16.msra.mxu0 %v4023
    %8180 = vmatprep.subr.bf16.mxu0 %v4008
    %8181 = vmatpush1.bf16.msra.mxu0 %v4007
    %8182 = vmatprep.subr.bf16.mxu0 %v3992
    %8183 = vmatpush1.bf16.msra.mxu0 %v3991
    %8184 = vmatprep.subr.bf16.mxu0 %v3976
    %8185 = vmatpush1.bf16.msra.mxu0 %v3975
    %8186 = vmatprep.subr.bf16.mxu0 %v3960
    %8187 = vmatpush1.bf16.msra.mxu0 %v3959
    %8188 = vmatprep.subr.bf16.mxu0 %v4200
    %8189 = vmatpush2.bf16.msra.mxu0 %v4199
    %8190 = vmatprep.subr.bf16.mxu0 %v4184
    %8191 = vmatpush2.bf16.msra.mxu0 %v4183
    %8192 = vmatprep.subr.bf16.mxu0 %v4168
    %8193 = vmatpush2.bf16.msra.mxu0 %v4167
    %8194 = vmatprep.subr.bf16.mxu0 %v4152
    %8195 = vmatpush2.bf16.msra.mxu0 %v4151
    %8196 = vmatprep.subr.bf16.mxu0 %v4136
    %8197 = vmatpush2.bf16.msra.mxu0 %v4135
    %8198 = vmatprep.subr.bf16.mxu0 %v4120
    %8199 = vmatpush2.bf16.msra.mxu0 %v4119
    %8200 = vmatprep.subr.bf16.mxu0 %v4104
    %8201 = vmatpush2.bf16.msra.mxu0 %v4103
    %8202 = vmatprep.subr.bf16.mxu0 %v4088
    %8203 = vmatpush2.bf16.msra.mxu0 %v4087
    %8204 = vmatprep.mubr.bf16.mxu0 %v7884
    %8205 = vmatmul.mubr.bf16.gmra.mxu0 %v7883
    %v8206 = vpop.f32.mrf.mxu0
    %v8207 = vadd.f32 %v8166, %v8206
    %v8208 = vpop.f32.mrf.mxu0
    %v8209 = vadd.f32 %v8168, %v8208
    %v8210 = vpop.f32.mrf.mxu0
    %v8211 = vpop.f32.mrf.mxu0
    %8212 = vdwg.mxu0
    %8213 = vmatprep.subr.bf16.mxu0 %v3818
    %8214 = vmatpush1.bf16.msra.mxu0 %v3817
    %8215 = vmatprep.subr.bf16.mxu0 %v3802
    %8216 = vmatpush1.bf16.msra.mxu0 %v3801
    %8217 = vmatprep.subr.bf16.mxu0 %v3786
    %8218 = vmatpush1.bf16.msra.mxu0 %v3785
    %8219 = vmatprep.subr.bf16.mxu0 %v3770
    %8220 = vmatpush1.bf16.msra.mxu0 %v3769
    %8221 = vmatprep.subr.bf16.mxu0 %v3754
    %8222 = vmatpush1.bf16.msra.mxu0 %v3753
    %8223 = vmatprep.subr.bf16.mxu0 %v3738
    %8224 = vmatpush1.bf16.msra.mxu0 %v3737
    %8225 = vmatprep.subr.bf16.mxu0 %v3722
    %8226 = vmatpush1.bf16.msra.mxu0 %v3721
    %8227 = vmatprep.subr.bf16.mxu0 %v3706
    %8228 = vmatpush1.bf16.msra.mxu0 %v3705
    %8229 = vmatprep.subr.bf16.mxu0 %v3946
    %8230 = vmatpush2.bf16.msra.mxu0 %v3945
    %8231 = vmatprep.subr.bf16.mxu0 %v3930
    %8232 = vmatpush2.bf16.msra.mxu0 %v3929
    %8233 = vmatprep.subr.bf16.mxu0 %v3914
    %8234 = vmatpush2.bf16.msra.mxu0 %v3913
    %8235 = vmatprep.subr.bf16.mxu0 %v3898
    %8236 = vmatpush2.bf16.msra.mxu0 %v3897
    %8237 = vmatprep.subr.bf16.mxu0 %v3882
    %8238 = vmatpush2.bf16.msra.mxu0 %v3881
    %8239 = vmatprep.subr.bf16.mxu0 %v3866
    %8240 = vmatpush2.bf16.msra.mxu0 %v3865
    %8241 = vmatprep.subr.bf16.mxu0 %v3850
    %8242 = vmatpush2.bf16.msra.mxu0 %v3849
    %8243 = vmatprep.subr.bf16.mxu0 %v3834
    %8244 = vmatpush2.bf16.msra.mxu0 %v3833
    %8245 = vmatprep.mubr.bf16.mxu0 %v7882
    %8246 = vmatmul.mubr.bf16.gmra.mxu0 %v7881
    %v8247 = vpop.f32.mrf.mxu0
    %v8248 = vadd.f32 0.0, %v8247
    %v8249 = vpop.f32.mrf.mxu0
    %v8250 = vadd.f32 0.0, %v8249
    %v8251 = vpop.f32.mrf.mxu0
    %v8252 = vpop.f32.mrf.mxu0
    %8253 = vdwg.mxu0
    %8254 = vmatprep.subr.bf16.mxu0 %v4074
    %8255 = vmatpush1.bf16.msra.mxu0 %v4073
    %8256 = vmatprep.subr.bf16.mxu0 %v4058
    %8257 = vmatpush1.bf16.msra.mxu0 %v4057
    %8258 = vmatprep.subr.bf16.mxu0 %v4042
    %8259 = vmatpush1.bf16.msra.mxu0 %v4041
    %8260 = vmatprep.subr.bf16.mxu0 %v4026
    %8261 = vmatpush1.bf16.msra.mxu0 %v4025
    %8262 = vmatprep.subr.bf16.mxu0 %v4010
    %8263 = vmatpush1.bf16.msra.mxu0 %v4009
    %8264 = vmatprep.subr.bf16.mxu0 %v3994
    %8265 = vmatpush1.bf16.msra.mxu0 %v3993
    %8266 = vmatprep.subr.bf16.mxu0 %v3978
    %8267 = vmatpush1.bf16.msra.mxu0 %v3977
    %8268 = vmatprep.subr.bf16.mxu0 %v3962
    %8269 = vmatpush1.bf16.msra.mxu0 %v3961
    %8270 = vmatprep.subr.bf16.mxu0 %v4202
    %8271 = vmatpush2.bf16.msra.mxu0 %v4201
    %8272 = vmatprep.subr.bf16.mxu0 %v4186
    %8273 = vmatpush2.bf16.msra.mxu0 %v4185
    %8274 = vmatprep.subr.bf16.mxu0 %v4170
    %8275 = vmatpush2.bf16.msra.mxu0 %v4169
    %8276 = vmatprep.subr.bf16.mxu0 %v4154
    %8277 = vmatpush2.bf16.msra.mxu0 %v4153
    %8278 = vmatprep.subr.bf16.mxu0 %v4138
    %8279 = vmatpush2.bf16.msra.mxu0 %v4137
    %8280 = vmatprep.subr.bf16.mxu0 %v4122
    %8281 = vmatpush2.bf16.msra.mxu0 %v4121
    %8282 = vmatprep.subr.bf16.mxu0 %v4106
    %8283 = vmatpush2.bf16.msra.mxu0 %v4105
    %8284 = vmatprep.subr.bf16.mxu0 %v4090
    %8285 = vmatpush2.bf16.msra.mxu0 %v4089
    %8286 = vmatprep.mubr.bf16.mxu0 %v7884
    %8287 = vmatmul.mubr.bf16.gmra.mxu0 %v7883
    %v8288 = vpop.f32.mrf.mxu0
    %v8289 = vadd.f32 %v8248, %v8288
    %v8290 = vpop.f32.mrf.mxu0
    %v8291 = vadd.f32 %v8250, %v8290
    %v8292 = vpop.f32.mrf.mxu0
    %v8293 = vpop.f32.mrf.mxu0
    %8294 = vdwg.mxu0
    %8295 = vmatprep.subr.bf16.mxu0 %v3820
    %8296 = vmatpush1.bf16.msra.mxu0 %v3819
    %8297 = vmatprep.subr.bf16.mxu0 %v3804
    %8298 = vmatpush1.bf16.msra.mxu0 %v3803
    %8299 = vmatprep.subr.bf16.mxu0 %v3788
    %8300 = vmatpush1.bf16.msra.mxu0 %v3787
    %8301 = vmatprep.subr.bf16.mxu0 %v3772
    %8302 = vmatpush1.bf16.msra.mxu0 %v3771
    %8303 = vmatprep.subr.bf16.mxu0 %v3756
    %8304 = vmatpush1.bf16.msra.mxu0 %v3755
    %8305 = vmatprep.subr.bf16.mxu0 %v3740
    %8306 = vmatpush1.bf16.msra.mxu0 %v3739
    %8307 = vmatprep.subr.bf16.mxu0 %v3724
    %8308 = vmatpush1.bf16.msra.mxu0 %v3723
    %8309 = vmatprep.subr.bf16.mxu0 %v3708
    %8310 = vmatpush1.bf16.msra.mxu0 %v3707
    %8311 = vmatprep.subr.bf16.mxu0 %v3948
    %8312 = vmatpush2.bf16.msra.mxu0 %v3947
    %8313 = vmatprep.subr.bf16.mxu0 %v3932
    %8314 = vmatpush2.bf16.msra.mxu0 %v3931
    %8315 = vmatprep.subr.bf16.mxu0 %v3916
    %8316 = vmatpush2.bf16.msra.mxu0 %v3915
    %8317 = vmatprep.subr.bf16.mxu0 %v3900
    %8318 = vmatpush2.bf16.msra.mxu0 %v3899
    %8319 = vmatprep.subr.bf16.mxu0 %v3884
    %8320 = vmatpush2.bf16.msra.mxu0 %v3883
    %8321 = vmatprep.subr.bf16.mxu0 %v3868
    %8322 = vmatpush2.bf16.msra.mxu0 %v3867
    %8323 = vmatprep.subr.bf16.mxu0 %v3852
    %8324 = vmatpush2.bf16.msra.mxu0 %v3851
    %8325 = vmatprep.subr.bf16.mxu0 %v3836
    %8326 = vmatpush2.bf16.msra.mxu0 %v3835
    %8327 = vmatprep.mubr.bf16.mxu0 %v7882
    %8328 = vmatmul.mubr.bf16.gmra.mxu0 %v7881
    %v8329 = vpop.f32.mrf.mxu0
    %v8330 = vadd.f32 0.0, %v8329
    %v8331 = vpop.f32.mrf.mxu0
    %v8332 = vadd.f32 0.0, %v8331
    %v8333 = vpop.f32.mrf.mxu0
    %v8334 = vpop.f32.mrf.mxu0
    %8335 = vdwg.mxu0
    %8336 = vmatprep.subr.bf16.mxu0 %v4076
    %8337 = vmatpush1.bf16.msra.mxu0 %v4075
    %8338 = vmatprep.subr.bf16.mxu0 %v4060
    %8339 = vmatpush1.bf16.msra.mxu0 %v4059
    %8340 = vmatprep.subr.bf16.mxu0 %v4044
    %8341 = vmatpush1.bf16.msra.mxu0 %v4043
    %8342 = vmatprep.subr.bf16.mxu0 %v4028
    %8343 = vmatpush1.bf16.msra.mxu0 %v4027
    %8344 = vmatprep.subr.bf16.mxu0 %v4012
    %8345 = vmatpush1.bf16.msra.mxu0 %v4011
    %8346 = vmatprep.subr.bf16.mxu0 %v3996
    %8347 = vmatpush1.bf16.msra.mxu0 %v3995
    %8348 = vmatprep.subr.bf16.mxu0 %v3980
    %8349 = vmatpush1.bf16.msra.mxu0 %v3979
    %8350 = vmatprep.subr.bf16.mxu0 %v3964
    %8351 = vmatpush1.bf16.msra.mxu0 %v3963
    %8352 = vmatprep.subr.bf16.mxu0 %v4204
    %8353 = vmatpush2.bf16.msra.mxu0 %v4203
    %8354 = vmatprep.subr.bf16.mxu0 %v4188
    %8355 = vmatpush2.bf16.msra.mxu0 %v4187
    %8356 = vmatprep.subr.bf16.mxu0 %v4172
    %8357 = vmatpush2.bf16.msra.mxu0 %v4171
    %8358 = vmatprep.subr.bf16.mxu0 %v4156
    %8359 = vmatpush2.bf16.msra.mxu0 %v4155
    %8360 = vmatprep.subr.bf16.mxu0 %v4140
    %8361 = vmatpush2.bf16.msra.mxu0 %v4139
    %8362 = vmatprep.subr.bf16.mxu0 %v4124
    %8363 = vmatpush2.bf16.msra.mxu0 %v4123
    %8364 = vmatprep.subr.bf16.mxu0 %v4108
    %8365 = vmatpush2.bf16.msra.mxu0 %v4107
    %8366 = vmatprep.subr.bf16.mxu0 %v4092
    %8367 = vmatpush2.bf16.msra.mxu0 %v4091
    %8368 = vmatprep.mubr.bf16.mxu0 %v7884
    %8369 = vmatmul.mubr.bf16.gmra.mxu0 %v7883
    %v8370 = vpop.f32.mrf.mxu0
    %v8371 = vadd.f32 %v8330, %v8370
    %v8372 = vpop.f32.mrf.mxu0
    %v8373 = vadd.f32 %v8332, %v8372
    %v8374 = vpop.f32.mrf.mxu0
    %v8375 = vpop.f32.mrf.mxu0
    %8376 = vdwg.mxu0
    %8377 = vmatprep.subr.bf16.mxu0 %v3822
    %8378 = vmatpush1.bf16.msra.mxu0 %v3821
    %8379 = vmatprep.subr.bf16.mxu0 %v3806
    %8380 = vmatpush1.bf16.msra.mxu0 %v3805
    %8381 = vmatprep.subr.bf16.mxu0 %v3790
    %8382 = vmatpush1.bf16.msra.mxu0 %v3789
    %8383 = vmatprep.subr.bf16.mxu0 %v3774
    %8384 = vmatpush1.bf16.msra.mxu0 %v3773
    %8385 = vmatprep.subr.bf16.mxu0 %v3758
    %8386 = vmatpush1.bf16.msra.mxu0 %v3757
    %8387 = vmatprep.subr.bf16.mxu0 %v3742
    %8388 = vmatpush1.bf16.msra.mxu0 %v3741
    %8389 = vmatprep.subr.bf16.mxu0 %v3726
    %8390 = vmatpush1.bf16.msra.mxu0 %v3725
    %8391 = vmatprep.subr.bf16.mxu0 %v3710
    %8392 = vmatpush1.bf16.msra.mxu0 %v3709
    %8393 = vmatprep.subr.bf16.mxu0 %v3950
    %8394 = vmatpush2.bf16.msra.mxu0 %v3949
    %8395 = vmatprep.subr.bf16.mxu0 %v3934
    %8396 = vmatpush2.bf16.msra.mxu0 %v3933
    %8397 = vmatprep.subr.bf16.mxu0 %v3918
    %8398 = vmatpush2.bf16.msra.mxu0 %v3917
    %8399 = vmatprep.subr.bf16.mxu0 %v3902
    %8400 = vmatpush2.bf16.msra.mxu0 %v3901
    %8401 = vmatprep.subr.bf16.mxu0 %v3886
    %8402 = vmatpush2.bf16.msra.mxu0 %v3885
    %8403 = vmatprep.subr.bf16.mxu0 %v3870
    %8404 = vmatpush2.bf16.msra.mxu0 %v3869
    %8405 = vmatprep.subr.bf16.mxu0 %v3854
    %8406 = vmatpush2.bf16.msra.mxu0 %v3853
    %8407 = vmatprep.subr.bf16.mxu0 %v3838
    %8408 = vmatpush2.bf16.msra.mxu0 %v3837
    %8409 = vmatprep.mubr.bf16.mxu0 %v7882
    %8410 = vmatmul.mubr.bf16.gmra.mxu0 %v7881
    %v8411 = vpop.f32.mrf.mxu0
    %v8412 = vadd.f32 0.0, %v8411
    %v8413 = vpop.f32.mrf.mxu0
    %v8414 = vadd.f32 0.0, %v8413
    %v8415 = vpop.f32.mrf.mxu0
    %v8416 = vpop.f32.mrf.mxu0
    %8417 = vdwg.mxu0
    %8418 = vmatprep.subr.bf16.mxu0 %v4078
    %8419 = vmatpush1.bf16.msra.mxu0 %v4077
    %8420 = vmatprep.subr.bf16.mxu0 %v4062
    %8421 = vmatpush1.bf16.msra.mxu0 %v4061
    %8422 = vmatprep.subr.bf16.mxu0 %v4046
    %8423 = vmatpush1.bf16.msra.mxu0 %v4045
    %8424 = vmatprep.subr.bf16.mxu0 %v4030
    %8425 = vmatpush1.bf16.msra.mxu0 %v4029
    %8426 = vmatprep.subr.bf16.mxu0 %v4014
    %8427 = vmatpush1.bf16.msra.mxu0 %v4013
    %8428 = vmatprep.subr.bf16.mxu0 %v3998
    %8429 = vmatpush1.bf16.msra.mxu0 %v3997
    %8430 = vmatprep.subr.bf16.mxu0 %v3982
    %8431 = vmatpush1.bf16.msra.mxu0 %v3981
    %8432 = vmatprep.subr.bf16.mxu0 %v3966
    %8433 = vmatpush1.bf16.msra.mxu0 %v3965
    %8434 = vmatprep.subr.bf16.mxu0 %v4206
    %8435 = vmatpush2.bf16.msra.mxu0 %v4205
    %8436 = vmatprep.subr.bf16.mxu0 %v4190
    %8437 = vmatpush2.bf16.msra.mxu0 %v4189
    %8438 = vmatprep.subr.bf16.mxu0 %v4174
    %8439 = vmatpush2.bf16.msra.mxu0 %v4173
    %8440 = vmatprep.subr.bf16.mxu0 %v4158
    %8441 = vmatpush2.bf16.msra.mxu0 %v4157
    %8442 = vmatprep.subr.bf16.mxu0 %v4142
    %8443 = vmatpush2.bf16.msra.mxu0 %v4141
    %8444 = vmatprep.subr.bf16.mxu0 %v4126
    %8445 = vmatpush2.bf16.msra.mxu0 %v4125
    %8446 = vmatprep.subr.bf16.mxu0 %v4110
    %8447 = vmatpush2.bf16.msra.mxu0 %v4109
    %8448 = vmatprep.subr.bf16.mxu0 %v4094
    %8449 = vmatpush2.bf16.msra.mxu0 %v4093
    %8450 = vmatprep.mubr.bf16.mxu0 %v7884
    %8451 = vmatmul.mubr.bf16.gmra.mxu0 %v7883
    %v8452 = vpop.f32.mrf.mxu0
    %v8453 = vadd.f32 %v8412, %v8452
    %v8454 = vpop.f32.mrf.mxu0
    %v8455 = vadd.f32 %v8414, %v8454
    %v8456 = vpop.f32.mrf.mxu0
    %v8457 = vpop.f32.mrf.mxu0
    %8458 = vdwg.mxu0
    %8459 = vmatprep.subr.bf16.mxu0 %v3824
    %8460 = vmatpush1.bf16.msra.mxu0 %v3823
    %8461 = vmatprep.subr.bf16.mxu0 %v3808
    %8462 = vmatpush1.bf16.msra.mxu0 %v3807
    %8463 = vmatprep.subr.bf16.mxu0 %v3792
    %8464 = vmatpush1.bf16.msra.mxu0 %v3791
    %8465 = vmatprep.subr.bf16.mxu0 %v3776
    %8466 = vmatpush1.bf16.msra.mxu0 %v3775
    %8467 = vmatprep.subr.bf16.mxu0 %v3760
    %8468 = vmatpush1.bf16.msra.mxu0 %v3759
    %8469 = vmatprep.subr.bf16.mxu0 %v3744
    %8470 = vmatpush1.bf16.msra.mxu0 %v3743
    %8471 = vmatprep.subr.bf16.mxu0 %v3728
    %8472 = vmatpush1.bf16.msra.mxu0 %v3727
    %8473 = vmatprep.subr.bf16.mxu0 %v3712
    %8474 = vmatpush1.bf16.msra.mxu0 %v3711
    %8475 = vmatprep.subr.bf16.mxu0 %v3952
    %8476 = vmatpush2.bf16.msra.mxu0 %v3951
    %8477 = vmatprep.subr.bf16.mxu0 %v3936
    %8478 = vmatpush2.bf16.msra.mxu0 %v3935
    %8479 = vmatprep.subr.bf16.mxu0 %v3920
    %8480 = vmatpush2.bf16.msra.mxu0 %v3919
    %8481 = vmatprep.subr.bf16.mxu0 %v3904
    %8482 = vmatpush2.bf16.msra.mxu0 %v3903
    %8483 = vmatprep.subr.bf16.mxu0 %v3888
    %8484 = vmatpush2.bf16.msra.mxu0 %v3887
    %8485 = vmatprep.subr.bf16.mxu0 %v3872
    %8486 = vmatpush2.bf16.msra.mxu0 %v3871
    %8487 = vmatprep.subr.bf16.mxu0 %v3856
    %8488 = vmatpush2.bf16.msra.mxu0 %v3855
    %8489 = vmatprep.subr.bf16.mxu0 %v3840
    %8490 = vmatpush2.bf16.msra.mxu0 %v3839
    %8491 = vmatprep.mubr.bf16.mxu0 %v7882
    %8492 = vmatmul.mubr.bf16.gmra.mxu0 %v7881
    %v8493 = vpop.f32.mrf.mxu0
    %v8494 = vadd.f32 0.0, %v8493
    %v8495 = vpop.f32.mrf.mxu0
    %v8496 = vadd.f32 0.0, %v8495
    %v8497 = vpop.f32.mrf.mxu0
    %v8498 = vpop.f32.mrf.mxu0
    %8499 = vdwg.mxu0
    %8500 = vmatprep.subr.bf16.mxu0 %v4080
    %8501 = vmatpush1.bf16.msra.mxu0 %v4079
    %8502 = vmatprep.subr.bf16.mxu0 %v4064
    %8503 = vmatpush1.bf16.msra.mxu0 %v4063
    %8504 = vmatprep.subr.bf16.mxu0 %v4048
    %8505 = vmatpush1.bf16.msra.mxu0 %v4047
    %8506 = vmatprep.subr.bf16.mxu0 %v4032
    %8507 = vmatpush1.bf16.msra.mxu0 %v4031
    %8508 = vmatprep.subr.bf16.mxu0 %v4016
    %8509 = vmatpush1.bf16.msra.mxu0 %v4015
    %8510 = vmatprep.subr.bf16.mxu0 %v4000
    %8511 = vmatpush1.bf16.msra.mxu0 %v3999
    %8512 = vmatprep.subr.bf16.mxu0 %v3984
    %8513 = vmatpush1.bf16.msra.mxu0 %v3983
    %8514 = vmatprep.subr.bf16.mxu0 %v3968
    %8515 = vmatpush1.bf16.msra.mxu0 %v3967
    %8516 = vmatprep.subr.bf16.mxu0 %v4208
    %8517 = vmatpush2.bf16.msra.mxu0 %v4207
    %8518 = vmatprep.subr.bf16.mxu0 %v4192
    %8519 = vmatpush2.bf16.msra.mxu0 %v4191
    %8520 = vmatprep.subr.bf16.mxu0 %v4176
    %8521 = vmatpush2.bf16.msra.mxu0 %v4175
    %8522 = vmatprep.subr.bf16.mxu0 %v4160
    %8523 = vmatpush2.bf16.msra.mxu0 %v4159
    %8524 = vmatprep.subr.bf16.mxu0 %v4144
    %8525 = vmatpush2.bf16.msra.mxu0 %v4143
    %8526 = vmatprep.subr.bf16.mxu0 %v4128
    %8527 = vmatpush2.bf16.msra.mxu0 %v4127
    %8528 = vmatprep.subr.bf16.mxu0 %v4112
    %8529 = vmatpush2.bf16.msra.mxu0 %v4111
    %8530 = vmatprep.subr.bf16.mxu0 %v4096
    %8531 = vmatpush2.bf16.msra.mxu0 %v4095
    %8532 = vmatprep.mubr.bf16.mxu0 %v7884
    %8533 = vmatmul.mubr.bf16.gmra.mxu0 %v7883
    %v8534 = vpop.f32.mrf.mxu0
    %v8535 = vadd.f32 %v8494, %v8534
    %v8536 = vpop.f32.mrf.mxu0
    %v8537 = vadd.f32 %v8496, %v8536
    %v8538 = vpop.f32.mrf.mxu0
    %v8539 = vpop.f32.mrf.mxu0
    %8540 = vdwg.mxu0
    %v8541 = vadd.f32 %v7865, %v7961
    %v8542 = vadd.f32 %v7866, %v7963
    %v8543 = vadd.f32 %v7867, %v8043
    %v8544 = vadd.f32 %v7868, %v8045
    %v8545 = vadd.f32 %v7869, %v8125
    %v8546 = vadd.f32 %v7870, %v8127
    %v8547 = vadd.f32 %v7871, %v8207
    %v8548 = vadd.f32 %v7872, %v8209
    %v8549 = vadd.f32 %v7873, %v8289
    %v8550 = vadd.f32 %v7874, %v8291
    %v8551 = vadd.f32 %v7875, %v8371
    %v8552 = vadd.f32 %v7876, %v8373
    %v8553 = vadd.f32 %v7877, %v8453
    %v8554 = vadd.f32 %v7878, %v8455
    %v8555 = vadd.f32 %v7879, %v8535
    %v8556 = vadd.f32 %v7880, %v8537
    %v8557 = vxor.u32 %v8541, 2147483648
    %v8558 = vxor.u32 %v8542, 2147483648
    %v8559 = vxor.u32 %v8543, 2147483648
    %v8560 = vxor.u32 %v8544, 2147483648
    %v8561 = vmul.f32 %v8557, 1.442695
    %v8562 = vpow.pop %v8561
    %v8563 = vmul.f32 %v8558, 1.442695
    %v8564 = vpow.pop %v8563
    %v8565 = vmul.f32 %v8559, 1.442695
    %v8566 = vpow.pop %v8565
    %v8567 = vmul.f32 %v8560, 1.442695
    %v8568 = vpow.pop %v8567
    %v8569 = vadd.f32 %v8562, 1.0
    %v8570 = vadd.f32 %v8564, 1.0
    %v8571 = vadd.f32 %v8566, 1.0
    %v8572 = vadd.f32 %v8568, 1.0
    %v8573 = vrcp.pop %v8569
    %v8574 = vmul.f32 1.0, %v8573
    %v8575 = vrcp.pop %v8570
    %v8576 = vmul.f32 1.0, %v8575
    %v8577 = vrcp.pop %v8571
    %v8578 = vmul.f32 1.0, %v8577
    %v8579 = vrcp.pop %v8572
    %v8580 = vmul.f32 1.0, %v8579
    %v8581 = vxor.u32 %v8545, 2147483648
    %v8582 = vxor.u32 %v8546, 2147483648
    %v8583 = vxor.u32 %v8547, 2147483648
    %v8584 = vxor.u32 %v8548, 2147483648
    %v8585 = vmul.f32 %v8581, 1.442695
    %v8586 = vpow.pop %v8585
    %v8587 = vmul.f32 %v8582, 1.442695
    %v8588 = vpow.pop %v8587
    %v8589 = vmul.f32 %v8583, 1.442695
    %v8590 = vpow.pop %v8589
    %v8591 = vmul.f32 %v8584, 1.442695
    %v8592 = vpow.pop %v8591
    %v8593 = vadd.f32 %v8586, 1.0
    %v8594 = vadd.f32 %v8588, 1.0
    %v8595 = vadd.f32 %v8590, 1.0
    %v8596 = vadd.f32 %v8592, 1.0
    %v8597 = vrcp.pop %v8593
    %v8598 = vmul.f32 1.0, %v8597
    %v8599 = vrcp.pop %v8594
    %v8600 = vmul.f32 1.0, %v8599
    %v8601 = vrcp.pop %v8595
    %v8602 = vmul.f32 1.0, %v8601
    %v8603 = vrcp.pop %v8596
    %v8604 = vmul.f32 1.0, %v8603
    %v8605 = vtanh.pop %v8549
    %v8606 = vtanh.pop %v8550
    %v8607 = vtanh.pop %v8551
    %v8608 = vtanh.pop %v8552
    %v8609 = vxor.u32 %v8553, 2147483648
    %v8610 = vxor.u32 %v8554, 2147483648
    %v8611 = vxor.u32 %v8555, 2147483648
    %v8612 = vxor.u32 %v8556, 2147483648
    %v8613 = vmul.f32 %v8609, 1.442695
    %v8614 = vpow.pop %v8613
    %v8615 = vmul.f32 %v8610, 1.442695
    %v8616 = vpow.pop %v8615
    %v8617 = vmul.f32 %v8611, 1.442695
    %v8618 = vpow.pop %v8617
    %v8619 = vmul.f32 %v8612, 1.442695
    %v8620 = vpow.pop %v8619
    %v8621 = vadd.f32 %v8614, 1.0
    %v8622 = vadd.f32 %v8616, 1.0
    %v8623 = vadd.f32 %v8618, 1.0
    %v8624 = vadd.f32 %v8620, 1.0
    %v8625 = vrcp.pop %v8621
    %v8626 = vmul.f32 1.0, %v8625
    %v8627 = vrcp.pop %v8622
    %v8628 = vmul.f32 1.0, %v8627
    %v8629 = vrcp.pop %v8623
    %v8630 = vmul.f32 1.0, %v8629
    %v8631 = vrcp.pop %v8624
    %v8632 = vmul.f32 1.0, %v8631
    %v8633 = vmul.f32 %v8598, %v7850
    %v8634 = vmul.f32 %v8600, %v7851
    %v8635 = vmul.f32 %v8602, %v7852
    %v8636 = vmul.f32 %v8604, %v7853
    %v8637 = vmul.f32 %v8574, %v8605
    %v8638 = vmul.f32 %v8576, %v8606
    %v8639 = vmul.f32 %v8578, %v8607
    %v8640 = vmul.f32 %v8580, %v8608
    %v8641 = vadd.f32 %v8633, %v8637
    %v8642 = vadd.f32 %v8634, %v8638
    %v8643 = vadd.f32 %v8635, %v8639
    %v8644 = vadd.f32 %v8636, %v8640
    %v8645 = vtanh.pop %v8641
    %v8646 = vtanh.pop %v8642
    %v8647 = vtanh.pop %v8643
    %v8648 = vtanh.pop %v8644
    %v8649 = vmul.f32 %v8626, %v8645
    %v8650 = vmul.f32 %v8628, %v8646
    %v8651 = vmul.f32 %v8630, %v8647
    %v8652 = vmul.f32 %v8632, %v8648
    %s8653 = smul.u32 5, 16
    %s8654 = smul.addr %s8653, 8
    %s8655 = scalar_lea.vmem [#allocation2], %s8654
    %v8656 = vld [vmem:[%s8655] sm:$0xff]
    %v8657 = vld [vmem:[%s8655 + $0x8] sm:$0xff]
    %v8658 = vld [vmem:[%s8655 + $0x10] sm:$0xff]
    %v8659 = vld [vmem:[%s8655 + $0x18] sm:$0xff]
    %v8660 = vld [vmem:[%s8655 + $0x20] sm:$0xff]
    %v8661 = vld [vmem:[%s8655 + $0x28] sm:$0xff]
    %v8662 = vld [vmem:[%s8655 + $0x30] sm:$0xff]
    %v8663 = vld [vmem:[%s8655 + $0x38] sm:$0xff]
    %v8664 = vld [vmem:[%s8655 + $0x40] sm:$0xff]
    %v8665 = vld [vmem:[%s8655 + $0x48] sm:$0xff]
    %v8666 = vld [vmem:[%s8655 + $0x50] sm:$0xff]
    %v8667 = vld [vmem:[%s8655 + $0x58] sm:$0xff]
    %v8668 = vld [vmem:[%s8655 + $0x60] sm:$0xff]
    %v8669 = vld [vmem:[%s8655 + $0x68] sm:$0xff]
    %v8670 = vld [vmem:[%s8655 + $0x70] sm:$0xff]
    %v8671 = vld [vmem:[%s8655 + $0x78] sm:$0xff]
    %v8672 = vpack.c.bf16 %v8649, %v8649
    %v8673 = vpack.c.bf16 %v8650, %v8650
    %v8674 = vpack.c.bf16 %v8651, %v8651
    %v8675 = vpack.c.bf16 %v8652, %v8652
    %8676 = vmatprep.subr.bf16.mxu0 %v3810
    %8677 = vmatpush1.bf16.msra.mxu0 %v3809
    %8678 = vmatprep.subr.bf16.mxu0 %v3794
    %8679 = vmatpush1.bf16.msra.mxu0 %v3793
    %8680 = vmatprep.subr.bf16.mxu0 %v3778
    %8681 = vmatpush1.bf16.msra.mxu0 %v3777
    %8682 = vmatprep.subr.bf16.mxu0 %v3762
    %8683 = vmatpush1.bf16.msra.mxu0 %v3761
    %8684 = vmatprep.subr.bf16.mxu0 %v3746
    %8685 = vmatpush1.bf16.msra.mxu0 %v3745
    %8686 = vmatprep.subr.bf16.mxu0 %v3730
    %8687 = vmatpush1.bf16.msra.mxu0 %v3729
    %8688 = vmatprep.subr.bf16.mxu0 %v3714
    %8689 = vmatpush1.bf16.msra.mxu0 %v3713
    %8690 = vmatprep.subr.bf16.mxu0 %v3698
    %8691 = vmatpush1.bf16.msra.mxu0 %v3697
    %8692 = vmatprep.subr.bf16.mxu0 %v3938
    %8693 = vmatpush2.bf16.msra.mxu0 %v3937
    %8694 = vmatprep.subr.bf16.mxu0 %v3922
    %8695 = vmatpush2.bf16.msra.mxu0 %v3921
    %8696 = vmatprep.subr.bf16.mxu0 %v3906
    %8697 = vmatpush2.bf16.msra.mxu0 %v3905
    %8698 = vmatprep.subr.bf16.mxu0 %v3890
    %8699 = vmatpush2.bf16.msra.mxu0 %v3889
    %8700 = vmatprep.subr.bf16.mxu0 %v3874
    %8701 = vmatpush2.bf16.msra.mxu0 %v3873
    %8702 = vmatprep.subr.bf16.mxu0 %v3858
    %8703 = vmatpush2.bf16.msra.mxu0 %v3857
    %8704 = vmatprep.subr.bf16.mxu0 %v3842
    %8705 = vmatpush2.bf16.msra.mxu0 %v3841
    %8706 = vmatprep.subr.bf16.mxu0 %v3826
    %8707 = vmatpush2.bf16.msra.mxu0 %v3825
    %8708 = vmatprep.mubr.bf16.mxu0 %v8673
    %8709 = vmatmul.mubr.bf16.gmra.mxu0 %v8672
    %v8710 = vpop.f32.mrf.mxu0
    %v8711 = vadd.f32 0.0, %v8710
    %v8712 = vpop.f32.mrf.mxu0
    %v8713 = vadd.f32 0.0, %v8712
    %v8714 = vpop.f32.mrf.mxu0
    %v8715 = vpop.f32.mrf.mxu0
    %8716 = vdwg.mxu0
    %8717 = vmatprep.subr.bf16.mxu0 %v4066
    %8718 = vmatpush1.bf16.msra.mxu0 %v4065
    %8719 = vmatprep.subr.bf16.mxu0 %v4050
    %8720 = vmatpush1.bf16.msra.mxu0 %v4049
    %8721 = vmatprep.subr.bf16.mxu0 %v4034
    %8722 = vmatpush1.bf16.msra.mxu0 %v4033
    %8723 = vmatprep.subr.bf16.mxu0 %v4018
    %8724 = vmatpush1.bf16.msra.mxu0 %v4017
    %8725 = vmatprep.subr.bf16.mxu0 %v4002
    %8726 = vmatpush1.bf16.msra.mxu0 %v4001
    %8727 = vmatprep.subr.bf16.mxu0 %v3986
    %8728 = vmatpush1.bf16.msra.mxu0 %v3985
    %8729 = vmatprep.subr.bf16.mxu0 %v3970
    %8730 = vmatpush1.bf16.msra.mxu0 %v3969
    %8731 = vmatprep.subr.bf16.mxu0 %v3954
    %8732 = vmatpush1.bf16.msra.mxu0 %v3953
    %8733 = vmatprep.subr.bf16.mxu0 %v4194
    %8734 = vmatpush2.bf16.msra.mxu0 %v4193
    %8735 = vmatprep.subr.bf16.mxu0 %v4178
    %8736 = vmatpush2.bf16.msra.mxu0 %v4177
    %8737 = vmatprep.subr.bf16.mxu0 %v4162
    %8738 = vmatpush2.bf16.msra.mxu0 %v4161
    %8739 = vmatprep.subr.bf16.mxu0 %v4146
    %8740 = vmatpush2.bf16.msra.mxu0 %v4145
    %8741 = vmatprep.subr.bf16.mxu0 %v4130
    %8742 = vmatpush2.bf16.msra.mxu0 %v4129
    %8743 = vmatprep.subr.bf16.mxu0 %v4114
    %8744 = vmatpush2.bf16.msra.mxu0 %v4113
    %8745 = vmatprep.subr.bf16.mxu0 %v4098
    %8746 = vmatpush2.bf16.msra.mxu0 %v4097
    %8747 = vmatprep.subr.bf16.mxu0 %v4082
    %8748 = vmatpush2.bf16.msra.mxu0 %v4081
    %8749 = vmatprep.mubr.bf16.mxu0 %v8675
    %8750 = vmatmul.mubr.bf16.gmra.mxu0 %v8674
    %v8751 = vpop.f32.mrf.mxu0
    %v8752 = vadd.f32 %v8711, %v8751
    %v8753 = vpop.f32.mrf.mxu0
    %v8754 = vadd.f32 %v8713, %v8753
    %v8755 = vpop.f32.mrf.mxu0
    %v8756 = vpop.f32.mrf.mxu0
    %8757 = vdwg.mxu0
    %8758 = vmatprep.subr.bf16.mxu0 %v3812
    %8759 = vmatpush1.bf16.msra.mxu0 %v3811
    %8760 = vmatprep.subr.bf16.mxu0 %v3796
    %8761 = vmatpush1.bf16.msra.mxu0 %v3795
    %8762 = vmatprep.subr.bf16.mxu0 %v3780
    %8763 = vmatpush1.bf16.msra.mxu0 %v3779
    %8764 = vmatprep.subr.bf16.mxu0 %v3764
    %8765 = vmatpush1.bf16.msra.mxu0 %v3763
    %8766 = vmatprep.subr.bf16.mxu0 %v3748
    %8767 = vmatpush1.bf16.msra.mxu0 %v3747
    %8768 = vmatprep.subr.bf16.mxu0 %v3732
    %8769 = vmatpush1.bf16.msra.mxu0 %v3731
    %8770 = vmatprep.subr.bf16.mxu0 %v3716
    %8771 = vmatpush1.bf16.msra.mxu0 %v3715
    %8772 = vmatprep.subr.bf16.mxu0 %v3700
    %8773 = vmatpush1.bf16.msra.mxu0 %v3699
    %8774 = vmatprep.subr.bf16.mxu0 %v3940
    %8775 = vmatpush2.bf16.msra.mxu0 %v3939
    %8776 = vmatprep.subr.bf16.mxu0 %v3924
    %8777 = vmatpush2.bf16.msra.mxu0 %v3923
    %8778 = vmatprep.subr.bf16.mxu0 %v3908
    %8779 = vmatpush2.bf16.msra.mxu0 %v3907
    %8780 = vmatprep.subr.bf16.mxu0 %v3892
    %8781 = vmatpush2.bf16.msra.mxu0 %v3891
    %8782 = vmatprep.subr.bf16.mxu0 %v3876
    %8783 = vmatpush2.bf16.msra.mxu0 %v3875
    %8784 = vmatprep.subr.bf16.mxu0 %v3860
    %8785 = vmatpush2.bf16.msra.mxu0 %v3859
    %8786 = vmatprep.subr.bf16.mxu0 %v3844
    %8787 = vmatpush2.bf16.msra.mxu0 %v3843
    %8788 = vmatprep.subr.bf16.mxu0 %v3828
    %8789 = vmatpush2.bf16.msra.mxu0 %v3827
    %8790 = vmatprep.mubr.bf16.mxu0 %v8673
    %8791 = vmatmul.mubr.bf16.gmra.mxu0 %v8672
    %v8792 = vpop.f32.mrf.mxu0
    %v8793 = vadd.f32 0.0, %v8792
    %v8794 = vpop.f32.mrf.mxu0
    %v8795 = vadd.f32 0.0, %v8794
    %v8796 = vpop.f32.mrf.mxu0
    %v8797 = vpop.f32.mrf.mxu0
    %8798 = vdwg.mxu0
    %8799 = vmatprep.subr.bf16.mxu0 %v4068
    %8800 = vmatpush1.bf16.msra.mxu0 %v4067
    %8801 = vmatprep.subr.bf16.mxu0 %v4052
    %8802 = vmatpush1.bf16.msra.mxu0 %v4051
    %8803 = vmatprep.subr.bf16.mxu0 %v4036
    %8804 = vmatpush1.bf16.msra.mxu0 %v4035
    %8805 = vmatprep.subr.bf16.mxu0 %v4020
    %8806 = vmatpush1.bf16.msra.mxu0 %v4019
    %8807 = vmatprep.subr.bf16.mxu0 %v4004
    %8808 = vmatpush1.bf16.msra.mxu0 %v4003
    %8809 = vmatprep.subr.bf16.mxu0 %v3988
    %8810 = vmatpush1.bf16.msra.mxu0 %v3987
    %8811 = vmatprep.subr.bf16.mxu0 %v3972
    %8812 = vmatpush1.bf16.msra.mxu0 %v3971
    %8813 = vmatprep.subr.bf16.mxu0 %v3956
    %8814 = vmatpush1.bf16.msra.mxu0 %v3955
    %8815 = vmatprep.subr.bf16.mxu0 %v4196
    %8816 = vmatpush2.bf16.msra.mxu0 %v4195
    %8817 = vmatprep.subr.bf16.mxu0 %v4180
    %8818 = vmatpush2.bf16.msra.mxu0 %v4179
    %8819 = vmatprep.subr.bf16.mxu0 %v4164
    %8820 = vmatpush2.bf16.msra.mxu0 %v4163
    %8821 = vmatprep.subr.bf16.mxu0 %v4148
    %8822 = vmatpush2.bf16.msra.mxu0 %v4147
    %8823 = vmatprep.subr.bf16.mxu0 %v4132
    %8824 = vmatpush2.bf16.msra.mxu0 %v4131
    %8825 = vmatprep.subr.bf16.mxu0 %v4116
    %8826 = vmatpush2.bf16.msra.mxu0 %v4115
    %8827 = vmatprep.subr.bf16.mxu0 %v4100
    %8828 = vmatpush2.bf16.msra.mxu0 %v4099
    %8829 = vmatprep.subr.bf16.mxu0 %v4084
    %8830 = vmatpush2.bf16.msra.mxu0 %v4083
    %8831 = vmatprep.mubr.bf16.mxu0 %v8675
    %8832 = vmatmul.mubr.bf16.gmra.mxu0 %v8674
    %v8833 = vpop.f32.mrf.mxu0
    %v8834 = vadd.f32 %v8793, %v8833
    %v8835 = vpop.f32.mrf.mxu0
    %v8836 = vadd.f32 %v8795, %v8835
    %v8837 = vpop.f32.mrf.mxu0
    %v8838 = vpop.f32.mrf.mxu0
    %8839 = vdwg.mxu0
    %8840 = vmatprep.subr.bf16.mxu0 %v3814
    %8841 = vmatpush1.bf16.msra.mxu0 %v3813
    %8842 = vmatprep.subr.bf16.mxu0 %v3798
    %8843 = vmatpush1.bf16.msra.mxu0 %v3797
    %8844 = vmatprep.subr.bf16.mxu0 %v3782
    %8845 = vmatpush1.bf16.msra.mxu0 %v3781
    %8846 = vmatprep.subr.bf16.mxu0 %v3766
    %8847 = vmatpush1.bf16.msra.mxu0 %v3765
    %8848 = vmatprep.subr.bf16.mxu0 %v3750
    %8849 = vmatpush1.bf16.msra.mxu0 %v3749
    %8850 = vmatprep.subr.bf16.mxu0 %v3734
    %8851 = vmatpush1.bf16.msra.mxu0 %v3733
    %8852 = vmatprep.subr.bf16.mxu0 %v3718
    %8853 = vmatpush1.bf16.msra.mxu0 %v3717
    %8854 = vmatprep.subr.bf16.mxu0 %v3702
    %8855 = vmatpush1.bf16.msra.mxu0 %v3701
    %8856 = vmatprep.subr.bf16.mxu0 %v3942
    %8857 = vmatpush2.bf16.msra.mxu0 %v3941
    %8858 = vmatprep.subr.bf16.mxu0 %v3926
    %8859 = vmatpush2.bf16.msra.mxu0 %v3925
    %8860 = vmatprep.subr.bf16.mxu0 %v3910
    %8861 = vmatpush2.bf16.msra.mxu0 %v3909
    %8862 = vmatprep.subr.bf16.mxu0 %v3894
    %8863 = vmatpush2.bf16.msra.mxu0 %v3893
    %8864 = vmatprep.subr.bf16.mxu0 %v3878
    %8865 = vmatpush2.bf16.msra.mxu0 %v3877
    %8866 = vmatprep.subr.bf16.mxu0 %v3862
    %8867 = vmatpush2.bf16.msra.mxu0 %v3861
    %8868 = vmatprep.subr.bf16.mxu0 %v3846
    %8869 = vmatpush2.bf16.msra.mxu0 %v3845
    %8870 = vmatprep.subr.bf16.mxu0 %v3830
    %8871 = vmatpush2.bf16.msra.mxu0 %v3829
    %8872 = vmatprep.mubr.bf16.mxu0 %v8673
    %8873 = vmatmul.mubr.bf16.gmra.mxu0 %v8672
    %v8874 = vpop.f32.mrf.mxu0
    %v8875 = vadd.f32 0.0, %v8874
    %v8876 = vpop.f32.mrf.mxu0
    %v8877 = vadd.f32 0.0, %v8876
    %v8878 = vpop.f32.mrf.mxu0
    %v8879 = vpop.f32.mrf.mxu0
    %8880 = vdwg.mxu0
    %8881 = vmatprep.subr.bf16.mxu0 %v4070
    %8882 = vmatpush1.bf16.msra.mxu0 %v4069
    %8883 = vmatprep.subr.bf16.mxu0 %v4054
    %8884 = vmatpush1.bf16.msra.mxu0 %v4053
    %8885 = vmatprep.subr.bf16.mxu0 %v4038
    %8886 = vmatpush1.bf16.msra.mxu0 %v4037
    %8887 = vmatprep.subr.bf16.mxu0 %v4022
    %8888 = vmatpush1.bf16.msra.mxu0 %v4021
    %8889 = vmatprep.subr.bf16.mxu0 %v4006
    %8890 = vmatpush1.bf16.msra.mxu0 %v4005
    %8891 = vmatprep.subr.bf16.mxu0 %v3990
    %8892 = vmatpush1.bf16.msra.mxu0 %v3989
    %8893 = vmatprep.subr.bf16.mxu0 %v3974
    %8894 = vmatpush1.bf16.msra.mxu0 %v3973
    %8895 = vmatprep.subr.bf16.mxu0 %v3958
    %8896 = vmatpush1.bf16.msra.mxu0 %v3957
    %8897 = vmatprep.subr.bf16.mxu0 %v4198
    %8898 = vmatpush2.bf16.msra.mxu0 %v4197
    %8899 = vmatprep.subr.bf16.mxu0 %v4182
    %8900 = vmatpush2.bf16.msra.mxu0 %v4181
    %8901 = vmatprep.subr.bf16.mxu0 %v4166
    %8902 = vmatpush2.bf16.msra.mxu0 %v4165
    %8903 = vmatprep.subr.bf16.mxu0 %v4150
    %8904 = vmatpush2.bf16.msra.mxu0 %v4149
    %8905 = vmatprep.subr.bf16.mxu0 %v4134
    %8906 = vmatpush2.bf16.msra.mxu0 %v4133
    %8907 = vmatprep.subr.bf16.mxu0 %v4118
    %8908 = vmatpush2.bf16.msra.mxu0 %v4117
    %8909 = vmatprep.subr.bf16.mxu0 %v4102
    %8910 = vmatpush2.bf16.msra.mxu0 %v4101
    %8911 = vmatprep.subr.bf16.mxu0 %v4086
    %8912 = vmatpush2.bf16.msra.mxu0 %v4085
    %8913 = vmatprep.mubr.bf16.mxu0 %v8675
    %8914 = vmatmul.mubr.bf16.gmra.mxu0 %v8674
    %v8915 = vpop.f32.mrf.mxu0
    %v8916 = vadd.f32 %v8875, %v8915
    %v8917 = vpop.f32.mrf.mxu0
    %v8918 = vadd.f32 %v8877, %v8917
    %v8919 = vpop.f32.mrf.mxu0
    %v8920 = vpop.f32.mrf.mxu0
    %8921 = vdwg.mxu0
    %8922 = vmatprep.subr.bf16.mxu0 %v3816
    %8923 = vmatpush1.bf16.msra.mxu0 %v3815
    %8924 = vmatprep.subr.bf16.mxu0 %v3800
    %8925 = vmatpush1.bf16.msra.mxu0 %v3799
    %8926 = vmatprep.subr.bf16.mxu0 %v3784
    %8927 = vmatpush1.bf16.msra.mxu0 %v3783
    %8928 = vmatprep.subr.bf16.mxu0 %v3768
    %8929 = vmatpush1.bf16.msra.mxu0 %v3767
    %8930 = vmatprep.subr.bf16.mxu0 %v3752
    %8931 = vmatpush1.bf16.msra.mxu0 %v3751
    %8932 = vmatprep.subr.bf16.mxu0 %v3736
    %8933 = vmatpush1.bf16.msra.mxu0 %v3735
    %8934 = vmatprep.subr.bf16.mxu0 %v3720
    %8935 = vmatpush1.bf16.msra.mxu0 %v3719
    %8936 = vmatprep.subr.bf16.mxu0 %v3704
    %8937 = vmatpush1.bf16.msra.mxu0 %v3703
    %8938 = vmatprep.subr.bf16.mxu0 %v3944
    %8939 = vmatpush2.bf16.msra.mxu0 %v3943
    %8940 = vmatprep.subr.bf16.mxu0 %v3928
    %8941 = vmatpush2.bf16.msra.mxu0 %v3927
    %8942 = vmatprep.subr.bf16.mxu0 %v3912
    %8943 = vmatpush2.bf16.msra.mxu0 %v3911
    %8944 = vmatprep.subr.bf16.mxu0 %v3896
    %8945 = vmatpush2.bf16.msra.mxu0 %v3895
    %8946 = vmatprep.subr.bf16.mxu0 %v3880
    %8947 = vmatpush2.bf16.msra.mxu0 %v3879
    %8948 = vmatprep.subr.bf16.mxu0 %v3864
    %8949 = vmatpush2.bf16.msra.mxu0 %v3863
    %8950 = vmatprep.subr.bf16.mxu0 %v3848
    %8951 = vmatpush2.bf16.msra.mxu0 %v3847
    %8952 = vmatprep.subr.bf16.mxu0 %v3832
    %8953 = vmatpush2.bf16.msra.mxu0 %v3831
    %8954 = vmatprep.mubr.bf16.mxu0 %v8673
    %8955 = vmatmul.mubr.bf16.gmra.mxu0 %v8672
    %v8956 = vpop.f32.mrf.mxu0
    %v8957 = vadd.f32 0.0, %v8956
    %v8958 = vpop.f32.mrf.mxu0
    %v8959 = vadd.f32 0.0, %v8958
    %v8960 = vpop.f32.mrf.mxu0
    %v8961 = vpop.f32.mrf.mxu0
    %8962 = vdwg.mxu0
    %8963 = vmatprep.subr.bf16.mxu0 %v4072
    %8964 = vmatpush1.bf16.msra.mxu0 %v4071
    %8965 = vmatprep.subr.bf16.mxu0 %v4056
    %8966 = vmatpush1.bf16.msra.mxu0 %v4055
    %8967 = vmatprep.subr.bf16.mxu0 %v4040
    %8968 = vmatpush1.bf16.msra.mxu0 %v4039
    %8969 = vmatprep.subr.bf16.mxu0 %v4024
    %8970 = vmatpush1.bf16.msra.mxu0 %v4023
    %8971 = vmatprep.subr.bf16.mxu0 %v4008
    %8972 = vmatpush1.bf16.msra.mxu0 %v4007
    %8973 = vmatprep.subr.bf16.mxu0 %v3992
    %8974 = vmatpush1.bf16.msra.mxu0 %v3991
    %8975 = vmatprep.subr.bf16.mxu0 %v3976
    %8976 = vmatpush1.bf16.msra.mxu0 %v3975
    %8977 = vmatprep.subr.bf16.mxu0 %v3960
    %8978 = vmatpush1.bf16.msra.mxu0 %v3959
    %8979 = vmatprep.subr.bf16.mxu0 %v4200
    %8980 = vmatpush2.bf16.msra.mxu0 %v4199
    %8981 = vmatprep.subr.bf16.mxu0 %v4184
    %8982 = vmatpush2.bf16.msra.mxu0 %v4183
    %8983 = vmatprep.subr.bf16.mxu0 %v4168
    %8984 = vmatpush2.bf16.msra.mxu0 %v4167
    %8985 = vmatprep.subr.bf16.mxu0 %v4152
    %8986 = vmatpush2.bf16.msra.mxu0 %v4151
    %8987 = vmatprep.subr.bf16.mxu0 %v4136
    %8988 = vmatpush2.bf16.msra.mxu0 %v4135
    %8989 = vmatprep.subr.bf16.mxu0 %v4120
    %8990 = vmatpush2.bf16.msra.mxu0 %v4119
    %8991 = vmatprep.subr.bf16.mxu0 %v4104
    %8992 = vmatpush2.bf16.msra.mxu0 %v4103
    %8993 = vmatprep.subr.bf16.mxu0 %v4088
    %8994 = vmatpush2.bf16.msra.mxu0 %v4087
    %8995 = vmatprep.mubr.bf16.mxu0 %v8675
    %8996 = vmatmul.mubr.bf16.gmra.mxu0 %v8674
    %v8997 = vpop.f32.mrf.mxu0
    %v8998 = vadd.f32 %v8957, %v8997
    %v8999 = vpop.f32.mrf.mxu0
    %v9000 = vadd.f32 %v8959, %v8999
    %v9001 = vpop.f32.mrf.mxu0
    %v9002 = vpop.f32.mrf.mxu0
    %9003 = vdwg.mxu0
    %9004 = vmatprep.subr.bf16.mxu0 %v3818
    %9005 = vmatpush1.bf16.msra.mxu0 %v3817
    %9006 = vmatprep.subr.bf16.mxu0 %v3802
    %9007 = vmatpush1.bf16.msra.mxu0 %v3801
    %9008 = vmatprep.subr.bf16.mxu0 %v3786
    %9009 = vmatpush1.bf16.msra.mxu0 %v3785
    %9010 = vmatprep.subr.bf16.mxu0 %v3770
    %9011 = vmatpush1.bf16.msra.mxu0 %v3769
    %9012 = vmatprep.subr.bf16.mxu0 %v3754
    %9013 = vmatpush1.bf16.msra.mxu0 %v3753
    %9014 = vmatprep.subr.bf16.mxu0 %v3738
    %9015 = vmatpush1.bf16.msra.mxu0 %v3737
    %9016 = vmatprep.subr.bf16.mxu0 %v3722
    %9017 = vmatpush1.bf16.msra.mxu0 %v3721
    %9018 = vmatprep.subr.bf16.mxu0 %v3706
    %9019 = vmatpush1.bf16.msra.mxu0 %v3705
    %9020 = vmatprep.subr.bf16.mxu0 %v3946
    %9021 = vmatpush2.bf16.msra.mxu0 %v3945
    %9022 = vmatprep.subr.bf16.mxu0 %v3930
    %9023 = vmatpush2.bf16.msra.mxu0 %v3929
    %9024 = vmatprep.subr.bf16.mxu0 %v3914
    %9025 = vmatpush2.bf16.msra.mxu0 %v3913
    %9026 = vmatprep.subr.bf16.mxu0 %v3898
    %9027 = vmatpush2.bf16.msra.mxu0 %v3897
    %9028 = vmatprep.subr.bf16.mxu0 %v3882
    %9029 = vmatpush2.bf16.msra.mxu0 %v3881
    %9030 = vmatprep.subr.bf16.mxu0 %v3866
    %9031 = vmatpush2.bf16.msra.mxu0 %v3865
    %9032 = vmatprep.subr.bf16.mxu0 %v3850
    %9033 = vmatpush2.bf16.msra.mxu0 %v3849
    %9034 = vmatprep.subr.bf16.mxu0 %v3834
    %9035 = vmatpush2.bf16.msra.mxu0 %v3833
    %9036 = vmatprep.mubr.bf16.mxu0 %v8673
    %9037 = vmatmul.mubr.bf16.gmra.mxu0 %v8672
    %v9038 = vpop.f32.mrf.mxu0
    %v9039 = vadd.f32 0.0, %v9038
    %v9040 = vpop.f32.mrf.mxu0
    %v9041 = vadd.f32 0.0, %v9040
    %v9042 = vpop.f32.mrf.mxu0
    %v9043 = vpop.f32.mrf.mxu0
    %9044 = vdwg.mxu0
    %9045 = vmatprep.subr.bf16.mxu0 %v4074
    %9046 = vmatpush1.bf16.msra.mxu0 %v4073
    %9047 = vmatprep.subr.bf16.mxu0 %v4058
    %9048 = vmatpush1.bf16.msra.mxu0 %v4057
    %9049 = vmatprep.subr.bf16.mxu0 %v4042
    %9050 = vmatpush1.bf16.msra.mxu0 %v4041
    %9051 = vmatprep.subr.bf16.mxu0 %v4026
    %9052 = vmatpush1.bf16.msra.mxu0 %v4025
    %9053 = vmatprep.subr.bf16.mxu0 %v4010
    %9054 = vmatpush1.bf16.msra.mxu0 %v4009
    %9055 = vmatprep.subr.bf16.mxu0 %v3994
    %9056 = vmatpush1.bf16.msra.mxu0 %v3993
    %9057 = vmatprep.subr.bf16.mxu0 %v3978
    %9058 = vmatpush1.bf16.msra.mxu0 %v3977
    %9059 = vmatprep.subr.bf16.mxu0 %v3962
    %9060 = vmatpush1.bf16.msra.mxu0 %v3961
    %9061 = vmatprep.subr.bf16.mxu0 %v4202
    %9062 = vmatpush2.bf16.msra.mxu0 %v4201
    %9063 = vmatprep.subr.bf16.mxu0 %v4186
    %9064 = vmatpush2.bf16.msra.mxu0 %v4185
    %9065 = vmatprep.subr.bf16.mxu0 %v4170
    %9066 = vmatpush2.bf16.msra.mxu0 %v4169
    %9067 = vmatprep.subr.bf16.mxu0 %v4154
    %9068 = vmatpush2.bf16.msra.mxu0 %v4153
    %9069 = vmatprep.subr.bf16.mxu0 %v4138
    %9070 = vmatpush2.bf16.msra.mxu0 %v4137
    %9071 = vmatprep.subr.bf16.mxu0 %v4122
    %9072 = vmatpush2.bf16.msra.mxu0 %v4121
    %9073 = vmatprep.subr.bf16.mxu0 %v4106
    %9074 = vmatpush2.bf16.msra.mxu0 %v4105
    %9075 = vmatprep.subr.bf16.mxu0 %v4090
    %9076 = vmatpush2.bf16.msra.mxu0 %v4089
    %9077 = vmatprep.mubr.bf16.mxu0 %v8675
    %9078 = vmatmul.mubr.bf16.gmra.mxu0 %v8674
    %v9079 = vpop.f32.mrf.mxu0
    %v9080 = vadd.f32 %v9039, %v9079
    %v9081 = vpop.f32.mrf.mxu0
    %v9082 = vadd.f32 %v9041, %v9081
    %v9083 = vpop.f32.mrf.mxu0
    %v9084 = vpop.f32.mrf.mxu0
    %9085 = vdwg.mxu0
    %9086 = vmatprep.subr.bf16.mxu0 %v3820
    %9087 = vmatpush1.bf16.msra.mxu0 %v3819
    %9088 = vmatprep.subr.bf16.mxu0 %v3804
    %9089 = vmatpush1.bf16.msra.mxu0 %v3803
    %9090 = vmatprep.subr.bf16.mxu0 %v3788
    %9091 = vmatpush1.bf16.msra.mxu0 %v3787
    %9092 = vmatprep.subr.bf16.mxu0 %v3772
    %9093 = vmatpush1.bf16.msra.mxu0 %v3771
    %9094 = vmatprep.subr.bf16.mxu0 %v3756
    %9095 = vmatpush1.bf16.msra.mxu0 %v3755
    %9096 = vmatprep.subr.bf16.mxu0 %v3740
    %9097 = vmatpush1.bf16.msra.mxu0 %v3739
    %9098 = vmatprep.subr.bf16.mxu0 %v3724
    %9099 = vmatpush1.bf16.msra.mxu0 %v3723
    %9100 = vmatprep.subr.bf16.mxu0 %v3708
    %9101 = vmatpush1.bf16.msra.mxu0 %v3707
    %9102 = vmatprep.subr.bf16.mxu0 %v3948
    %9103 = vmatpush2.bf16.msra.mxu0 %v3947
    %9104 = vmatprep.subr.bf16.mxu0 %v3932
    %9105 = vmatpush2.bf16.msra.mxu0 %v3931
    %9106 = vmatprep.subr.bf16.mxu0 %v3916
    %9107 = vmatpush2.bf16.msra.mxu0 %v3915
    %9108 = vmatprep.subr.bf16.mxu0 %v3900
    %9109 = vmatpush2.bf16.msra.mxu0 %v3899
    %9110 = vmatprep.subr.bf16.mxu0 %v3884
    %9111 = vmatpush2.bf16.msra.mxu0 %v3883
    %9112 = vmatprep.subr.bf16.mxu0 %v3868
    %9113 = vmatpush2.bf16.msra.mxu0 %v3867
    %9114 = vmatprep.subr.bf16.mxu0 %v3852
    %9115 = vmatpush2.bf16.msra.mxu0 %v3851
    %9116 = vmatprep.subr.bf16.mxu0 %v3836
    %9117 = vmatpush2.bf16.msra.mxu0 %v3835
    %9118 = vmatprep.mubr.bf16.mxu0 %v8673
    %9119 = vmatmul.mubr.bf16.gmra.mxu0 %v8672
    %v9120 = vpop.f32.mrf.mxu0
    %v9121 = vadd.f32 0.0, %v9120
    %v9122 = vpop.f32.mrf.mxu0
    %v9123 = vadd.f32 0.0, %v9122
    %v9124 = vpop.f32.mrf.mxu0
    %v9125 = vpop.f32.mrf.mxu0
    %9126 = vdwg.mxu0
    %9127 = vmatprep.subr.bf16.mxu0 %v4076
    %9128 = vmatpush1.bf16.msra.mxu0 %v4075
    %9129 = vmatprep.subr.bf16.mxu0 %v4060
    %9130 = vmatpush1.bf16.msra.mxu0 %v4059
    %9131 = vmatprep.subr.bf16.mxu0 %v4044
    %9132 = vmatpush1.bf16.msra.mxu0 %v4043
    %9133 = vmatprep.subr.bf16.mxu0 %v4028
    %9134 = vmatpush1.bf16.msra.mxu0 %v4027
    %9135 = vmatprep.subr.bf16.mxu0 %v4012
    %9136 = vmatpush1.bf16.msra.mxu0 %v4011
    %9137 = vmatprep.subr.bf16.mxu0 %v3996
    %9138 = vmatpush1.bf16.msra.mxu0 %v3995
    %9139 = vmatprep.subr.bf16.mxu0 %v3980
    %9140 = vmatpush1.bf16.msra.mxu0 %v3979
    %9141 = vmatprep.subr.bf16.mxu0 %v3964
    %9142 = vmatpush1.bf16.msra.mxu0 %v3963
    %9143 = vmatprep.subr.bf16.mxu0 %v4204
    %9144 = vmatpush2.bf16.msra.mxu0 %v4203
    %9145 = vmatprep.subr.bf16.mxu0 %v4188
    %9146 = vmatpush2.bf16.msra.mxu0 %v4187
    %9147 = vmatprep.subr.bf16.mxu0 %v4172
    %9148 = vmatpush2.bf16.msra.mxu0 %v4171
    %9149 = vmatprep.subr.bf16.mxu0 %v4156
    %9150 = vmatpush2.bf16.msra.mxu0 %v4155
    %9151 = vmatprep.subr.bf16.mxu0 %v4140
    %9152 = vmatpush2.bf16.msra.mxu0 %v4139
    %9153 = vmatprep.subr.bf16.mxu0 %v4124
    %9154 = vmatpush2.bf16.msra.mxu0 %v4123
    %9155 = vmatprep.subr.bf16.mxu0 %v4108
    %9156 = vmatpush2.bf16.msra.mxu0 %v4107
    %9157 = vmatprep.subr.bf16.mxu0 %v4092
    %9158 = vmatpush2.bf16.msra.mxu0 %v4091
    %9159 = vmatprep.mubr.bf16.mxu0 %v8675
    %9160 = vmatmul.mubr.bf16.gmra.mxu0 %v8674
    %v9161 = vpop.f32.mrf.mxu0
    %v9162 = vadd.f32 %v9121, %v9161
    %v9163 = vpop.f32.mrf.mxu0
    %v9164 = vadd.f32 %v9123, %v9163
    %v9165 = vpop.f32.mrf.mxu0
    %v9166 = vpop.f32.mrf.mxu0
    %9167 = vdwg.mxu0
    %9168 = vmatprep.subr.bf16.mxu0 %v3822
    %9169 = vmatpush1.bf16.msra.mxu0 %v3821
    %9170 = vmatprep.subr.bf16.mxu0 %v3806
    %9171 = vmatpush1.bf16.msra.mxu0 %v3805
    %9172 = vmatprep.subr.bf16.mxu0 %v3790
    %9173 = vmatpush1.bf16.msra.mxu0 %v3789
    %9174 = vmatprep.subr.bf16.mxu0 %v3774
    %9175 = vmatpush1.bf16.msra.mxu0 %v3773
    %9176 = vmatprep.subr.bf16.mxu0 %v3758
    %9177 = vmatpush1.bf16.msra.mxu0 %v3757
    %9178 = vmatprep.subr.bf16.mxu0 %v3742
    %9179 = vmatpush1.bf16.msra.mxu0 %v3741
    %9180 = vmatprep.subr.bf16.mxu0 %v3726
    %9181 = vmatpush1.bf16.msra.mxu0 %v3725
    %9182 = vmatprep.subr.bf16.mxu0 %v3710
    %9183 = vmatpush1.bf16.msra.mxu0 %v3709
    %9184 = vmatprep.subr.bf16.mxu0 %v3950
    %9185 = vmatpush2.bf16.msra.mxu0 %v3949
    %9186 = vmatprep.subr.bf16.mxu0 %v3934
    %9187 = vmatpush2.bf16.msra.mxu0 %v3933
    %9188 = vmatprep.subr.bf16.mxu0 %v3918
    %9189 = vmatpush2.bf16.msra.mxu0 %v3917
    %9190 = vmatprep.subr.bf16.mxu0 %v3902
    %9191 = vmatpush2.bf16.msra.mxu0 %v3901
    %9192 = vmatprep.subr.bf16.mxu0 %v3886
    %9193 = vmatpush2.bf16.msra.mxu0 %v3885
    %9194 = vmatprep.subr.bf16.mxu0 %v3870
    %9195 = vmatpush2.bf16.msra.mxu0 %v3869
    %9196 = vmatprep.subr.bf16.mxu0 %v3854
    %9197 = vmatpush2.bf16.msra.mxu0 %v3853
    %9198 = vmatprep.subr.bf16.mxu0 %v3838
    %9199 = vmatpush2.bf16.msra.mxu0 %v3837
    %9200 = vmatprep.mubr.bf16.mxu0 %v8673
    %9201 = vmatmul.mubr.bf16.gmra.mxu0 %v8672
    %v9202 = vpop.f32.mrf.mxu0
    %v9203 = vadd.f32 0.0, %v9202
    %v9204 = vpop.f32.mrf.mxu0
    %v9205 = vadd.f32 0.0, %v9204
    %v9206 = vpop.f32.mrf.mxu0
    %v9207 = vpop.f32.mrf.mxu0
    %9208 = vdwg.mxu0
    %9209 = vmatprep.subr.bf16.mxu0 %v4078
    %9210 = vmatpush1.bf16.msra.mxu0 %v4077
    %9211 = vmatprep.subr.bf16.mxu0 %v4062
    %9212 = vmatpush1.bf16.msra.mxu0 %v4061
    %9213 = vmatprep.subr.bf16.mxu0 %v4046
    %9214 = vmatpush1.bf16.msra.mxu0 %v4045
    %9215 = vmatprep.subr.bf16.mxu0 %v4030
    %9216 = vmatpush1.bf16.msra.mxu0 %v4029
    %9217 = vmatprep.subr.bf16.mxu0 %v4014
    %9218 = vmatpush1.bf16.msra.mxu0 %v4013
    %9219 = vmatprep.subr.bf16.mxu0 %v3998
    %9220 = vmatpush1.bf16.msra.mxu0 %v3997
    %9221 = vmatprep.subr.bf16.mxu0 %v3982
    %9222 = vmatpush1.bf16.msra.mxu0 %v3981
    %9223 = vmatprep.subr.bf16.mxu0 %v3966
    %9224 = vmatpush1.bf16.msra.mxu0 %v3965
    %9225 = vmatprep.subr.bf16.mxu0 %v4206
    %9226 = vmatpush2.bf16.msra.mxu0 %v4205
    %9227 = vmatprep.subr.bf16.mxu0 %v4190
    %9228 = vmatpush2.bf16.msra.mxu0 %v4189
    %9229 = vmatprep.subr.bf16.mxu0 %v4174
    %9230 = vmatpush2.bf16.msra.mxu0 %v4173
    %9231 = vmatprep.subr.bf16.mxu0 %v4158
    %9232 = vmatpush2.bf16.msra.mxu0 %v4157
    %9233 = vmatprep.subr.bf16.mxu0 %v4142
    %9234 = vmatpush2.bf16.msra.mxu0 %v4141
    %9235 = vmatprep.subr.bf16.mxu0 %v4126
    %9236 = vmatpush2.bf16.msra.mxu0 %v4125
    %9237 = vmatprep.subr.bf16.mxu0 %v4110
    %9238 = vmatpush2.bf16.msra.mxu0 %v4109
    %9239 = vmatprep.subr.bf16.mxu0 %v4094
    %9240 = vmatpush2.bf16.msra.mxu0 %v4093
    %9241 = vmatprep.mubr.bf16.mxu0 %v8675
    %9242 = vmatmul.mubr.bf16.gmra.mxu0 %v8674
    %v9243 = vpop.f32.mrf.mxu0
    %v9244 = vadd.f32 %v9203, %v9243
    %v9245 = vpop.f32.mrf.mxu0
    %v9246 = vadd.f32 %v9205, %v9245
    %v9247 = vpop.f32.mrf.mxu0
    %v9248 = vpop.f32.mrf.mxu0
    %9249 = vdwg.mxu0
    %9250 = vmatprep.subr.bf16.mxu0 %v3824
    %9251 = vmatpush1.bf16.msra.mxu0 %v3823
    %9252 = vmatprep.subr.bf16.mxu0 %v3808
    %9253 = vmatpush1.bf16.msra.mxu0 %v3807
    %9254 = vmatprep.subr.bf16.mxu0 %v3792
    %9255 = vmatpush1.bf16.msra.mxu0 %v3791
    %9256 = vmatprep.subr.bf16.mxu0 %v3776
    %9257 = vmatpush1.bf16.msra.mxu0 %v3775
    %9258 = vmatprep.subr.bf16.mxu0 %v3760
    %9259 = vmatpush1.bf16.msra.mxu0 %v3759
    %9260 = vmatprep.subr.bf16.mxu0 %v3744
    %9261 = vmatpush1.bf16.msra.mxu0 %v3743
    %9262 = vmatprep.subr.bf16.mxu0 %v3728
    %9263 = vmatpush1.bf16.msra.mxu0 %v3727
    %9264 = vmatprep.subr.bf16.mxu0 %v3712
    %9265 = vmatpush1.bf16.msra.mxu0 %v3711
    %9266 = vmatprep.subr.bf16.mxu0 %v3952
    %9267 = vmatpush2.bf16.msra.mxu0 %v3951
    %9268 = vmatprep.subr.bf16.mxu0 %v3936
    %9269 = vmatpush2.bf16.msra.mxu0 %v3935
    %9270 = vmatprep.subr.bf16.mxu0 %v3920
    %9271 = vmatpush2.bf16.msra.mxu0 %v3919
    %9272 = vmatprep.subr.bf16.mxu0 %v3904
    %9273 = vmatpush2.bf16.msra.mxu0 %v3903
    %9274 = vmatprep.subr.bf16.mxu0 %v3888
    %9275 = vmatpush2.bf16.msra.mxu0 %v3887
    %9276 = vmatprep.subr.bf16.mxu0 %v3872
    %9277 = vmatpush2.bf16.msra.mxu0 %v3871
    %9278 = vmatprep.subr.bf16.mxu0 %v3856
    %9279 = vmatpush2.bf16.msra.mxu0 %v3855
    %9280 = vmatprep.subr.bf16.mxu0 %v3840
    %9281 = vmatpush2.bf16.msra.mxu0 %v3839
    %9282 = vmatprep.mubr.bf16.mxu0 %v8673
    %9283 = vmatmul.mubr.bf16.gmra.mxu0 %v8672
    %v9284 = vpop.f32.mrf.mxu0
    %v9285 = vadd.f32 0.0, %v9284
    %v9286 = vpop.f32.mrf.mxu0
    %v9287 = vadd.f32 0.0, %v9286
    %v9288 = vpop.f32.mrf.mxu0
    %v9289 = vpop.f32.mrf.mxu0
    %9290 = vdwg.mxu0
    %9291 = vmatprep.subr.bf16.mxu0 %v4080
    %9292 = vmatpush1.bf16.msra.mxu0 %v4079
    %9293 = vmatprep.subr.bf16.mxu0 %v4064
    %9294 = vmatpush1.bf16.msra.mxu0 %v4063
    %9295 = vmatprep.subr.bf16.mxu0 %v4048
    %9296 = vmatpush1.bf16.msra.mxu0 %v4047
    %9297 = vmatprep.subr.bf16.mxu0 %v4032
    %9298 = vmatpush1.bf16.msra.mxu0 %v4031
    %9299 = vmatprep.subr.bf16.mxu0 %v4016
    %9300 = vmatpush1.bf16.msra.mxu0 %v4015
    %9301 = vmatprep.subr.bf16.mxu0 %v4000
    %9302 = vmatpush1.bf16.msra.mxu0 %v3999
    %9303 = vmatprep.subr.bf16.mxu0 %v3984
    %9304 = vmatpush1.bf16.msra.mxu0 %v3983
    %9305 = vmatprep.subr.bf16.mxu0 %v3968
    %9306 = vmatpush1.bf16.msra.mxu0 %v3967
    %9307 = vmatprep.subr.bf16.mxu0 %v4208
    %9308 = vmatpush2.bf16.msra.mxu0 %v4207
    %9309 = vmatprep.subr.bf16.mxu0 %v4192
    %9310 = vmatpush2.bf16.msra.mxu0 %v4191
    %9311 = vmatprep.subr.bf16.mxu0 %v4176
    %9312 = vmatpush2.bf16.msra.mxu0 %v4175
    %9313 = vmatprep.subr.bf16.mxu0 %v4160
    %9314 = vmatpush2.bf16.msra.mxu0 %v4159
    %9315 = vmatprep.subr.bf16.mxu0 %v4144
    %9316 = vmatpush2.bf16.msra.mxu0 %v4143
    %9317 = vmatprep.subr.bf16.mxu0 %v4128
    %9318 = vmatpush2.bf16.msra.mxu0 %v4127
    %9319 = vmatprep.subr.bf16.mxu0 %v4112
    %9320 = vmatpush2.bf16.msra.mxu0 %v4111
    %9321 = vmatprep.subr.bf16.mxu0 %v4096
    %9322 = vmatpush2.bf16.msra.mxu0 %v4095
    %9323 = vmatprep.mubr.bf16.mxu0 %v8675
    %9324 = vmatmul.mubr.bf16.gmra.mxu0 %v8674
    %v9325 = vpop.f32.mrf.mxu0
    %v9326 = vadd.f32 %v9285, %v9325
    %v9327 = vpop.f32.mrf.mxu0
    %v9328 = vadd.f32 %v9287, %v9327
    %v9329 = vpop.f32.mrf.mxu0
    %v9330 = vpop.f32.mrf.mxu0
    %9331 = vdwg.mxu0
    %v9332 = vadd.f32 %v8656, %v8752
    %v9333 = vadd.f32 %v8657, %v8754
    %v9334 = vadd.f32 %v8658, %v8834
    %v9335 = vadd.f32 %v8659, %v8836
    %v9336 = vadd.f32 %v8660, %v8916
    %v9337 = vadd.f32 %v8661, %v8918
    %v9338 = vadd.f32 %v8662, %v8998
    %v9339 = vadd.f32 %v8663, %v9000
    %v9340 = vadd.f32 %v8664, %v9080
    %v9341 = vadd.f32 %v8665, %v9082
    %v9342 = vadd.f32 %v8666, %v9162
    %v9343 = vadd.f32 %v8667, %v9164
    %v9344 = vadd.f32 %v8668, %v9244
    %v9345 = vadd.f32 %v8669, %v9246
    %v9346 = vadd.f32 %v8670, %v9326
    %v9347 = vadd.f32 %v8671, %v9328
    %v9348 = vxor.u32 %v9332, 2147483648
    %v9349 = vxor.u32 %v9333, 2147483648
    %v9350 = vxor.u32 %v9334, 2147483648
    %v9351 = vxor.u32 %v9335, 2147483648
    %v9352 = vmul.f32 %v9348, 1.442695
    %v9353 = vpow.pop %v9352
    %v9354 = vmul.f32 %v9349, 1.442695
    %v9355 = vpow.pop %v9354
    %v9356 = vmul.f32 %v9350, 1.442695
    %v9357 = vpow.pop %v9356
    %v9358 = vmul.f32 %v9351, 1.442695
    %v9359 = vpow.pop %v9358
    %v9360 = vadd.f32 %v9353, 1.0
    %v9361 = vadd.f32 %v9355, 1.0
    %v9362 = vadd.f32 %v9357, 1.0
    %v9363 = vadd.f32 %v9359, 1.0
    %v9364 = vrcp.pop %v9360
    %v9365 = vmul.f32 1.0, %v9364
    %v9366 = vrcp.pop %v9361
    %v9367 = vmul.f32 1.0, %v9366
    %v9368 = vrcp.pop %v9362
    %v9369 = vmul.f32 1.0, %v9368
    %v9370 = vrcp.pop %v9363
    %v9371 = vmul.f32 1.0, %v9370
    %v9372 = vxor.u32 %v9336, 2147483648
    %v9373 = vxor.u32 %v9337, 2147483648
    %v9374 = vxor.u32 %v9338, 2147483648
    %v9375 = vxor.u32 %v9339, 2147483648
    %v9376 = vmul.f32 %v9372, 1.442695
    %v9377 = vpow.pop %v9376
    %v9378 = vmul.f32 %v9373, 1.442695
    %v9379 = vpow.pop %v9378
    %v9380 = vmul.f32 %v9374, 1.442695
    %v9381 = vpow.pop %v9380
    %v9382 = vmul.f32 %v9375, 1.442695
    %v9383 = vpow.pop %v9382
    %v9384 = vadd.f32 %v9377, 1.0
    %v9385 = vadd.f32 %v9379, 1.0
    %v9386 = vadd.f32 %v9381, 1.0
    %v9387 = vadd.f32 %v9383, 1.0
    %v9388 = vrcp.pop %v9384
    %v9389 = vmul.f32 1.0, %v9388
    %v9390 = vrcp.pop %v9385
    %v9391 = vmul.f32 1.0, %v9390
    %v9392 = vrcp.pop %v9386
    %v9393 = vmul.f32 1.0, %v9392
    %v9394 = vrcp.pop %v9387
    %v9395 = vmul.f32 1.0, %v9394
    %v9396 = vtanh.pop %v9340
    %v9397 = vtanh.pop %v9341
    %v9398 = vtanh.pop %v9342
    %v9399 = vtanh.pop %v9343
    %v9400 = vxor.u32 %v9344, 2147483648
    %v9401 = vxor.u32 %v9345, 2147483648
    %v9402 = vxor.u32 %v9346, 2147483648
    %v9403 = vxor.u32 %v9347, 2147483648
    %v9404 = vmul.f32 %v9400, 1.442695
    %v9405 = vpow.pop %v9404
    %v9406 = vmul.f32 %v9401, 1.442695
    %v9407 = vpow.pop %v9406
    %v9408 = vmul.f32 %v9402, 1.442695
    %v9409 = vpow.pop %v9408
    %v9410 = vmul.f32 %v9403, 1.442695
    %v9411 = vpow.pop %v9410
    %v9412 = vadd.f32 %v9405, 1.0
    %v9413 = vadd.f32 %v9407, 1.0
    %v9414 = vadd.f32 %v9409, 1.0
    %v9415 = vadd.f32 %v9411, 1.0
    %v9416 = vrcp.pop %v9412
    %v9417 = vmul.f32 1.0, %v9416
    %v9418 = vrcp.pop %v9413
    %v9419 = vmul.f32 1.0, %v9418
    %v9420 = vrcp.pop %v9414
    %v9421 = vmul.f32 1.0, %v9420
    %v9422 = vrcp.pop %v9415
    %v9423 = vmul.f32 1.0, %v9422
    %v9424 = vmul.f32 %v9389, %v8641
    %v9425 = vmul.f32 %v9391, %v8642
    %v9426 = vmul.f32 %v9393, %v8643
    %v9427 = vmul.f32 %v9395, %v8644
    %v9428 = vmul.f32 %v9365, %v9396
    %v9429 = vmul.f32 %v9367, %v9397
    %v9430 = vmul.f32 %v9369, %v9398
    %v9431 = vmul.f32 %v9371, %v9399
    %v9432 = vadd.f32 %v9424, %v9428
    %v9433 = vadd.f32 %v9425, %v9429
    %v9434 = vadd.f32 %v9426, %v9430
    %v9435 = vadd.f32 %v9427, %v9431
    %v9436 = vtanh.pop %v9432
    %v9437 = vtanh.pop %v9433
    %v9438 = vtanh.pop %v9434
    %v9439 = vtanh.pop %v9435
    %v9440 = vmul.f32 %v9417, %v9436
    %v9441 = vmul.f32 %v9419, %v9437
    %v9442 = vmul.f32 %v9421, %v9438
    %v9443 = vmul.f32 %v9423, %v9439
    %s9444 = smul.u32 6, 16
    %s9445 = smul.addr %s9444, 8
    %s9446 = scalar_lea.vmem [#allocation2], %s9445
    %v9447 = vld [vmem:[%s9446] sm:$0xff]
    %v9448 = vld [vmem:[%s9446 + $0x8] sm:$0xff]
    %v9449 = vld [vmem:[%s9446 + $0x10] sm:$0xff]
    %v9450 = vld [vmem:[%s9446 + $0x18] sm:$0xff]
    %v9451 = vld [vmem:[%s9446 + $0x20] sm:$0xff]
    %v9452 = vld [vmem:[%s9446 + $0x28] sm:$0xff]
    %v9453 = vld [vmem:[%s9446 + $0x30] sm:$0xff]
    %v9454 = vld [vmem:[%s9446 + $0x38] sm:$0xff]
    %v9455 = vld [vmem:[%s9446 + $0x40] sm:$0xff]
    %v9456 = vld [vmem:[%s9446 + $0x48] sm:$0xff]
    %v9457 = vld [vmem:[%s9446 + $0x50] sm:$0xff]
    %v9458 = vld [vmem:[%s9446 + $0x58] sm:$0xff]
    %v9459 = vld [vmem:[%s9446 + $0x60] sm:$0xff]
    %v9460 = vld [vmem:[%s9446 + $0x68] sm:$0xff]
    %v9461 = vld [vmem:[%s9446 + $0x70] sm:$0xff]
    %v9462 = vld [vmem:[%s9446 + $0x78] sm:$0xff]
    %v9463 = vpack.c.bf16 %v9440, %v9440
    %v9464 = vpack.c.bf16 %v9441, %v9441
    %v9465 = vpack.c.bf16 %v9442, %v9442
    %v9466 = vpack.c.bf16 %v9443, %v9443
    %9467 = vmatprep.subr.bf16.mxu0 %v3810
    %9468 = vmatpush1.bf16.msra.mxu0 %v3809
    %9469 = vmatprep.subr.bf16.mxu0 %v3794
    %9470 = vmatpush1.bf16.msra.mxu0 %v3793
    %9471 = vmatprep.subr.bf16.mxu0 %v3778
    %9472 = vmatpush1.bf16.msra.mxu0 %v3777
    %9473 = vmatprep.subr.bf16.mxu0 %v3762
    %9474 = vmatpush1.bf16.msra.mxu0 %v3761
    %9475 = vmatprep.subr.bf16.mxu0 %v3746
    %9476 = vmatpush1.bf16.msra.mxu0 %v3745
    %9477 = vmatprep.subr.bf16.mxu0 %v3730
    %9478 = vmatpush1.bf16.msra.mxu0 %v3729
    %9479 = vmatprep.subr.bf16.mxu0 %v3714
    %9480 = vmatpush1.bf16.msra.mxu0 %v3713
    %9481 = vmatprep.subr.bf16.mxu0 %v3698
    %9482 = vmatpush1.bf16.msra.mxu0 %v3697
    %9483 = vmatprep.subr.bf16.mxu0 %v3938
    %9484 = vmatpush2.bf16.msra.mxu0 %v3937
    %9485 = vmatprep.subr.bf16.mxu0 %v3922
    %9486 = vmatpush2.bf16.msra.mxu0 %v3921
    %9487 = vmatprep.subr.bf16.mxu0 %v3906
    %9488 = vmatpush2.bf16.msra.mxu0 %v3905
    %9489 = vmatprep.subr.bf16.mxu0 %v3890
    %9490 = vmatpush2.bf16.msra.mxu0 %v3889
    %9491 = vmatprep.subr.bf16.mxu0 %v3874
    %9492 = vmatpush2.bf16.msra.mxu0 %v3873
    %9493 = vmatprep.subr.bf16.mxu0 %v3858
    %9494 = vmatpush2.bf16.msra.mxu0 %v3857
    %9495 = vmatprep.subr.bf16.mxu0 %v3842
    %9496 = vmatpush2.bf16.msra.mxu0 %v3841
    %9497 = vmatprep.subr.bf16.mxu0 %v3826
    %9498 = vmatpush2.bf16.msra.mxu0 %v3825
    %9499 = vmatprep.mubr.bf16.mxu0 %v9464
    %9500 = vmatmul.mubr.bf16.gmra.mxu0 %v9463
    %v9501 = vpop.f32.mrf.mxu0
    %v9502 = vadd.f32 0.0, %v9501
    %v9503 = vpop.f32.mrf.mxu0
    %v9504 = vadd.f32 0.0, %v9503
    %v9505 = vpop.f32.mrf.mxu0
    %v9506 = vpop.f32.mrf.mxu0
    %9507 = vdwg.mxu0
    %9508 = vmatprep.subr.bf16.mxu0 %v4066
    %9509 = vmatpush1.bf16.msra.mxu0 %v4065
    %9510 = vmatprep.subr.bf16.mxu0 %v4050
    %9511 = vmatpush1.bf16.msra.mxu0 %v4049
    %9512 = vmatprep.subr.bf16.mxu0 %v4034
    %9513 = vmatpush1.bf16.msra.mxu0 %v4033
    %9514 = vmatprep.subr.bf16.mxu0 %v4018
    %9515 = vmatpush1.bf16.msra.mxu0 %v4017
    %9516 = vmatprep.subr.bf16.mxu0 %v4002
    %9517 = vmatpush1.bf16.msra.mxu0 %v4001
    %9518 = vmatprep.subr.bf16.mxu0 %v3986
    %9519 = vmatpush1.bf16.msra.mxu0 %v3985
    %9520 = vmatprep.subr.bf16.mxu0 %v3970
    %9521 = vmatpush1.bf16.msra.mxu0 %v3969
    %9522 = vmatprep.subr.bf16.mxu0 %v3954
    %9523 = vmatpush1.bf16.msra.mxu0 %v3953
    %9524 = vmatprep.subr.bf16.mxu0 %v4194
    %9525 = vmatpush2.bf16.msra.mxu0 %v4193
    %9526 = vmatprep.subr.bf16.mxu0 %v4178
    %9527 = vmatpush2.bf16.msra.mxu0 %v4177
    %9528 = vmatprep.subr.bf16.mxu0 %v4162
    %9529 = vmatpush2.bf16.msra.mxu0 %v4161
    %9530 = vmatprep.subr.bf16.mxu0 %v4146
    %9531 = vmatpush2.bf16.msra.mxu0 %v4145
    %9532 = vmatprep.subr.bf16.mxu0 %v4130
    %9533 = vmatpush2.bf16.msra.mxu0 %v4129
    %9534 = vmatprep.subr.bf16.mxu0 %v4114
    %9535 = vmatpush2.bf16.msra.mxu0 %v4113
    %9536 = vmatprep.subr.bf16.mxu0 %v4098
    %9537 = vmatpush2.bf16.msra.mxu0 %v4097
    %9538 = vmatprep.subr.bf16.mxu0 %v4082
    %9539 = vmatpush2.bf16.msra.mxu0 %v4081
    %9540 = vmatprep.mubr.bf16.mxu0 %v9466
    %9541 = vmatmul.mubr.bf16.gmra.mxu0 %v9465
    %v9542 = vpop.f32.mrf.mxu0
    %v9543 = vadd.f32 %v9502, %v9542
    %v9544 = vpop.f32.mrf.mxu0
    %v9545 = vadd.f32 %v9504, %v9544
    %v9546 = vpop.f32.mrf.mxu0
    %v9547 = vpop.f32.mrf.mxu0
    %9548 = vdwg.mxu0
    %9549 = vmatprep.subr.bf16.mxu0 %v3812
    %9550 = vmatpush1.bf16.msra.mxu0 %v3811
    %9551 = vmatprep.subr.bf16.mxu0 %v3796
    %9552 = vmatpush1.bf16.msra.mxu0 %v3795
    %9553 = vmatprep.subr.bf16.mxu0 %v3780
    %9554 = vmatpush1.bf16.msra.mxu0 %v3779
    %9555 = vmatprep.subr.bf16.mxu0 %v3764
    %9556 = vmatpush1.bf16.msra.mxu0 %v3763
    %9557 = vmatprep.subr.bf16.mxu0 %v3748
    %9558 = vmatpush1.bf16.msra.mxu0 %v3747
    %9559 = vmatprep.subr.bf16.mxu0 %v3732
    %9560 = vmatpush1.bf16.msra.mxu0 %v3731
    %9561 = vmatprep.subr.bf16.mxu0 %v3716
    %9562 = vmatpush1.bf16.msra.mxu0 %v3715
    %9563 = vmatprep.subr.bf16.mxu0 %v3700
    %9564 = vmatpush1.bf16.msra.mxu0 %v3699
    %9565 = vmatprep.subr.bf16.mxu0 %v3940
    %9566 = vmatpush2.bf16.msra.mxu0 %v3939
    %9567 = vmatprep.subr.bf16.mxu0 %v3924
    %9568 = vmatpush2.bf16.msra.mxu0 %v3923
    %9569 = vmatprep.subr.bf16.mxu0 %v3908
    %9570 = vmatpush2.bf16.msra.mxu0 %v3907
    %9571 = vmatprep.subr.bf16.mxu0 %v3892
    %9572 = vmatpush2.bf16.msra.mxu0 %v3891
    %9573 = vmatprep.subr.bf16.mxu0 %v3876
    %9574 = vmatpush2.bf16.msra.mxu0 %v3875
    %9575 = vmatprep.subr.bf16.mxu0 %v3860
    %9576 = vmatpush2.bf16.msra.mxu0 %v3859
    %9577 = vmatprep.subr.bf16.mxu0 %v3844
    %9578 = vmatpush2.bf16.msra.mxu0 %v3843
    %9579 = vmatprep.subr.bf16.mxu0 %v3828
    %9580 = vmatpush2.bf16.msra.mxu0 %v3827
    %9581 = vmatprep.mubr.bf16.mxu0 %v9464
    %9582 = vmatmul.mubr.bf16.gmra.mxu0 %v9463
    %v9583 = vpop.f32.mrf.mxu0
    %v9584 = vadd.f32 0.0, %v9583
    %v9585 = vpop.f32.mrf.mxu0
    %v9586 = vadd.f32 0.0, %v9585
    %v9587 = vpop.f32.mrf.mxu0
    %v9588 = vpop.f32.mrf.mxu0
    %9589 = vdwg.mxu0
    %9590 = vmatprep.subr.bf16.mxu0 %v4068
    %9591 = vmatpush1.bf16.msra.mxu0 %v4067
    %9592 = vmatprep.subr.bf16.mxu0 %v4052
    %9593 = vmatpush1.bf16.msra.mxu0 %v4051
    %9594 = vmatprep.subr.bf16.mxu0 %v4036
    %9595 = vmatpush1.bf16.msra.mxu0 %v4035
    %9596 = vmatprep.subr.bf16.mxu0 %v4020
    %9597 = vmatpush1.bf16.msra.mxu0 %v4019
    %9598 = vmatprep.subr.bf16.mxu0 %v4004
    %9599 = vmatpush1.bf16.msra.mxu0 %v4003
    %9600 = vmatprep.subr.bf16.mxu0 %v3988
    %9601 = vmatpush1.bf16.msra.mxu0 %v3987
    %9602 = vmatprep.subr.bf16.mxu0 %v3972
    %9603 = vmatpush1.bf16.msra.mxu0 %v3971
    %9604 = vmatprep.subr.bf16.mxu0 %v3956
    %9605 = vmatpush1.bf16.msra.mxu0 %v3955
    %9606 = vmatprep.subr.bf16.mxu0 %v4196
    %9607 = vmatpush2.bf16.msra.mxu0 %v4195
    %9608 = vmatprep.subr.bf16.mxu0 %v4180
    %9609 = vmatpush2.bf16.msra.mxu0 %v4179
    %9610 = vmatprep.subr.bf16.mxu0 %v4164
    %9611 = vmatpush2.bf16.msra.mxu0 %v4163
    %9612 = vmatprep.subr.bf16.mxu0 %v4148
    %9613 = vmatpush2.bf16.msra.mxu0 %v4147
    %9614 = vmatprep.subr.bf16.mxu0 %v4132
    %9615 = vmatpush2.bf16.msra.mxu0 %v4131
    %9616 = vmatprep.subr.bf16.mxu0 %v4116
    %9617 = vmatpush2.bf16.msra.mxu0 %v4115
    %9618 = vmatprep.subr.bf16.mxu0 %v4100
    %9619 = vmatpush2.bf16.msra.mxu0 %v4099
    %9620 = vmatprep.subr.bf16.mxu0 %v4084
    %9621 = vmatpush2.bf16.msra.mxu0 %v4083
    %9622 = vmatprep.mubr.bf16.mxu0 %v9466
    %9623 = vmatmul.mubr.bf16.gmra.mxu0 %v9465
    %v9624 = vpop.f32.mrf.mxu0
    %v9625 = vadd.f32 %v9584, %v9624
    %v9626 = vpop.f32.mrf.mxu0
    %v9627 = vadd.f32 %v9586, %v9626
    %v9628 = vpop.f32.mrf.mxu0
    %v9629 = vpop.f32.mrf.mxu0
    %9630 = vdwg.mxu0
    %9631 = vmatprep.subr.bf16.mxu0 %v3814
    %9632 = vmatpush1.bf16.msra.mxu0 %v3813
    %9633 = vmatprep.subr.bf16.mxu0 %v3798
    %9634 = vmatpush1.bf16.msra.mxu0 %v3797
    %9635 = vmatprep.subr.bf16.mxu0 %v3782
    %9636 = vmatpush1.bf16.msra.mxu0 %v3781
    %9637 = vmatprep.subr.bf16.mxu0 %v3766
    %9638 = vmatpush1.bf16.msra.mxu0 %v3765
    %9639 = vmatprep.subr.bf16.mxu0 %v3750
    %9640 = vmatpush1.bf16.msra.mxu0 %v3749
    %9641 = vmatprep.subr.bf16.mxu0 %v3734
    %9642 = vmatpush1.bf16.msra.mxu0 %v3733
    %9643 = vmatprep.subr.bf16.mxu0 %v3718
    %9644 = vmatpush1.bf16.msra.mxu0 %v3717
    %9645 = vmatprep.subr.bf16.mxu0 %v3702
    %9646 = vmatpush1.bf16.msra.mxu0 %v3701
    %9647 = vmatprep.subr.bf16.mxu0 %v3942
    %9648 = vmatpush2.bf16.msra.mxu0 %v3941
    %9649 = vmatprep.subr.bf16.mxu0 %v3926
    %9650 = vmatpush2.bf16.msra.mxu0 %v3925
    %9651 = vmatprep.subr.bf16.mxu0 %v3910
    %9652 = vmatpush2.bf16.msra.mxu0 %v3909
    %9653 = vmatprep.subr.bf16.mxu0 %v3894
    %9654 = vmatpush2.bf16.msra.mxu0 %v3893
    %9655 = vmatprep.subr.bf16.mxu0 %v3878
    %9656 = vmatpush2.bf16.msra.mxu0 %v3877
    %9657 = vmatprep.subr.bf16.mxu0 %v3862
    %9658 = vmatpush2.bf16.msra.mxu0 %v3861
    %9659 = vmatprep.subr.bf16.mxu0 %v3846
    %9660 = vmatpush2.bf16.msra.mxu0 %v3845
    %9661 = vmatprep.subr.bf16.mxu0 %v3830
    %9662 = vmatpush2.bf16.msra.mxu0 %v3829
    %9663 = vmatprep.mubr.bf16.mxu0 %v9464
    %9664 = vmatmul.mubr.bf16.gmra.mxu0 %v9463
    %v9665 = vpop.f32.mrf.mxu0
    %v9666 = vadd.f32 0.0, %v9665
    %v9667 = vpop.f32.mrf.mxu0
    %v9668 = vadd.f32 0.0, %v9667
    %v9669 = vpop.f32.mrf.mxu0
    %v9670 = vpop.f32.mrf.mxu0
    %9671 = vdwg.mxu0
    %9672 = vmatprep.subr.bf16.mxu0 %v4070
    %9673 = vmatpush1.bf16.msra.mxu0 %v4069
    %9674 = vmatprep.subr.bf16.mxu0 %v4054
    %9675 = vmatpush1.bf16.msra.mxu0 %v4053
    %9676 = vmatprep.subr.bf16.mxu0 %v4038
    %9677 = vmatpush1.bf16.msra.mxu0 %v4037
    %9678 = vmatprep.subr.bf16.mxu0 %v4022
    %9679 = vmatpush1.bf16.msra.mxu0 %v4021
    %9680 = vmatprep.subr.bf16.mxu0 %v4006
    %9681 = vmatpush1.bf16.msra.mxu0 %v4005
    %9682 = vmatprep.subr.bf16.mxu0 %v3990
    %9683 = vmatpush1.bf16.msra.mxu0 %v3989
    %9684 = vmatprep.subr.bf16.mxu0 %v3974
    %9685 = vmatpush1.bf16.msra.mxu0 %v3973
    %9686 = vmatprep.subr.bf16.mxu0 %v3958
    %9687 = vmatpush1.bf16.msra.mxu0 %v3957
    %9688 = vmatprep.subr.bf16.mxu0 %v4198
    %9689 = vmatpush2.bf16.msra.mxu0 %v4197
    %9690 = vmatprep.subr.bf16.mxu0 %v4182
    %9691 = vmatpush2.bf16.msra.mxu0 %v4181
    %9692 = vmatprep.subr.bf16.mxu0 %v4166
    %9693 = vmatpush2.bf16.msra.mxu0 %v4165
    %9694 = vmatprep.subr.bf16.mxu0 %v4150
    %9695 = vmatpush2.bf16.msra.mxu0 %v4149
    %9696 = vmatprep.subr.bf16.mxu0 %v4134
    %9697 = vmatpush2.bf16.msra.mxu0 %v4133
    %9698 = vmatprep.subr.bf16.mxu0 %v4118
    %9699 = vmatpush2.bf16.msra.mxu0 %v4117
    %9700 = vmatprep.subr.bf16.mxu0 %v4102
    %9701 = vmatpush2.bf16.msra.mxu0 %v4101
    %9702 = vmatprep.subr.bf16.mxu0 %v4086
    %9703 = vmatpush2.bf16.msra.mxu0 %v4085
    %9704 = vmatprep.mubr.bf16.mxu0 %v9466
    %9705 = vmatmul.mubr.bf16.gmra.mxu0 %v9465
    %v9706 = vpop.f32.mrf.mxu0
    %v9707 = vadd.f32 %v9666, %v9706
    %v9708 = vpop.f32.mrf.mxu0
    %v9709 = vadd.f32 %v9668, %v9708
    %v9710 = vpop.f32.mrf.mxu0
    %v9711 = vpop.f32.mrf.mxu0
    %9712 = vdwg.mxu0
    %9713 = vmatprep.subr.bf16.mxu0 %v3816
    %9714 = vmatpush1.bf16.msra.mxu0 %v3815
    %9715 = vmatprep.subr.bf16.mxu0 %v3800
    %9716 = vmatpush1.bf16.msra.mxu0 %v3799
    %9717 = vmatprep.subr.bf16.mxu0 %v3784
    %9718 = vmatpush1.bf16.msra.mxu0 %v3783
    %9719 = vmatprep.subr.bf16.mxu0 %v3768
    %9720 = vmatpush1.bf16.msra.mxu0 %v3767
    %9721 = vmatprep.subr.bf16.mxu0 %v3752
    %9722 = vmatpush1.bf16.msra.mxu0 %v3751
    %9723 = vmatprep.subr.bf16.mxu0 %v3736
    %9724 = vmatpush1.bf16.msra.mxu0 %v3735
    %9725 = vmatprep.subr.bf16.mxu0 %v3720
    %9726 = vmatpush1.bf16.msra.mxu0 %v3719
    %9727 = vmatprep.subr.bf16.mxu0 %v3704
    %9728 = vmatpush1.bf16.msra.mxu0 %v3703
    %9729 = vmatprep.subr.bf16.mxu0 %v3944
    %9730 = vmatpush2.bf16.msra.mxu0 %v3943
    %9731 = vmatprep.subr.bf16.mxu0 %v3928
    %9732 = vmatpush2.bf16.msra.mxu0 %v3927
    %9733 = vmatprep.subr.bf16.mxu0 %v3912
    %9734 = vmatpush2.bf16.msra.mxu0 %v3911
    %9735 = vmatprep.subr.bf16.mxu0 %v3896
    %9736 = vmatpush2.bf16.msra.mxu0 %v3895
    %9737 = vmatprep.subr.bf16.mxu0 %v3880
    %9738 = vmatpush2.bf16.msra.mxu0 %v3879
    %9739 = vmatprep.subr.bf16.mxu0 %v3864
    %9740 = vmatpush2.bf16.msra.mxu0 %v3863
    %9741 = vmatprep.subr.bf16.mxu0 %v3848
    %9742 = vmatpush2.bf16.msra.mxu0 %v3847
    %9743 = vmatprep.subr.bf16.mxu0 %v3832
    %9744 = vmatpush2.bf16.msra.mxu0 %v3831
    %9745 = vmatprep.mubr.bf16.mxu0 %v9464
    %9746 = vmatmul.mubr.bf16.gmra.mxu0 %v9463
    %v9747 = vpop.f32.mrf.mxu0
    %v9748 = vadd.f32 0.0, %v9747
    %v9749 = vpop.f32.mrf.mxu0
    %v9750 = vadd.f32 0.0, %v9749
    %v9751 = vpop.f32.mrf.mxu0
    %v9752 = vpop.f32.mrf.mxu0
    %9753 = vdwg.mxu0
    %9754 = vmatprep.subr.bf16.mxu0 %v4072
    %9755 = vmatpush1.bf16.msra.mxu0 %v4071
    %9756 = vmatprep.subr.bf16.mxu0 %v4056
    %9757 = vmatpush1.bf16.msra.mxu0 %v4055
    %9758 = vmatprep.subr.bf16.mxu0 %v4040
    %9759 = vmatpush1.bf16.msra.mxu0 %v4039
    %9760 = vmatprep.subr.bf16.mxu0 %v4024
    %9761 = vmatpush1.bf16.msra.mxu0 %v4023
    %9762 = vmatprep.subr.bf16.mxu0 %v4008
    %9763 = vmatpush1.bf16.msra.mxu0 %v4007
    %9764 = vmatprep.subr.bf16.mxu0 %v3992
    %9765 = vmatpush1.bf16.msra.mxu0 %v3991
    %9766 = vmatprep.subr.bf16.mxu0 %v3976
    %9767 = vmatpush1.bf16.msra.mxu0 %v3975
    %9768 = vmatprep.subr.bf16.mxu0 %v3960
    %9769 = vmatpush1.bf16.msra.mxu0 %v3959
    %9770 = vmatprep.subr.bf16.mxu0 %v4200
    %9771 = vmatpush2.bf16.msra.mxu0 %v4199
    %9772 = vmatprep.subr.bf16.mxu0 %v4184
    %9773 = vmatpush2.bf16.msra.mxu0 %v4183
    %9774 = vmatprep.subr.bf16.mxu0 %v4168
    %9775 = vmatpush2.bf16.msra.mxu0 %v4167
    %9776 = vmatprep.subr.bf16.mxu0 %v4152
    %9777 = vmatpush2.bf16.msra.mxu0 %v4151
    %9778 = vmatprep.subr.bf16.mxu0 %v4136
    %9779 = vmatpush2.bf16.msra.mxu0 %v4135
    %9780 = vmatprep.subr.bf16.mxu0 %v4120
    %9781 = vmatpush2.bf16.msra.mxu0 %v4119
    %9782 = vmatprep.subr.bf16.mxu0 %v4104
    %9783 = vmatpush2.bf16.msra.mxu0 %v4103
    %9784 = vmatprep.subr.bf16.mxu0 %v4088
    %9785 = vmatpush2.bf16.msra.mxu0 %v4087
    %9786 = vmatprep.mubr.bf16.mxu0 %v9466
    %9787 = vmatmul.mubr.bf16.gmra.mxu0 %v9465
    %v9788 = vpop.f32.mrf.mxu0
    %v9789 = vadd.f32 %v9748, %v9788
    %v9790 = vpop.f32.mrf.mxu0
    %v9791 = vadd.f32 %v9750, %v9790
    %v9792 = vpop.f32.mrf.mxu0
    %v9793 = vpop.f32.mrf.mxu0
    %9794 = vdwg.mxu0
    %9795 = vmatprep.subr.bf16.mxu0 %v3818
    %9796 = vmatpush1.bf16.msra.mxu0 %v3817
    %9797 = vmatprep.subr.bf16.mxu0 %v3802
    %9798 = vmatpush1.bf16.msra.mxu0 %v3801
    %9799 = vmatprep.subr.bf16.mxu0 %v3786
    %9800 = vmatpush1.bf16.msra.mxu0 %v3785
    %9801 = vmatprep.subr.bf16.mxu0 %v3770
    %9802 = vmatpush1.bf16.msra.mxu0 %v3769
    %9803 = vmatprep.subr.bf16.mxu0 %v3754
    %9804 = vmatpush1.bf16.msra.mxu0 %v3753
    %9805 = vmatprep.subr.bf16.mxu0 %v3738
    %9806 = vmatpush1.bf16.msra.mxu0 %v3737
    %9807 = vmatprep.subr.bf16.mxu0 %v3722
    %9808 = vmatpush1.bf16.msra.mxu0 %v3721
    %9809 = vmatprep.subr.bf16.mxu0 %v3706
    %9810 = vmatpush1.bf16.msra.mxu0 %v3705
    %9811 = vmatprep.subr.bf16.mxu0 %v3946
    %9812 = vmatpush2.bf16.msra.mxu0 %v3945
    %9813 = vmatprep.subr.bf16.mxu0 %v3930
    %9814 = vmatpush2.bf16.msra.mxu0 %v3929
    %9815 = vmatprep.subr.bf16.mxu0 %v3914
    %9816 = vmatpush2.bf16.msra.mxu0 %v3913
    %9817 = vmatprep.subr.bf16.mxu0 %v3898
    %9818 = vmatpush2.bf16.msra.mxu0 %v3897
    %9819 = vmatprep.subr.bf16.mxu0 %v3882
    %9820 = vmatpush2.bf16.msra.mxu0 %v3881
    %9821 = vmatprep.subr.bf16.mxu0 %v3866
    %9822 = vmatpush2.bf16.msra.mxu0 %v3865
    %9823 = vmatprep.subr.bf16.mxu0 %v3850
    %9824 = vmatpush2.bf16.msra.mxu0 %v3849
    %9825 = vmatprep.subr.bf16.mxu0 %v3834
    %9826 = vmatpush2.bf16.msra.mxu0 %v3833
    %9827 = vmatprep.mubr.bf16.mxu0 %v9464
    %9828 = vmatmul.mubr.bf16.gmra.mxu0 %v9463
    %v9829 = vpop.f32.mrf.mxu0
    %v9830 = vadd.f32 0.0, %v9829
    %v9831 = vpop.f32.mrf.mxu0
    %v9832 = vadd.f32 0.0, %v9831
    %v9833 = vpop.f32.mrf.mxu0
    %v9834 = vpop.f32.mrf.mxu0
    %9835 = vdwg.mxu0
    %9836 = vmatprep.subr.bf16.mxu0 %v4074
    %9837 = vmatpush1.bf16.msra.mxu0 %v4073
    %9838 = vmatprep.subr.bf16.mxu0 %v4058
    %9839 = vmatpush1.bf16.msra.mxu0 %v4057
    %9840 = vmatprep.subr.bf16.mxu0 %v4042
    %9841 = vmatpush1.bf16.msra.mxu0 %v4041
    %9842 = vmatprep.subr.bf16.mxu0 %v4026
    %9843 = vmatpush1.bf16.msra.mxu0 %v4025
    %9844 = vmatprep.subr.bf16.mxu0 %v4010
    %9845 = vmatpush1.bf16.msra.mxu0 %v4009
    %9846 = vmatprep.subr.bf16.mxu0 %v3994
    %9847 = vmatpush1.bf16.msra.mxu0 %v3993
    %9848 = vmatprep.subr.bf16.mxu0 %v3978
    %9849 = vmatpush1.bf16.msra.mxu0 %v3977
    %9850 = vmatprep.subr.bf16.mxu0 %v3962
    %9851 = vmatpush1.bf16.msra.mxu0 %v3961
    %9852 = vmatprep.subr.bf16.mxu0 %v4202
    %9853 = vmatpush2.bf16.msra.mxu0 %v4201
    %9854 = vmatprep.subr.bf16.mxu0 %v4186
    %9855 = vmatpush2.bf16.msra.mxu0 %v4185
    %9856 = vmatprep.subr.bf16.mxu0 %v4170
    %9857 = vmatpush2.bf16.msra.mxu0 %v4169
    %9858 = vmatprep.subr.bf16.mxu0 %v4154
    %9859 = vmatpush2.bf16.msra.mxu0 %v4153
    %9860 = vmatprep.subr.bf16.mxu0 %v4138
    %9861 = vmatpush2.bf16.msra.mxu0 %v4137
    %9862 = vmatprep.subr.bf16.mxu0 %v4122
    %9863 = vmatpush2.bf16.msra.mxu0 %v4121
    %9864 = vmatprep.subr.bf16.mxu0 %v4106
    %9865 = vmatpush2.bf16.msra.mxu0 %v4105
    %9866 = vmatprep.subr.bf16.mxu0 %v4090
    %9867 = vmatpush2.bf16.msra.mxu0 %v4089
    %9868 = vmatprep.mubr.bf16.mxu0 %v9466
    %9869 = vmatmul.mubr.bf16.gmra.mxu0 %v9465
    %v9870 = vpop.f32.mrf.mxu0
    %v9871 = vadd.f32 %v9830, %v9870
    %v9872 = vpop.f32.mrf.mxu0
    %v9873 = vadd.f32 %v9832, %v9872
    %v9874 = vpop.f32.mrf.mxu0
    %v9875 = vpop.f32.mrf.mxu0
    %9876 = vdwg.mxu0
    %9877 = vmatprep.subr.bf16.mxu0 %v3820
    %9878 = vmatpush1.bf16.msra.mxu0 %v3819
    %9879 = vmatprep.subr.bf16.mxu0 %v3804
    %9880 = vmatpush1.bf16.msra.mxu0 %v3803
    %9881 = vmatprep.subr.bf16.mxu0 %v3788
    %9882 = vmatpush1.bf16.msra.mxu0 %v3787
    %9883 = vmatprep.subr.bf16.mxu0 %v3772
    %9884 = vmatpush1.bf16.msra.mxu0 %v3771
    %9885 = vmatprep.subr.bf16.mxu0 %v3756
    %9886 = vmatpush1.bf16.msra.mxu0 %v3755
    %9887 = vmatprep.subr.bf16.mxu0 %v3740
    %9888 = vmatpush1.bf16.msra.mxu0 %v3739
    %9889 = vmatprep.subr.bf16.mxu0 %v3724
    %9890 = vmatpush1.bf16.msra.mxu0 %v3723
    %9891 = vmatprep.subr.bf16.mxu0 %v3708
    %9892 = vmatpush1.bf16.msra.mxu0 %v3707
    %9893 = vmatprep.subr.bf16.mxu0 %v3948
    %9894 = vmatpush2.bf16.msra.mxu0 %v3947
    %9895 = vmatprep.subr.bf16.mxu0 %v3932
    %9896 = vmatpush2.bf16.msra.mxu0 %v3931
    %9897 = vmatprep.subr.bf16.mxu0 %v3916
    %9898 = vmatpush2.bf16.msra.mxu0 %v3915
    %9899 = vmatprep.subr.bf16.mxu0 %v3900
    %9900 = vmatpush2.bf16.msra.mxu0 %v3899
    %9901 = vmatprep.subr.bf16.mxu0 %v3884
    %9902 = vmatpush2.bf16.msra.mxu0 %v3883
    %9903 = vmatprep.subr.bf16.mxu0 %v3868
    %9904 = vmatpush2.bf16.msra.mxu0 %v3867
    %9905 = vmatprep.subr.bf16.mxu0 %v3852
    %9906 = vmatpush2.bf16.msra.mxu0 %v3851
    %9907 = vmatprep.subr.bf16.mxu0 %v3836
    %9908 = vmatpush2.bf16.msra.mxu0 %v3835
    %9909 = vmatprep.mubr.bf16.mxu0 %v9464
    %9910 = vmatmul.mubr.bf16.gmra.mxu0 %v9463
    %v9911 = vpop.f32.mrf.mxu0
    %v9912 = vadd.f32 0.0, %v9911
    %v9913 = vpop.f32.mrf.mxu0
    %v9914 = vadd.f32 0.0, %v9913
    %v9915 = vpop.f32.mrf.mxu0
    %v9916 = vpop.f32.mrf.mxu0
    %9917 = vdwg.mxu0
    %9918 = vmatprep.subr.bf16.mxu0 %v4076
    %9919 = vmatpush1.bf16.msra.mxu0 %v4075
    %9920 = vmatprep.subr.bf16.mxu0 %v4060
    %9921 = vmatpush1.bf16.msra.mxu0 %v4059
    %9922 = vmatprep.subr.bf16.mxu0 %v4044
    %9923 = vmatpush1.bf16.msra.mxu0 %v4043
    %9924 = vmatprep.subr.bf16.mxu0 %v4028
    %9925 = vmatpush1.bf16.msra.mxu0 %v4027
    %9926 = vmatprep.subr.bf16.mxu0 %v4012
    %9927 = vmatpush1.bf16.msra.mxu0 %v4011
    %9928 = vmatprep.subr.bf16.mxu0 %v3996
    %9929 = vmatpush1.bf16.msra.mxu0 %v3995
    %9930 = vmatprep.subr.bf16.mxu0 %v3980
    %9931 = vmatpush1.bf16.msra.mxu0 %v3979
    %9932 = vmatprep.subr.bf16.mxu0 %v3964
    %9933 = vmatpush1.bf16.msra.mxu0 %v3963
    %9934 = vmatprep.subr.bf16.mxu0 %v4204
    %9935 = vmatpush2.bf16.msra.mxu0 %v4203
    %9936 = vmatprep.subr.bf16.mxu0 %v4188
    %9937 = vmatpush2.bf16.msra.mxu0 %v4187
    %9938 = vmatprep.subr.bf16.mxu0 %v4172
    %9939 = vmatpush2.bf16.msra.mxu0 %v4171
    %9940 = vmatprep.subr.bf16.mxu0 %v4156
    %9941 = vmatpush2.bf16.msra.mxu0 %v4155
    %9942 = vmatprep.subr.bf16.mxu0 %v4140
    %9943 = vmatpush2.bf16.msra.mxu0 %v4139
    %9944 = vmatprep.subr.bf16.mxu0 %v4124
    %9945 = vmatpush2.bf16.msra.mxu0 %v4123
    %9946 = vmatprep.subr.bf16.mxu0 %v4108
    %9947 = vmatpush2.bf16.msra.mxu0 %v4107
    %9948 = vmatprep.subr.bf16.mxu0 %v4092
    %9949 = vmatpush2.bf16.msra.mxu0 %v4091
    %9950 = vmatprep.mubr.bf16.mxu0 %v9466
    %9951 = vmatmul.mubr.bf16.gmra.mxu0 %v9465
    %v9952 = vpop.f32.mrf.mxu0
    %v9953 = vadd.f32 %v9912, %v9952
    %v9954 = vpop.f32.mrf.mxu0
    %v9955 = vadd.f32 %v9914, %v9954
    %v9956 = vpop.f32.mrf.mxu0
    %v9957 = vpop.f32.mrf.mxu0
    %9958 = vdwg.mxu0
    %9959 = vmatprep.subr.bf16.mxu0 %v3822
    %9960 = vmatpush1.bf16.msra.mxu0 %v3821
    %9961 = vmatprep.subr.bf16.mxu0 %v3806
    %9962 = vmatpush1.bf16.msra.mxu0 %v3805
    %9963 = vmatprep.subr.bf16.mxu0 %v3790
    %9964 = vmatpush1.bf16.msra.mxu0 %v3789
    %9965 = vmatprep.subr.bf16.mxu0 %v3774
    %9966 = vmatpush1.bf16.msra.mxu0 %v3773
    %9967 = vmatprep.subr.bf16.mxu0 %v3758
    %9968 = vmatpush1.bf16.msra.mxu0 %v3757
    %9969 = vmatprep.subr.bf16.mxu0 %v3742
    %9970 = vmatpush1.bf16.msra.mxu0 %v3741
    %9971 = vmatprep.subr.bf16.mxu0 %v3726
    %9972 = vmatpush1.bf16.msra.mxu0 %v3725
    %9973 = vmatprep.subr.bf16.mxu0 %v3710
    %9974 = vmatpush1.bf16.msra.mxu0 %v3709
    %9975 = vmatprep.subr.bf16.mxu0 %v3950
    %9976 = vmatpush2.bf16.msra.mxu0 %v3949
    %9977 = vmatprep.subr.bf16.mxu0 %v3934
    %9978 = vmatpush2.bf16.msra.mxu0 %v3933
    %9979 = vmatprep.subr.bf16.mxu0 %v3918
    %9980 = vmatpush2.bf16.msra.mxu0 %v3917
    %9981 = vmatprep.subr.bf16.mxu0 %v3902
    %9982 = vmatpush2.bf16.msra.mxu0 %v3901
    %9983 = vmatprep.subr.bf16.mxu0 %v3886
    %9984 = vmatpush2.bf16.msra.mxu0 %v3885
    %9985 = vmatprep.subr.bf16.mxu0 %v3870
    %9986 = vmatpush2.bf16.msra.mxu0 %v3869
    %9987 = vmatprep.subr.bf16.mxu0 %v3854
    %9988 = vmatpush2.bf16.msra.mxu0 %v3853
    %9989 = vmatprep.subr.bf16.mxu0 %v3838
    %9990 = vmatpush2.bf16.msra.mxu0 %v3837
    %9991 = vmatprep.mubr.bf16.mxu0 %v9464
    %9992 = vmatmul.mubr.bf16.gmra.mxu0 %v9463
    %v9993 = vpop.f32.mrf.mxu0
    %v9994 = vadd.f32 0.0, %v9993
    %v9995 = vpop.f32.mrf.mxu0
    %v9996 = vadd.f32 0.0, %v9995
    %v9997 = vpop.f32.mrf.mxu0
    %v9998 = vpop.f32.mrf.mxu0
    %9999 = vdwg.mxu0
    %10000 = vmatprep.subr.bf16.mxu0 %v4078
    %10001 = vmatpush1.bf16.msra.mxu0 %v4077
    %10002 = vmatprep.subr.bf16.mxu0 %v4062
    %10003 = vmatpush1.bf16.msra.mxu0 %v4061
    %10004 = vmatprep.subr.bf16.mxu0 %v4046
    %10005 = vmatpush1.bf16.msra.mxu0 %v4045
    %10006 = vmatprep.subr.bf16.mxu0 %v4030
    %10007 = vmatpush1.bf16.msra.mxu0 %v4029
    %10008 = vmatprep.subr.bf16.mxu0 %v4014
    %10009 = vmatpush1.bf16.msra.mxu0 %v4013
    %10010 = vmatprep.subr.bf16.mxu0 %v3998
    %10011 = vmatpush1.bf16.msra.mxu0 %v3997
    %10012 = vmatprep.subr.bf16.mxu0 %v3982
    %10013 = vmatpush1.bf16.msra.mxu0 %v3981
    %10014 = vmatprep.subr.bf16.mxu0 %v3966
    %10015 = vmatpush1.bf16.msra.mxu0 %v3965
    %10016 = vmatprep.subr.bf16.mxu0 %v4206
    %10017 = vmatpush2.bf16.msra.mxu0 %v4205
    %10018 = vmatprep.subr.bf16.mxu0 %v4190
    %10019 = vmatpush2.bf16.msra.mxu0 %v4189
    %10020 = vmatprep.subr.bf16.mxu0 %v4174
    %10021 = vmatpush2.bf16.msra.mxu0 %v4173
    %10022 = vmatprep.subr.bf16.mxu0 %v4158
    %10023 = vmatpush2.bf16.msra.mxu0 %v4157
    %10024 = vmatprep.subr.bf16.mxu0 %v4142
    %10025 = vmatpush2.bf16.msra.mxu0 %v4141
    %10026 = vmatprep.subr.bf16.mxu0 %v4126
    %10027 = vmatpush2.bf16.msra.mxu0 %v4125
    %10028 = vmatprep.subr.bf16.mxu0 %v4110
    %10029 = vmatpush2.bf16.msra.mxu0 %v4109
    %10030 = vmatprep.subr.bf16.mxu0 %v4094
    %10031 = vmatpush2.bf16.msra.mxu0 %v4093
    %10032 = vmatprep.mubr.bf16.mxu0 %v9466
    %10033 = vmatmul.mubr.bf16.gmra.mxu0 %v9465
    %v10034 = vpop.f32.mrf.mxu0
    %v10035 = vadd.f32 %v9994, %v10034
    %v10036 = vpop.f32.mrf.mxu0
    %v10037 = vadd.f32 %v9996, %v10036
    %v10038 = vpop.f32.mrf.mxu0
    %v10039 = vpop.f32.mrf.mxu0
    %10040 = vdwg.mxu0
    %10041 = vmatprep.subr.bf16.mxu0 %v3824
    %10042 = vmatpush1.bf16.msra.mxu0 %v3823
    %10043 = vmatprep.subr.bf16.mxu0 %v3808
    %10044 = vmatpush1.bf16.msra.mxu0 %v3807
    %10045 = vmatprep.subr.bf16.mxu0 %v3792
    %10046 = vmatpush1.bf16.msra.mxu0 %v3791
    %10047 = vmatprep.subr.bf16.mxu0 %v3776
    %10048 = vmatpush1.bf16.msra.mxu0 %v3775
    %10049 = vmatprep.subr.bf16.mxu0 %v3760
    %10050 = vmatpush1.bf16.msra.mxu0 %v3759
    %10051 = vmatprep.subr.bf16.mxu0 %v3744
    %10052 = vmatpush1.bf16.msra.mxu0 %v3743
    %10053 = vmatprep.subr.bf16.mxu0 %v3728
    %10054 = vmatpush1.bf16.msra.mxu0 %v3727
    %10055 = vmatprep.subr.bf16.mxu0 %v3712
    %10056 = vmatpush1.bf16.msra.mxu0 %v3711
    %10057 = vmatprep.subr.bf16.mxu0 %v3952
    %10058 = vmatpush2.bf16.msra.mxu0 %v3951
    %10059 = vmatprep.subr.bf16.mxu0 %v3936
    %10060 = vmatpush2.bf16.msra.mxu0 %v3935
    %10061 = vmatprep.subr.bf16.mxu0 %v3920
    %10062 = vmatpush2.bf16.msra.mxu0 %v3919
    %10063 = vmatprep.subr.bf16.mxu0 %v3904
    %10064 = vmatpush2.bf16.msra.mxu0 %v3903
    %10065 = vmatprep.subr.bf16.mxu0 %v3888
    %10066 = vmatpush2.bf16.msra.mxu0 %v3887
    %10067 = vmatprep.subr.bf16.mxu0 %v3872
    %10068 = vmatpush2.bf16.msra.mxu0 %v3871
    %10069 = vmatprep.subr.bf16.mxu0 %v3856
    %10070 = vmatpush2.bf16.msra.mxu0 %v3855
    %10071 = vmatprep.subr.bf16.mxu0 %v3840
    %10072 = vmatpush2.bf16.msra.mxu0 %v3839
    %10073 = vmatprep.mubr.bf16.mxu0 %v9464
    %10074 = vmatmul.mubr.bf16.gmra.mxu0 %v9463
    %v10075 = vpop.f32.mrf.mxu0
    %v10076 = vadd.f32 0.0, %v10075
    %v10077 = vpop.f32.mrf.mxu0
    %v10078 = vadd.f32 0.0, %v10077
    %v10079 = vpop.f32.mrf.mxu0
    %v10080 = vpop.f32.mrf.mxu0
    %10081 = vdwg.mxu0
    %10082 = vmatprep.subr.bf16.mxu0 %v4080
    %10083 = vmatpush1.bf16.msra.mxu0 %v4079
    %10084 = vmatprep.subr.bf16.mxu0 %v4064
    %10085 = vmatpush1.bf16.msra.mxu0 %v4063
    %10086 = vmatprep.subr.bf16.mxu0 %v4048
    %10087 = vmatpush1.bf16.msra.mxu0 %v4047
    %10088 = vmatprep.subr.bf16.mxu0 %v4032
    %10089 = vmatpush1.bf16.msra.mxu0 %v4031
    %10090 = vmatprep.subr.bf16.mxu0 %v4016
    %10091 = vmatpush1.bf16.msra.mxu0 %v4015
    %10092 = vmatprep.subr.bf16.mxu0 %v4000
    %10093 = vmatpush1.bf16.msra.mxu0 %v3999
    %10094 = vmatprep.subr.bf16.mxu0 %v3984
    %10095 = vmatpush1.bf16.msra.mxu0 %v3983
    %10096 = vmatprep.subr.bf16.mxu0 %v3968
    %10097 = vmatpush1.bf16.msra.mxu0 %v3967
    %10098 = vmatprep.subr.bf16.mxu0 %v4208
    %10099 = vmatpush2.bf16.msra.mxu0 %v4207
    %10100 = vmatprep.subr.bf16.mxu0 %v4192
    %10101 = vmatpush2.bf16.msra.mxu0 %v4191
    %10102 = vmatprep.subr.bf16.mxu0 %v4176
    %10103 = vmatpush2.bf16.msra.mxu0 %v4175
    %10104 = vmatprep.subr.bf16.mxu0 %v4160
    %10105 = vmatpush2.bf16.msra.mxu0 %v4159
    %10106 = vmatprep.subr.bf16.mxu0 %v4144
    %10107 = vmatpush2.bf16.msra.mxu0 %v4143
    %10108 = vmatprep.subr.bf16.mxu0 %v4128
    %10109 = vmatpush2.bf16.msra.mxu0 %v4127
    %10110 = vmatprep.subr.bf16.mxu0 %v4112
    %10111 = vmatpush2.bf16.msra.mxu0 %v4111
    %10112 = vmatprep.subr.bf16.mxu0 %v4096
    %10113 = vmatpush2.bf16.msra.mxu0 %v4095
    %10114 = vmatprep.mubr.bf16.mxu0 %v9466
    %10115 = vmatmul.mubr.bf16.gmra.mxu0 %v9465
    %v10116 = vpop.f32.mrf.mxu0
    %v10117 = vadd.f32 %v10076, %v10116
    %v10118 = vpop.f32.mrf.mxu0
    %v10119 = vadd.f32 %v10078, %v10118
    %v10120 = vpop.f32.mrf.mxu0
    %v10121 = vpop.f32.mrf.mxu0
    %10122 = vdwg.mxu0
    %v10123 = vadd.f32 %v9447, %v9543
    %v10124 = vadd.f32 %v9448, %v9545
    %v10125 = vadd.f32 %v9449, %v9625
    %v10126 = vadd.f32 %v9450, %v9627
    %v10127 = vadd.f32 %v9451, %v9707
    %v10128 = vadd.f32 %v9452, %v9709
    %v10129 = vadd.f32 %v9453, %v9789
    %v10130 = vadd.f32 %v9454, %v9791
    %v10131 = vadd.f32 %v9455, %v9871
    %v10132 = vadd.f32 %v9456, %v9873
    %v10133 = vadd.f32 %v9457, %v9953
    %v10134 = vadd.f32 %v9458, %v9955
    %v10135 = vadd.f32 %v9459, %v10035
    %v10136 = vadd.f32 %v9460, %v10037
    %v10137 = vadd.f32 %v9461, %v10117
    %v10138 = vadd.f32 %v9462, %v10119
    %v10139 = vxor.u32 %v10123, 2147483648
    %v10140 = vxor.u32 %v10124, 2147483648
    %v10141 = vxor.u32 %v10125, 2147483648
    %v10142 = vxor.u32 %v10126, 2147483648
    %v10143 = vmul.f32 %v10139, 1.442695
    %v10144 = vpow.pop %v10143
    %v10145 = vmul.f32 %v10140, 1.442695
    %v10146 = vpow.pop %v10145
    %v10147 = vmul.f32 %v10141, 1.442695
    %v10148 = vpow.pop %v10147
    %v10149 = vmul.f32 %v10142, 1.442695
    %v10150 = vpow.pop %v10149
    %v10151 = vadd.f32 %v10144, 1.0
    %v10152 = vadd.f32 %v10146, 1.0
    %v10153 = vadd.f32 %v10148, 1.0
    %v10154 = vadd.f32 %v10150, 1.0
    %v10155 = vrcp.pop %v10151
    %v10156 = vmul.f32 1.0, %v10155
    %v10157 = vrcp.pop %v10152
    %v10158 = vmul.f32 1.0, %v10157
    %v10159 = vrcp.pop %v10153
    %v10160 = vmul.f32 1.0, %v10159
    %v10161 = vrcp.pop %v10154
    %v10162 = vmul.f32 1.0, %v10161
    %v10163 = vxor.u32 %v10127, 2147483648
    %v10164 = vxor.u32 %v10128, 2147483648
    %v10165 = vxor.u32 %v10129, 2147483648
    %v10166 = vxor.u32 %v10130, 2147483648
    %v10167 = vmul.f32 %v10163, 1.442695
    %v10168 = vpow.pop %v10167
    %v10169 = vmul.f32 %v10164, 1.442695
    %v10170 = vpow.pop %v10169
    %v10171 = vmul.f32 %v10165, 1.442695
    %v10172 = vpow.pop %v10171
    %v10173 = vmul.f32 %v10166, 1.442695
    %v10174 = vpow.pop %v10173
    %v10175 = vadd.f32 %v10168, 1.0
    %v10176 = vadd.f32 %v10170, 1.0
    %v10177 = vadd.f32 %v10172, 1.0
    %v10178 = vadd.f32 %v10174, 1.0
    %v10179 = vrcp.pop %v10175
    %v10180 = vmul.f32 1.0, %v10179
    %v10181 = vrcp.pop %v10176
    %v10182 = vmul.f32 1.0, %v10181
    %v10183 = vrcp.pop %v10177
    %v10184 = vmul.f32 1.0, %v10183
    %v10185 = vrcp.pop %v10178
    %v10186 = vmul.f32 1.0, %v10185
    %v10187 = vtanh.pop %v10131
    %v10188 = vtanh.pop %v10132
    %v10189 = vtanh.pop %v10133
    %v10190 = vtanh.pop %v10134
    %v10191 = vxor.u32 %v10135, 2147483648
    %v10192 = vxor.u32 %v10136, 2147483648
    %v10193 = vxor.u32 %v10137, 2147483648
    %v10194 = vxor.u32 %v10138, 2147483648
    %v10195 = vmul.f32 %v10191, 1.442695
    %v10196 = vpow.pop %v10195
    %v10197 = vmul.f32 %v10192, 1.442695
    %v10198 = vpow.pop %v10197
    %v10199 = vmul.f32 %v10193, 1.442695
    %v10200 = vpow.pop %v10199
    %v10201 = vmul.f32 %v10194, 1.442695
    %v10202 = vpow.pop %v10201
    %v10203 = vadd.f32 %v10196, 1.0
    %v10204 = vadd.f32 %v10198, 1.0
    %v10205 = vadd.f32 %v10200, 1.0
    %v10206 = vadd.f32 %v10202, 1.0
    %v10207 = vrcp.pop %v10203
    %v10208 = vmul.f32 1.0, %v10207
    %v10209 = vrcp.pop %v10204
    %v10210 = vmul.f32 1.0, %v10209
    %v10211 = vrcp.pop %v10205
    %v10212 = vmul.f32 1.0, %v10211
    %v10213 = vrcp.pop %v10206
    %v10214 = vmul.f32 1.0, %v10213
    %v10215 = vmul.f32 %v10180, %v9432
    %v10216 = vmul.f32 %v10182, %v9433
    %v10217 = vmul.f32 %v10184, %v9434
    %v10218 = vmul.f32 %v10186, %v9435
    %v10219 = vmul.f32 %v10156, %v10187
    %v10220 = vmul.f32 %v10158, %v10188
    %v10221 = vmul.f32 %v10160, %v10189
    %v10222 = vmul.f32 %v10162, %v10190
    %v10223 = vadd.f32 %v10215, %v10219
    %v10224 = vadd.f32 %v10216, %v10220
    %v10225 = vadd.f32 %v10217, %v10221
    %v10226 = vadd.f32 %v10218, %v10222
    %v10227 = vtanh.pop %v10223
    %v10228 = vtanh.pop %v10224
    %v10229 = vtanh.pop %v10225
    %v10230 = vtanh.pop %v10226
    %v10231 = vmul.f32 %v10208, %v10227
    %v10232 = vmul.f32 %v10210, %v10228
    %v10233 = vmul.f32 %v10212, %v10229
    %v10234 = vmul.f32 %v10214, %v10230
    %s10235 = smul.u32 7, 16
    %s10236 = smul.addr %s10235, 8
    %s10237 = scalar_lea.vmem [#allocation2], %s10236
    %v10238 = vld [vmem:[%s10237] sm:$0xff]
    %v10239 = vld [vmem:[%s10237 + $0x8] sm:$0xff]
    %v10240 = vld [vmem:[%s10237 + $0x10] sm:$0xff]
    %v10241 = vld [vmem:[%s10237 + $0x18] sm:$0xff]
    %v10242 = vld [vmem:[%s10237 + $0x20] sm:$0xff]
    %v10243 = vld [vmem:[%s10237 + $0x28] sm:$0xff]
    %v10244 = vld [vmem:[%s10237 + $0x30] sm:$0xff]
    %v10245 = vld [vmem:[%s10237 + $0x38] sm:$0xff]
    %v10246 = vld [vmem:[%s10237 + $0x40] sm:$0xff]
    %v10247 = vld [vmem:[%s10237 + $0x48] sm:$0xff]
    %v10248 = vld [vmem:[%s10237 + $0x50] sm:$0xff]
    %v10249 = vld [vmem:[%s10237 + $0x58] sm:$0xff]
    %v10250 = vld [vmem:[%s10237 + $0x60] sm:$0xff]
    %v10251 = vld [vmem:[%s10237 + $0x68] sm:$0xff]
    %v10252 = vld [vmem:[%s10237 + $0x70] sm:$0xff]
    %v10253 = vld [vmem:[%s10237 + $0x78] sm:$0xff]
    %v10254 = vpack.c.bf16 %v10231, %v10231
    %v10255 = vpack.c.bf16 %v10232, %v10232
    %v10256 = vpack.c.bf16 %v10233, %v10233
    %v10257 = vpack.c.bf16 %v10234, %v10234
    %10258 = vmatprep.subr.bf16.mxu0 %v3810
    %10259 = vmatpush1.bf16.msra.mxu0 %v3809
    %10260 = vmatprep.subr.bf16.mxu0 %v3794
    %10261 = vmatpush1.bf16.msra.mxu0 %v3793
    %10262 = vmatprep.subr.bf16.mxu0 %v3778
    %10263 = vmatpush1.bf16.msra.mxu0 %v3777
    %10264 = vmatprep.subr.bf16.mxu0 %v3762
    %10265 = vmatpush1.bf16.msra.mxu0 %v3761
    %10266 = vmatprep.subr.bf16.mxu0 %v3746
    %10267 = vmatpush1.bf16.msra.mxu0 %v3745
    %10268 = vmatprep.subr.bf16.mxu0 %v3730
    %10269 = vmatpush1.bf16.msra.mxu0 %v3729
    %10270 = vmatprep.subr.bf16.mxu0 %v3714
    %10271 = vmatpush1.bf16.msra.mxu0 %v3713
    %10272 = vmatprep.subr.bf16.mxu0 %v3698
    %10273 = vmatpush1.bf16.msra.mxu0 %v3697
    %10274 = vmatprep.subr.bf16.mxu0 %v3938
    %10275 = vmatpush2.bf16.msra.mxu0 %v3937
    %10276 = vmatprep.subr.bf16.mxu0 %v3922
    %10277 = vmatpush2.bf16.msra.mxu0 %v3921
    %10278 = vmatprep.subr.bf16.mxu0 %v3906
    %10279 = vmatpush2.bf16.msra.mxu0 %v3905
    %10280 = vmatprep.subr.bf16.mxu0 %v3890
    %10281 = vmatpush2.bf16.msra.mxu0 %v3889
    %10282 = vmatprep.subr.bf16.mxu0 %v3874
    %10283 = vmatpush2.bf16.msra.mxu0 %v3873
    %10284 = vmatprep.subr.bf16.mxu0 %v3858
    %10285 = vmatpush2.bf16.msra.mxu0 %v3857
    %10286 = vmatprep.subr.bf16.mxu0 %v3842
    %10287 = vmatpush2.bf16.msra.mxu0 %v3841
    %10288 = vmatprep.subr.bf16.mxu0 %v3826
    %10289 = vmatpush2.bf16.msra.mxu0 %v3825
    %10290 = vmatprep.mubr.bf16.mxu0 %v10255
    %10291 = vmatmul.mubr.bf16.gmra.mxu0 %v10254
    %v10292 = vpop.f32.mrf.mxu0
    %v10293 = vadd.f32 0.0, %v10292
    %v10294 = vpop.f32.mrf.mxu0
    %v10295 = vadd.f32 0.0, %v10294
    %v10296 = vpop.f32.mrf.mxu0
    %v10297 = vpop.f32.mrf.mxu0
    %10298 = vdwg.mxu0
    %10299 = vmatprep.subr.bf16.mxu0 %v4066
    %10300 = vmatpush1.bf16.msra.mxu0 %v4065
    %10301 = vmatprep.subr.bf16.mxu0 %v4050
    %10302 = vmatpush1.bf16.msra.mxu0 %v4049
    %10303 = vmatprep.subr.bf16.mxu0 %v4034
    %10304 = vmatpush1.bf16.msra.mxu0 %v4033
    %10305 = vmatprep.subr.bf16.mxu0 %v4018
    %10306 = vmatpush1.bf16.msra.mxu0 %v4017
    %10307 = vmatprep.subr.bf16.mxu0 %v4002
    %10308 = vmatpush1.bf16.msra.mxu0 %v4001
    %10309 = vmatprep.subr.bf16.mxu0 %v3986
    %10310 = vmatpush1.bf16.msra.mxu0 %v3985
    %10311 = vmatprep.subr.bf16.mxu0 %v3970
    %10312 = vmatpush1.bf16.msra.mxu0 %v3969
    %10313 = vmatprep.subr.bf16.mxu0 %v3954
    %10314 = vmatpush1.bf16.msra.mxu0 %v3953
    %10315 = vmatprep.subr.bf16.mxu0 %v4194
    %10316 = vmatpush2.bf16.msra.mxu0 %v4193
    %10317 = vmatprep.subr.bf16.mxu0 %v4178
    %10318 = vmatpush2.bf16.msra.mxu0 %v4177
    %10319 = vmatprep.subr.bf16.mxu0 %v4162
    %10320 = vmatpush2.bf16.msra.mxu0 %v4161
    %10321 = vmatprep.subr.bf16.mxu0 %v4146
    %10322 = vmatpush2.bf16.msra.mxu0 %v4145
    %10323 = vmatprep.subr.bf16.mxu0 %v4130
    %10324 = vmatpush2.bf16.msra.mxu0 %v4129
    %10325 = vmatprep.subr.bf16.mxu0 %v4114
    %10326 = vmatpush2.bf16.msra.mxu0 %v4113
    %10327 = vmatprep.subr.bf16.mxu0 %v4098
    %10328 = vmatpush2.bf16.msra.mxu0 %v4097
    %10329 = vmatprep.subr.bf16.mxu0 %v4082
    %10330 = vmatpush2.bf16.msra.mxu0 %v4081
    %10331 = vmatprep.mubr.bf16.mxu0 %v10257
    %10332 = vmatmul.mubr.bf16.gmra.mxu0 %v10256
    %v10333 = vpop.f32.mrf.mxu0
    %v10334 = vadd.f32 %v10293, %v10333
    %v10335 = vpop.f32.mrf.mxu0
    %v10336 = vadd.f32 %v10295, %v10335
    %v10337 = vpop.f32.mrf.mxu0
    %v10338 = vpop.f32.mrf.mxu0
    %10339 = vdwg.mxu0
    %10340 = vmatprep.subr.bf16.mxu0 %v3812
    %10341 = vmatpush1.bf16.msra.mxu0 %v3811
    %10342 = vmatprep.subr.bf16.mxu0 %v3796
    %10343 = vmatpush1.bf16.msra.mxu0 %v3795
    %10344 = vmatprep.subr.bf16.mxu0 %v3780
    %10345 = vmatpush1.bf16.msra.mxu0 %v3779
    %10346 = vmatprep.subr.bf16.mxu0 %v3764
    %10347 = vmatpush1.bf16.msra.mxu0 %v3763
    %10348 = vmatprep.subr.bf16.mxu0 %v3748
    %10349 = vmatpush1.bf16.msra.mxu0 %v3747
    %10350 = vmatprep.subr.bf16.mxu0 %v3732
    %10351 = vmatpush1.bf16.msra.mxu0 %v3731
    %10352 = vmatprep.subr.bf16.mxu0 %v3716
    %10353 = vmatpush1.bf16.msra.mxu0 %v3715
    %10354 = vmatprep.subr.bf16.mxu0 %v3700
    %10355 = vmatpush1.bf16.msra.mxu0 %v3699
    %10356 = vmatprep.subr.bf16.mxu0 %v3940
    %10357 = vmatpush2.bf16.msra.mxu0 %v3939
    %10358 = vmatprep.subr.bf16.mxu0 %v3924
    %10359 = vmatpush2.bf16.msra.mxu0 %v3923
    %10360 = vmatprep.subr.bf16.mxu0 %v3908
    %10361 = vmatpush2.bf16.msra.mxu0 %v3907
    %10362 = vmatprep.subr.bf16.mxu0 %v3892
    %10363 = vmatpush2.bf16.msra.mxu0 %v3891
    %10364 = vmatprep.subr.bf16.mxu0 %v3876
    %10365 = vmatpush2.bf16.msra.mxu0 %v3875
    %10366 = vmatprep.subr.bf16.mxu0 %v3860
    %10367 = vmatpush2.bf16.msra.mxu0 %v3859
    %10368 = vmatprep.subr.bf16.mxu0 %v3844
    %10369 = vmatpush2.bf16.msra.mxu0 %v3843
    %10370 = vmatprep.subr.bf16.mxu0 %v3828
    %10371 = vmatpush2.bf16.msra.mxu0 %v3827
    %10372 = vmatprep.mubr.bf16.mxu0 %v10255
    %10373 = vmatmul.mubr.bf16.gmra.mxu0 %v10254
    %v10374 = vpop.f32.mrf.mxu0
    %v10375 = vadd.f32 0.0, %v10374
    %v10376 = vpop.f32.mrf.mxu0
    %v10377 = vadd.f32 0.0, %v10376
    %v10378 = vpop.f32.mrf.mxu0
    %v10379 = vpop.f32.mrf.mxu0
    %10380 = vdwg.mxu0
    %10381 = vmatprep.subr.bf16.mxu0 %v4068
    %10382 = vmatpush1.bf16.msra.mxu0 %v4067
    %10383 = vmatprep.subr.bf16.mxu0 %v4052
    %10384 = vmatpush1.bf16.msra.mxu0 %v4051
    %10385 = vmatprep.subr.bf16.mxu0 %v4036
    %10386 = vmatpush1.bf16.msra.mxu0 %v4035
    %10387 = vmatprep.subr.bf16.mxu0 %v4020
    %10388 = vmatpush1.bf16.msra.mxu0 %v4019
    %10389 = vmatprep.subr.bf16.mxu0 %v4004
    %10390 = vmatpush1.bf16.msra.mxu0 %v4003
    %10391 = vmatprep.subr.bf16.mxu0 %v3988
    %10392 = vmatpush1.bf16.msra.mxu0 %v3987
    %10393 = vmatprep.subr.bf16.mxu0 %v3972
    %10394 = vmatpush1.bf16.msra.mxu0 %v3971
    %10395 = vmatprep.subr.bf16.mxu0 %v3956
    %10396 = vmatpush1.bf16.msra.mxu0 %v3955
    %10397 = vmatprep.subr.bf16.mxu0 %v4196
    %10398 = vmatpush2.bf16.msra.mxu0 %v4195
    %10399 = vmatprep.subr.bf16.mxu0 %v4180
    %10400 = vmatpush2.bf16.msra.mxu0 %v4179
    %10401 = vmatprep.subr.bf16.mxu0 %v4164
    %10402 = vmatpush2.bf16.msra.mxu0 %v4163
    %10403 = vmatprep.subr.bf16.mxu0 %v4148
    %10404 = vmatpush2.bf16.msra.mxu0 %v4147
    %10405 = vmatprep.subr.bf16.mxu0 %v4132
    %10406 = vmatpush2.bf16.msra.mxu0 %v4131
    %10407 = vmatprep.subr.bf16.mxu0 %v4116
    %10408 = vmatpush2.bf16.msra.mxu0 %v4115
    %10409 = vmatprep.subr.bf16.mxu0 %v4100
    %10410 = vmatpush2.bf16.msra.mxu0 %v4099
    %10411 = vmatprep.subr.bf16.mxu0 %v4084
    %10412 = vmatpush2.bf16.msra.mxu0 %v4083
    %10413 = vmatprep.mubr.bf16.mxu0 %v10257
    %10414 = vmatmul.mubr.bf16.gmra.mxu0 %v10256
    %v10415 = vpop.f32.mrf.mxu0
    %v10416 = vadd.f32 %v10375, %v10415
    %v10417 = vpop.f32.mrf.mxu0
    %v10418 = vadd.f32 %v10377, %v10417
    %v10419 = vpop.f32.mrf.mxu0
    %v10420 = vpop.f32.mrf.mxu0
    %10421 = vdwg.mxu0
    %10422 = vmatprep.subr.bf16.mxu0 %v3814
    %10423 = vmatpush1.bf16.msra.mxu0 %v3813
    %10424 = vmatprep.subr.bf16.mxu0 %v3798
    %10425 = vmatpush1.bf16.msra.mxu0 %v3797
    %10426 = vmatprep.subr.bf16.mxu0 %v3782
    %10427 = vmatpush1.bf16.msra.mxu0 %v3781
    %10428 = vmatprep.subr.bf16.mxu0 %v3766
    %10429 = vmatpush1.bf16.msra.mxu0 %v3765
    %10430 = vmatprep.subr.bf16.mxu0 %v3750
    %10431 = vmatpush1.bf16.msra.mxu0 %v3749
    %10432 = vmatprep.subr.bf16.mxu0 %v3734
    %10433 = vmatpush1.bf16.msra.mxu0 %v3733
    %10434 = vmatprep.subr.bf16.mxu0 %v3718
    %10435 = vmatpush1.bf16.msra.mxu0 %v3717
    %10436 = vmatprep.subr.bf16.mxu0 %v3702
    %10437 = vmatpush1.bf16.msra.mxu0 %v3701
    %10438 = vmatprep.subr.bf16.mxu0 %v3942
    %10439 = vmatpush2.bf16.msra.mxu0 %v3941
    %10440 = vmatprep.subr.bf16.mxu0 %v3926
    %10441 = vmatpush2.bf16.msra.mxu0 %v3925
    %10442 = vmatprep.subr.bf16.mxu0 %v3910
    %10443 = vmatpush2.bf16.msra.mxu0 %v3909
    %10444 = vmatprep.subr.bf16.mxu0 %v3894
    %10445 = vmatpush2.bf16.msra.mxu0 %v3893
    %10446 = vmatprep.subr.bf16.mxu0 %v3878
    %10447 = vmatpush2.bf16.msra.mxu0 %v3877
    %10448 = vmatprep.subr.bf16.mxu0 %v3862
    %10449 = vmatpush2.bf16.msra.mxu0 %v3861
    %10450 = vmatprep.subr.bf16.mxu0 %v3846
    %10451 = vmatpush2.bf16.msra.mxu0 %v3845
    %10452 = vmatprep.subr.bf16.mxu0 %v3830
    %10453 = vmatpush2.bf16.msra.mxu0 %v3829
    %10454 = vmatprep.mubr.bf16.mxu0 %v10255
    %10455 = vmatmul.mubr.bf16.gmra.mxu0 %v10254
    %v10456 = vpop.f32.mrf.mxu0
    %v10457 = vadd.f32 0.0, %v10456
    %v10458 = vpop.f32.mrf.mxu0
    %v10459 = vadd.f32 0.0, %v10458
    %v10460 = vpop.f32.mrf.mxu0
    %v10461 = vpop.f32.mrf.mxu0
    %10462 = vdwg.mxu0
    %10463 = vmatprep.subr.bf16.mxu0 %v4070
    %10464 = vmatpush1.bf16.msra.mxu0 %v4069
    %10465 = vmatprep.subr.bf16.mxu0 %v4054
    %10466 = vmatpush1.bf16.msra.mxu0 %v4053
    %10467 = vmatprep.subr.bf16.mxu0 %v4038
    %10468 = vmatpush1.bf16.msra.mxu0 %v4037
    %10469 = vmatprep.subr.bf16.mxu0 %v4022
    %10470 = vmatpush1.bf16.msra.mxu0 %v4021
    %10471 = vmatprep.subr.bf16.mxu0 %v4006
    %10472 = vmatpush1.bf16.msra.mxu0 %v4005
    %10473 = vmatprep.subr.bf16.mxu0 %v3990
    %10474 = vmatpush1.bf16.msra.mxu0 %v3989
    %10475 = vmatprep.subr.bf16.mxu0 %v3974
    %10476 = vmatpush1.bf16.msra.mxu0 %v3973
    %10477 = vmatprep.subr.bf16.mxu0 %v3958
    %10478 = vmatpush1.bf16.msra.mxu0 %v3957
    %10479 = vmatprep.subr.bf16.mxu0 %v4198
    %10480 = vmatpush2.bf16.msra.mxu0 %v4197
    %10481 = vmatprep.subr.bf16.mxu0 %v4182
    %10482 = vmatpush2.bf16.msra.mxu0 %v4181
    %10483 = vmatprep.subr.bf16.mxu0 %v4166
    %10484 = vmatpush2.bf16.msra.mxu0 %v4165
    %10485 = vmatprep.subr.bf16.mxu0 %v4150
    %10486 = vmatpush2.bf16.msra.mxu0 %v4149
    %10487 = vmatprep.subr.bf16.mxu0 %v4134
    %10488 = vmatpush2.bf16.msra.mxu0 %v4133
    %10489 = vmatprep.subr.bf16.mxu0 %v4118
    %10490 = vmatpush2.bf16.msra.mxu0 %v4117
    %10491 = vmatprep.subr.bf16.mxu0 %v4102
    %10492 = vmatpush2.bf16.msra.mxu0 %v4101
    %10493 = vmatprep.subr.bf16.mxu0 %v4086
    %10494 = vmatpush2.bf16.msra.mxu0 %v4085
    %10495 = vmatprep.mubr.bf16.mxu0 %v10257
    %10496 = vmatmul.mubr.bf16.gmra.mxu0 %v10256
    %v10497 = vpop.f32.mrf.mxu0
    %v10498 = vadd.f32 %v10457, %v10497
    %v10499 = vpop.f32.mrf.mxu0
    %v10500 = vadd.f32 %v10459, %v10499
    %v10501 = vpop.f32.mrf.mxu0
    %v10502 = vpop.f32.mrf.mxu0
    %10503 = vdwg.mxu0
    %10504 = vmatprep.subr.bf16.mxu0 %v3816
    %10505 = vmatpush1.bf16.msra.mxu0 %v3815
    %10506 = vmatprep.subr.bf16.mxu0 %v3800
    %10507 = vmatpush1.bf16.msra.mxu0 %v3799
    %10508 = vmatprep.subr.bf16.mxu0 %v3784
    %10509 = vmatpush1.bf16.msra.mxu0 %v3783
    %10510 = vmatprep.subr.bf16.mxu0 %v3768
    %10511 = vmatpush1.bf16.msra.mxu0 %v3767
    %10512 = vmatprep.subr.bf16.mxu0 %v3752
    %10513 = vmatpush1.bf16.msra.mxu0 %v3751
    %10514 = vmatprep.subr.bf16.mxu0 %v3736
    %10515 = vmatpush1.bf16.msra.mxu0 %v3735
    %10516 = vmatprep.subr.bf16.mxu0 %v3720
    %10517 = vmatpush1.bf16.msra.mxu0 %v3719
    %10518 = vmatprep.subr.bf16.mxu0 %v3704
    %10519 = vmatpush1.bf16.msra.mxu0 %v3703
    %10520 = vmatprep.subr.bf16.mxu0 %v3944
    %10521 = vmatpush2.bf16.msra.mxu0 %v3943
    %10522 = vmatprep.subr.bf16.mxu0 %v3928
    %10523 = vmatpush2.bf16.msra.mxu0 %v3927
    %10524 = vmatprep.subr.bf16.mxu0 %v3912
    %10525 = vmatpush2.bf16.msra.mxu0 %v3911
    %10526 = vmatprep.subr.bf16.mxu0 %v3896
    %10527 = vmatpush2.bf16.msra.mxu0 %v3895
    %10528 = vmatprep.subr.bf16.mxu0 %v3880
    %10529 = vmatpush2.bf16.msra.mxu0 %v3879
    %10530 = vmatprep.subr.bf16.mxu0 %v3864
    %10531 = vmatpush2.bf16.msra.mxu0 %v3863
    %10532 = vmatprep.subr.bf16.mxu0 %v3848
    %10533 = vmatpush2.bf16.msra.mxu0 %v3847
    %10534 = vmatprep.subr.bf16.mxu0 %v3832
    %10535 = vmatpush2.bf16.msra.mxu0 %v3831
    %10536 = vmatprep.mubr.bf16.mxu0 %v10255
    %10537 = vmatmul.mubr.bf16.gmra.mxu0 %v10254
    %v10538 = vpop.f32.mrf.mxu0
    %v10539 = vadd.f32 0.0, %v10538
    %v10540 = vpop.f32.mrf.mxu0
    %v10541 = vadd.f32 0.0, %v10540
    %v10542 = vpop.f32.mrf.mxu0
    %v10543 = vpop.f32.mrf.mxu0
    %10544 = vdwg.mxu0
    %10545 = vmatprep.subr.bf16.mxu0 %v4072
    %10546 = vmatpush1.bf16.msra.mxu0 %v4071
    %10547 = vmatprep.subr.bf16.mxu0 %v4056
    %10548 = vmatpush1.bf16.msra.mxu0 %v4055
    %10549 = vmatprep.subr.bf16.mxu0 %v4040
    %10550 = vmatpush1.bf16.msra.mxu0 %v4039
    %10551 = vmatprep.subr.bf16.mxu0 %v4024
    %10552 = vmatpush1.bf16.msra.mxu0 %v4023
    %10553 = vmatprep.subr.bf16.mxu0 %v4008
    %10554 = vmatpush1.bf16.msra.mxu0 %v4007
    %10555 = vmatprep.subr.bf16.mxu0 %v3992
    %10556 = vmatpush1.bf16.msra.mxu0 %v3991
    %10557 = vmatprep.subr.bf16.mxu0 %v3976
    %10558 = vmatpush1.bf16.msra.mxu0 %v3975
    %10559 = vmatprep.subr.bf16.mxu0 %v3960
    %10560 = vmatpush1.bf16.msra.mxu0 %v3959
    %10561 = vmatprep.subr.bf16.mxu0 %v4200
    %10562 = vmatpush2.bf16.msra.mxu0 %v4199
    %10563 = vmatprep.subr.bf16.mxu0 %v4184
    %10564 = vmatpush2.bf16.msra.mxu0 %v4183
    %10565 = vmatprep.subr.bf16.mxu0 %v4168
    %10566 = vmatpush2.bf16.msra.mxu0 %v4167
    %10567 = vmatprep.subr.bf16.mxu0 %v4152
    %10568 = vmatpush2.bf16.msra.mxu0 %v4151
    %10569 = vmatprep.subr.bf16.mxu0 %v4136
    %10570 = vmatpush2.bf16.msra.mxu0 %v4135
    %10571 = vmatprep.subr.bf16.mxu0 %v4120
    %10572 = vmatpush2.bf16.msra.mxu0 %v4119
    %10573 = vmatprep.subr.bf16.mxu0 %v4104
    %10574 = vmatpush2.bf16.msra.mxu0 %v4103
    %10575 = vmatprep.subr.bf16.mxu0 %v4088
    %10576 = vmatpush2.bf16.msra.mxu0 %v4087
    %10577 = vmatprep.mubr.bf16.mxu0 %v10257
    %10578 = vmatmul.mubr.bf16.gmra.mxu0 %v10256
    %v10579 = vpop.f32.mrf.mxu0
    %v10580 = vadd.f32 %v10539, %v10579
    %v10581 = vpop.f32.mrf.mxu0
    %v10582 = vadd.f32 %v10541, %v10581
    %v10583 = vpop.f32.mrf.mxu0
    %v10584 = vpop.f32.mrf.mxu0
    %10585 = vdwg.mxu0
    %10586 = vmatprep.subr.bf16.mxu0 %v3818
    %10587 = vmatpush1.bf16.msra.mxu0 %v3817
    %10588 = vmatprep.subr.bf16.mxu0 %v3802
    %10589 = vmatpush1.bf16.msra.mxu0 %v3801
    %10590 = vmatprep.subr.bf16.mxu0 %v3786
    %10591 = vmatpush1.bf16.msra.mxu0 %v3785
    %10592 = vmatprep.subr.bf16.mxu0 %v3770
    %10593 = vmatpush1.bf16.msra.mxu0 %v3769
    %10594 = vmatprep.subr.bf16.mxu0 %v3754
    %10595 = vmatpush1.bf16.msra.mxu0 %v3753
    %10596 = vmatprep.subr.bf16.mxu0 %v3738
    %10597 = vmatpush1.bf16.msra.mxu0 %v3737
    %10598 = vmatprep.subr.bf16.mxu0 %v3722
    %10599 = vmatpush1.bf16.msra.mxu0 %v3721
    %10600 = vmatprep.subr.bf16.mxu0 %v3706
    %10601 = vmatpush1.bf16.msra.mxu0 %v3705
    %10602 = vmatprep.subr.bf16.mxu0 %v3946
    %10603 = vmatpush2.bf16.msra.mxu0 %v3945
    %10604 = vmatprep.subr.bf16.mxu0 %v3930
    %10605 = vmatpush2.bf16.msra.mxu0 %v3929
    %10606 = vmatprep.subr.bf16.mxu0 %v3914
    %10607 = vmatpush2.bf16.msra.mxu0 %v3913
    %10608 = vmatprep.subr.bf16.mxu0 %v3898
    %10609 = vmatpush2.bf16.msra.mxu0 %v3897
    %10610 = vmatprep.subr.bf16.mxu0 %v3882
    %10611 = vmatpush2.bf16.msra.mxu0 %v3881
    %10612 = vmatprep.subr.bf16.mxu0 %v3866
    %10613 = vmatpush2.bf16.msra.mxu0 %v3865
    %10614 = vmatprep.subr.bf16.mxu0 %v3850
    %10615 = vmatpush2.bf16.msra.mxu0 %v3849
    %10616 = vmatprep.subr.bf16.mxu0 %v3834
    %10617 = vmatpush2.bf16.msra.mxu0 %v3833
    %10618 = vmatprep.mubr.bf16.mxu0 %v10255
    %10619 = vmatmul.mubr.bf16.gmra.mxu0 %v10254
    %v10620 = vpop.f32.mrf.mxu0
    %v10621 = vadd.f32 0.0, %v10620
    %v10622 = vpop.f32.mrf.mxu0
    %v10623 = vadd.f32 0.0, %v10622
    %v10624 = vpop.f32.mrf.mxu0
    %v10625 = vpop.f32.mrf.mxu0
    %10626 = vdwg.mxu0
    %10627 = vmatprep.subr.bf16.mxu0 %v4074
    %10628 = vmatpush1.bf16.msra.mxu0 %v4073
    %10629 = vmatprep.subr.bf16.mxu0 %v4058
    %10630 = vmatpush1.bf16.msra.mxu0 %v4057
    %10631 = vmatprep.subr.bf16.mxu0 %v4042
    %10632 = vmatpush1.bf16.msra.mxu0 %v4041
    %10633 = vmatprep.subr.bf16.mxu0 %v4026
    %10634 = vmatpush1.bf16.msra.mxu0 %v4025
    %10635 = vmatprep.subr.bf16.mxu0 %v4010
    %10636 = vmatpush1.bf16.msra.mxu0 %v4009
    %10637 = vmatprep.subr.bf16.mxu0 %v3994
    %10638 = vmatpush1.bf16.msra.mxu0 %v3993
    %10639 = vmatprep.subr.bf16.mxu0 %v3978
    %10640 = vmatpush1.bf16.msra.mxu0 %v3977
    %10641 = vmatprep.subr.bf16.mxu0 %v3962
    %10642 = vmatpush1.bf16.msra.mxu0 %v3961
    %10643 = vmatprep.subr.bf16.mxu0 %v4202
    %10644 = vmatpush2.bf16.msra.mxu0 %v4201
    %10645 = vmatprep.subr.bf16.mxu0 %v4186
    %10646 = vmatpush2.bf16.msra.mxu0 %v4185
    %10647 = vmatprep.subr.bf16.mxu0 %v4170
    %10648 = vmatpush2.bf16.msra.mxu0 %v4169
    %10649 = vmatprep.subr.bf16.mxu0 %v4154
    %10650 = vmatpush2.bf16.msra.mxu0 %v4153
    %10651 = vmatprep.subr.bf16.mxu0 %v4138
    %10652 = vmatpush2.bf16.msra.mxu0 %v4137
    %10653 = vmatprep.subr.bf16.mxu0 %v4122
    %10654 = vmatpush2.bf16.msra.mxu0 %v4121
    %10655 = vmatprep.subr.bf16.mxu0 %v4106
    %10656 = vmatpush2.bf16.msra.mxu0 %v4105
    %10657 = vmatprep.subr.bf16.mxu0 %v4090
    %10658 = vmatpush2.bf16.msra.mxu0 %v4089
    %10659 = vmatprep.mubr.bf16.mxu0 %v10257
    %10660 = vmatmul.mubr.bf16.gmra.mxu0 %v10256
    %v10661 = vpop.f32.mrf.mxu0
    %v10662 = vadd.f32 %v10621, %v10661
    %v10663 = vpop.f32.mrf.mxu0
    %v10664 = vadd.f32 %v10623, %v10663
    %v10665 = vpop.f32.mrf.mxu0
    %v10666 = vpop.f32.mrf.mxu0
    %10667 = vdwg.mxu0
    %10668 = vmatprep.subr.bf16.mxu0 %v3820
    %10669 = vmatpush1.bf16.msra.mxu0 %v3819
    %10670 = vmatprep.subr.bf16.mxu0 %v3804
    %10671 = vmatpush1.bf16.msra.mxu0 %v3803
    %10672 = vmatprep.subr.bf16.mxu0 %v3788
    %10673 = vmatpush1.bf16.msra.mxu0 %v3787
    %10674 = vmatprep.subr.bf16.mxu0 %v3772
    %10675 = vmatpush1.bf16.msra.mxu0 %v3771
    %10676 = vmatprep.subr.bf16.mxu0 %v3756
    %10677 = vmatpush1.bf16.msra.mxu0 %v3755
    %10678 = vmatprep.subr.bf16.mxu0 %v3740
    %10679 = vmatpush1.bf16.msra.mxu0 %v3739
    %10680 = vmatprep.subr.bf16.mxu0 %v3724
    %10681 = vmatpush1.bf16.msra.mxu0 %v3723
    %10682 = vmatprep.subr.bf16.mxu0 %v3708
    %10683 = vmatpush1.bf16.msra.mxu0 %v3707
    %10684 = vmatprep.subr.bf16.mxu0 %v3948
    %10685 = vmatpush2.bf16.msra.mxu0 %v3947
    %10686 = vmatprep.subr.bf16.mxu0 %v3932
    %10687 = vmatpush2.bf16.msra.mxu0 %v3931
    %10688 = vmatprep.subr.bf16.mxu0 %v3916
    %10689 = vmatpush2.bf16.msra.mxu0 %v3915
    %10690 = vmatprep.subr.bf16.mxu0 %v3900
    %10691 = vmatpush2.bf16.msra.mxu0 %v3899
    %10692 = vmatprep.subr.bf16.mxu0 %v3884
    %10693 = vmatpush2.bf16.msra.mxu0 %v3883
    %10694 = vmatprep.subr.bf16.mxu0 %v3868
    %10695 = vmatpush2.bf16.msra.mxu0 %v3867
    %10696 = vmatprep.subr.bf16.mxu0 %v3852
    %10697 = vmatpush2.bf16.msra.mxu0 %v3851
    %10698 = vmatprep.subr.bf16.mxu0 %v3836
    %10699 = vmatpush2.bf16.msra.mxu0 %v3835
    %10700 = vmatprep.mubr.bf16.mxu0 %v10255
    %10701 = vmatmul.mubr.bf16.gmra.mxu0 %v10254
    %v10702 = vpop.f32.mrf.mxu0
    %v10703 = vadd.f32 0.0, %v10702
    %v10704 = vpop.f32.mrf.mxu0
    %v10705 = vadd.f32 0.0, %v10704
    %v10706 = vpop.f32.mrf.mxu0
    %v10707 = vpop.f32.mrf.mxu0
    %10708 = vdwg.mxu0
    %10709 = vmatprep.subr.bf16.mxu0 %v4076
    %10710 = vmatpush1.bf16.msra.mxu0 %v4075
    %10711 = vmatprep.subr.bf16.mxu0 %v4060
    %10712 = vmatpush1.bf16.msra.mxu0 %v4059
    %10713 = vmatprep.subr.bf16.mxu0 %v4044
    %10714 = vmatpush1.bf16.msra.mxu0 %v4043
    %10715 = vmatprep.subr.bf16.mxu0 %v4028
    %10716 = vmatpush1.bf16.msra.mxu0 %v4027
    %10717 = vmatprep.subr.bf16.mxu0 %v4012
    %10718 = vmatpush1.bf16.msra.mxu0 %v4011
    %10719 = vmatprep.subr.bf16.mxu0 %v3996
    %10720 = vmatpush1.bf16.msra.mxu0 %v3995
    %10721 = vmatprep.subr.bf16.mxu0 %v3980
    %10722 = vmatpush1.bf16.msra.mxu0 %v3979
    %10723 = vmatprep.subr.bf16.mxu0 %v3964
    %10724 = vmatpush1.bf16.msra.mxu0 %v3963
    %10725 = vmatprep.subr.bf16.mxu0 %v4204
    %10726 = vmatpush2.bf16.msra.mxu0 %v4203
    %10727 = vmatprep.subr.bf16.mxu0 %v4188
    %10728 = vmatpush2.bf16.msra.mxu0 %v4187
    %10729 = vmatprep.subr.bf16.mxu0 %v4172
    %10730 = vmatpush2.bf16.msra.mxu0 %v4171
    %10731 = vmatprep.subr.bf16.mxu0 %v4156
    %10732 = vmatpush2.bf16.msra.mxu0 %v4155
    %10733 = vmatprep.subr.bf16.mxu0 %v4140
    %10734 = vmatpush2.bf16.msra.mxu0 %v4139
    %10735 = vmatprep.subr.bf16.mxu0 %v4124
    %10736 = vmatpush2.bf16.msra.mxu0 %v4123
    %10737 = vmatprep.subr.bf16.mxu0 %v4108
    %10738 = vmatpush2.bf16.msra.mxu0 %v4107
    %10739 = vmatprep.subr.bf16.mxu0 %v4092
    %10740 = vmatpush2.bf16.msra.mxu0 %v4091
    %10741 = vmatprep.mubr.bf16.mxu0 %v10257
    %10742 = vmatmul.mubr.bf16.gmra.mxu0 %v10256
    %v10743 = vpop.f32.mrf.mxu0
    %v10744 = vadd.f32 %v10703, %v10743
    %v10745 = vpop.f32.mrf.mxu0
    %v10746 = vadd.f32 %v10705, %v10745
    %v10747 = vpop.f32.mrf.mxu0
    %v10748 = vpop.f32.mrf.mxu0
    %10749 = vdwg.mxu0
    %10750 = vmatprep.subr.bf16.mxu0 %v3822
    %10751 = vmatpush1.bf16.msra.mxu0 %v3821
    %10752 = vmatprep.subr.bf16.mxu0 %v3806
    %10753 = vmatpush1.bf16.msra.mxu0 %v3805
    %10754 = vmatprep.subr.bf16.mxu0 %v3790
    %10755 = vmatpush1.bf16.msra.mxu0 %v3789
    %10756 = vmatprep.subr.bf16.mxu0 %v3774
    %10757 = vmatpush1.bf16.msra.mxu0 %v3773
    %10758 = vmatprep.subr.bf16.mxu0 %v3758
    %10759 = vmatpush1.bf16.msra.mxu0 %v3757
    %10760 = vmatprep.subr.bf16.mxu0 %v3742
    %10761 = vmatpush1.bf16.msra.mxu0 %v3741
    %10762 = vmatprep.subr.bf16.mxu0 %v3726
    %10763 = vmatpush1.bf16.msra.mxu0 %v3725
    %10764 = vmatprep.subr.bf16.mxu0 %v3710
    %10765 = vmatpush1.bf16.msra.mxu0 %v3709
    %10766 = vmatprep.subr.bf16.mxu0 %v3950
    %10767 = vmatpush2.bf16.msra.mxu0 %v3949
    %10768 = vmatprep.subr.bf16.mxu0 %v3934
    %10769 = vmatpush2.bf16.msra.mxu0 %v3933
    %10770 = vmatprep.subr.bf16.mxu0 %v3918
    %10771 = vmatpush2.bf16.msra.mxu0 %v3917
    %10772 = vmatprep.subr.bf16.mxu0 %v3902
    %10773 = vmatpush2.bf16.msra.mxu0 %v3901
    %10774 = vmatprep.subr.bf16.mxu0 %v3886
    %10775 = vmatpush2.bf16.msra.mxu0 %v3885
    %10776 = vmatprep.subr.bf16.mxu0 %v3870
    %10777 = vmatpush2.bf16.msra.mxu0 %v3869
    %10778 = vmatprep.subr.bf16.mxu0 %v3854
    %10779 = vmatpush2.bf16.msra.mxu0 %v3853
    %10780 = vmatprep.subr.bf16.mxu0 %v3838
    %10781 = vmatpush2.bf16.msra.mxu0 %v3837
    %10782 = vmatprep.mubr.bf16.mxu0 %v10255
    %10783 = vmatmul.mubr.bf16.gmra.mxu0 %v10254
    %v10784 = vpop.f32.mrf.mxu0
    %v10785 = vadd.f32 0.0, %v10784
    %v10786 = vpop.f32.mrf.mxu0
    %v10787 = vadd.f32 0.0, %v10786
    %v10788 = vpop.f32.mrf.mxu0
    %v10789 = vpop.f32.mrf.mxu0
    %10790 = vdwg.mxu0
    %10791 = vmatprep.subr.bf16.mxu0 %v4078
    %10792 = vmatpush1.bf16.msra.mxu0 %v4077
    %10793 = vmatprep.subr.bf16.mxu0 %v4062
    %10794 = vmatpush1.bf16.msra.mxu0 %v4061
    %10795 = vmatprep.subr.bf16.mxu0 %v4046
    %10796 = vmatpush1.bf16.msra.mxu0 %v4045
    %10797 = vmatprep.subr.bf16.mxu0 %v4030
    %10798 = vmatpush1.bf16.msra.mxu0 %v4029
    %10799 = vmatprep.subr.bf16.mxu0 %v4014
    %10800 = vmatpush1.bf16.msra.mxu0 %v4013
    %10801 = vmatprep.subr.bf16.mxu0 %v3998
    %10802 = vmatpush1.bf16.msra.mxu0 %v3997
    %10803 = vmatprep.subr.bf16.mxu0 %v3982
    %10804 = vmatpush1.bf16.msra.mxu0 %v3981
    %10805 = vmatprep.subr.bf16.mxu0 %v3966
    %10806 = vmatpush1.bf16.msra.mxu0 %v3965
    %10807 = vmatprep.subr.bf16.mxu0 %v4206
    %10808 = vmatpush2.bf16.msra.mxu0 %v4205
    %10809 = vmatprep.subr.bf16.mxu0 %v4190
    %10810 = vmatpush2.bf16.msra.mxu0 %v4189
    %10811 = vmatprep.subr.bf16.mxu0 %v4174
    %10812 = vmatpush2.bf16.msra.mxu0 %v4173
    %10813 = vmatprep.subr.bf16.mxu0 %v4158
    %10814 = vmatpush2.bf16.msra.mxu0 %v4157
    %10815 = vmatprep.subr.bf16.mxu0 %v4142
    %10816 = vmatpush2.bf16.msra.mxu0 %v4141
    %10817 = vmatprep.subr.bf16.mxu0 %v4126
    %10818 = vmatpush2.bf16.msra.mxu0 %v4125
    %10819 = vmatprep.subr.bf16.mxu0 %v4110
    %10820 = vmatpush2.bf16.msra.mxu0 %v4109
    %10821 = vmatprep.subr.bf16.mxu0 %v4094
    %10822 = vmatpush2.bf16.msra.mxu0 %v4093
    %10823 = vmatprep.mubr.bf16.mxu0 %v10257
    %10824 = vmatmul.mubr.bf16.gmra.mxu0 %v10256
    %v10825 = vpop.f32.mrf.mxu0
    %v10826 = vadd.f32 %v10785, %v10825
    %v10827 = vpop.f32.mrf.mxu0
    %v10828 = vadd.f32 %v10787, %v10827
    %v10829 = vpop.f32.mrf.mxu0
    %v10830 = vpop.f32.mrf.mxu0
    %10831 = vdwg.mxu0
    %10832 = vmatprep.subr.bf16.mxu0 %v3824
    %10833 = vmatpush1.bf16.msra.mxu0 %v3823
    %10834 = vmatprep.subr.bf16.mxu0 %v3808
    %10835 = vmatpush1.bf16.msra.mxu0 %v3807
    %10836 = vmatprep.subr.bf16.mxu0 %v3792
    %10837 = vmatpush1.bf16.msra.mxu0 %v3791
    %10838 = vmatprep.subr.bf16.mxu0 %v3776
    %10839 = vmatpush1.bf16.msra.mxu0 %v3775
    %10840 = vmatprep.subr.bf16.mxu0 %v3760
    %10841 = vmatpush1.bf16.msra.mxu0 %v3759
    %10842 = vmatprep.subr.bf16.mxu0 %v3744
    %10843 = vmatpush1.bf16.msra.mxu0 %v3743
    %10844 = vmatprep.subr.bf16.mxu0 %v3728
    %10845 = vmatpush1.bf16.msra.mxu0 %v3727
    %10846 = vmatprep.subr.bf16.mxu0 %v3712
    %10847 = vmatpush1.bf16.msra.mxu0 %v3711
    %10848 = vmatprep.subr.bf16.mxu0 %v3952
    %10849 = vmatpush2.bf16.msra.mxu0 %v3951
    %10850 = vmatprep.subr.bf16.mxu0 %v3936
    %10851 = vmatpush2.bf16.msra.mxu0 %v3935
    %10852 = vmatprep.subr.bf16.mxu0 %v3920
    %10853 = vmatpush2.bf16.msra.mxu0 %v3919
    %10854 = vmatprep.subr.bf16.mxu0 %v3904
    %10855 = vmatpush2.bf16.msra.mxu0 %v3903
    %10856 = vmatprep.subr.bf16.mxu0 %v3888
    %10857 = vmatpush2.bf16.msra.mxu0 %v3887
    %10858 = vmatprep.subr.bf16.mxu0 %v3872
    %10859 = vmatpush2.bf16.msra.mxu0 %v3871
    %10860 = vmatprep.subr.bf16.mxu0 %v3856
    %10861 = vmatpush2.bf16.msra.mxu0 %v3855
    %10862 = vmatprep.subr.bf16.mxu0 %v3840
    %10863 = vmatpush2.bf16.msra.mxu0 %v3839
    %10864 = vmatprep.mubr.bf16.mxu0 %v10255
    %10865 = vmatmul.mubr.bf16.gmra.mxu0 %v10254
    %v10866 = vpop.f32.mrf.mxu0
    %v10867 = vadd.f32 0.0, %v10866
    %v10868 = vpop.f32.mrf.mxu0
    %v10869 = vadd.f32 0.0, %v10868
    %v10870 = vpop.f32.mrf.mxu0
    %v10871 = vpop.f32.mrf.mxu0
    %10872 = vdwg.mxu0
    %10873 = vmatprep.subr.bf16.mxu0 %v4080
    %10874 = vmatpush1.bf16.msra.mxu0 %v4079
    %10875 = vmatprep.subr.bf16.mxu0 %v4064
    %10876 = vmatpush1.bf16.msra.mxu0 %v4063
    %10877 = vmatprep.subr.bf16.mxu0 %v4048
    %10878 = vmatpush1.bf16.msra.mxu0 %v4047
    %10879 = vmatprep.subr.bf16.mxu0 %v4032
    %10880 = vmatpush1.bf16.msra.mxu0 %v4031
    %10881 = vmatprep.subr.bf16.mxu0 %v4016
    %10882 = vmatpush1.bf16.msra.mxu0 %v4015
    %10883 = vmatprep.subr.bf16.mxu0 %v4000
    %10884 = vmatpush1.bf16.msra.mxu0 %v3999
    %10885 = vmatprep.subr.bf16.mxu0 %v3984
    %10886 = vmatpush1.bf16.msra.mxu0 %v3983
    %10887 = vmatprep.subr.bf16.mxu0 %v3968
    %10888 = vmatpush1.bf16.msra.mxu0 %v3967
    %10889 = vmatprep.subr.bf16.mxu0 %v4208
    %10890 = vmatpush2.bf16.msra.mxu0 %v4207
    %10891 = vmatprep.subr.bf16.mxu0 %v4192
    %10892 = vmatpush2.bf16.msra.mxu0 %v4191
    %10893 = vmatprep.subr.bf16.mxu0 %v4176
    %10894 = vmatpush2.bf16.msra.mxu0 %v4175
    %10895 = vmatprep.subr.bf16.mxu0 %v4160
    %10896 = vmatpush2.bf16.msra.mxu0 %v4159
    %10897 = vmatprep.subr.bf16.mxu0 %v4144
    %10898 = vmatpush2.bf16.msra.mxu0 %v4143
    %10899 = vmatprep.subr.bf16.mxu0 %v4128
    %10900 = vmatpush2.bf16.msra.mxu0 %v4127
    %10901 = vmatprep.subr.bf16.mxu0 %v4112
    %10902 = vmatpush2.bf16.msra.mxu0 %v4111
    %10903 = vmatprep.subr.bf16.mxu0 %v4096
    %10904 = vmatpush2.bf16.msra.mxu0 %v4095
    %10905 = vmatprep.mubr.bf16.mxu0 %v10257
    %10906 = vmatmul.mubr.bf16.gmra.mxu0 %v10256
    %v10907 = vpop.f32.mrf.mxu0
    %v10908 = vadd.f32 %v10867, %v10907
    %v10909 = vpop.f32.mrf.mxu0
    %v10910 = vadd.f32 %v10869, %v10909
    %v10911 = vpop.f32.mrf.mxu0
    %v10912 = vpop.f32.mrf.mxu0
    %10913 = vdwg.mxu0
    %v10914 = vadd.f32 %v10238, %v10334
    %v10915 = vadd.f32 %v10239, %v10336
    %v10916 = vadd.f32 %v10240, %v10416
    %v10917 = vadd.f32 %v10241, %v10418
    %v10918 = vadd.f32 %v10242, %v10498
    %v10919 = vadd.f32 %v10243, %v10500
    %v10920 = vadd.f32 %v10244, %v10580
    %v10921 = vadd.f32 %v10245, %v10582
    %v10922 = vadd.f32 %v10246, %v10662
    %v10923 = vadd.f32 %v10247, %v10664
    %v10924 = vadd.f32 %v10248, %v10744
    %v10925 = vadd.f32 %v10249, %v10746
    %v10926 = vadd.f32 %v10250, %v10826
    %v10927 = vadd.f32 %v10251, %v10828
    %v10928 = vadd.f32 %v10252, %v10908
    %v10929 = vadd.f32 %v10253, %v10910
    %v10930 = vxor.u32 %v10914, 2147483648
    %v10931 = vxor.u32 %v10915, 2147483648
    %v10932 = vxor.u32 %v10916, 2147483648
    %v10933 = vxor.u32 %v10917, 2147483648
    %v10934 = vmul.f32 %v10930, 1.442695
    %v10935 = vpow.pop %v10934
    %v10936 = vmul.f32 %v10931, 1.442695
    %v10937 = vpow.pop %v10936
    %v10938 = vmul.f32 %v10932, 1.442695
    %v10939 = vpow.pop %v10938
    %v10940 = vmul.f32 %v10933, 1.442695
    %v10941 = vpow.pop %v10940
    %v10942 = vadd.f32 %v10935, 1.0
    %v10943 = vadd.f32 %v10937, 1.0
    %v10944 = vadd.f32 %v10939, 1.0
    %v10945 = vadd.f32 %v10941, 1.0
    %v10946 = vrcp.pop %v10942
    %v10947 = vmul.f32 1.0, %v10946
    %v10948 = vrcp.pop %v10943
    %v10949 = vmul.f32 1.0, %v10948
    %v10950 = vrcp.pop %v10944
    %v10951 = vmul.f32 1.0, %v10950
    %v10952 = vrcp.pop %v10945
    %v10953 = vmul.f32 1.0, %v10952
    %v10954 = vxor.u32 %v10918, 2147483648
    %v10955 = vxor.u32 %v10919, 2147483648
    %v10956 = vxor.u32 %v10920, 2147483648
    %v10957 = vxor.u32 %v10921, 2147483648
    %v10958 = vmul.f32 %v10954, 1.442695
    %v10959 = vpow.pop %v10958
    %v10960 = vmul.f32 %v10955, 1.442695
    %v10961 = vpow.pop %v10960
    %v10962 = vmul.f32 %v10956, 1.442695
    %v10963 = vpow.pop %v10962
    %v10964 = vmul.f32 %v10957, 1.442695
    %v10965 = vpow.pop %v10964
    %v10966 = vadd.f32 %v10959, 1.0
    %v10967 = vadd.f32 %v10961, 1.0
    %v10968 = vadd.f32 %v10963, 1.0
    %v10969 = vadd.f32 %v10965, 1.0
    %v10970 = vrcp.pop %v10966
    %v10971 = vmul.f32 1.0, %v10970
    %v10972 = vrcp.pop %v10967
    %v10973 = vmul.f32 1.0, %v10972
    %v10974 = vrcp.pop %v10968
    %v10975 = vmul.f32 1.0, %v10974
    %v10976 = vrcp.pop %v10969
    %v10977 = vmul.f32 1.0, %v10976
    %v10978 = vtanh.pop %v10922
    %v10979 = vtanh.pop %v10923
    %v10980 = vtanh.pop %v10924
    %v10981 = vtanh.pop %v10925
    %v10982 = vxor.u32 %v10926, 2147483648
    %v10983 = vxor.u32 %v10927, 2147483648
    %v10984 = vxor.u32 %v10928, 2147483648
    %v10985 = vxor.u32 %v10929, 2147483648
    %v10986 = vmul.f32 %v10982, 1.442695
    %v10987 = vpow.pop %v10986
    %v10988 = vmul.f32 %v10983, 1.442695
    %v10989 = vpow.pop %v10988
    %v10990 = vmul.f32 %v10984, 1.442695
    %v10991 = vpow.pop %v10990
    %v10992 = vmul.f32 %v10985, 1.442695
    %v10993 = vpow.pop %v10992
    %v10994 = vadd.f32 %v10987, 1.0
    %v10995 = vadd.f32 %v10989, 1.0
    %v10996 = vadd.f32 %v10991, 1.0
    %v10997 = vadd.f32 %v10993, 1.0
    %v10998 = vrcp.pop %v10994
    %v10999 = vmul.f32 1.0, %v10998
    %v11000 = vrcp.pop %v10995
    %v11001 = vmul.f32 1.0, %v11000
    %v11002 = vrcp.pop %v10996
    %v11003 = vmul.f32 1.0, %v11002
    %v11004 = vrcp.pop %v10997
    %v11005 = vmul.f32 1.0, %v11004
    %v11006 = vmul.f32 %v10971, %v10223
    %v11007 = vmul.f32 %v10973, %v10224
    %v11008 = vmul.f32 %v10975, %v10225
    %v11009 = vmul.f32 %v10977, %v10226
    %v11010 = vmul.f32 %v10947, %v10978
    %v11011 = vmul.f32 %v10949, %v10979
    %v11012 = vmul.f32 %v10951, %v10980
    %v11013 = vmul.f32 %v10953, %v10981
    %v11014 = vadd.f32 %v11006, %v11010
    %v11015 = vadd.f32 %v11007, %v11011
    %v11016 = vadd.f32 %v11008, %v11012
    %v11017 = vadd.f32 %v11009, %v11013
    %v11018 = vtanh.pop %v11014
    %v11019 = vtanh.pop %v11015
    %v11020 = vtanh.pop %v11016
    %v11021 = vtanh.pop %v11017
    %v11022 = vmul.f32 %v10999, %v11018
    %v11023 = vmul.f32 %v11001, %v11019
    %v11024 = vmul.f32 %v11003, %v11020
    %v11025 = vmul.f32 %v11005, %v11021
    %v11026 = vpack.c.bf16 %v11022, %v11022
    %v11027 = vpack.c.bf16 %v11023, %v11023
    %v11028 = vpack.c.bf16 %v11024, %v11024
    %v11029 = vpack.c.bf16 %v11025, %v11025
    %v11030 = vld [vmem:[%s4] sm:$0xff]
    %v11031 = vld [vmem:[%s4 + $0x8] sm:$0xff]
    %v11032 = vld [vmem:[%s4 + $0x10] sm:$0xff]
    %v11033 = vld [vmem:[%s4 + $0x18] sm:$0xff]
    %v11034 = vld [vmem:[%s4 + $0x20] sm:$0xff]
    %v11035 = vld [vmem:[%s4 + $0x28] sm:$0xff]
    %v11036 = vld [vmem:[%s4 + $0x30] sm:$0xff]
    %v11037 = vld [vmem:[%s4 + $0x38] sm:$0xff]
    %v11038 = vld [vmem:[%s4 + $0x40] sm:$0xff]
    %v11039 = vld [vmem:[%s4 + $0x48] sm:$0xff]
    %v11040 = vld [vmem:[%s4 + $0x50] sm:$0xff]
    %v11041 = vld [vmem:[%s4 + $0x58] sm:$0xff]
    %v11042 = vld [vmem:[%s4 + $0x60] sm:$0xff]
    %v11043 = vld [vmem:[%s4 + $0x68] sm:$0xff]
    %v11044 = vld [vmem:[%s4 + $0x70] sm:$0xff]
    %v11045 = vld [vmem:[%s4 + $0x78] sm:$0xff]
    %v11046 = vld [vmem:[%s4 + $0x80] sm:$0xff]
    %v11047 = vld [vmem:[%s4 + $0x88] sm:$0xff]
    %v11048 = vld [vmem:[%s4 + $0x90] sm:$0xff]
    %v11049 = vld [vmem:[%s4 + $0x98] sm:$0xff]
    %v11050 = vld [vmem:[%s4 + $0xa0] sm:$0xff]
    %v11051 = vld [vmem:[%s4 + $0xa8] sm:$0xff]
    %v11052 = vld [vmem:[%s4 + $0xb0] sm:$0xff]
    %v11053 = vld [vmem:[%s4 + $0xb8] sm:$0xff]
    %v11054 = vld [vmem:[%s4 + $0xc0] sm:$0xff]
    %v11055 = vld [vmem:[%s4 + $0xc8] sm:$0xff]
    %v11056 = vld [vmem:[%s4 + $0xd0] sm:$0xff]
    %v11057 = vld [vmem:[%s4 + $0xd8] sm:$0xff]
    %v11058 = vld [vmem:[%s4 + $0xe0] sm:$0xff]
    %v11059 = vld [vmem:[%s4 + $0xe8] sm:$0xff]
    %v11060 = vld [vmem:[%s4 + $0xf0] sm:$0xff]
    %v11061 = vld [vmem:[%s4 + $0xf8] sm:$0xff]
    %v11062 = vld [vmem:[%s4 + $0x100] sm:$0xff]
    %v11063 = vld [vmem:[%s4 + $0x108] sm:$0xff]
    %v11064 = vld [vmem:[%s4 + $0x110] sm:$0xff]
    %v11065 = vld [vmem:[%s4 + $0x118] sm:$0xff]
    %v11066 = vld [vmem:[%s4 + $0x120] sm:$0xff]
    %v11067 = vld [vmem:[%s4 + $0x128] sm:$0xff]
    %v11068 = vld [vmem:[%s4 + $0x130] sm:$0xff]
    %v11069 = vld [vmem:[%s4 + $0x138] sm:$0xff]
    %v11070 = vld [vmem:[%s4 + $0x140] sm:$0xff]
    %v11071 = vld [vmem:[%s4 + $0x148] sm:$0xff]
    %v11072 = vld [vmem:[%s4 + $0x150] sm:$0xff]
    %v11073 = vld [vmem:[%s4 + $0x158] sm:$0xff]
    %v11074 = vld [vmem:[%s4 + $0x160] sm:$0xff]
    %v11075 = vld [vmem:[%s4 + $0x168] sm:$0xff]
    %v11076 = vld [vmem:[%s4 + $0x170] sm:$0xff]
    %v11077 = vld [vmem:[%s4 + $0x178] sm:$0xff]
    %v11078 = vld [vmem:[%s4 + $0x180] sm:$0xff]
    %v11079 = vld [vmem:[%s4 + $0x188] sm:$0xff]
    %v11080 = vld [vmem:[%s4 + $0x190] sm:$0xff]
    %v11081 = vld [vmem:[%s4 + $0x198] sm:$0xff]
    %v11082 = vld [vmem:[%s4 + $0x1a0] sm:$0xff]
    %v11083 = vld [vmem:[%s4 + $0x1a8] sm:$0xff]
    %v11084 = vld [vmem:[%s4 + $0x1b0] sm:$0xff]
    %v11085 = vld [vmem:[%s4 + $0x1b8] sm:$0xff]
    %v11086 = vld [vmem:[%s4 + $0x1c0] sm:$0xff]
    %v11087 = vld [vmem:[%s4 + $0x1c8] sm:$0xff]
    %v11088 = vld [vmem:[%s4 + $0x1d0] sm:$0xff]
    %v11089 = vld [vmem:[%s4 + $0x1d8] sm:$0xff]
    %v11090 = vld [vmem:[%s4 + $0x1e0] sm:$0xff]
    %v11091 = vld [vmem:[%s4 + $0x1e8] sm:$0xff]
    %v11092 = vld [vmem:[%s4 + $0x1f0] sm:$0xff]
    %v11093 = vld [vmem:[%s4 + $0x1f8] sm:$0xff]
    %v11094 = vld [vmem:[%s5] sm:$0x3]
    %v11096 = vlaneseq
    %v11097 = vshrl.u32 %v11096, 7
    %v11098 = vsub.s32 0, %v11097
    %v11099 = vrot.slane %v11094, %v11098
    %v11100 = vlaneseq
    %v11101 = vshrl.u32 %v11100, 7
    %v11102 = vsub.s32 1, %v11101
    %v11103 = vrot.slane %v11094, %v11102
    %v11170 = vunpack.c.l.b16 %v11030
    %v11171 = vunpack.c.h.b16 %v11030
    %v11172 = vunpack.c.l.b16 %v11031
    %v11173 = vunpack.c.h.b16 %v11031
    %v11174 = vunpack.c.l.b16 %v11032
    %v11175 = vunpack.c.h.b16 %v11032
    %v11176 = vunpack.c.l.b16 %v11033
    %v11177 = vunpack.c.h.b16 %v11033
    %v11178 = vunpack.c.l.b16 %v11034
    %v11179 = vunpack.c.h.b16 %v11034
    %v11180 = vunpack.c.l.b16 %v11035
    %v11181 = vunpack.c.h.b16 %v11035
    %v11182 = vunpack.c.l.b16 %v11036
    %v11183 = vunpack.c.h.b16 %v11036
    %v11184 = vunpack.c.l.b16 %v11037
    %v11185 = vunpack.c.h.b16 %v11037
    %v11186 = vunpack.c.l.b16 %v11038
    %v11187 = vunpack.c.h.b16 %v11038
    %v11188 = vunpack.c.l.b16 %v11039
    %v11189 = vunpack.c.h.b16 %v11039
    %v11190 = vunpack.c.l.b16 %v11040
    %v11191 = vunpack.c.h.b16 %v11040
    %v11192 = vunpack.c.l.b16 %v11041
    %v11193 = vunpack.c.h.b16 %v11041
    %v11194 = vunpack.c.l.b16 %v11042
    %v11195 = vunpack.c.h.b16 %v11042
    %v11196 = vunpack.c.l.b16 %v11043
    %v11197 = vunpack.c.h.b16 %v11043
    %v11198 = vunpack.c.l.b16 %v11044
    %v11199 = vunpack.c.h.b16 %v11044
    %v11200 = vunpack.c.l.b16 %v11045
    %v11201 = vunpack.c.h.b16 %v11045
    %v11202 = vunpack.c.l.b16 %v11046
    %v11203 = vunpack.c.h.b16 %v11046
    %v11204 = vunpack.c.l.b16 %v11047
    %v11205 = vunpack.c.h.b16 %v11047
    %v11206 = vunpack.c.l.b16 %v11048
    %v11207 = vunpack.c.h.b16 %v11048
    %v11208 = vunpack.c.l.b16 %v11049
    %v11209 = vunpack.c.h.b16 %v11049
    %v11210 = vunpack.c.l.b16 %v11050
    %v11211 = vunpack.c.h.b16 %v11050
    %v11212 = vunpack.c.l.b16 %v11051
    %v11213 = vunpack.c.h.b16 %v11051
    %v11214 = vunpack.c.l.b16 %v11052
    %v11215 = vunpack.c.h.b16 %v11052
    %v11216 = vunpack.c.l.b16 %v11053
    %v11217 = vunpack.c.h.b16 %v11053
    %v11218 = vunpack.c.l.b16 %v11054
    %v11219 = vunpack.c.h.b16 %v11054
    %v11220 = vunpack.c.l.b16 %v11055
    %v11221 = vunpack.c.h.b16 %v11055
    %v11222 = vunpack.c.l.b16 %v11056
    %v11223 = vunpack.c.h.b16 %v11056
    %v11224 = vunpack.c.l.b16 %v11057
    %v11225 = vunpack.c.h.b16 %v11057
    %v11226 = vunpack.c.l.b16 %v11058
    %v11227 = vunpack.c.h.b16 %v11058
    %v11228 = vunpack.c.l.b16 %v11059
    %v11229 = vunpack.c.h.b16 %v11059
    %v11230 = vunpack.c.l.b16 %v11060
    %v11231 = vunpack.c.h.b16 %v11060
    %v11232 = vunpack.c.l.b16 %v11061
    %v11233 = vunpack.c.h.b16 %v11061
    %v11234 = vunpack.c.l.b16 %v11062
    %v11235 = vunpack.c.h.b16 %v11062
    %v11236 = vunpack.c.l.b16 %v11063
    %v11237 = vunpack.c.h.b16 %v11063
    %v11238 = vunpack.c.l.b16 %v11064
    %v11239 = vunpack.c.h.b16 %v11064
    %v11240 = vunpack.c.l.b16 %v11065
    %v11241 = vunpack.c.h.b16 %v11065
    %v11242 = vunpack.c.l.b16 %v11066
    %v11243 = vunpack.c.h.b16 %v11066
    %v11244 = vunpack.c.l.b16 %v11067
    %v11245 = vunpack.c.h.b16 %v11067
    %v11246 = vunpack.c.l.b16 %v11068
    %v11247 = vunpack.c.h.b16 %v11068
    %v11248 = vunpack.c.l.b16 %v11069
    %v11249 = vunpack.c.h.b16 %v11069
    %v11250 = vunpack.c.l.b16 %v11070
    %v11251 = vunpack.c.h.b16 %v11070
    %v11252 = vunpack.c.l.b16 %v11071
    %v11253 = vunpack.c.h.b16 %v11071
    %v11254 = vunpack.c.l.b16 %v11072
    %v11255 = vunpack.c.h.b16 %v11072
    %v11256 = vunpack.c.l.b16 %v11073
    %v11257 = vunpack.c.h.b16 %v11073
    %v11258 = vunpack.c.l.b16 %v11074
    %v11259 = vunpack.c.h.b16 %v11074
    %v11260 = vunpack.c.l.b16 %v11075
    %v11261 = vunpack.c.h.b16 %v11075
    %v11262 = vunpack.c.l.b16 %v11076
    %v11263 = vunpack.c.h.b16 %v11076
    %v11264 = vunpack.c.l.b16 %v11077
    %v11265 = vunpack.c.h.b16 %v11077
    %v11266 = vunpack.c.l.b16 %v11078
    %v11267 = vunpack.c.h.b16 %v11078
    %v11268 = vunpack.c.l.b16 %v11079
    %v11269 = vunpack.c.h.b16 %v11079
    %v11270 = vunpack.c.l.b16 %v11080
    %v11271 = vunpack.c.h.b16 %v11080
    %v11272 = vunpack.c.l.b16 %v11081
    %v11273 = vunpack.c.h.b16 %v11081
    %v11274 = vunpack.c.l.b16 %v11082
    %v11275 = vunpack.c.h.b16 %v11082
    %v11276 = vunpack.c.l.b16 %v11083
    %v11277 = vunpack.c.h.b16 %v11083
    %v11278 = vunpack.c.l.b16 %v11084
    %v11279 = vunpack.c.h.b16 %v11084
    %v11280 = vunpack.c.l.b16 %v11085
    %v11281 = vunpack.c.h.b16 %v11085
    %v11282 = vunpack.c.l.b16 %v11086
    %v11283 = vunpack.c.h.b16 %v11086
    %v11284 = vunpack.c.l.b16 %v11087
    %v11285 = vunpack.c.h.b16 %v11087
    %v11286 = vunpack.c.l.b16 %v11088
    %v11287 = vunpack.c.h.b16 %v11088
    %v11288 = vunpack.c.l.b16 %v11089
    %v11289 = vunpack.c.h.b16 %v11089
    %v11290 = vunpack.c.l.b16 %v11090
    %v11291 = vunpack.c.h.b16 %v11090
    %v11292 = vunpack.c.l.b16 %v11091
    %v11293 = vunpack.c.h.b16 %v11091
    %v11294 = vunpack.c.l.b16 %v11092
    %v11295 = vunpack.c.h.b16 %v11092
    %v11296 = vunpack.c.l.b16 %v11093
    %v11297 = vunpack.c.h.b16 %v11093
    %v11298 = vpack.c.b16 %v11172, %v11170
    %v11299 = vpack.c.b16 %v11173, %v11171
    %v11300 = vpack.c.b16 %v11176, %v11174
    %v11301 = vpack.c.b16 %v11177, %v11175
    %v11302 = vpack.c.b16 %v11180, %v11178
    %v11303 = vpack.c.b16 %v11181, %v11179
    %v11304 = vpack.c.b16 %v11184, %v11182
    %v11305 = vpack.c.b16 %v11185, %v11183
    %v11306 = vpack.c.b16 %v11188, %v11186
    %v11307 = vpack.c.b16 %v11189, %v11187
    %v11308 = vpack.c.b16 %v11192, %v11190
    %v11309 = vpack.c.b16 %v11193, %v11191
    %v11310 = vpack.c.b16 %v11196, %v11194
    %v11311 = vpack.c.b16 %v11197, %v11195
    %v11312 = vpack.c.b16 %v11200, %v11198
    %v11313 = vpack.c.b16 %v11201, %v11199
    %v11314 = vpack.c.b16 %v11204, %v11202
    %v11315 = vpack.c.b16 %v11205, %v11203
    %v11316 = vpack.c.b16 %v11208, %v11206
    %v11317 = vpack.c.b16 %v11209, %v11207
    %v11318 = vpack.c.b16 %v11212, %v11210
    %v11319 = vpack.c.b16 %v11213, %v11211
    %v11320 = vpack.c.b16 %v11216, %v11214
    %v11321 = vpack.c.b16 %v11217, %v11215
    %v11322 = vpack.c.b16 %v11220, %v11218
    %v11323 = vpack.c.b16 %v11221, %v11219
    %v11324 = vpack.c.b16 %v11224, %v11222
    %v11325 = vpack.c.b16 %v11225, %v11223
    %v11326 = vpack.c.b16 %v11228, %v11226
    %v11327 = vpack.c.b16 %v11229, %v11227
    %v11328 = vpack.c.b16 %v11232, %v11230
    %v11329 = vpack.c.b16 %v11233, %v11231
    %v11330 = vpack.c.b16 %v11236, %v11234
    %v11331 = vpack.c.b16 %v11237, %v11235
    %v11332 = vpack.c.b16 %v11240, %v11238
    %v11333 = vpack.c.b16 %v11241, %v11239
    %v11334 = vpack.c.b16 %v11244, %v11242
    %v11335 = vpack.c.b16 %v11245, %v11243
    %v11336 = vpack.c.b16 %v11248, %v11246
    %v11337 = vpack.c.b16 %v11249, %v11247
    %v11338 = vpack.c.b16 %v11252, %v11250
    %v11339 = vpack.c.b16 %v11253, %v11251
    %v11340 = vpack.c.b16 %v11256, %v11254
    %v11341 = vpack.c.b16 %v11257, %v11255
    %v11342 = vpack.c.b16 %v11260, %v11258
    %v11343 = vpack.c.b16 %v11261, %v11259
    %v11344 = vpack.c.b16 %v11264, %v11262
    %v11345 = vpack.c.b16 %v11265, %v11263
    %v11346 = vpack.c.b16 %v11268, %v11266
    %v11347 = vpack.c.b16 %v11269, %v11267
    %v11348 = vpack.c.b16 %v11272, %v11270
    %v11349 = vpack.c.b16 %v11273, %v11271
    %v11350 = vpack.c.b16 %v11276, %v11274
    %v11351 = vpack.c.b16 %v11277, %v11275
    %v11352 = vpack.c.b16 %v11280, %v11278
    %v11353 = vpack.c.b16 %v11281, %v11279
    %v11354 = vpack.c.b16 %v11284, %v11282
    %v11355 = vpack.c.b16 %v11285, %v11283
    %v11356 = vpack.c.b16 %v11288, %v11286
    %v11357 = vpack.c.b16 %v11289, %v11287
    %v11358 = vpack.c.b16 %v11292, %v11290
    %v11359 = vpack.c.b16 %v11293, %v11291
    %v11360 = vpack.c.b16 %v11296, %v11294
    %v11361 = vpack.c.b16 %v11297, %v11295
    %11426 = vmatprep.subr.bf16.mxu0 %v11313
    %11427 = vmatpush1.bf16.msra.mxu0 %v11312
    %11428 = vmatprep.subr.bf16.mxu0 %v11311
    %11429 = vmatpush1.bf16.msra.mxu0 %v11310
    %11430 = vmatprep.subr.bf16.mxu0 %v11309
    %11431 = vmatpush1.bf16.msra.mxu0 %v11308
    %11432 = vmatprep.subr.bf16.mxu0 %v11307
    %11433 = vmatpush1.bf16.msra.mxu0 %v11306
    %11434 = vmatprep.subr.bf16.mxu0 %v11305
    %11435 = vmatpush1.bf16.msra.mxu0 %v11304
    %11436 = vmatprep.subr.bf16.mxu0 %v11303
    %11437 = vmatpush1.bf16.msra.mxu0 %v11302
    %11438 = vmatprep.subr.bf16.mxu0 %v11301
    %11439 = vmatpush1.bf16.msra.mxu0 %v11300
    %11440 = vmatprep.subr.bf16.mxu0 %v11299
    %11441 = vmatpush1.bf16.msra.mxu0 %v11298
    %11442 = vmatprep.subr.bf16.mxu0 %v11329
    %11443 = vmatpush2.bf16.msra.mxu0 %v11328
    %11444 = vmatprep.subr.bf16.mxu0 %v11327
    %11445 = vmatpush2.bf16.msra.mxu0 %v11326
    %11446 = vmatprep.subr.bf16.mxu0 %v11325
    %11447 = vmatpush2.bf16.msra.mxu0 %v11324
    %11448 = vmatprep.subr.bf16.mxu0 %v11323
    %11449 = vmatpush2.bf16.msra.mxu0 %v11322
    %11450 = vmatprep.subr.bf16.mxu0 %v11321
    %11451 = vmatpush2.bf16.msra.mxu0 %v11320
    %11452 = vmatprep.subr.bf16.mxu0 %v11319
    %11453 = vmatpush2.bf16.msra.mxu0 %v11318
    %11454 = vmatprep.subr.bf16.mxu0 %v11317
    %11455 = vmatpush2.bf16.msra.mxu0 %v11316
    %11456 = vmatprep.subr.bf16.mxu0 %v11315
    %11457 = vmatpush2.bf16.msra.mxu0 %v11314
    %11458 = vmatprep.mubr.bf16.mxu0 %v11027
    %11459 = vmatmul.mubr.bf16.gmra.mxu0 %v11026
    %v11460 = vpop.f32.mrf.mxu0
    %v11461 = vadd.f32 %v11099, %v11460
    %v11462 = vpop.f32.mrf.mxu0
    %v11463 = vadd.f32 %v11103, %v11462
    %v11464 = vpop.f32.mrf.mxu0
    %v11465 = vpop.f32.mrf.mxu0
    %11466 = vdwg.mxu0
    %11467 = vmatprep.subr.bf16.mxu0 %v11345
    %11468 = vmatpush1.bf16.msra.mxu0 %v11344
    %11469 = vmatprep.subr.bf16.mxu0 %v11343
    %11470 = vmatpush1.bf16.msra.mxu0 %v11342
    %11471 = vmatprep.subr.bf16.mxu0 %v11341
    %11472 = vmatpush1.bf16.msra.mxu0 %v11340
    %11473 = vmatprep.subr.bf16.mxu0 %v11339
    %11474 = vmatpush1.bf16.msra.mxu0 %v11338
    %11475 = vmatprep.subr.bf16.mxu0 %v11337
    %11476 = vmatpush1.bf16.msra.mxu0 %v11336
    %11477 = vmatprep.subr.bf16.mxu0 %v11335
    %11478 = vmatpush1.bf16.msra.mxu0 %v11334
    %11479 = vmatprep.subr.bf16.mxu0 %v11333
    %11480 = vmatpush1.bf16.msra.mxu0 %v11332
    %11481 = vmatprep.subr.bf16.mxu0 %v11331
    %11482 = vmatpush1.bf16.msra.mxu0 %v11330
    %11483 = vmatprep.subr.bf16.mxu0 %v11361
    %11484 = vmatpush2.bf16.msra.mxu0 %v11360
    %11485 = vmatprep.subr.bf16.mxu0 %v11359
    %11486 = vmatpush2.bf16.msra.mxu0 %v11358
    %11487 = vmatprep.subr.bf16.mxu0 %v11357
    %11488 = vmatpush2.bf16.msra.mxu0 %v11356
    %11489 = vmatprep.subr.bf16.mxu0 %v11355
    %11490 = vmatpush2.bf16.msra.mxu0 %v11354
    %11491 = vmatprep.subr.bf16.mxu0 %v11353
    %11492 = vmatpush2.bf16.msra.mxu0 %v11352
    %11493 = vmatprep.subr.bf16.mxu0 %v11351
    %11494 = vmatpush2.bf16.msra.mxu0 %v11350
    %11495 = vmatprep.subr.bf16.mxu0 %v11349
    %11496 = vmatpush2.bf16.msra.mxu0 %v11348
    %11497 = vmatprep.subr.bf16.mxu0 %v11347
    %11498 = vmatpush2.bf16.msra.mxu0 %v11346
    %11499 = vmatprep.mubr.bf16.mxu0 %v11029
    %11500 = vmatmul.mubr.bf16.gmra.mxu0 %v11028
    %v11501 = vpop.f32.mrf.mxu0
    %v11502 = vadd.f32 %v11461, %v11501
    %v11503 = vpop.f32.mrf.mxu0
    %v11504 = vadd.f32 %v11463, %v11503
    %v11505 = vpop.f32.mrf.mxu0
    %v11506 = vpop.f32.mrf.mxu0
    %11507 = vdwg.mxu0
    %11508 = vst [vmem:[#allocation5] sm:$0xff] %v11502
    %11509 = vst [vmem:[#allocation5 + $0x8] sm:$0xff] %v11504
    %v11510 = vpack.c.bf16 %v11502, %v11502
    %v11511 = vpack.c.bf16 %v11504, %v11504
    %v11512 = vld [vmem:[%s6] sm:$0xf]
    %v11513 = vld [vmem:[%s6 + $0x4] sm:$0xf]
    %v11514 = vld [vmem:[%s6 + $0x8] sm:$0xf]
    %v11515 = vld [vmem:[%s6 + $0xc] sm:$0xf]
    %v11516 = vld [vmem:[%s6 + $0x10] sm:$0xf]
    %v11517 = vld [vmem:[%s6 + $0x14] sm:$0xf]
    %v11518 = vld [vmem:[%s6 + $0x18] sm:$0xf]
    %v11519 = vld [vmem:[%s6 + $0x1c] sm:$0xf]
    %v11520 = vld [vmem:[%s6 + $0x20] sm:$0xf]
    %v11521 = vld [vmem:[%s6 + $0x24] sm:$0xf]
    %v11522 = vld [vmem:[%s6 + $0x28] sm:$0xf]
    %v11523 = vld [vmem:[%s6 + $0x2c] sm:$0xf]
    %v11524 = vld [vmem:[%s6 + $0x30] sm:$0xf]
    %v11525 = vld [vmem:[%s6 + $0x34] sm:$0xf]
    %v11526 = vld [vmem:[%s6 + $0x38] sm:$0xf]
    %v11527 = vld [vmem:[%s6 + $0x3c] sm:$0xf]
    %v11528 = vld [vmem:[%s6 + $0x40] sm:$0xf]
    %v11529 = vld [vmem:[%s6 + $0x44] sm:$0xf]
    %v11530 = vld [vmem:[%s6 + $0x48] sm:$0xf]
    %v11531 = vld [vmem:[%s6 + $0x4c] sm:$0xf]
    %v11532 = vld [vmem:[%s6 + $0x50] sm:$0xf]
    %v11533 = vld [vmem:[%s6 + $0x54] sm:$0xf]
    %v11534 = vld [vmem:[%s6 + $0x58] sm:$0xf]
    %v11535 = vld [vmem:[%s6 + $0x5c] sm:$0xf]
    %v11536 = vld [vmem:[%s6 + $0x60] sm:$0xf]
    %v11537 = vld [vmem:[%s6 + $0x64] sm:$0xf]
    %v11538 = vld [vmem:[%s6 + $0x68] sm:$0xf]
    %v11539 = vld [vmem:[%s6 + $0x6c] sm:$0xf]
    %v11540 = vld [vmem:[%s6 + $0x70] sm:$0xf]
    %v11541 = vld [vmem:[%s6 + $0x74] sm:$0xf]
    %v11542 = vld [vmem:[%s6 + $0x78] sm:$0xf]
    %v11543 = vld [vmem:[%s6 + $0x7c] sm:$0xf]
    %v11544 = vld [vmem:[%s7] sm:$0x1]
    %v11546 = vlaneseq
    %v11547 = vshrl.u32 %v11546, 7
    %v11548 = vsub.s32 0, %v11547
    %v11549 = vrot.slane %v11544, %v11548
    %v11583 = vunpack.c.l.b16 %v11512
    %v11584 = vunpack.c.l.b16 %v11513
    %v11585 = vunpack.c.l.b16 %v11514
    %v11586 = vunpack.c.l.b16 %v11515
    %v11587 = vunpack.c.l.b16 %v11516
    %v11588 = vunpack.c.l.b16 %v11517
    %v11589 = vunpack.c.l.b16 %v11518
    %v11590 = vunpack.c.l.b16 %v11519
    %v11591 = vunpack.c.l.b16 %v11520
    %v11592 = vunpack.c.l.b16 %v11521
    %v11593 = vunpack.c.l.b16 %v11522
    %v11594 = vunpack.c.l.b16 %v11523
    %v11595 = vunpack.c.l.b16 %v11524
    %v11596 = vunpack.c.l.b16 %v11525
    %v11597 = vunpack.c.l.b16 %v11526
    %v11598 = vunpack.c.l.b16 %v11527
    %v11599 = vunpack.c.l.b16 %v11528
    %v11600 = vunpack.c.l.b16 %v11529
    %v11601 = vunpack.c.l.b16 %v11530
    %v11602 = vunpack.c.l.b16 %v11531
    %v11603 = vunpack.c.l.b16 %v11532
    %v11604 = vunpack.c.l.b16 %v11533
    %v11605 = vunpack.c.l.b16 %v11534
    %v11606 = vunpack.c.l.b16 %v11535
    %v11607 = vunpack.c.l.b16 %v11536
    %v11608 = vunpack.c.l.b16 %v11537
    %v11609 = vunpack.c.l.b16 %v11538
    %v11610 = vunpack.c.l.b16 %v11539
    %v11611 = vunpack.c.l.b16 %v11540
    %v11612 = vunpack.c.l.b16 %v11541
    %v11613 = vunpack.c.l.b16 %v11542
    %v11614 = vunpack.c.l.b16 %v11543
    %v11615 = vpack.c.b16 %v11584, %v11583
    %v11616 = vpack.c.b16 %v11586, %v11585
    %v11617 = vpack.c.b16 %v11588, %v11587
    %v11618 = vpack.c.b16 %v11590, %v11589
    %v11619 = vpack.c.b16 %v11592, %v11591
    %v11620 = vpack.c.b16 %v11594, %v11593
    %v11621 = vpack.c.b16 %v11596, %v11595
    %v11622 = vpack.c.b16 %v11598, %v11597
    %v11623 = vpack.c.b16 %v11600, %v11599
    %v11624 = vpack.c.b16 %v11602, %v11601
    %v11625 = vpack.c.b16 %v11604, %v11603
    %v11626 = vpack.c.b16 %v11606, %v11605
    %v11627 = vpack.c.b16 %v11608, %v11607
    %v11628 = vpack.c.b16 %v11610, %v11609
    %v11629 = vpack.c.b16 %v11612, %v11611
    %v11630 = vpack.c.b16 %v11614, %v11613
    %11647 = vmatprep.subr.bf16.mxu0 0
    %11648 = vmatpush1.bf16.msra.mxu0 %v11622
    %11649 = vmatprep.subr.bf16.mxu0 0
    %11650 = vmatpush1.bf16.msra.mxu0 %v11621
    %11651 = vmatprep.subr.bf16.mxu0 0
    %11652 = vmatpush1.bf16.msra.mxu0 %v11620
    %11653 = vmatprep.subr.bf16.mxu0 0
    %11654 = vmatpush1.bf16.msra.mxu0 %v11619
    %11655 = vmatprep.subr.bf16.mxu0 0
    %11656 = vmatpush1.bf16.msra.mxu0 %v11618
    %11657 = vmatprep.subr.bf16.mxu0 0
    %11658 = vmatpush1.bf16.msra.mxu0 %v11617
    %11659 = vmatprep.subr.bf16.mxu0 0
    %11660 = vmatpush1.bf16.msra.mxu0 %v11616
    %11661 = vmatprep.subr.bf16.mxu0 0
    %11662 = vmatpush1.bf16.msra.mxu0 %v11615
    %11663 = vmatprep.subr.bf16.mxu0 0
    %11664 = vmatpush2.bf16.msra.mxu0 %v11630
    %11665 = vmatprep.subr.bf16.mxu0 0
    %11666 = vmatpush2.bf16.msra.mxu0 %v11629
    %11667 = vmatprep.subr.bf16.mxu0 0
    %11668 = vmatpush2.bf16.msra.mxu0 %v11628
    %11669 = vmatprep.subr.bf16.mxu0 0
    %11670 = vmatpush2.bf16.msra.mxu0 %v11627
    %11671 = vmatprep.subr.bf16.mxu0 0
    %11672 = vmatpush2.bf16.msra.mxu0 %v11626
    %11673 = vmatprep.subr.bf16.mxu0 0
    %11674 = vmatpush2.bf16.msra.mxu0 %v11625
    %11675 = vmatprep.subr.bf16.mxu0 0
    %11676 = vmatpush2.bf16.msra.mxu0 %v11624
    %11677 = vmatprep.subr.bf16.mxu0 0
    %11678 = vmatpush2.bf16.msra.mxu0 %v11623
    %11679 = vmatprep.mubr.bf16.mxu0 %v11511
    %11680 = vmatmul.mubr.bf16.gmra.mxu0 %v11510
    %v11681 = vpop.f32.mrf.mxu0
    %v11682 = vadd.f32 %v11549, %v11681
    %v11683 = vpop.f32.mrf.mxu0
    %v11684 = vpop.f32.mrf.mxu0
    %v11685 = vpop.f32.mrf.mxu0
    %11686 = vdwg.mxu0
    %11687 = vst [vmem:[#allocation3] sm:$0xff] %v11682
    // Predicated region
    $region34: #{lstm_tiny_forward.1} parent=1 // pred_check
      _
    $region35: #{lstm_tiny_forward.1} parent=1 // pred_check_branch
      %11689 = sbr.rel (0) target = $region37
    $region36: #{lstm_tiny_forward.1} parent=1 // pred_region
      %s11691 = ssub.s32 128, 128
      %11692 = vsyncadd [#allocation4], %s11691
      %s11694 = sshll.u32 [#allocation3], 4
      %s11695 = int_to_ptr.vmem [resolvable:$true] %s11694
      %11697 = dma.vmem_to_hbm [thread:$0]  %s11695, 128, %s8, [#allocation4]
    $region37: #{lstm_tiny_forward.1} parent=1 // pred_fallthru
      _
    // Predicated region
    $region38: #{lstm_tiny_forward.1} parent=1 // pred_check
      _
    $region39: #{lstm_tiny_forward.1} parent=1 // pred_check_branch
      %11699 = sbr.rel (0) target = $region41
    $region40: #{lstm_tiny_forward.1} parent=1 // pred_region
      %s11701 = ssub.s32 256, 256
      %11702 = vsyncadd [#allocation6], %s11701
      %s11704 = sshll.u32 [#allocation5], 4
      %s11705 = int_to_ptr.vmem [resolvable:$true] %s11704
      %11707 = dma.vmem_to_hbm [thread:$0]  %s11705, 256, %s9, [#allocation6]
    $region41: #{lstm_tiny_forward.1} parent=1 // pred_fallthru
      _
    // Predicated region
    $region42: #{lstm_tiny_forward.1} parent=1 // pred_check
      _
    $region43: #{lstm_tiny_forward.1} parent=1 // pred_check_branch
      %11709 = sbr.rel (0) target = $region45
    $region44: #{lstm_tiny_forward.1} parent=1 // pred_region
      %11710 = dma.done [#allocation4], 128
    $region45: #{lstm_tiny_forward.1} parent=1 // pred_fallthru
      _
    // Predicated region
    $region46: #{lstm_tiny_forward.1} parent=1 // pred_check
      _
    $region47: #{lstm_tiny_forward.1} parent=1 // pred_check_branch
      %11712 = sbr.rel (0) target = $region49
    $region48: #{lstm_tiny_forward.1} parent=1 // pred_region
      %11713 = dma.done [#allocation6], 256
    $region49: #{lstm_tiny_forward.1} parent=1 // pred_fallthru
      _
    %11714 = vsyncpa [#allocation4], 1
    %11715 = vsyncpa [#allocation6], 1

</llo_original>
